<compile_context>
chip_gen: v7x
topology: tpu7x:2x2x1
jax: 0.10.0
libtpu: 0.0.40
codegen_flags: <defaults>
</compile_context>

<pallas_src>
import jax
import jax.numpy as jnp
from jax import lax
from jax.experimental import pallas as pl
from jax.experimental.pallas import tpu as pltpu


def _round_up(n, m):
    return ((n + m - 1) // m) * m


def bottleneck_kernel(x_ref, x_hbm, w1_ref, b1_ref, w2_ref, b2_ref, w3_ref,
                      b3_ref, out_ref, h1pad_ref, halo_ref, sem):
    # x_ref:     (1, TH, W, Cp)       row tile of the input (auto-pipelined)
    # x_hbm:     (B, H, W, Cp)        raw HBM view of x (for halo-row DMA)
    # out_ref:   (1, TH, W, Cp)       row tile of the output
    # h1pad_ref: (TH+2, Wp2, Pp)      padded conv1 activations (VMEM scratch)
    # halo_ref:  (2, 1, W, Cp)        DMA landing buffer for the 2 halo rows
    TH, W, Cp = out_ref.shape[1], out_ref.shape[2], out_ref.shape[3]
    Pp = w1_ref.shape[1]
    act_dt = h1pad_ref.dtype

    b = pl.program_id(0)
    r = pl.program_id(1)
    nR = pl.num_programs(1)
    r0 = r * TH

    # ---- start halo-row DMAs early (overlap with conv1 on the main tile) ----
    @pl.when(r > 0)
    def _():
        pltpu.make_async_copy(x_hbm.at[pl.ds(b, 1), pl.ds(r0 - 1, 1)],
                              halo_ref.at[pl.ds(0, 1)], sem.at[0]).start()

    @pl.when(r < nR - 1)
    def _():
        pltpu.make_async_copy(x_hbm.at[pl.ds(b, 1), pl.ds(r0 + TH, 1)],
                              halo_ref.at[pl.ds(1, 1)], sem.at[1]).start()

    def conv1(rows2d):  # (M, Cp) -> relu(rows2d @ w1 + b1) in f32: (M, Pp)
        h = jnp.dot(rows2d, w1_ref[...], preferred_element_type=jnp.float32)
        return jnp.maximum(h + b1_ref[...], 0.0)

    # conv1 + BN1 + ReLU on the TH rows of this tile -> interior of h1pad.
    h_main = conv1(x_ref[0].reshape(TH * W, Cp)).astype(act_dt)
    h1pad_ref[pl.ds(1, TH), pl.ds(1, W), :] = h_main.reshape(TH, W, Pp)

    # Zero only the left / right padding columns (the only columns outside the
    # interior that conv2 ever reads; the trailing alignment columns are never
    # read).  ~2*(TH+2)*Pp stores per step instead of a full-scratch memset.
    zcol = jnp.zeros((TH + 2, 1, Pp), act_dt)
    h1pad_ref[:, pl.ds(0, 1), :] = zcol
    h1pad_ref[:, pl.ds(W + 1, 1), :] = zcol

    # ---- halo rows: wait DMAs, one merged 2-row conv1 matmul ----
    @pl.when(r > 0)
    def _():
        pltpu.make_async_copy(x_hbm.at[pl.ds(b, 1), pl.ds(r0 - 1, 1)],
                              halo_ref.at[pl.ds(0, 1)], sem.at[0]).wait()

    @pl.when(r < nR - 1)
    def _():
        pltpu.make_async_copy(x_hbm.at[pl.ds(b, 1), pl.ds(r0 + TH, 1)],
                              halo_ref.at[pl.ds(1, 1)], sem.at[1]).wait()

    h_halo = conv1(halo_ref[...].reshape(2 * W, Cp)).astype(act_dt)
    h_halo = h_halo.reshape(2, W, Pp)
    h1pad_ref[pl.ds(0, 1), pl.ds(1, W), :] = h_halo[:1]
    h1pad_ref[pl.ds(TH + 1, 1), pl.ds(1, W), :] = h_halo[1:]

    # On image-boundary tiles the halo row is conv2 zero-padding, not conv1 of
    # a (nonexistent / stale) row: overwrite it with zeros every such step.
    zrow = jnp.zeros((1, W, Pp), act_dt)

    @pl.when(r == 0)
    def _():
        h1pad_ref[pl.ds(0, 1), pl.ds(1, W), :] = zrow

    @pl.when(r == nR - 1)
    def _():
        h1pad_ref[pl.ds(TH + 1, 1), pl.ds(1, W), :] = zrow

    # ---- conv2 (3x3, stride=1, pad=1) + BN2 + ReLU: 9 accumulating matmuls.
    # No 9x-wide patch materialization; each tap is a (TH*W, Pp) x (Pp, Pp)
    # MXU matmul accumulated in f32.
    acc = None
    for dy in range(3):
        for dx in range(3):
            lhs = h1pad_ref[pl.ds(dy, TH), pl.ds(dx, W), :].reshape(TH * W, Pp)
            part = jnp.dot(lhs, w2_ref[dy * 3 + dx],
                           preferred_element_type=jnp.float32)
            acc = part if acc is None else acc + part
    h2 = jnp.maximum(acc + b2_ref[...], 0.0).astype(act_dt)

    # ---- conv3 (1x1) + BN3, residual add (late re-read of x), final ReLU ----
    h3 = jnp.dot(h2, w3_ref[...], preferred_element_type=jnp.float32)
    h3 = h3 + b3_ref[...]
    xres = x_ref[0].reshape(TH * W, Cp).astype(jnp.float32)
    out = jnp.maximum(h3 + xres, 0.0)
    out_ref[0] = out.reshape(TH, W, Cp).astype(out_ref.dtype)


def _vmem_bytes(tile_h, W, Wp2, Cp, Pp, itemsize):
    xblk = 2 * tile_h * W * Cp * itemsize            # double-buffered x row tile
    oblk = 2 * tile_h * W * Cp * itemsize            # double-buffered out tile
    wts = (Cp * Pp + 9 * Pp * Pp + Pp * Cp) * itemsize + (2 * Pp + Cp) * 4
    scr = (tile_h + 2) * Wp2 * Pp * itemsize + 2 * W * Cp * itemsize
    tmp = tile_h * W * (2 * Pp + 2 * Cp) * 4         # f32 value temporaries
    return xblk + oblk + 2 * wts + scr + tmp         # weights counted x2 (safe)


def _default_tile_h(H, W, Wp2, Cp, Pp, itemsize):
    # Grow the row tile until M = tile_h*W is large enough to amortize MXU
    # fill/drain and the ~0.35us per-grid-step overhead, within a VMEM budget
    # that stays comfortable even on v7x (64 MiB physical).
    budget = 48 * 1024 * 1024
    best = 1
    for d in range(1, H + 1):
        if H % d:
            continue
        if d > 1 and _vmem_bytes(d, W, Wp2, Cp, Pp, itemsize) > budget:
            break
        best = d
        if d * W >= 1024:
            break
    return best


def bottleneck_pallas(x, w1, s1, b1, w2, s2, b2, w3, s3, b3,
                      tile_h=None, compute_dtype=None):
    """x: (B, H, W, Cin) NHWC.  w1:(Cin,P) w2:(3,3,P,P HWIO) w3:(P,Cout).
    s*/b* are 1-D folded BatchNorm scale/bias (inference mode).
    compute_dtype: optional MXU operand dtype (e.g. jnp.bfloat16 on v6e/v7x)."""
    B, H, W, Cin = x.shape
    Cin_w, P = w1.shape
    kh, kw, P_in2, P_out2 = w2.shape
    P_w, Cout = w3.shape
    assert (kh, kw) == (3, 3) and Cin_w == Cin
    assert P_in2 == P and P_out2 == P and P_w == P
    assert Cin == Cout, (
        "identity residual requires in_planes == expansion*planes "
        "(stride=1, downsample=None)")

    cdt = x.dtype if compute_dtype is None else jnp.dtype(compute_dtype)
    itemsize = jnp.dtype(cdt).itemsize

    LANE = 128
    Cp = _round_up(Cin, LANE)   # padded Cin == padded Cout
    Pp = _round_up(P, LANE)
    Wp2 = _round_up(W + 2, 8)   # sublane-aligned padded-width of h1pad scratch

    if tile_h is None:
        tile_h = _default_tile_h(H, W, Wp2, Cp, Pp, itemsize)
    assert H % tile_h == 0, "tile_h must divide H"
    n_rows = H // tile_h

    # Fold BN scale into the conv weights; zero-pad channels to lane multiples.
    w1p = jnp.zeros((Cp, Pp), cdt).at[:Cin, :P].set((w1 * s1[None, :]).astype(cdt))
    b1p = jnp.zeros((1, Pp), jnp.float32).at[0, :P].set(b1.astype(jnp.float32))

    w2f = (w2 * s2[None, None, None, :]).astype(cdt)
    w2p = (jnp.zeros((3, 3, Pp, Pp), cdt).at[:, :, :P, :P].set(w2f)
           .reshape(9, Pp, Pp))                      # tap-indexed weight layout
    b2p = jnp.zeros((1, Pp), jnp.float32).at[0, :P].set(b2.astype(jnp.float32))

    w3p = jnp.zeros((Pp, Cp), cdt).at[:P, :Cout].set((w3 * s3[None, :]).astype(cdt))
    b3p = jnp.zeros((1, Cp), jnp.float32).at[0, :Cout].set(b3.astype(jnp.float32))

    xp = x.astype(cdt)
    if Cp != Cin:
        # TODO(synk): for non-128-multiple channel counts (toy configs only)
        # the Cp-wide output is sliced afterwards; real ResNet stages hit
        # Cp == Cout and skip this.
        xp = jnp.pad(xp, ((0, 0), (0, 0), (0, 0), (0, Cp - Cin)))

    est = _vmem_bytes(tile_h, W, Wp2, Cp, Pp, itemsize)
    vmem_limit = int(min(max(int(est * 1.5), 32 * 1024 * 1024),
                         64 * 1024 * 1024))

    def build(single_buffer_consts):
        extra = {}
        if single_buffer_consts:
            # Grid-invariant weights: single buffer (their index_map is
            # constant, the second pipeline buffer would never be used).
            extra = dict(pipeline_mode=pl.Buffered(1))

        def const_spec(shape):
            return pl.BlockSpec(shape, lambda b, r: (0,) * len(shape), **extra)

        return pl.pallas_call(
            bottleneck_kernel,
            out_shape=jax.ShapeDtypeStruct((B, H, W, Cp), x.dtype),
            grid=(B, n_rows),
            in_specs=[
                pl.BlockSpec((1, tile_h, W, Cp), lambda b, r: (b, r, 0, 0)),  # x row tile
                pl.BlockSpec(memory_space=pl.ANY),                            # x in HBM (halo DMA)
                const_spec((Cp, Pp)),        # w1 (BN folded)
                const_spec((1, Pp)),         # b1
                const_spec((9, Pp, Pp)),     # w2 (tap-major, BN folded)
                const_spec((1, Pp)),         # b2
                const_spec((Pp, Cp)),        # w3 (BN folded)
                const_spec((1, Cp)),         # b3
            ],
            out_specs=pl.BlockSpec((1, tile_h, W, Cp), lambda b, r: (b, r, 0, 0)),
            scratch_shapes=[
                pltpu.VMEM((tile_h + 2, Wp2, Pp), cdt),   # padded conv1 acts
                pltpu.VMEM((2, 1, W, Cp), cdt),           # halo row landing buf
                pltpu.SemaphoreType.DMA((2,)),
            ],
            compiler_params=pltpu.CompilerParams(
                dimension_semantics=("parallel", "parallel"),
                vmem_limit_bytes=vmem_limit),
        )

    args = (xp, xp, w1p, b1p, w2p, b2p, w3p, b3p)
    try:
        out = build(True)(*args)
    except Exception:
        # Fallback if this Pallas build rejects pipeline_mode=pl.Buffered(1).
        out = build(False)(*args)

    return out if Cp == Cout else out[..., :Cout]


def fold_bn(gamma, beta, mean, var, eps=1e-5):
    scale = gamma / jnp.sqrt(var + eps)
    bias = beta - mean * scale
    return scale, bias


def reference_bottleneck(x, w1, s1, b1, w2, s2, b2, w3, s3, b3):
    """Pure-JAX reference (NHWC, BN in inference mode) for correctness check."""
    dn = ("NHWC", "HWIO", "NHWC")
    h = lax.conv_general_dilated(x, w1[None, None], (1, 1), "VALID",
                                 dimension_numbers=dn)
    h = jnp.maximum(h * s1 + b1, 0.0)
    h = lax.conv_general_dilated(h, w2, (1, 1), ((1, 1), (1, 1)),
                                 dimension_numbers=dn)
    h = jnp.maximum(h * s2 + b2, 0.0)
    h = lax.conv_general_dilated(h, w3[None, None], (1, 1), "VALID",
                                 dimension_numbers=dn)
    h = h * s3 + b3
    return jnp.maximum(h + x, 0.0)


if __name__ == "__main__":
    # Small shapes: planes=4, expansion=4 -> in_planes = 16, spatial 16x16, B=2.
    B, H, W = 2, 16, 16
    planes = 4
    in_planes = 4 * planes                   # 16, so identity residual is valid
    cout = 4 * planes

    key = jax.random.PRNGKey(0)
    ks = jax.random.split(key, 16)

    x = jax.random.normal(ks[0], (B, H, W, in_planes), jnp.float32)

    # conv weights (deterministic synthetic init)
    w1 = jax.random.normal(ks[1], (in_planes, planes), jnp.float32) * 0.1
    w2 = jax.random.normal(ks[2], (3, 3, planes, planes), jnp.float32) * 0.1
    w3 = jax.random.normal(ks[3], (planes, cout), jnp.float32) * 0.1

    # BatchNorm params (gamma, beta, running mean/var) folded to scale/bias.
    def bn_params(kg, kb, km, kv, c):
        gamma = 1.0 + 0.1 * jax.random.normal(kg, (c,), jnp.float32)
        beta = 0.1 * jax.random.normal(kb, (c,), jnp.float32)
        mean = 0.1 * jax.random.normal(km, (c,), jnp.float32)
        var = 0.5 + jnp.abs(jax.random.normal(kv, (c,), jnp.float32))
        return fold_bn(gamma, beta, mean, var)

    s1, b1 = bn_params(ks[4], ks[5], ks[6], ks[7], planes)
    s2, b2 = bn_params(ks[8], ks[9], ks[10], ks[11], planes)
    s3, b3 = bn_params(ks[12], ks[13], ks[14], ks[15], cout)

    ref = jax.block_until_ready(
        reference_bottleneck(x, w1, s1, b1, w2, s2, b2, w3, s3, b3))

    # Default tile_h (single row tile at this size) ...
    out_a = jax.block_until_ready(
        bottleneck_pallas(x, w1, s1, b1, w2, s2, b2, w3, s3, b3))
    # ... and a multi-tile run that exercises the halo DMA path.
    out_b = jax.block_until_ready(
        bottleneck_pallas(x, w1, s1, b1, w2, s2, b2, w3, s3, b3, tile_h=4))

    for out in (out_a, out_b):
        assert out.shape == (B, H, W, cout)
        assert jnp.allclose(out, ref, atol=1e-4, rtol=1e-4), \
            f"max err {jnp.max(jnp.abs(out - ref))}"

    print("KERNEL_OK")
</pallas_src>

<mosaic_0001>
module attributes {stable_mosaic.version = 11 : i64} {
  func.func @bottleneck_kernel(%arg0: i32, %arg1: i32, %arg2: memref<1x16x16x128xf32, #tpu.memory_space<vmem>>, %arg3: memref<2x16x16x128xf32, #tpu.memory_space<any>>, %arg4: memref<128x128xf32, #tpu.memory_space<vmem>>, %arg5: memref<1x128xf32, #tpu.memory_space<vmem>>, %arg6: memref<9x128x128xf32, #tpu.memory_space<vmem>>, %arg7: memref<1x128xf32, #tpu.memory_space<vmem>>, %arg8: memref<128x128xf32, #tpu.memory_space<vmem>>, %arg9: memref<1x128xf32, #tpu.memory_space<vmem>>, %arg10: memref<1x16x16x128xf32, #tpu.memory_space<vmem>>, %arg11: memref<18x24x128xf32, #tpu.memory_space<vmem>>, %arg12: memref<2x1x16x128xf32, #tpu.memory_space<vmem>>, %arg13: memref<2x!tpu.dma_semaphore, #tpu.memory_space<semaphore_mem>>) attributes {dimension_semantics = [#tpu.dimension_semantics<parallel>, #tpu.dimension_semantics<parallel>], iteration_bounds = array<i64: 2, 1>, scalar_prefetch = 0 : i64, scratch_operands = 3 : i64, tpu.core_type = #tpu.core_type<tc>, window_params = [{transform_indices = @transform_0, window_bounds = array<i64: 1, 16, 16, 128>}, {}, {pipeline_mode = #tpu.pipeline_mode<synchronous>, transform_indices = @transform_2, window_bounds = array<i64: 128, 128>}, {pipeline_mode = #tpu.pipeline_mode<synchronous>, transform_indices = @transform_3, window_bounds = array<i64: 1, 128>}, {pipeline_mode = #tpu.pipeline_mode<synchronous>, transform_indices = @transform_4, window_bounds = array<i64: 9, 128, 128>}, {pipeline_mode = #tpu.pipeline_mode<synchronous>, transform_indices = @transform_5, window_bounds = array<i64: 1, 128>}, {pipeline_mode = #tpu.pipeline_mode<synchronous>, transform_indices = @transform_6, window_bounds = array<i64: 128, 128>}, {pipeline_mode = #tpu.pipeline_mode<synchronous>, transform_indices = @transform_7, window_bounds = array<i64: 1, 128>}, {transform_indices = @transform_8, window_bounds = array<i64: 1, 16, 16, 128>}]} {
    %c16_i32 = arith.constant 16 : i32
    %0 = arith.muli %arg1, %c16_i32 : i32
    %c0_i32 = arith.constant 0 : i32
    %1 = arith.cmpi sgt, %arg1, %c0_i32 : i32
    %2 = arith.extui %1 : i1 to i32
    %c0_i32_0 = arith.constant 0 : i32
    %3 = arith.cmpi ne, %2, %c0_i32_0 : i32
    scf.if %3 {
      %c1_i32 = arith.constant 1 : i32
      %122 = arith.subi %0, %c1_i32 : i32
      %c0_i32_117 = arith.constant 0 : i32
      %c0_i32_118 = arith.constant 0 : i32
      %c0_i32_119 = arith.constant 0 : i32
      %123 = tpu.memref_slice %arg3[%arg0, %122, %c0_i32_118, %c0_i32_119] : memref<2x16x16x128xf32, #tpu.memory_space<any>> -> memref<1x1x16x128xf32, #tpu.memory_space<any>>
      %c0_i32_120 = arith.constant 0 : i32
      %c0_i32_121 = arith.constant 0 : i32
      %c0_i32_122 = arith.constant 0 : i32
      %c0_i32_123 = arith.constant 0 : i32
      %124 = tpu.memref_slice %arg12[%c0_i32_120, %c0_i32_121, %c0_i32_122, %c0_i32_123] : memref<2x1x16x128xf32, #tpu.memory_space<vmem>> -> memref<1x1x16x128xf32, #tpu.memory_space<vmem>>
      %125 = tpu.memref_slice %arg13[%c0_i32_117] : memref<2x!tpu.dma_semaphore, #tpu.memory_space<semaphore_mem>> -> memref<1x!tpu.dma_semaphore, #tpu.memory_space<semaphore_mem>>
      %126 = tpu.memref_squeeze %125 : memref<1x!tpu.dma_semaphore, #tpu.memory_space<semaphore_mem>> -> memref<!tpu.dma_semaphore, #tpu.memory_space<semaphore_mem>>
      tpu.enqueue_dma source(%123 : memref<1x1x16x128xf32, #tpu.memory_space<any>>) target(%124 : memref<1x1x16x128xf32, #tpu.memory_space<vmem>>) target_semaphore(%126 : memref<!tpu.dma_semaphore, #tpu.memory_space<semaphore_mem>>)
    } else {
    }
    %c0_i32_1 = arith.constant 0 : i32
    %4 = arith.cmpi slt, %arg1, %c0_i32_1 : i32
    %5 = arith.extui %4 : i1 to i32
    %c0_i32_2 = arith.constant 0 : i32
    %6 = arith.cmpi ne, %5, %c0_i32_2 : i32
    scf.if %6 {
      %c16_i32_117 = arith.constant 16 : i32
      %122 = arith.addi %0, %c16_i32_117 : i32
      %c1_i32 = arith.constant 1 : i32
      %c0_i32_118 = arith.constant 0 : i32
      %c0_i32_119 = arith.constant 0 : i32
      %123 = tpu.memref_slice %arg3[%arg0, %122, %c0_i32_118, %c0_i32_119] : memref<2x16x16x128xf32, #tpu.memory_space<any>> -> memref<1x1x16x128xf32, #tpu.memory_space<any>>
      %c1_i32_120 = arith.constant 1 : i32
      %c0_i32_121 = arith.constant 0 : i32
      %c0_i32_122 = arith.constant 0 : i32
      %c0_i32_123 = arith.constant 0 : i32
      %124 = tpu.memref_slice %arg12[%c1_i32_120, %c0_i32_121, %c0_i32_122, %c0_i32_123] : memref<2x1x16x128xf32, #tpu.memory_space<vmem>> -> memref<1x1x16x128xf32, #tpu.memory_space<vmem>>
      %125 = tpu.memref_slice %arg13[%c1_i32] : memref<2x!tpu.dma_semaphore, #tpu.memory_space<semaphore_mem>> -> memref<1x!tpu.dma_semaphore, #tpu.memory_space<semaphore_mem>>
      %126 = tpu.memref_squeeze %125 : memref<1x!tpu.dma_semaphore, #tpu.memory_space<semaphore_mem>> -> memref<!tpu.dma_semaphore, #tpu.memory_space<semaphore_mem>>
      tpu.enqueue_dma source(%123 : memref<1x1x16x128xf32, #tpu.memory_space<any>>) target(%124 : memref<1x1x16x128xf32, #tpu.memory_space<vmem>>) target_semaphore(%126 : memref<!tpu.dma_semaphore, #tpu.memory_space<semaphore_mem>>)
    } else {
    }
    %c0 = arith.constant 0 : index
    %c0_3 = arith.constant 0 : index
    %c0_4 = arith.constant 0 : index
    %c0_5 = arith.constant 0 : index
    %7 = vector.load %arg2[%c0, %c0_3, %c0_4, %c0_5] : memref<1x16x16x128xf32, #tpu.memory_space<vmem>>, vector<1x16x16x128xf32>
    %8 = vector.shape_cast %7 : vector<1x16x16x128xf32> to vector<16x16x128xf32>
    %9 = vector.shape_cast %8 : vector<16x16x128xf32> to vector<256x128xf32>
    %c0_6 = arith.constant 0 : index
    %c0_7 = arith.constant 0 : index
    %10 = vector.load %arg4[%c0_6, %c0_7] : memref<128x128xf32, #tpu.memory_space<vmem>>, vector<128x128xf32>
    %cst = arith.constant dense<0.000000e+00> : vector<256x128xf32>
    %11 = tpu.matmul %9, %10, %cst {dimension_numbers = #tpu.dot_dimension_numbers<[1], [0], [0], [1], [0, 0, 1, 1], [], []>} : vector<256x128xf32>, vector<128x128xf32>, vector<256x128xf32> -> vector<256x128xf32>
    %c0_8 = arith.constant 0 : index
    %c0_9 = arith.constant 0 : index
    %12 = vector.load %arg5[%c0_8, %c0_9] : memref<1x128xf32, #tpu.memory_space<vmem>>, vector<1x128xf32>
    %13 = vector.broadcast %12 : vector<1x128xf32> to vector<256x128xf32>
    %14 = arith.addf %11, %13 : vector<256x128xf32>
    %cst_10 = arith.constant 0.000000e+00 : f32
    %15 = vector.broadcast %cst_10 : f32 to vector<256x128xf32>
    %16 = arith.maximumf %14, %15 : vector<256x128xf32>
    %17 = vector.shape_cast %16 : vector<256x128xf32> to vector<16x16x128xf32>
    %c1 = arith.constant 1 : index
    %c1_11 = arith.constant 1 : index
    %c0_12 = arith.constant 0 : index
    %18 = vector.load %arg11[%c1, %c1_11, %c0_12] : memref<18x24x128xf32, #tpu.memory_space<vmem>>, vector<16x16x128xf32>
    tpu.vector_store %arg11[%c1, %c1_11, %c0_12], %17 {strides = array<i32>} : memref<18x24x128xf32, #tpu.memory_space<vmem>>, vector<16x16x128xf32>,
    %cst_13 = arith.constant 0.000000e+00 : f32
    %19 = vector.broadcast %cst_13 : f32 to vector<18x1x128xf32>
    %c0_14 = arith.constant 0 : index
    %c0_15 = arith.constant 0 : index
    %c0_16 = arith.constant 0 : index
    %20 = vector.load %arg11[%c0_14, %c0_15, %c0_16] : memref<18x24x128xf32, #tpu.memory_space<vmem>>, vector<18x1x128xf32>
    tpu.vector_store %arg11[%c0_14, %c0_15, %c0_16], %19 {strides = array<i32>} : memref<18x24x128xf32, #tpu.memory_space<vmem>>, vector<18x1x128xf32>,
    %c0_17 = arith.constant 0 : index
    %c17 = arith.constant 17 : index
    %c0_18 = arith.constant 0 : index
    %21 = vector.load %arg11[%c0_17, %c17, %c0_18] : memref<18x24x128xf32, #tpu.memory_space<vmem>>, vector<18x1x128xf32>
    tpu.vector_store %arg11[%c0_17, %c17, %c0_18], %19 {strides = array<i32>} : memref<18x24x128xf32, #tpu.memory_space<vmem>>, vector<18x1x128xf32>,
    %c0_i32_19 = arith.constant 0 : i32
    %22 = arith.cmpi sgt, %arg1, %c0_i32_19 : i32
    %23 = arith.extui %22 : i1 to i32
    %c0_i32_20 = arith.constant 0 : i32
    %24 = arith.cmpi ne, %23, %c0_i32_20 : i32
    scf.if %24 {
      %c1_i32 = arith.constant 1 : i32
      %122 = arith.subi %0, %c1_i32 : i32
      %c0_i32_117 = arith.constant 0 : i32
      %c0_i32_118 = arith.constant 0 : i32
      %c0_i32_119 = arith.constant 0 : i32
      %123 = tpu.memref_slice %arg3[%arg0, %122, %c0_i32_118, %c0_i32_119] : memref<2x16x16x128xf32, #tpu.memory_space<any>> -> memref<1x1x16x128xf32, #tpu.memory_space<any>>
      %c0_i32_120 = arith.constant 0 : i32
      %c0_i32_121 = arith.constant 0 : i32
      %c0_i32_122 = arith.constant 0 : i32
      %c0_i32_123 = arith.constant 0 : i32
      %124 = tpu.memref_slice %arg12[%c0_i32_120, %c0_i32_121, %c0_i32_122, %c0_i32_123] : memref<2x1x16x128xf32, #tpu.memory_space<vmem>> -> memref<1x1x16x128xf32, #tpu.memory_space<vmem>>
      %125 = tpu.memref_slice %arg13[%c0_i32_117] : memref<2x!tpu.dma_semaphore, #tpu.memory_space<semaphore_mem>> -> memref<1x!tpu.dma_semaphore, #tpu.memory_space<semaphore_mem>>
      %126 = tpu.memref_squeeze %125 : memref<1x!tpu.dma_semaphore, #tpu.memory_space<semaphore_mem>> -> memref<!tpu.dma_semaphore, #tpu.memory_space<semaphore_mem>>
      tpu.wait_dma2 semaphore(%126 : memref<!tpu.dma_semaphore, #tpu.memory_space<semaphore_mem>>) src(%123 : memref<1x1x16x128xf32, #tpu.memory_space<any>>) dst(%124 : memref<1x1x16x128xf32, #tpu.memory_space<vmem>>)
    } else {
    }
    %c0_i32_21 = arith.constant 0 : i32
    %25 = arith.cmpi slt, %arg1, %c0_i32_21 : i32
    %26 = arith.extui %25 : i1 to i32
    %c0_i32_22 = arith.constant 0 : i32
    %27 = arith.cmpi ne, %26, %c0_i32_22 : i32
    scf.if %27 {
      %c16_i32_117 = arith.constant 16 : i32
      %122 = arith.addi %0, %c16_i32_117 : i32
      %c1_i32 = arith.constant 1 : i32
      %c0_i32_118 = arith.constant 0 : i32
      %c0_i32_119 = arith.constant 0 : i32
      %123 = tpu.memref_slice %arg3[%arg0, %122, %c0_i32_118, %c0_i32_119] : memref<2x16x16x128xf32, #tpu.memory_space<any>> -> memref<1x1x16x128xf32, #tpu.memory_space<any>>
      %c1_i32_120 = arith.constant 1 : i32
      %c0_i32_121 = arith.constant 0 : i32
      %c0_i32_122 = arith.constant 0 : i32
      %c0_i32_123 = arith.constant 0 : i32
      %124 = tpu.memref_slice %arg12[%c1_i32_120, %c0_i32_121, %c0_i32_122, %c0_i32_123] : memref<2x1x16x128xf32, #tpu.memory_space<vmem>> -> memref<1x1x16x128xf32, #tpu.memory_space<vmem>>
      %125 = tpu.memref_slice %arg13[%c1_i32] : memref<2x!tpu.dma_semaphore, #tpu.memory_space<semaphore_mem>> -> memref<1x!tpu.dma_semaphore, #tpu.memory_space<semaphore_mem>>
      %126 = tpu.memref_squeeze %125 : memref<1x!tpu.dma_semaphore, #tpu.memory_space<semaphore_mem>> -> memref<!tpu.dma_semaphore, #tpu.memory_space<semaphore_mem>>
      tpu.wait_dma2 semaphore(%126 : memref<!tpu.dma_semaphore, #tpu.memory_space<semaphore_mem>>) src(%123 : memref<1x1x16x128xf32, #tpu.memory_space<any>>) dst(%124 : memref<1x1x16x128xf32, #tpu.memory_space<vmem>>)
    } else {
    }
    %c0_23 = arith.constant 0 : index
    %c0_24 = arith.constant 0 : index
    %c0_25 = arith.constant 0 : index
    %c0_26 = arith.constant 0 : index
    %28 = vector.load %arg12[%c0_23, %c0_24, %c0_25, %c0_26] : memref<2x1x16x128xf32, #tpu.memory_space<vmem>>, vector<2x1x16x128xf32>
    %29 = vector.shape_cast %28 : vector<2x1x16x128xf32> to vector<32x128xf32>
    %c0_27 = arith.constant 0 : index
    %c0_28 = arith.constant 0 : index
    %30 = vector.load %arg4[%c0_27, %c0_28] : memref<128x128xf32, #tpu.memory_space<vmem>>, vector<128x128xf32>
    %cst_29 = arith.constant dense<0.000000e+00> : vector<32x128xf32>
    %31 = tpu.matmul %29, %30, %cst_29 {dimension_numbers = #tpu.dot_dimension_numbers<[1], [0], [0], [1], [0, 0, 1, 1], [], []>} : vector<32x128xf32>, vector<128x128xf32>, vector<32x128xf32> -> vector<32x128xf32>
    %c0_30 = arith.constant 0 : index
    %c0_31 = arith.constant 0 : index
    %32 = vector.load %arg5[%c0_30, %c0_31] : memref<1x128xf32, #tpu.memory_space<vmem>>, vector<1x128xf32>
    %33 = vector.broadcast %32 : vector<1x128xf32> to vector<32x128xf32>
    %34 = arith.addf %31, %33 : vector<32x128xf32>
    %cst_32 = arith.constant 0.000000e+00 : f32
    %35 = vector.broadcast %cst_32 : f32 to vector<32x128xf32>
    %36 = arith.maximumf %34, %35 : vector<32x128xf32>
    %37 = vector.shape_cast %36 : vector<32x128xf32> to vector<2x16x128xf32>
    %38 = vector.extract_strided_slice %37 {offsets = [0, 0, 0], sizes = [1, 16, 128], strides = [1, 1, 1]} : vector<2x16x128xf32> to vector<1x16x128xf32>
    %c0_33 = arith.constant 0 : index
    %c1_34 = arith.constant 1 : index
    %c0_35 = arith.constant 0 : index
    %39 = vector.load %arg11[%c0_33, %c1_34, %c0_35] : memref<18x24x128xf32, #tpu.memory_space<vmem>>, vector<1x16x128xf32>
    tpu.vector_store %arg11[%c0_33, %c1_34, %c0_35], %38 {strides = array<i32>} : memref<18x24x128xf32, #tpu.memory_space<vmem>>, vector<1x16x128xf32>,
    %40 = vector.extract_strided_slice %37 {offsets = [1, 0, 0], sizes = [1, 16, 128], strides = [1, 1, 1]} : vector<2x16x128xf32> to vector<1x16x128xf32>
    %c17_36 = arith.constant 17 : index
    %c1_37 = arith.constant 1 : index
    %c0_38 = arith.constant 0 : index
    %41 = vector.load %arg11[%c17_36, %c1_37, %c0_38] : memref<18x24x128xf32, #tpu.memory_space<vmem>>, vector<1x16x128xf32>
    tpu.vector_store %arg11[%c17_36, %c1_37, %c0_38], %40 {strides = array<i32>} : memref<18x24x128xf32, #tpu.memory_space<vmem>>, vector<1x16x128xf32>,
    %cst_39 = arith.constant 0.000000e+00 : f32
    %42 = vector.broadcast %cst_39 : f32 to vector<1x16x128xf32>
    %c0_i32_40 = arith.constant 0 : i32
    %43 = arith.cmpi eq, %arg1, %c0_i32_40 : i32
    %44 = arith.extui %43 : i1 to i32
    %c0_i32_41 = arith.constant 0 : i32
    %45 = arith.cmpi ne, %44, %c0_i32_41 : i32
    scf.if %45 {
      %c0_117 = arith.constant 0 : index
      %c1_118 = arith.constant 1 : index
      %c0_119 = arith.constant 0 : index
      %122 = vector.load %arg11[%c0_117, %c1_118, %c0_119] : memref<18x24x128xf32, #tpu.memory_space<vmem>>, vector<1x16x128xf32>
      tpu.vector_store %arg11[%c0_117, %c1_118, %c0_119], %42 {strides = array<i32>} : memref<18x24x128xf32, #tpu.memory_space<vmem>>, vector<1x16x128xf32>,
    } else {
    }
    %c0_i32_42 = arith.constant 0 : i32
    %46 = arith.cmpi eq, %arg1, %c0_i32_42 : i32
    %47 = arith.extui %46 : i1 to i32
    %c0_i32_43 = arith.constant 0 : i32
    %48 = arith.cmpi ne, %47, %c0_i32_43 : i32
    scf.if %48 {
      %c17_117 = arith.constant 17 : index
      %c1_118 = arith.constant 1 : index
      %c0_119 = arith.constant 0 : index
      %122 = vector.load %arg11[%c17_117, %c1_118, %c0_119] : memref<18x24x128xf32, #tpu.memory_space<vmem>>, vector<1x16x128xf32>
      tpu.vector_store %arg11[%c17_117, %c1_118, %c0_119], %42 {strides = array<i32>} : memref<18x24x128xf32, #tpu.memory_space<vmem>>, vector<1x16x128xf32>,
    } else {
    }
    %c0_44 = arith.constant 0 : index
    %c0_45 = arith.constant 0 : index
    %c0_46 = arith.constant 0 : index
    %49 = vector.load %arg11[%c0_44, %c0_45, %c0_46] : memref<18x24x128xf32, #tpu.memory_space<vmem>>, vector<16x16x128xf32>
    %50 = vector.shape_cast %49 : vector<16x16x128xf32> to vector<256x128xf32>
    %c0_47 = arith.constant 0 : index
    %c0_48 = arith.constant 0 : index
    %c0_49 = arith.constant 0 : index
    %51 = vector.load %arg6[%c0_47, %c0_48, %c0_49] : memref<9x128x128xf32, #tpu.memory_space<vmem>>, vector<1x128x128xf32>
    %52 = vector.shape_cast %51 : vector<1x128x128xf32> to vector<128x128xf32>
    %cst_50 = arith.constant dense<0.000000e+00> : vector<256x128xf32>
    %53 = tpu.matmul %50, %52, %cst_50 {dimension_numbers = #tpu.dot_dimension_numbers<[1], [0], [0], [1], [0, 0, 1, 1], [], []>} : vector<256x128xf32>, vector<128x128xf32>, vector<256x128xf32> -> vector<256x128xf32>
    %c0_51 = arith.constant 0 : index
    %c1_52 = arith.constant 1 : index
    %c0_53 = arith.constant 0 : index
    %54 = vector.load %arg11[%c0_51, %c1_52, %c0_53] : memref<18x24x128xf32, #tpu.memory_space<vmem>>, vector<16x16x128xf32>
    %55 = vector.shape_cast %54 : vector<16x16x128xf32> to vector<256x128xf32>
    %c1_54 = arith.constant 1 : index
    %c0_55 = arith.constant 0 : index
    %c0_56 = arith.constant 0 : index
    %56 = vector.load %arg6[%c1_54, %c0_55, %c0_56] : memref<9x128x128xf32, #tpu.memory_space<vmem>>, vector<1x128x128xf32>
    %57 = vector.shape_cast %56 : vector<1x128x128xf32> to vector<128x128xf32>
    %cst_57 = arith.constant dense<0.000000e+00> : vector<256x128xf32>
    %58 = tpu.matmul %55, %57, %cst_57 {dimension_numbers = #tpu.dot_dimension_numbers<[1], [0], [0], [1], [0, 0, 1, 1], [], []>} : vector<256x128xf32>, vector<128x128xf32>, vector<256x128xf32> -> vector<256x128xf32>
    %59 = arith.addf %53, %58 : vector<256x128xf32>
    %c0_58 = arith.constant 0 : index
    %c2 = arith.constant 2 : index
    %c0_59 = arith.constant 0 : index
    %60 = vector.load %arg11[%c0_58, %c2, %c0_59] : memref<18x24x128xf32, #tpu.memory_space<vmem>>, vector<16x16x128xf32>
    %61 = vector.shape_cast %60 : vector<16x16x128xf32> to vector<256x128xf32>
    %c2_60 = arith.constant 2 : index
    %c0_61 = arith.constant 0 : index
    %c0_62 = arith.constant 0 : index
    %62 = vector.load %arg6[%c2_60, %c0_61, %c0_62] : memref<9x128x128xf32, #tpu.memory_space<vmem>>, vector<1x128x128xf32>
    %63 = vector.shape_cast %62 : vector<1x128x128xf32> to vector<128x128xf32>
    %cst_63 = arith.constant dense<0.000000e+00> : vector<256x128xf32>
    %64 = tpu.matmul %61, %63, %cst_63 {dimension_numbers = #tpu.dot_dimension_numbers<[1], [0], [0], [1], [0, 0, 1, 1], [], []>} : vector<256x128xf32>, vector<128x128xf32>, vector<256x128xf32> -> vector<256x128xf32>
    %65 = arith.addf %59, %64 : vector<256x128xf32>
    %c1_64 = arith.constant 1 : index
    %c0_65 = arith.constant 0 : index
    %c0_66 = arith.constant 0 : index
    %66 = vector.load %arg11[%c1_64, %c0_65, %c0_66] : memref<18x24x128xf32, #tpu.memory_space<vmem>>, vector<16x16x128xf32>
    %67 = vector.shape_cast %66 : vector<16x16x128xf32> to vector<256x128xf32>
    %c3 = arith.constant 3 : index
    %c0_67 = arith.constant 0 : index
    %c0_68 = arith.constant 0 : index
    %68 = vector.load %arg6[%c3, %c0_67, %c0_68] : memref<9x128x128xf32, #tpu.memory_space<vmem>>, vector<1x128x128xf32>
    %69 = vector.shape_cast %68 : vector<1x128x128xf32> to vector<128x128xf32>
    %cst_69 = arith.constant dense<0.000000e+00> : vector<256x128xf32>
    %70 = tpu.matmul %67, %69, %cst_69 {dimension_numbers = #tpu.dot_dimension_numbers<[1], [0], [0], [1], [0, 0, 1, 1], [], []>} : vector<256x128xf32>, vector<128x128xf32>, vector<256x128xf32> -> vector<256x128xf32>
    %71 = arith.addf %65, %70 : vector<256x128xf32>
    %c1_70 = arith.constant 1 : index
    %c1_71 = arith.constant 1 : index
    %c0_72 = arith.constant 0 : index
    %72 = vector.load %arg11[%c1_70, %c1_71, %c0_72] : memref<18x24x128xf32, #tpu.memory_space<vmem>>, vector<16x16x128xf32>
    %73 = vector.shape_cast %72 : vector<16x16x128xf32> to vector<256x128xf32>
    %c4 = arith.constant 4 : index
    %c0_73 = arith.constant 0 : index
    %c0_74 = arith.constant 0 : index
    %74 = vector.load %arg6[%c4, %c0_73, %c0_74] : memref<9x128x128xf32, #tpu.memory_space<vmem>>, vector<1x128x128xf32>
    %75 = vector.shape_cast %74 : vector<1x128x128xf32> to vector<128x128xf32>
    %cst_75 = arith.constant dense<0.000000e+00> : vector<256x128xf32>
    %76 = tpu.matmul %73, %75, %cst_75 {dimension_numbers = #tpu.dot_dimension_numbers<[1], [0], [0], [1], [0, 0, 1, 1], [], []>} : vector<256x128xf32>, vector<128x128xf32>, vector<256x128xf32> -> vector<256x128xf32>
    %77 = arith.addf %71, %76 : vector<256x128xf32>
    %c1_76 = arith.constant 1 : index
    %c2_77 = arith.constant 2 : index
    %c0_78 = arith.constant 0 : index
    %78 = vector.load %arg11[%c1_76, %c2_77, %c0_78] : memref<18x24x128xf32, #tpu.memory_space<vmem>>, vector<16x16x128xf32>
    %79 = vector.shape_cast %78 : vector<16x16x128xf32> to vector<256x128xf32>
    %c5 = arith.constant 5 : index
    %c0_79 = arith.constant 0 : index
    %c0_80 = arith.constant 0 : index
    %80 = vector.load %arg6[%c5, %c0_79, %c0_80] : memref<9x128x128xf32, #tpu.memory_space<vmem>>, vector<1x128x128xf32>
    %81 = vector.shape_cast %80 : vector<1x128x128xf32> to vector<128x128xf32>
    %cst_81 = arith.constant dense<0.000000e+00> : vector<256x128xf32>
    %82 = tpu.matmul %79, %81, %cst_81 {dimension_numbers = #tpu.dot_dimension_numbers<[1], [0], [0], [1], [0, 0, 1, 1], [], []>} : vector<256x128xf32>, vector<128x128xf32>, vector<256x128xf32> -> vector<256x128xf32>
    %83 = arith.addf %77, %82 : vector<256x128xf32>
    %c2_82 = arith.constant 2 : index
    %c0_83 = arith.constant 0 : index
    %c0_84 = arith.constant 0 : index
    %84 = vector.load %arg11[%c2_82, %c0_83, %c0_84] : memref<18x24x128xf32, #tpu.memory_space<vmem>>, vector<16x16x128xf32>
    %85 = vector.shape_cast %84 : vector<16x16x128xf32> to vector<256x128xf32>
    %c6 = arith.constant 6 : index
    %c0_85 = arith.constant 0 : index
    %c0_86 = arith.constant 0 : index
    %86 = vector.load %arg6[%c6, %c0_85, %c0_86] : memref<9x128x128xf32, #tpu.memory_space<vmem>>, vector<1x128x128xf32>
    %87 = vector.shape_cast %86 : vector<1x128x128xf32> to vector<128x128xf32>
    %cst_87 = arith.constant dense<0.000000e+00> : vector<256x128xf32>
    %88 = tpu.matmul %85, %87, %cst_87 {dimension_numbers = #tpu.dot_dimension_numbers<[1], [0], [0], [1], [0, 0, 1, 1], [], []>} : vector<256x128xf32>, vector<128x128xf32>, vector<256x128xf32> -> vector<256x128xf32>
    %89 = arith.addf %83, %88 : vector<256x128xf32>
    %c2_88 = arith.constant 2 : index
    %c1_89 = arith.constant 1 : index
    %c0_90 = arith.constant 0 : index
    %90 = vector.load %arg11[%c2_88, %c1_89, %c0_90] : memref<18x24x128xf32, #tpu.memory_space<vmem>>, vector<16x16x128xf32>
    %91 = vector.shape_cast %90 : vector<16x16x128xf32> to vector<256x128xf32>
    %c7 = arith.constant 7 : index
    %c0_91 = arith.constant 0 : index
    %c0_92 = arith.constant 0 : index
    %92 = vector.load %arg6[%c7, %c0_91, %c0_92] : memref<9x128x128xf32, #tpu.memory_space<vmem>>, vector<1x128x128xf32>
    %93 = vector.shape_cast %92 : vector<1x128x128xf32> to vector<128x128xf32>
    %cst_93 = arith.constant dense<0.000000e+00> : vector<256x128xf32>
    %94 = tpu.matmul %91, %93, %cst_93 {dimension_numbers = #tpu.dot_dimension_numbers<[1], [0], [0], [1], [0, 0, 1, 1], [], []>} : vector<256x128xf32>, vector<128x128xf32>, vector<256x128xf32> -> vector<256x128xf32>
    %95 = arith.addf %89, %94 : vector<256x128xf32>
    %c2_94 = arith.constant 2 : index
    %c2_95 = arith.constant 2 : index
    %c0_96 = arith.constant 0 : index
    %96 = vector.load %arg11[%c2_94, %c2_95, %c0_96] : memref<18x24x128xf32, #tpu.memory_space<vmem>>, vector<16x16x128xf32>
    %97 = vector.shape_cast %96 : vector<16x16x128xf32> to vector<256x128xf32>
    %c8 = arith.constant 8 : index
    %c0_97 = arith.constant 0 : index
    %c0_98 = arith.constant 0 : index
    %98 = vector.load %arg6[%c8, %c0_97, %c0_98] : memref<9x128x128xf32, #tpu.memory_space<vmem>>, vector<1x128x128xf32>
    %99 = vector.shape_cast %98 : vector<1x128x128xf32> to vector<128x128xf32>
    %cst_99 = arith.constant dense<0.000000e+00> : vector<256x128xf32>
    %100 = tpu.matmul %97, %99, %cst_99 {dimension_numbers = #tpu.dot_dimension_numbers<[1], [0], [0], [1], [0, 0, 1, 1], [], []>} : vector<256x128xf32>, vector<128x128xf32>, vector<256x128xf32> -> vector<256x128xf32>
    %101 = arith.addf %95, %100 : vector<256x128xf32>
    %c0_100 = arith.constant 0 : index
    %c0_101 = arith.constant 0 : index
    %102 = vector.load %arg7[%c0_100, %c0_101] : memref<1x128xf32, #tpu.memory_space<vmem>>, vector<1x128xf32>
    %103 = vector.broadcast %102 : vector<1x128xf32> to vector<256x128xf32>
    %104 = arith.addf %101, %103 : vector<256x128xf32>
    %cst_102 = arith.constant 0.000000e+00 : f32
    %105 = vector.broadcast %cst_102 : f32 to vector<256x128xf32>
    %106 = arith.maximumf %104, %105 : vector<256x128xf32>
    %c0_103 = arith.constant 0 : index
    %c0_104 = arith.constant 0 : index
    %107 = vector.load %arg8[%c0_103, %c0_104] : memref<128x128xf32, #tpu.memory_space<vmem>>, vector<128x128xf32>
    %cst_105 = arith.constant dense<0.000000e+00> : vector<256x128xf32>
    %108 = tpu.matmul %106, %107, %cst_105 {dimension_numbers = #tpu.dot_dimension_numbers<[1], [0], [0], [1], [0, 0, 1, 1], [], []>} : vector<256x128xf32>, vector<128x128xf32>, vector<256x128xf32> -> vector<256x128xf32>
    %c0_106 = arith.constant 0 : index
    %c0_107 = arith.constant 0 : index
    %109 = vector.load %arg9[%c0_106, %c0_107] : memref<1x128xf32, #tpu.memory_space<vmem>>, vector<1x128xf32>
    %110 = vector.broadcast %109 : vector<1x128xf32> to vector<256x128xf32>
    %111 = arith.addf %108, %110 : vector<256x128xf32>
    %c0_108 = arith.constant 0 : index
    %c0_109 = arith.constant 0 : index
    %c0_110 = arith.constant 0 : index
    %c0_111 = arith.constant 0 : index
    %112 = vector.load %arg2[%c0_108, %c0_109, %c0_110, %c0_111] : memref<1x16x16x128xf32, #tpu.memory_space<vmem>>, vector<1x16x16x128xf32>
    %113 = vector.shape_cast %112 : vector<1x16x16x128xf32> to vector<16x16x128xf32>
    %114 = vector.shape_cast %113 : vector<16x16x128xf32> to vector<256x128xf32>
    %115 = arith.addf %111, %114 : vector<256x128xf32>
    %cst_112 = arith.constant 0.000000e+00 : f32
    %116 = vector.broadcast %cst_112 : f32 to vector<256x128xf32>
    %117 = arith.maximumf %115, %116 : vector<256x128xf32>
    %118 = vector.shape_cast %117 : vector<256x128xf32> to vector<16x16x128xf32>
    %c0_113 = arith.constant 0 : index
    %c0_114 = arith.constant 0 : index
    %c0_115 = arith.constant 0 : index
    %c0_116 = arith.constant 0 : index
    %119 = vector.load %arg10[%c0_113, %c0_114, %c0_115, %c0_116] : memref<1x16x16x128xf32, #tpu.memory_space<vmem>>, vector<1x16x16x128xf32>
    %120 = vector.shape_cast %119 : vector<1x16x16x128xf32> to vector<16x16x128xf32>
    %121 = vector.shape_cast %118 : vector<16x16x128xf32> to vector<1x16x16x128xf32>
    tpu.vector_store %arg10[%c0_113, %c0_114, %c0_115, %c0_116], %121 {strides = array<i32>} : memref<1x16x16x128xf32, #tpu.memory_space<vmem>>, vector<1x16x16x128xf32>,
    return
  }
  func.func @transform_0(%arg0: i32, %arg1: i32) -> (i32, i32, i32, i32) {
    %c0_i32 = arith.constant 0 : i32
    %c0_i32_0 = arith.constant 0 : i32
    %c0_i32_1 = arith.constant 0 : i32
    return %arg0, %arg1, %c0_i32, %c0_i32_0 : i32, i32, i32, i32
  }
  func.func @transform_2(%arg0: i32, %arg1: i32) -> (i32, i32) {
    %c0_i32 = arith.constant 0 : i32
    %c0_i32_0 = arith.constant 0 : i32
    %c0_i32_1 = arith.constant 0 : i32
    return %c0_i32, %c0_i32_0 : i32, i32
  }
  func.func @transform_3(%arg0: i32, %arg1: i32) -> (i32, i32) {
    %c0_i32 = arith.constant 0 : i32
    %c0_i32_0 = arith.constant 0 : i32
    %c0_i32_1 = arith.constant 0 : i32
    return %c0_i32, %c0_i32_0 : i32, i32
  }
  func.func @transform_4(%arg0: i32, %arg1: i32) -> (i32, i32, i32) {
    %c0_i32 = arith.constant 0 : i32
    %c0_i32_0 = arith.constant 0 : i32
    %c0_i32_1 = arith.constant 0 : i32
    %c0_i32_2 = arith.constant 0 : i32
    return %c0_i32, %c0_i32_0, %c0_i32_1 : i32, i32, i32
  }
  func.func @transform_5(%arg0: i32, %arg1: i32) -> (i32, i32) {
    %c0_i32 = arith.constant 0 : i32
    %c0_i32_0 = arith.constant 0 : i32
    %c0_i32_1 = arith.constant 0 : i32
    return %c0_i32, %c0_i32_0 : i32, i32
  }
  func.func @transform_6(%arg0: i32, %arg1: i32) -> (i32, i32) {
    %c0_i32 = arith.constant 0 : i32
    %c0_i32_0 = arith.constant 0 : i32
    %c0_i32_1 = arith.constant 0 : i32
    return %c0_i32, %c0_i32_0 : i32, i32
  }
  func.func @transform_7(%arg0: i32, %arg1: i32) -> (i32, i32) {
    %c0_i32 = arith.constant 0 : i32
    %c0_i32_0 = arith.constant 0 : i32
    %c0_i32_1 = arith.constant 0 : i32
    return %c0_i32, %c0_i32_0 : i32, i32
  }
  func.func @transform_8(%arg0: i32, %arg1: i32) -> (i32, i32, i32, i32) {
    %c0_i32 = arith.constant 0 : i32
    %c0_i32_0 = arith.constant 0 : i32
    %c0_i32_1 = arith.constant 0 : i32
    return %arg0, %arg1, %c0_i32, %c0_i32_0 : i32, i32, i32, i32
  }
}

module attributes {stable_mosaic.version = 11 : i64} {
  func.func @bottleneck_kernel(%arg0: i32, %arg1: i32, %arg2: memref<1x16x16x128xf32, #tpu.memory_space<vmem>>, %arg3: memref<2x16x16x128xf32, #tpu.memory_space<any>>, %arg4: memref<128x128xf32, #tpu.memory_space<vmem>>, %arg5: memref<1x128xf32, #tpu.memory_space<vmem>>, %arg6: memref<9x128x128xf32, #tpu.memory_space<vmem>>, %arg7: memref<1x128xf32, #tpu.memory_space<vmem>>, %arg8: memref<128x128xf32, #tpu.memory_space<vmem>>, %arg9: memref<1x128xf32, #tpu.memory_space<vmem>>, %arg10: memref<1x16x16x128xf32, #tpu.memory_space<vmem>>, %arg11: memref<18x24x128xf32, #tpu.memory_space<vmem>>, %arg12: memref<2x1x16x128xf32, #tpu.memory_space<vmem>>, %arg13: memref<2x!tpu.dma_semaphore, #tpu.memory_space<semaphore_mem>>) attributes {dimension_semantics = [#tpu.dimension_semantics<parallel>, #tpu.dimension_semantics<parallel>], iteration_bounds = array<i64: 2, 1>, scalar_prefetch = 0 : i64, scratch_operands = 3 : i64, tpu.core_type = #tpu.core_type<tc>, window_params = [{transform_indices = @transform_0, window_bounds = array<i64: 1, 16, 16, 128>}, {}, {pipeline_mode = #tpu.pipeline_mode<synchronous>, transform_indices = @transform_2, window_bounds = array<i64: 128, 128>}, {pipeline_mode = #tpu.pipeline_mode<synchronous>, transform_indices = @transform_3, window_bounds = array<i64: 1, 128>}, {pipeline_mode = #tpu.pipeline_mode<synchronous>, transform_indices = @transform_4, window_bounds = array<i64: 9, 128, 128>}, {pipeline_mode = #tpu.pipeline_mode<synchronous>, transform_indices = @transform_5, window_bounds = array<i64: 1, 128>}, {pipeline_mode = #tpu.pipeline_mode<synchronous>, transform_indices = @transform_6, window_bounds = array<i64: 128, 128>}, {pipeline_mode = #tpu.pipeline_mode<synchronous>, transform_indices = @transform_7, window_bounds = array<i64: 1, 128>}, {transform_indices = @transform_8, window_bounds = array<i64: 1, 16, 16, 128>}]} {
    %c16_i32 = arith.constant 16 : i32
    %0 = arith.muli %arg1, %c16_i32 : i32
    %c0_i32 = arith.constant 0 : i32
    %1 = arith.cmpi sgt, %arg1, %c0_i32 : i32
    %2 = arith.extui %1 : i1 to i32
    %c0_i32_0 = arith.constant 0 : i32
    %3 = arith.cmpi ne, %2, %c0_i32_0 : i32
    scf.if %3 {
      %c1_i32 = arith.constant 1 : i32
      %122 = arith.subi %0, %c1_i32 : i32
      %c0_i32_117 = arith.constant 0 : i32
      %c0_i32_118 = arith.constant 0 : i32
      %c0_i32_119 = arith.constant 0 : i32
      %123 = tpu.memref_slice %arg3[%arg0, %122, %c0_i32_118, %c0_i32_119] : memref<2x16x16x128xf32, #tpu.memory_space<any>> -> memref<1x1x16x128xf32, #tpu.memory_space<any>>
      %c0_i32_120 = arith.constant 0 : i32
      %c0_i32_121 = arith.constant 0 : i32
      %c0_i32_122 = arith.constant 0 : i32
      %c0_i32_123 = arith.constant 0 : i32
      %124 = tpu.memref_slice %arg12[%c0_i32_120, %c0_i32_121, %c0_i32_122, %c0_i32_123] : memref<2x1x16x128xf32, #tpu.memory_space<vmem>> -> memref<1x1x16x128xf32, #tpu.memory_space<vmem>>
      %125 = tpu.memref_slice %arg13[%c0_i32_117] : memref<2x!tpu.dma_semaphore, #tpu.memory_space<semaphore_mem>> -> memref<1x!tpu.dma_semaphore, #tpu.memory_space<semaphore_mem>>
      %126 = tpu.memref_squeeze %125 : memref<1x!tpu.dma_semaphore, #tpu.memory_space<semaphore_mem>> -> memref<!tpu.dma_semaphore, #tpu.memory_space<semaphore_mem>>
      tpu.enqueue_dma source(%123 : memref<1x1x16x128xf32, #tpu.memory_space<any>>) target(%124 : memref<1x1x16x128xf32, #tpu.memory_space<vmem>>) target_semaphore(%126 : memref<!tpu.dma_semaphore, #tpu.memory_space<semaphore_mem>>)
    } else {
    }
    %c0_i32_1 = arith.constant 0 : i32
    %4 = arith.cmpi slt, %arg1, %c0_i32_1 : i32
    %5 = arith.extui %4 : i1 to i32
    %c0_i32_2 = arith.constant 0 : i32
    %6 = arith.cmpi ne, %5, %c0_i32_2 : i32
    scf.if %6 {
      %c16_i32_117 = arith.constant 16 : i32
      %122 = arith.addi %0, %c16_i32_117 : i32
      %c1_i32 = arith.constant 1 : i32
      %c0_i32_118 = arith.constant 0 : i32
      %c0_i32_119 = arith.constant 0 : i32
      %123 = tpu.memref_slice %arg3[%arg0, %122, %c0_i32_118, %c0_i32_119] : memref<2x16x16x128xf32, #tpu.memory_space<any>> -> memref<1x1x16x128xf32, #tpu.memory_space<any>>
      %c1_i32_120 = arith.constant 1 : i32
      %c0_i32_121 = arith.constant 0 : i32
      %c0_i32_122 = arith.constant 0 : i32
      %c0_i32_123 = arith.constant 0 : i32
      %124 = tpu.memref_slice %arg12[%c1_i32_120, %c0_i32_121, %c0_i32_122, %c0_i32_123] : memref<2x1x16x128xf32, #tpu.memory_space<vmem>> -> memref<1x1x16x128xf32, #tpu.memory_space<vmem>>
      %125 = tpu.memref_slice %arg13[%c1_i32] : memref<2x!tpu.dma_semaphore, #tpu.memory_space<semaphore_mem>> -> memref<1x!tpu.dma_semaphore, #tpu.memory_space<semaphore_mem>>
      %126 = tpu.memref_squeeze %125 : memref<1x!tpu.dma_semaphore, #tpu.memory_space<semaphore_mem>> -> memref<!tpu.dma_semaphore, #tpu.memory_space<semaphore_mem>>
      tpu.enqueue_dma source(%123 : memref<1x1x16x128xf32, #tpu.memory_space<any>>) target(%124 : memref<1x1x16x128xf32, #tpu.memory_space<vmem>>) target_semaphore(%126 : memref<!tpu.dma_semaphore, #tpu.memory_space<semaphore_mem>>)
    } else {
    }
    %c0 = arith.constant 0 : index
    %c0_3 = arith.constant 0 : index
    %c0_4 = arith.constant 0 : index
    %c0_5 = arith.constant 0 : index
    %7 = vector.load %arg2[%c0, %c0_3, %c0_4, %c0_5] : memref<1x16x16x128xf32, #tpu.memory_space<vmem>>, vector<1x16x16x128xf32>
    %8 = vector.shape_cast %7 : vector<1x16x16x128xf32> to vector<16x16x128xf32>
    %9 = vector.shape_cast %8 : vector<16x16x128xf32> to vector<256x128xf32>
    %c0_6 = arith.constant 0 : index
    %c0_7 = arith.constant 0 : index
    %10 = vector.load %arg4[%c0_6, %c0_7] : memref<128x128xf32, #tpu.memory_space<vmem>>, vector<128x128xf32>
    %cst = arith.constant dense<0.000000e+00> : vector<256x128xf32>
    %11 = tpu.matmul %9, %10, %cst {dimension_numbers = #tpu.dot_dimension_numbers<[1], [0], [0], [1], [0, 0, 1, 1], [], []>} : vector<256x128xf32>, vector<128x128xf32>, vector<256x128xf32> -> vector<256x128xf32>
    %c0_8 = arith.constant 0 : index
    %c0_9 = arith.constant 0 : index
    %12 = vector.load %arg5[%c0_8, %c0_9] : memref<1x128xf32, #tpu.memory_space<vmem>>, vector<1x128xf32>
    %13 = vector.broadcast %12 : vector<1x128xf32> to vector<256x128xf32>
    %14 = arith.addf %11, %13 : vector<256x128xf32>
    %cst_10 = arith.constant 0.000000e+00 : f32
    %15 = vector.broadcast %cst_10 : f32 to vector<256x128xf32>
    %16 = arith.maximumf %14, %15 : vector<256x128xf32>
    %17 = vector.shape_cast %16 : vector<256x128xf32> to vector<16x16x128xf32>
    %c1 = arith.constant 1 : index
    %c1_11 = arith.constant 1 : index
    %c0_12 = arith.constant 0 : index
    %18 = vector.load %arg11[%c1, %c1_11, %c0_12] : memref<18x24x128xf32, #tpu.memory_space<vmem>>, vector<16x16x128xf32>
    tpu.vector_store %arg11[%c1, %c1_11, %c0_12], %17 {strides = array<i32>} : memref<18x24x128xf32, #tpu.memory_space<vmem>>, vector<16x16x128xf32>,
    %cst_13 = arith.constant 0.000000e+00 : f32
    %19 = vector.broadcast %cst_13 : f32 to vector<18x1x128xf32>
    %c0_14 = arith.constant 0 : index
    %c0_15 = arith.constant 0 : index
    %c0_16 = arith.constant 0 : index
    %20 = vector.load %arg11[%c0_14, %c0_15, %c0_16] : memref<18x24x128xf32, #tpu.memory_space<vmem>>, vector<18x1x128xf32>
    tpu.vector_store %arg11[%c0_14, %c0_15, %c0_16], %19 {strides = array<i32>} : memref<18x24x128xf32, #tpu.memory_space<vmem>>, vector<18x1x128xf32>,
    %c0_17 = arith.constant 0 : index
    %c17 = arith.constant 17 : index
    %c0_18 = arith.constant 0 : index
    %21 = vector.load %arg11[%c0_17, %c17, %c0_18] : memref<18x24x128xf32, #tpu.memory_space<vmem>>, vector<18x1x128xf32>
    tpu.vector_store %arg11[%c0_17, %c17, %c0_18], %19 {strides = array<i32>} : memref<18x24x128xf32, #tpu.memory_space<vmem>>, vector<18x1x128xf32>,
    %c0_i32_19 = arith.constant 0 : i32
    %22 = arith.cmpi sgt, %arg1, %c0_i32_19 : i32
    %23 = arith.extui %22 : i1 to i32
    %c0_i32_20 = arith.constant 0 : i32
    %24 = arith.cmpi ne, %23, %c0_i32_20 : i32
    scf.if %24 {
      %c1_i32 = arith.constant 1 : i32
      %122 = arith.subi %0, %c1_i32 : i32
      %c0_i32_117 = arith.constant 0 : i32
      %c0_i32_118 = arith.constant 0 : i32
      %c0_i32_119 = arith.constant 0 : i32
      %123 = tpu.memref_slice %arg3[%arg0, %122, %c0_i32_118, %c0_i32_119] : memref<2x16x16x128xf32, #tpu.memory_space<any>> -> memref<1x1x16x128xf32, #tpu.memory_space<any>>
      %c0_i32_120 = arith.constant 0 : i32
      %c0_i32_121 = arith.constant 0 : i32
      %c0_i32_122 = arith.constant 0 : i32
      %c0_i32_123 = arith.constant 0 : i32
      %124 = tpu.memref_slice %arg12[%c0_i32_120, %c0_i32_121, %c0_i32_122, %c0_i32_123] : memref<2x1x16x128xf32, #tpu.memory_space<vmem>> -> memref<1x1x16x128xf32, #tpu.memory_space<vmem>>
      %125 = tpu.memref_slice %arg13[%c0_i32_117] : memref<2x!tpu.dma_semaphore, #tpu.memory_space<semaphore_mem>> -> memref<1x!tpu.dma_semaphore, #tpu.memory_space<semaphore_mem>>
      %126 = tpu.memref_squeeze %125 : memref<1x!tpu.dma_semaphore, #tpu.memory_space<semaphore_mem>> -> memref<!tpu.dma_semaphore, #tpu.memory_space<semaphore_mem>>
      tpu.wait_dma2 semaphore(%126 : memref<!tpu.dma_semaphore, #tpu.memory_space<semaphore_mem>>) src(%123 : memref<1x1x16x128xf32, #tpu.memory_space<any>>) dst(%124 : memref<1x1x16x128xf32, #tpu.memory_space<vmem>>)
    } else {
    }
    %c0_i32_21 = arith.constant 0 : i32
    %25 = arith.cmpi slt, %arg1, %c0_i32_21 : i32
    %26 = arith.extui %25 : i1 to i32
    %c0_i32_22 = arith.constant 0 : i32
    %27 = arith.cmpi ne, %26, %c0_i32_22 : i32
    scf.if %27 {
      %c16_i32_117 = arith.constant 16 : i32
      %122 = arith.addi %0, %c16_i32_117 : i32
      %c1_i32 = arith.constant 1 : i32
      %c0_i32_118 = arith.constant 0 : i32
      %c0_i32_119 = arith.constant 0 : i32
      %123 = tpu.memref_slice %arg3[%arg0, %122, %c0_i32_118, %c0_i32_119] : memref<2x16x16x128xf32, #tpu.memory_space<any>> -> memref<1x1x16x128xf32, #tpu.memory_space<any>>
      %c1_i32_120 = arith.constant 1 : i32
      %c0_i32_121 = arith.constant 0 : i32
      %c0_i32_122 = arith.constant 0 : i32
      %c0_i32_123 = arith.constant 0 : i32
      %124 = tpu.memref_slice %arg12[%c1_i32_120, %c0_i32_121, %c0_i32_122, %c0_i32_123] : memref<2x1x16x128xf32, #tpu.memory_space<vmem>> -> memref<1x1x16x128xf32, #tpu.memory_space<vmem>>
      %125 = tpu.memref_slice %arg13[%c1_i32] : memref<2x!tpu.dma_semaphore, #tpu.memory_space<semaphore_mem>> -> memref<1x!tpu.dma_semaphore, #tpu.memory_space<semaphore_mem>>
      %126 = tpu.memref_squeeze %125 : memref<1x!tpu.dma_semaphore, #tpu.memory_space<semaphore_mem>> -> memref<!tpu.dma_semaphore, #tpu.memory_space<semaphore_mem>>
      tpu.wait_dma2 semaphore(%126 : memref<!tpu.dma_semaphore, #tpu.memory_space<semaphore_mem>>) src(%123 : memref<1x1x16x128xf32, #tpu.memory_space<any>>) dst(%124 : memref<1x1x16x128xf32, #tpu.memory_space<vmem>>)
    } else {
    }
    %c0_23 = arith.constant 0 : index
    %c0_24 = arith.constant 0 : index
    %c0_25 = arith.constant 0 : index
    %c0_26 = arith.constant 0 : index
    %28 = vector.load %arg12[%c0_23, %c0_24, %c0_25, %c0_26] : memref<2x1x16x128xf32, #tpu.memory_space<vmem>>, vector<2x1x16x128xf32>
    %29 = vector.shape_cast %28 : vector<2x1x16x128xf32> to vector<32x128xf32>
    %c0_27 = arith.constant 0 : index
    %c0_28 = arith.constant 0 : index
    %30 = vector.load %arg4[%c0_27, %c0_28] : memref<128x128xf32, #tpu.memory_space<vmem>>, vector<128x128xf32>
    %cst_29 = arith.constant dense<0.000000e+00> : vector<32x128xf32>
    %31 = tpu.matmul %29, %30, %cst_29 {dimension_numbers = #tpu.dot_dimension_numbers<[1], [0], [0], [1], [0, 0, 1, 1], [], []>} : vector<32x128xf32>, vector<128x128xf32>, vector<32x128xf32> -> vector<32x128xf32>
    %c0_30 = arith.constant 0 : index
    %c0_31 = arith.constant 0 : index
    %32 = vector.load %arg5[%c0_30, %c0_31] : memref<1x128xf32, #tpu.memory_space<vmem>>, vector<1x128xf32>
    %33 = vector.broadcast %32 : vector<1x128xf32> to vector<32x128xf32>
    %34 = arith.addf %31, %33 : vector<32x128xf32>
    %cst_32 = arith.constant 0.000000e+00 : f32
    %35 = vector.broadcast %cst_32 : f32 to vector<32x128xf32>
    %36 = arith.maximumf %34, %35 : vector<32x128xf32>
    %37 = vector.shape_cast %36 : vector<32x128xf32> to vector<2x16x128xf32>
    %38 = vector.extract_strided_slice %37 {offsets = [0, 0, 0], sizes = [1, 16, 128], strides = [1, 1, 1]} : vector<2x16x128xf32> to vector<1x16x128xf32>
    %c0_33 = arith.constant 0 : index
    %c1_34 = arith.constant 1 : index
    %c0_35 = arith.constant 0 : index
    %39 = vector.load %arg11[%c0_33, %c1_34, %c0_35] : memref<18x24x128xf32, #tpu.memory_space<vmem>>, vector<1x16x128xf32>
    tpu.vector_store %arg11[%c0_33, %c1_34, %c0_35], %38 {strides = array<i32>} : memref<18x24x128xf32, #tpu.memory_space<vmem>>, vector<1x16x128xf32>,
    %40 = vector.extract_strided_slice %37 {offsets = [1, 0, 0], sizes = [1, 16, 128], strides = [1, 1, 1]} : vector<2x16x128xf32> to vector<1x16x128xf32>
    %c17_36 = arith.constant 17 : index
    %c1_37 = arith.constant 1 : index
    %c0_38 = arith.constant 0 : index
    %41 = vector.load %arg11[%c17_36, %c1_37, %c0_38] : memref<18x24x128xf32, #tpu.memory_space<vmem>>, vector<1x16x128xf32>
    tpu.vector_store %arg11[%c17_36, %c1_37, %c0_38], %40 {strides = array<i32>} : memref<18x24x128xf32, #tpu.memory_space<vmem>>, vector<1x16x128xf32>,
    %cst_39 = arith.constant 0.000000e+00 : f32
    %42 = vector.broadcast %cst_39 : f32 to vector<1x16x128xf32>
    %c0_i32_40 = arith.constant 0 : i32
    %43 = arith.cmpi eq, %arg1, %c0_i32_40 : i32
    %44 = arith.extui %43 : i1 to i32
    %c0_i32_41 = arith.constant 0 : i32
    %45 = arith.cmpi ne, %44, %c0_i32_41 : i32
    scf.if %45 {
      %c0_117 = arith.constant 0 : index
      %c1_118 = arith.constant 1 : index
      %c0_119 = arith.constant 0 : index
      %122 = vector.load %arg11[%c0_117, %c1_118, %c0_119] : memref<18x24x128xf32, #tpu.memory_space<vmem>>, vector<1x16x128xf32>
      tpu.vector_store %arg11[%c0_117, %c1_118, %c0_119], %42 {strides = array<i32>} : memref<18x24x128xf32, #tpu.memory_space<vmem>>, vector<1x16x128xf32>,
    } else {
    }
    %c0_i32_42 = arith.constant 0 : i32
    %46 = arith.cmpi eq, %arg1, %c0_i32_42 : i32
    %47 = arith.extui %46 : i1 to i32
    %c0_i32_43 = arith.constant 0 : i32
    %48 = arith.cmpi ne, %47, %c0_i32_43 : i32
    scf.if %48 {
      %c17_117 = arith.constant 17 : index
      %c1_118 = arith.constant 1 : index
      %c0_119 = arith.constant 0 : index
      %122 = vector.load %arg11[%c17_117, %c1_118, %c0_119] : memref<18x24x128xf32, #tpu.memory_space<vmem>>, vector<1x16x128xf32>
      tpu.vector_store %arg11[%c17_117, %c1_118, %c0_119], %42 {strides = array<i32>} : memref<18x24x128xf32, #tpu.memory_space<vmem>>, vector<1x16x128xf32>,
    } else {
    }
    %c0_44 = arith.constant 0 : index
    %c0_45 = arith.constant 0 : index
    %c0_46 = arith.constant 0 : index
    %49 = vector.load %arg11[%c0_44, %c0_45, %c0_46] : memref<18x24x128xf32, #tpu.memory_space<vmem>>, vector<16x16x128xf32>
    %50 = vector.shape_cast %49 : vector<16x16x128xf32> to vector<256x128xf32>
    %c0_47 = arith.constant 0 : index
    %c0_48 = arith.constant 0 : index
    %c0_49 = arith.constant 0 : index
    %51 = vector.load %arg6[%c0_47, %c0_48, %c0_49] : memref<9x128x128xf32, #tpu.memory_space<vmem>>, vector<1x128x128xf32>
    %52 = vector.shape_cast %51 : vector<1x128x128xf32> to vector<128x128xf32>
    %cst_50 = arith.constant dense<0.000000e+00> : vector<256x128xf32>
    %53 = tpu.matmul %50, %52, %cst_50 {dimension_numbers = #tpu.dot_dimension_numbers<[1], [0], [0], [1], [0, 0, 1, 1], [], []>} : vector<256x128xf32>, vector<128x128xf32>, vector<256x128xf32> -> vector<256x128xf32>
    %c0_51 = arith.constant 0 : index
    %c1_52 = arith.constant 1 : index
    %c0_53 = arith.constant 0 : index
    %54 = vector.load %arg11[%c0_51, %c1_52, %c0_53] : memref<18x24x128xf32, #tpu.memory_space<vmem>>, vector<16x16x128xf32>
    %55 = vector.shape_cast %54 : vector<16x16x128xf32> to vector<256x128xf32>
    %c1_54 = arith.constant 1 : index
    %c0_55 = arith.constant 0 : index
    %c0_56 = arith.constant 0 : index
    %56 = vector.load %arg6[%c1_54, %c0_55, %c0_56] : memref<9x128x128xf32, #tpu.memory_space<vmem>>, vector<1x128x128xf32>
    %57 = vector.shape_cast %56 : vector<1x128x128xf32> to vector<128x128xf32>
    %cst_57 = arith.constant dense<0.000000e+00> : vector<256x128xf32>
    %58 = tpu.matmul %55, %57, %cst_57 {dimension_numbers = #tpu.dot_dimension_numbers<[1], [0], [0], [1], [0, 0, 1, 1], [], []>} : vector<256x128xf32>, vector<128x128xf32>, vector<256x128xf32> -> vector<256x128xf32>
    %59 = arith.addf %53, %58 : vector<256x128xf32>
    %c0_58 = arith.constant 0 : index
    %c2 = arith.constant 2 : index
    %c0_59 = arith.constant 0 : index
    %60 = vector.load %arg11[%c0_58, %c2, %c0_59] : memref<18x24x128xf32, #tpu.memory_space<vmem>>, vector<16x16x128xf32>
    %61 = vector.shape_cast %60 : vector<16x16x128xf32> to vector<256x128xf32>
    %c2_60 = arith.constant 2 : index
    %c0_61 = arith.constant 0 : index
    %c0_62 = arith.constant 0 : index
    %62 = vector.load %arg6[%c2_60, %c0_61, %c0_62] : memref<9x128x128xf32, #tpu.memory_space<vmem>>, vector<1x128x128xf32>
    %63 = vector.shape_cast %62 : vector<1x128x128xf32> to vector<128x128xf32>
    %cst_63 = arith.constant dense<0.000000e+00> : vector<256x128xf32>
    %64 = tpu.matmul %61, %63, %cst_63 {dimension_numbers = #tpu.dot_dimension_numbers<[1], [0], [0], [1], [0, 0, 1, 1], [], []>} : vector<256x128xf32>, vector<128x128xf32>, vector<256x128xf32> -> vector<256x128xf32>
    %65 = arith.addf %59, %64 : vector<256x128xf32>
    %c1_64 = arith.constant 1 : index
    %c0_65 = arith.constant 0 : index
    %c0_66 = arith.constant 0 : index
    %66 = vector.load %arg11[%c1_64, %c0_65, %c0_66] : memref<18x24x128xf32, #tpu.memory_space<vmem>>, vector<16x16x128xf32>
    %67 = vector.shape_cast %66 : vector<16x16x128xf32> to vector<256x128xf32>
    %c3 = arith.constant 3 : index
    %c0_67 = arith.constant 0 : index
    %c0_68 = arith.constant 0 : index
    %68 = vector.load %arg6[%c3, %c0_67, %c0_68] : memref<9x128x128xf32, #tpu.memory_space<vmem>>, vector<1x128x128xf32>
    %69 = vector.shape_cast %68 : vector<1x128x128xf32> to vector<128x128xf32>
    %cst_69 = arith.constant dense<0.000000e+00> : vector<256x128xf32>
    %70 = tpu.matmul %67, %69, %cst_69 {dimension_numbers = #tpu.dot_dimension_numbers<[1], [0], [0], [1], [0, 0, 1, 1], [], []>} : vector<256x128xf32>, vector<128x128xf32>, vector<256x128xf32> -> vector<256x128xf32>
    %71 = arith.addf %65, %70 : vector<256x128xf32>
    %c1_70 = arith.constant 1 : index
    %c1_71 = arith.constant 1 : index
    %c0_72 = arith.constant 0 : index
    %72 = vector.load %arg11[%c1_70, %c1_71, %c0_72] : memref<18x24x128xf32, #tpu.memory_space<vmem>>, vector<16x16x128xf32>
    %73 = vector.shape_cast %72 : vector<16x16x128xf32> to vector<256x128xf32>
    %c4 = arith.constant 4 : index
    %c0_73 = arith.constant 0 : index
    %c0_74 = arith.constant 0 : index
    %74 = vector.load %arg6[%c4, %c0_73, %c0_74] : memref<9x128x128xf32, #tpu.memory_space<vmem>>, vector<1x128x128xf32>
    %75 = vector.shape_cast %74 : vector<1x128x128xf32> to vector<128x128xf32>
    %cst_75 = arith.constant dense<0.000000e+00> : vector<256x128xf32>
    %76 = tpu.matmul %73, %75, %cst_75 {dimension_numbers = #tpu.dot_dimension_numbers<[1], [0], [0], [1], [0, 0, 1, 1], [], []>} : vector<256x128xf32>, vector<128x128xf32>, vector<256x128xf32> -> vector<256x128xf32>
    %77 = arith.addf %71, %76 : vector<256x128xf32>
    %c1_76 = arith.constant 1 : index
    %c2_77 = arith.constant 2 : index
    %c0_78 = arith.constant 0 : index
    %78 = vector.load %arg11[%c1_76, %c2_77, %c0_78] : memref<18x24x128xf32, #tpu.memory_space<vmem>>, vector<16x16x128xf32>
    %79 = vector.shape_cast %78 : vector<16x16x128xf32> to vector<256x128xf32>
    %c5 = arith.constant 5 : index
    %c0_79 = arith.constant 0 : index
    %c0_80 = arith.constant 0 : index
    %80 = vector.load %arg6[%c5, %c0_79, %c0_80] : memref<9x128x128xf32, #tpu.memory_space<vmem>>, vector<1x128x128xf32>
    %81 = vector.shape_cast %80 : vector<1x128x128xf32> to vector<128x128xf32>
    %cst_81 = arith.constant dense<0.000000e+00> : vector<256x128xf32>
    %82 = tpu.matmul %79, %81, %cst_81 {dimension_numbers = #tpu.dot_dimension_numbers<[1], [0], [0], [1], [0, 0, 1, 1], [], []>} : vector<256x128xf32>, vector<128x128xf32>, vector<256x128xf32> -> vector<256x128xf32>
    %83 = arith.addf %77, %82 : vector<256x128xf32>
    %c2_82 = arith.constant 2 : index
    %c0_83 = arith.constant 0 : index
    %c0_84 = arith.constant 0 : index
    %84 = vector.load %arg11[%c2_82, %c0_83, %c0_84] : memref<18x24x128xf32, #tpu.memory_space<vmem>>, vector<16x16x128xf32>
    %85 = vector.shape_cast %84 : vector<16x16x128xf32> to vector<256x128xf32>
    %c6 = arith.constant 6 : index
    %c0_85 = arith.constant 0 : index
    %c0_86 = arith.constant 0 : index
    %86 = vector.load %arg6[%c6, %c0_85, %c0_86] : memref<9x128x128xf32, #tpu.memory_space<vmem>>, vector<1x128x128xf32>
    %87 = vector.shape_cast %86 : vector<1x128x128xf32> to vector<128x128xf32>
    %cst_87 = arith.constant dense<0.000000e+00> : vector<256x128xf32>
    %88 = tpu.matmul %85, %87, %cst_87 {dimension_numbers = #tpu.dot_dimension_numbers<[1], [0], [0], [1], [0, 0, 1, 1], [], []>} : vector<256x128xf32>, vector<128x128xf32>, vector<256x128xf32> -> vector<256x128xf32>
    %89 = arith.addf %83, %88 : vector<256x128xf32>
    %c2_88 = arith.constant 2 : index
    %c1_89 = arith.constant 1 : index
    %c0_90 = arith.constant 0 : index
    %90 = vector.load %arg11[%c2_88, %c1_89, %c0_90] : memref<18x24x128xf32, #tpu.memory_space<vmem>>, vector<16x16x128xf32>
    %91 = vector.shape_cast %90 : vector<16x16x128xf32> to vector<256x128xf32>
    %c7 = arith.constant 7 : index
    %c0_91 = arith.constant 0 : index
    %c0_92 = arith.constant 0 : index
    %92 = vector.load %arg6[%c7, %c0_91, %c0_92] : memref<9x128x128xf32, #tpu.memory_space<vmem>>, vector<1x128x128xf32>
    %93 = vector.shape_cast %92 : vector<1x128x128xf32> to vector<128x128xf32>
    %cst_93 = arith.constant dense<0.000000e+00> : vector<256x128xf32>
    %94 = tpu.matmul %91, %93, %cst_93 {dimension_numbers = #tpu.dot_dimension_numbers<[1], [0], [0], [1], [0, 0, 1, 1], [], []>} : vector<256x128xf32>, vector<128x128xf32>, vector<256x128xf32> -> vector<256x128xf32>
    %95 = arith.addf %89, %94 : vector<256x128xf32>
    %c2_94 = arith.constant 2 : index
    %c2_95 = arith.constant 2 : index
    %c0_96 = arith.constant 0 : index
    %96 = vector.load %arg11[%c2_94, %c2_95, %c0_96] : memref<18x24x128xf32, #tpu.memory_space<vmem>>, vector<16x16x128xf32>
    %97 = vector.shape_cast %96 : vector<16x16x128xf32> to vector<256x128xf32>
    %c8 = arith.constant 8 : index
    %c0_97 = arith.constant 0 : index
    %c0_98 = arith.constant 0 : index
    %98 = vector.load %arg6[%c8, %c0_97, %c0_98] : memref<9x128x128xf32, #tpu.memory_space<vmem>>, vector<1x128x128xf32>
    %99 = vector.shape_cast %98 : vector<1x128x128xf32> to vector<128x128xf32>
    %cst_99 = arith.constant dense<0.000000e+00> : vector<256x128xf32>
    %100 = tpu.matmul %97, %99, %cst_99 {dimension_numbers = #tpu.dot_dimension_numbers<[1], [0], [0], [1], [0, 0, 1, 1], [], []>} : vector<256x128xf32>, vector<128x128xf32>, vector<256x128xf32> -> vector<256x128xf32>
    %101 = arith.addf %95, %100 : vector<256x128xf32>
    %c0_100 = arith.constant 0 : index
    %c0_101 = arith.constant 0 : index
    %102 = vector.load %arg7[%c0_100, %c0_101] : memref<1x128xf32, #tpu.memory_space<vmem>>, vector<1x128xf32>
    %103 = vector.broadcast %102 : vector<1x128xf32> to vector<256x128xf32>
    %104 = arith.addf %101, %103 : vector<256x128xf32>
    %cst_102 = arith.constant 0.000000e+00 : f32
    %105 = vector.broadcast %cst_102 : f32 to vector<256x128xf32>
    %106 = arith.maximumf %104, %105 : vector<256x128xf32>
    %c0_103 = arith.constant 0 : index
    %c0_104 = arith.constant 0 : index
    %107 = vector.load %arg8[%c0_103, %c0_104] : memref<128x128xf32, #tpu.memory_space<vmem>>, vector<128x128xf32>
    %cst_105 = arith.constant dense<0.000000e+00> : vector<256x128xf32>
    %108 = tpu.matmul %106, %107, %cst_105 {dimension_numbers = #tpu.dot_dimension_numbers<[1], [0], [0], [1], [0, 0, 1, 1], [], []>} : vector<256x128xf32>, vector<128x128xf32>, vector<256x128xf32> -> vector<256x128xf32>
    %c0_106 = arith.constant 0 : index
    %c0_107 = arith.constant 0 : index
    %109 = vector.load %arg9[%c0_106, %c0_107] : memref<1x128xf32, #tpu.memory_space<vmem>>, vector<1x128xf32>
    %110 = vector.broadcast %109 : vector<1x128xf32> to vector<256x128xf32>
    %111 = arith.addf %108, %110 : vector<256x128xf32>
    %c0_108 = arith.constant 0 : index
    %c0_109 = arith.constant 0 : index
    %c0_110 = arith.constant 0 : index
    %c0_111 = arith.constant 0 : index
    %112 = vector.load %arg2[%c0_108, %c0_109, %c0_110, %c0_111] : memref<1x16x16x128xf32, #tpu.memory_space<vmem>>, vector<1x16x16x128xf32>
    %113 = vector.shape_cast %112 : vector<1x16x16x128xf32> to vector<16x16x128xf32>
    %114 = vector.shape_cast %113 : vector<16x16x128xf32> to vector<256x128xf32>
    %115 = arith.addf %111, %114 : vector<256x128xf32>
    %cst_112 = arith.constant 0.000000e+00 : f32
    %116 = vector.broadcast %cst_112 : f32 to vector<256x128xf32>
    %117 = arith.maximumf %115, %116 : vector<256x128xf32>
    %118 = vector.shape_cast %117 : vector<256x128xf32> to vector<16x16x128xf32>
    %c0_113 = arith.constant 0 : index
    %c0_114 = arith.constant 0 : index
    %c0_115 = arith.constant 0 : index
    %c0_116 = arith.constant 0 : index
    %119 = vector.load %arg10[%c0_113, %c0_114, %c0_115, %c0_116] : memref<1x16x16x128xf32, #tpu.memory_space<vmem>>, vector<1x16x16x128xf32>
    %120 = vector.shape_cast %119 : vector<1x16x16x128xf32> to vector<16x16x128xf32>
    %121 = vector.shape_cast %118 : vector<16x16x128xf32> to vector<1x16x16x128xf32>
    tpu.vector_store %arg10[%c0_113, %c0_114, %c0_115, %c0_116], %121 {strides = array<i32>} : memref<1x16x16x128xf32, #tpu.memory_space<vmem>>, vector<1x16x16x128xf32>,
    return
  }
  func.func @transform_0(%arg0: i32, %arg1: i32) -> (i32, i32, i32, i32) {
    %c0_i32 = arith.constant 0 : i32
    %c0_i32_0 = arith.constant 0 : i32
    %c0_i32_1 = arith.constant 0 : i32
    return %arg0, %arg1, %c0_i32, %c0_i32_0 : i32, i32, i32, i32
  }
  func.func @transform_2(%arg0: i32, %arg1: i32) -> (i32, i32) {
    %c0_i32 = arith.constant 0 : i32
    %c0_i32_0 = arith.constant 0 : i32
    %c0_i32_1 = arith.constant 0 : i32
    return %c0_i32, %c0_i32_0 : i32, i32
  }
  func.func @transform_3(%arg0: i32, %arg1: i32) -> (i32, i32) {
    %c0_i32 = arith.constant 0 : i32
    %c0_i32_0 = arith.constant 0 : i32
    %c0_i32_1 = arith.constant 0 : i32
    return %c0_i32, %c0_i32_0 : i32, i32
  }
  func.func @transform_4(%arg0: i32, %arg1: i32) -> (i32, i32, i32) {
    %c0_i32 = arith.constant 0 : i32
    %c0_i32_0 = arith.constant 0 : i32
    %c0_i32_1 = arith.constant 0 : i32
    %c0_i32_2 = arith.constant 0 : i32
    return %c0_i32, %c0_i32_0, %c0_i32_1 : i32, i32, i32
  }
  func.func @transform_5(%arg0: i32, %arg1: i32) -> (i32, i32) {
    %c0_i32 = arith.constant 0 : i32
    %c0_i32_0 = arith.constant 0 : i32
    %c0_i32_1 = arith.constant 0 : i32
    return %c0_i32, %c0_i32_0 : i32, i32
  }
  func.func @transform_6(%arg0: i32, %arg1: i32) -> (i32, i32) {
    %c0_i32 = arith.constant 0 : i32
    %c0_i32_0 = arith.constant 0 : i32
    %c0_i32_1 = arith.constant 0 : i32
    return %c0_i32, %c0_i32_0 : i32, i32
  }
  func.func @transform_7(%arg0: i32, %arg1: i32) -> (i32, i32) {
    %c0_i32 = arith.constant 0 : i32
    %c0_i32_0 = arith.constant 0 : i32
    %c0_i32_1 = arith.constant 0 : i32
    return %c0_i32, %c0_i32_0 : i32, i32
  }
  func.func @transform_8(%arg0: i32, %arg1: i32) -> (i32, i32, i32, i32) {
    %c0_i32 = arith.constant 0 : i32
    %c0_i32_0 = arith.constant 0 : i32
    %c0_i32_1 = arith.constant 0 : i32
    return %arg0, %arg1, %c0_i32, %c0_i32_0 : i32, i32, i32, i32
  }
}

</mosaic_0001>

<llo_original>
// kernel: tpu_custom_call.1
$region0: #{tpu_custom_call.1}
  #allocation0 [shape = 'u32[]', space=smem, size = 0x4, offset = 0x4, fixed_abs, tag = 'smem constant byte address 0x4 - core index']
  #allocation1 [shape = 'u32[144,128]{1,0:T(1,128)}', space=vmem, size = 0x12000, scoped, tag = 'internal scratch']
  #allocation2 [shape = 'f32[18,24,128]{2,1,0:T(8,128)}', space=vmem, size = 0x36000, scoped, tag = 'scratch operand']
  #allocation3 [shape = 'f32[2,1,16,128]{3,2,1,0:T(8,128)}', space=vmem, size = 0x4000, scoped, tag = 'scratch operand']
  #allocation4 [shape = 's32[2]{0}', space=sflag, size = 0x8, scoped, tag = 'scratch operand']
  #allocation14 [shape = 's32[]', space=sflag, size = 0x4, offset = 0, fixed_abs, tag = 'sflag constant byte address 0x0 - dummy sync flag']
  #allocation15 [shape = 's32[]', space=sflag, size = 0x4, offset = 0, fixed_abs, tag = 'sflag constant byte address 0x0 - dummy sync flag']
  #allocation16 [shape = 'u32[]', space=smem, size = 0x4, offset = 0x44, fixed_abs, tag = 'smem constant byte address 0x44 - assertion arg 0']
  #allocation17 [shape = 'u32[]', space=smem, size = 0x4, offset = 0x48, fixed_abs, tag = 'smem constant byte address 0x48 - assertion arg 1']
  #allocation18 [shape = 's32[]', space=sflag, size = 0x4, offset = 0, fixed_abs, tag = 'sflag constant byte address 0x0 - dummy sync flag']
  #allocation19 [shape = 's32[]', space=sflag, size = 0x4, offset = 0, fixed_abs, tag = 'sflag constant byte address 0x0 - dummy sync flag']
  %s0 = inlined_call_operand.hbm [shape: f32[2,16,16,128], index: 0, kind: input, shape index: {}]
  %s1 = inlined_call_operand.hbm [shape: f32[2,16,16,128], index: 1, kind: input, shape index: {}]
  %s2 = inlined_call_operand.hbm [shape: f32[128,128], index: 2, kind: input, shape index: {}]
  %s3 = inlined_call_operand.vmem [shape: f32[1,128], index: 3, kind: input, shape index: {}]
  %s4 = inlined_call_operand.hbm [shape: f32[9,128,128], index: 4, kind: input, shape index: {}]
  %s5 = inlined_call_operand.vmem [shape: f32[1,128], index: 5, kind: input, shape index: {}]
  %s6 = inlined_call_operand.hbm [shape: f32[128,128], index: 6, kind: input, shape index: {}]
  %s7 = inlined_call_operand.vmem [shape: f32[1,128], index: 7, kind: input, shape index: {}]
  %s8 = inlined_call_operand.hbm [shape: f32[2,16,16,128], index: 8, kind: output, shape index: {}]
  %s9 = sld [smem:[#allocation0]]
  $region105: #{tpu_custom_call.1} parent=0
    _
  %s11 = ssub.s32 1, %s9
  %s12 = scalar_select 0, %s11, %s9
  $region1: #{tpu_custom_call.1} parent=0
    #allocation5 [shape = 'u8[262144]{0}', space=vmem, size = 0x40000, scoped, tag = 'input window, operand 0']
    #allocation6 [shape = 's32[2]{0}', space=sflag, size = 0x8, scoped, tag = 'scoped memory for tpu_custom_call.1']
    #allocation7 [shape = 's32[2]{0}', space=sflag, size = 0x8, scoped, tag = 'scoped memory for tpu_custom_call.1']
    #allocation8 [shape = 'u8[65536]{0}', space=vmem, size = 0x10000, scoped, tag = 'input window, operand 2, single buffered']
    #allocation9 [shape = 's32[1]{0}', space=sflag, size = 0x4, scoped, tag = 'scoped memory for tpu_custom_call.1']
    #allocation10 [shape = 'u8[589824]{0}', space=vmem, size = 0x90000, scoped, tag = 'input window, operand 4, single buffered']
    #allocation11 [shape = 'u8[65536]{0}', space=vmem, size = 0x10000, scoped, tag = 'input window, operand 6, single buffered']
    #allocation12 [shape = 's32[1]{0}', space=sflag, size = 0x4, scoped, tag = 'scoped memory for tpu_custom_call.1']
    #allocation13 [shape = 'u8[262144]{0}', space=vmem, size = 0x40000, scoped, tag = 'output window, operand 0']
    %13 = vsyncpa [#allocation6], 0
    %s14 = scalar_lea.sflag [#allocation6], 1
    %15 = vsyncpa %s14, 0
    %16 = vsyncpa [#allocation9], 0
    %17 = vsyncpa [#allocation12], 0
    %18 = vsyncpa [#allocation7], 0
    %s19 = scalar_lea.sflag [#allocation7], 1
    %20 = vsyncpa %s19, 0
    loop: start=0, step=1, limit=4
    $region2: #{tpu_custom_call.1} parent=1 // loop_pre_header
      _
    $region3: #{tpu_custom_call.1} parent=1 // loop_header
      %s22 = sphi 0, %s26
      %p23 = scmp.ge.s32.totalorder %s22, 4
      %s29 = sphi 0, %s41
      %s30 = sphi 0, %s37
      %s31 = sphi 0, %s29
      %s32 = sphi 0, %s30
      %s33 = sphi 0, %s31
      %s34 = sphi 0, %s32
      %s46 = sphi 0, %s48
      %s49 = sphi 0, %s46
      %s50 = sphi 0, %s49
      %s66 = sphi 0, %s50
      %s70 = sphi 0, %s70
      %s72 = sphi 0, %s70
      %s73 = sphi 0, %s72
      %s87 = sphi 0, %s73
      %s91 = sphi 0, %s91
      %s93 = sphi 0, %s91
      %s94 = sphi 0, %s93
      %s108 = sphi 0, %s94
      %s112 = sphi 0, %s112
      %s114 = sphi 0, %s112
      %s115 = sphi 0, %s114
      %s129 = sphi 0, %s115
      %s133 = sphi 0, %s133
      %s135 = sphi 0, %s133
      %s136 = sphi 0, %s135
      %s150 = sphi 0, %s136
      %s154 = sphi 0, %s154
      %s156 = sphi 0, %s154
      %s157 = sphi 0, %s156
      %s171 = sphi 0, %s157
      %s175 = sphi 0, %s175
      %s177 = sphi 0, %s175
      %s178 = sphi 0, %s177
      %s192 = sphi 0, %s178
      %s200 = sphi 0, %s202
      %s203 = sphi 0, %s200
      %s204 = sphi 0, %s203
      %s220 = sphi 0, %s204
    $region4: #{tpu_custom_call.1} parent=1 // loop_header_branch
      %25 = sbr.rel (%p23) target = $region8
    $region5: #{tpu_custom_call.1} parent=1 // loop_body
      %s27 = ssub.s32 %s22, 1
      %s28 = ssub.s32 %s22, 2
      %s35 = sadd.s32 1, %s30
      %p36 = scmp.ge.s32.totalorder %s35, 1
      %s37 = scalar_select %p36, 0, %s35
      %s38 = sadd.s32 1, %s29
      %s39 = scalar_select %p36, %s38, %s29
      %p40 = scmp.ge.s32.totalorder %s39, 2
      %s41 = scalar_select %p40, 0, %s39
      %s42 = ssub.s32 %s29, %s41
      %s43 = ssub.s32 %s30, %s37
      %s44 = sor.u32 %s42, %s43
      %p45 = scmp.eq.s32.totalorder %s44, 0
      %s47 = sadd.s32 %s46, 1
      %s48 = scalar_select %p45, %s46, %s47
      %p51 = pneg %p45
      %p52 = scmp.eq.s32.totalorder %s22, 1
      %p53 = por %p51, %p52
      %p54 = scmp.ne.s32.totalorder %s46, %s49
      %p55 = scmp.eq.s32.totalorder %s22, 0
      %p56 = por %p54, %p55
      %p57 = scmp.ne.s32.totalorder %s46, %s49
      %p58 = scmp.eq.s32.totalorder %s27, 1
      %p59 = por %p57, %p58
      %p60 = scmp.ne.s32.totalorder %s49, %s50
      %p61 = scmp.eq.s32.totalorder %s27, 0
      %p62 = por %p60, %p61
      %p63 = scmp.ne.s32.totalorder %s49, %s50
      %p64 = scmp.eq.s32.totalorder %s28, 1
      %p65 = por %p63, %p64
      %p67 = scmp.ne.s32.totalorder %s50, %s66
      %p68 = scmp.eq.s32.totalorder %s28, 0
      %p69 = por %p67, %p68
      %s71 = sadd.s32 %s70, 1
      %p74 = scmp.eq.s32.totalorder %s22, 1
      %p75 = scmp.ne.s32.totalorder %s70, %s72
      %p76 = scmp.eq.s32.totalorder %s22, 0
      %p77 = por %p75, %p76
      %p78 = scmp.ne.s32.totalorder %s70, %s72
      %p79 = scmp.eq.s32.totalorder %s27, 1
      %p80 = por %p78, %p79
      %p81 = scmp.ne.s32.totalorder %s72, %s73
      %p82 = scmp.eq.s32.totalorder %s27, 0
      %p83 = por %p81, %p82
      %p84 = scmp.ne.s32.totalorder %s72, %s73
      %p85 = scmp.eq.s32.totalorder %s28, 1
      %p86 = por %p84, %p85
      %p88 = scmp.ne.s32.totalorder %s73, %s87
      %p89 = scmp.eq.s32.totalorder %s28, 0
      %p90 = por %p88, %p89
      %s92 = sadd.s32 %s91, 1
      %p95 = scmp.eq.s32.totalorder %s22, 1
      %p96 = scmp.ne.s32.totalorder %s91, %s93
      %p97 = scmp.eq.s32.totalorder %s22, 0
      %p98 = por %p96, %p97
      %p99 = scmp.ne.s32.totalorder %s91, %s93
      %p100 = scmp.eq.s32.totalorder %s27, 1
      %p101 = por %p99, %p100
      %p102 = scmp.ne.s32.totalorder %s93, %s94
      %p103 = scmp.eq.s32.totalorder %s27, 0
      %p104 = por %p102, %p103
      %p105 = scmp.ne.s32.totalorder %s93, %s94
      %p106 = scmp.eq.s32.totalorder %s28, 1
      %p107 = por %p105, %p106
      %p109 = scmp.ne.s32.totalorder %s94, %s108
      %p110 = scmp.eq.s32.totalorder %s28, 0
      %p111 = por %p109, %p110
      %s113 = sadd.s32 %s112, 1
      %p116 = scmp.eq.s32.totalorder %s22, 1
      %p117 = scmp.ne.s32.totalorder %s112, %s114
      %p118 = scmp.eq.s32.totalorder %s22, 0
      %p119 = por %p117, %p118
      %p120 = scmp.ne.s32.totalorder %s112, %s114
      %p121 = scmp.eq.s32.totalorder %s27, 1
      %p122 = por %p120, %p121
      %p123 = scmp.ne.s32.totalorder %s114, %s115
      %p124 = scmp.eq.s32.totalorder %s27, 0
      %p125 = por %p123, %p124
      %p126 = scmp.ne.s32.totalorder %s114, %s115
      %p127 = scmp.eq.s32.totalorder %s28, 1
      %p128 = por %p126, %p127
      %p130 = scmp.ne.s32.totalorder %s115, %s129
      %p131 = scmp.eq.s32.totalorder %s28, 0
      %p132 = por %p130, %p131
      %s134 = sadd.s32 %s133, 1
      %p137 = scmp.eq.s32.totalorder %s22, 1
      %p138 = scmp.ne.s32.totalorder %s133, %s135
      %p139 = scmp.eq.s32.totalorder %s22, 0
      %p140 = por %p138, %p139
      %p141 = scmp.ne.s32.totalorder %s133, %s135
      %p142 = scmp.eq.s32.totalorder %s27, 1
      %p143 = por %p141, %p142
      %p144 = scmp.ne.s32.totalorder %s135, %s136
      %p145 = scmp.eq.s32.totalorder %s27, 0
      %p146 = por %p144, %p145
      %p147 = scmp.ne.s32.totalorder %s135, %s136
      %p148 = scmp.eq.s32.totalorder %s28, 1
      %p149 = por %p147, %p148
      %p151 = scmp.ne.s32.totalorder %s136, %s150
      %p152 = scmp.eq.s32.totalorder %s28, 0
      %p153 = por %p151, %p152
      %s155 = sadd.s32 %s154, 1
      %p158 = scmp.eq.s32.totalorder %s22, 1
      %p159 = scmp.ne.s32.totalorder %s154, %s156
      %p160 = scmp.eq.s32.totalorder %s22, 0
      %p161 = por %p159, %p160
      %p162 = scmp.ne.s32.totalorder %s154, %s156
      %p163 = scmp.eq.s32.totalorder %s27, 1
      %p164 = por %p162, %p163
      %p165 = scmp.ne.s32.totalorder %s156, %s157
      %p166 = scmp.eq.s32.totalorder %s27, 0
      %p167 = por %p165, %p166
      %p168 = scmp.ne.s32.totalorder %s156, %s157
      %p169 = scmp.eq.s32.totalorder %s28, 1
      %p170 = por %p168, %p169
      %p172 = scmp.ne.s32.totalorder %s157, %s171
      %p173 = scmp.eq.s32.totalorder %s28, 0
      %p174 = por %p172, %p173
      %s176 = sadd.s32 %s175, 1
      %p179 = scmp.eq.s32.totalorder %s22, 1
      %p180 = scmp.ne.s32.totalorder %s175, %s177
      %p181 = scmp.eq.s32.totalorder %s22, 0
      %p182 = por %p180, %p181
      %p183 = scmp.ne.s32.totalorder %s175, %s177
      %p184 = scmp.eq.s32.totalorder %s27, 1
      %p185 = por %p183, %p184
      %p186 = scmp.ne.s32.totalorder %s177, %s178
      %p187 = scmp.eq.s32.totalorder %s27, 0
      %p188 = por %p186, %p187
      %p189 = scmp.ne.s32.totalorder %s177, %s178
      %p190 = scmp.eq.s32.totalorder %s28, 1
      %p191 = por %p189, %p190
      %p193 = scmp.ne.s32.totalorder %s178, %s192
      %p194 = scmp.eq.s32.totalorder %s28, 0
      %p195 = por %p193, %p194
      %s196 = ssub.s32 %s29, %s41
      %s197 = ssub.s32 %s30, %s37
      %s198 = sor.u32 %s196, %s197
      %p199 = scmp.eq.s32.totalorder %s198, 0
      %s201 = sadd.s32 %s200, 1
      %s202 = scalar_select %p199, %s200, %s201
      %p205 = pneg %p199
      %p206 = scmp.eq.s32.totalorder %s22, 1
      %p207 = por %p205, %p206
      %p208 = scmp.ne.s32.totalorder %s200, %s203
      %p209 = scmp.eq.s32.totalorder %s22, 0
      %p210 = por %p208, %p209
      %p211 = scmp.ne.s32.totalorder %s200, %s203
      %p212 = scmp.eq.s32.totalorder %s27, 1
      %p213 = por %p211, %p212
      %p214 = scmp.ne.s32.totalorder %s203, %s204
      %p215 = scmp.eq.s32.totalorder %s27, 0
      %p216 = por %p214, %p215
      %p217 = scmp.ne.s32.totalorder %s203, %s204
      %p218 = scmp.eq.s32.totalorder %s28, 1
      %p219 = por %p217, %p218
      %p221 = scmp.ne.s32.totalorder %s204, %s220
      %p222 = scmp.eq.s32.totalorder %s28, 0
      %p223 = por %p221, %p222
      %p224 = scmp.le.s32.totalorder 1, %s22
      %p225 = scmp.lt.s32.totalorder %s22, 3
      %p226 = pnand %p224, %p225
      %p227 = pneg %p226
      // Predicated region
      $region9: #{tpu_custom_call.1} parent=5 // pred_check
        _
      $region10: #{tpu_custom_call.1} parent=5 // pred_check_branch
        %229 = sbr.rel (%p226) target = $region12
      $region11: #{tpu_custom_call.1} parent=5 // pred_region
        %s230 = ssub.s32 %s22, 1
        // Predicated region
        $region13: #{tpu_custom_call.1} parent=11 // pred_check
          %p231 = pneg %p83
        $region14: #{tpu_custom_call.1} parent=11 // pred_check_branch
          %233 = sbr.rel (%p231) target = $region16
        $region15: #{tpu_custom_call.1} parent=11 // pred_region
          %s235 = ssub.s32 2048, 2048
          %236 = vsyncadd [#allocation9], %s235
          %s237 = sshll.u32 [#allocation8], 4
          %s238 = int_to_ptr.vmem [resolvable:$true] %s237
          %243 = dma.hbm_to_vmem [thread:$0]  %s2, 2048, %s238, [#allocation9], 128, 128, 8
        $region16: #{tpu_custom_call.1} parent=11 // pred_fallthru
          _
        // Predicated region
        $region17: #{tpu_custom_call.1} parent=11 // pred_check
          %p244 = pneg %p104
        $region18: #{tpu_custom_call.1} parent=11 // pred_check_branch
          %246 = sbr.rel (%p244) target = $region20
        $region19: #{tpu_custom_call.1} parent=11 // pred_region
          _
        $region20: #{tpu_custom_call.1} parent=11 // pred_fallthru
          _
        // Predicated region
        $region21: #{tpu_custom_call.1} parent=11 // pred_check
          %p247 = pneg %p125
        $region22: #{tpu_custom_call.1} parent=11 // pred_check_branch
          %249 = sbr.rel (%p247) target = $region24
        $region23: #{tpu_custom_call.1} parent=11 // pred_region
          %s251 = ssub.s32 18432, 18432
          %252 = vsyncadd [#allocation9], %s251
          %s253 = sshll.u32 [#allocation10], 4
          %s254 = int_to_ptr.vmem [resolvable:$true] %s253
          %259 = dma.hbm_to_vmem [thread:$0]  %s4, 18432, %s254, [#allocation9], 128, 128, 8
        $region24: #{tpu_custom_call.1} parent=11 // pred_fallthru
          _
        // Predicated region
        $region25: #{tpu_custom_call.1} parent=11 // pred_check
          %p260 = pneg %p146
        $region26: #{tpu_custom_call.1} parent=11 // pred_check_branch
          %262 = sbr.rel (%p260) target = $region28
        $region27: #{tpu_custom_call.1} parent=11 // pred_region
          _
        $region28: #{tpu_custom_call.1} parent=11 // pred_fallthru
          _
        // Predicated region
        $region29: #{tpu_custom_call.1} parent=11 // pred_check
          %p263 = pneg %p167
        $region30: #{tpu_custom_call.1} parent=11 // pred_check_branch
          %265 = sbr.rel (%p263) target = $region32
        $region31: #{tpu_custom_call.1} parent=11 // pred_region
          %s267 = ssub.s32 2048, 2048
          %268 = vsyncadd [#allocation12], %s267
          %s269 = sshll.u32 [#allocation11], 4
          %s270 = int_to_ptr.vmem [resolvable:$true] %s269
          %275 = dma.hbm_to_vmem [thread:$0]  %s6, 2048, %s270, [#allocation12], 128, 128, 8
        $region32: #{tpu_custom_call.1} parent=11 // pred_fallthru
          _
        // Predicated region
        $region33: #{tpu_custom_call.1} parent=11 // pred_check
          %p276 = pneg %p188
        $region34: #{tpu_custom_call.1} parent=11 // pred_check_branch
          %278 = sbr.rel (%p276) target = $region36
        $region35: #{tpu_custom_call.1} parent=11 // pred_region
          _
        $region36: #{tpu_custom_call.1} parent=11 // pred_fallthru
          _
      $region12: #{tpu_custom_call.1} parent=5 // pred_fallthru
        _
      %p279 = scmp.lt.s32.totalorder %s22, 2
      // Predicated region
      $region37: #{tpu_custom_call.1} parent=5 // pred_check
        %p280 = pneg %p279
      $region38: #{tpu_custom_call.1} parent=5 // pred_check_branch
        %282 = sbr.rel (%p280) target = $region40
      $region39: #{tpu_custom_call.1} parent=5 // pred_region
        // Predicated region
        $region41: #{tpu_custom_call.1} parent=39 // pred_check
          %p283 = pneg %p56
        $region42: #{tpu_custom_call.1} parent=39 // pred_check_branch
          %285 = sbr.rel (%p283) target = $region44
        $region43: #{tpu_custom_call.1} parent=39 // pred_region
          %s286 = sand.u32 %s46, 1
          %s287 = scalar_lea.sflag [#allocation6], %s286
          %s288 = sand.u32 %s46, 1
          %s289 = smul.addr %s288, 256
          %s290 = scalar_lea.vmem [#allocation5], %s289
          %s291 = smul.u32 16, %s30
          %s293 = ssub.s32 4096, 4096
          %294 = vsyncadd %s287, %s293
          %s295 = smul.addr %s291, 2
          %s296 = smul.addr %s29, 32
          %s297 = sadd.s32 %s295, %s296
          %s298 = smul.addr %s297, 128
          %s299 = scalar_lea.hbm %s0, %s298
          %s300 = sshll.u32 %s290, 4
          %s301 = int_to_ptr.vmem [resolvable:$true] %s300
          %306 = dma.hbm_to_vmem [thread:$0]  %s299, 4096, %s301, %s287, 128, 128, 8
        $region44: #{tpu_custom_call.1} parent=39 // pred_fallthru
          _
      $region40: #{tpu_custom_call.1} parent=5 // pred_fallthru
        _
      %p307 = scmp.le.s32.totalorder 1, %s22
      %p308 = scmp.lt.s32.totalorder %s22, 3
      %p309 = pnand %p307, %p308
      %p310 = pneg %p309
      // Predicated region
      $region45: #{tpu_custom_call.1} parent=5 // pred_check
        _
      $region46: #{tpu_custom_call.1} parent=5 // pred_check_branch
        %312 = sbr.rel (%p309) target = $region48
      $region47: #{tpu_custom_call.1} parent=5 // pred_region
        %s313 = ssub.s32 %s22, 1
        %s314 = sand.u32 %s49, 1
        %s315 = scalar_lea.sflag [#allocation6], %s314
        %s316 = sand.u32 %s49, 1
        %s317 = smul.addr %s316, 256
        %s318 = scalar_lea.vmem [#allocation5], %s317
        // Predicated region
        $region49: #{tpu_custom_call.1} parent=47 // pred_check
          %p319 = pneg %p62
        $region50: #{tpu_custom_call.1} parent=47 // pred_check_branch
          %321 = sbr.rel (%p319) target = $region52
        $region51: #{tpu_custom_call.1} parent=47 // pred_region
          %322 = dma.done %s315, 4096
        $region52: #{tpu_custom_call.1} parent=47 // pred_fallthru
          _
        // Predicated region
        $region53: #{tpu_custom_call.1} parent=47 // pred_check
          %p323 = pneg %p83
        $region54: #{tpu_custom_call.1} parent=47 // pred_check_branch
          %325 = sbr.rel (%p323) target = $region56
        $region55: #{tpu_custom_call.1} parent=47 // pred_region
          %326 = dma.done [#allocation9], 2048
        $region56: #{tpu_custom_call.1} parent=47 // pred_fallthru
          _
        // Predicated region
        $region57: #{tpu_custom_call.1} parent=47 // pred_check
          %p327 = pneg %p125
        $region58: #{tpu_custom_call.1} parent=47 // pred_check_branch
          %329 = sbr.rel (%p327) target = $region60
        $region59: #{tpu_custom_call.1} parent=47 // pred_region
          %330 = dma.done [#allocation9], 18432
        $region60: #{tpu_custom_call.1} parent=47 // pred_fallthru
          _
        // Predicated region
        $region61: #{tpu_custom_call.1} parent=47 // pred_check
          %p331 = pneg %p167
        $region62: #{tpu_custom_call.1} parent=47 // pred_check_branch
          %333 = sbr.rel (%p331) target = $region64
        $region63: #{tpu_custom_call.1} parent=47 // pred_region
          %334 = dma.done [#allocation12], 2048
        $region64: #{tpu_custom_call.1} parent=47 // pred_fallthru
          _
        %s335 = sand.u32 %s49, 1
        %s336 = scalar_lea.sflag [#allocation6], %s335
        %s337 = sand.u32 %s49, 1
        %s338 = smul.addr %s337, 256
        %s339 = scalar_lea.vmem [#allocation5], %s338
        %p340 = pneg %p62
        %p341 = pneg %p59
        %p342 = pneg %p83
        %p343 = pneg %p80
        %p344 = pneg %p104
        %p345 = pneg %p101
        %p346 = pneg %p125
        %p347 = pneg %p122
        %p348 = pneg %p146
        %p349 = pneg %p143
        %p350 = pneg %p167
        %p351 = pneg %p164
        %p352 = pneg %p188
        %p353 = pneg %p185
        %p354 = pneg %p216
        %p355 = pneg %p213
        %s356 = sand.u32 %s203, 1
        %s357 = scalar_lea.sflag [#allocation7], %s356
        %s358 = sand.u32 %s203, 1
        %s359 = smul.addr %s358, 256
        %s360 = scalar_lea.vmem [#allocation13], %s359
        %s361 = smul.u32 16, %s32
        %s362 = smul.u32 16, %s32
        %s363 = smul.u32 %s32, 16
        %p364 = scmp.gt.s32.totalorder %s32, 0
        // Predicated region
        $region65: #{tpu_custom_call.1} parent=47 // pred_check
          %p365 = pneg %p364
        $region66: #{tpu_custom_call.1} parent=47 // pred_check_branch
          %367 = sbr.rel (%p365) target = $region68
        $region67: #{tpu_custom_call.1} parent=47 // pred_region
          %s368 = ssub.s32 %s363, 1
          %s369 = smul.u32 %s368, 16
          %s370 = smul.u32 %s31, 256
          %s371 = sadd.s32 %s369, %s370
          %s372 = smul.addr %s371, 16
          %s373 = scalar_lea.hbm %s1, %s372
          // Predicated region
          $region69: #{tpu_custom_call.1} parent=67 // pred_check
            _
          $region70: #{tpu_custom_call.1} parent=67 // pred_check_branch
            %375 = sbr.rel target = $region72
          $region71: #{tpu_custom_call.1} parent=67 // pred_region
            %376 = sst [smem:[#allocation16]] [#allocation15]
            %377 = sst [smem:[#allocation17]] [#allocation14]
          $region72: #{tpu_custom_call.1} parent=67 // pred_fallthru
            _
          %379 = shalt.err (0)
          %s381 = sshll.u32 [#allocation3], 4
          %s382 = int_to_ptr.vmem [resolvable:$true] %s381
          %384 = dma.hbm_to_vmem [thread:$0]  %s373, 256, %s382, [#allocation4]
        $region68: #{tpu_custom_call.1} parent=47 // pred_fallthru
          _
        %p385 = scmp.lt.s32.totalorder %s32, 0
        // Predicated region
        $region73: #{tpu_custom_call.1} parent=47 // pred_check
          %p386 = pneg %p385
        $region74: #{tpu_custom_call.1} parent=47 // pred_check_branch
          %388 = sbr.rel (%p386) target = $region76
        $region75: #{tpu_custom_call.1} parent=47 // pred_region
          %s389 = sadd.s32 %s363, 16
          %s390 = smul.u32 %s389, 16
          %s391 = smul.u32 %s31, 256
          %s392 = sadd.s32 %s390, %s391
          %s393 = smul.addr %s392, 16
          %s394 = scalar_lea.hbm %s1, %s393
          %s395 = scalar_lea.vmem [#allocation3], 16
          %s396 = scalar_lea.sflag [#allocation4], 1
          // Predicated region
          $region77: #{tpu_custom_call.1} parent=75 // pred_check
            _
          $region78: #{tpu_custom_call.1} parent=75 // pred_check_branch
            %398 = sbr.rel target = $region80
          $region79: #{tpu_custom_call.1} parent=75 // pred_region
            %399 = sst [smem:[#allocation16]] [#allocation19]
            %400 = sst [smem:[#allocation17]] [#allocation18]
          $region80: #{tpu_custom_call.1} parent=75 // pred_fallthru
            _
          %402 = shalt.err (0)
          %s404 = sshll.u32 %s395, 4
          %s405 = int_to_ptr.vmem [resolvable:$true] %s404
          %407 = dma.hbm_to_vmem [thread:$0]  %s394, 256, %s405, %s396
        $region76: #{tpu_custom_call.1} parent=47 // pred_fallthru
          _
        %v408 = vld [vmem:[%s318] sm:$0xff]
        %v409 = vld [vmem:[%s318 + $0x8] sm:$0xff]
        %v410 = vld [vmem:[%s318 + $0x10] sm:$0xff]
        %v411 = vld [vmem:[%s318 + $0x18] sm:$0xff]
        %v412 = vld [vmem:[%s318 + $0x20] sm:$0xff]
        %v413 = vld [vmem:[%s318 + $0x28] sm:$0xff]
        %v414 = vld [vmem:[%s318 + $0x30] sm:$0xff]
        %v415 = vld [vmem:[%s318 + $0x38] sm:$0xff]
        %v416 = vld [vmem:[%s318 + $0x40] sm:$0xff]
        %v417 = vld [vmem:[%s318 + $0x48] sm:$0xff]
        %v418 = vld [vmem:[%s318 + $0x50] sm:$0xff]
        %v419 = vld [vmem:[%s318 + $0x58] sm:$0xff]
        %v420 = vld [vmem:[%s318 + $0x60] sm:$0xff]
        %v421 = vld [vmem:[%s318 + $0x68] sm:$0xff]
        %v422 = vld [vmem:[%s318 + $0x70] sm:$0xff]
        %v423 = vld [vmem:[%s318 + $0x78] sm:$0xff]
        %v424 = vld [vmem:[%s318 + $0x80] sm:$0xff]
        %v425 = vld [vmem:[%s318 + $0x88] sm:$0xff]
        %v426 = vld [vmem:[%s318 + $0x90] sm:$0xff]
        %v427 = vld [vmem:[%s318 + $0x98] sm:$0xff]
        %v428 = vld [vmem:[%s318 + $0xa0] sm:$0xff]
        %v429 = vld [vmem:[%s318 + $0xa8] sm:$0xff]
        %v430 = vld [vmem:[%s318 + $0xb0] sm:$0xff]
        %v431 = vld [vmem:[%s318 + $0xb8] sm:$0xff]
        %v432 = vld [vmem:[%s318 + $0xc0] sm:$0xff]
        %v433 = vld [vmem:[%s318 + $0xc8] sm:$0xff]
        %v434 = vld [vmem:[%s318 + $0xd0] sm:$0xff]
        %v435 = vld [vmem:[%s318 + $0xd8] sm:$0xff]
        %v436 = vld [vmem:[%s318 + $0xe0] sm:$0xff]
        %v437 = vld [vmem:[%s318 + $0xe8] sm:$0xff]
        %v438 = vld [vmem:[%s318 + $0xf0] sm:$0xff]
        %v439 = vld [vmem:[%s318 + $0xf8] sm:$0xff]
        %v440 = vld [vmem:[#allocation8] sm:$0xff]
        %v441 = vld [vmem:[#allocation8 + $0x8] sm:$0xff]
        %v442 = vld [vmem:[#allocation8 + $0x10] sm:$0xff]
        %v443 = vld [vmem:[#allocation8 + $0x18] sm:$0xff]
        %v444 = vld [vmem:[#allocation8 + $0x20] sm:$0xff]
        %v445 = vld [vmem:[#allocation8 + $0x28] sm:$0xff]
        %v446 = vld [vmem:[#allocation8 + $0x30] sm:$0xff]
        %v447 = vld [vmem:[#allocation8 + $0x38] sm:$0xff]
        %v448 = vld [vmem:[#allocation8 + $0x40] sm:$0xff]
        %v449 = vld [vmem:[#allocation8 + $0x48] sm:$0xff]
        %v450 = vld [vmem:[#allocation8 + $0x50] sm:$0xff]
        %v451 = vld [vmem:[#allocation8 + $0x58] sm:$0xff]
        %v452 = vld [vmem:[#allocation8 + $0x60] sm:$0xff]
        %v453 = vld [vmem:[#allocation8 + $0x68] sm:$0xff]
        %v454 = vld [vmem:[#allocation8 + $0x70] sm:$0xff]
        %v455 = vld [vmem:[#allocation8 + $0x78] sm:$0xff]
        %v456 = vld [vmem:[%s3] sm:$0x1]
        %v458 = vlaneseq
        %v459 = vshrl.u32 %v458, 7
        %v460 = vsub.s32 0, %v459
        %v461 = vrot.slane %v456, %v460
        %463 = vmatprep.subr.mxu0 0.0
        %464 = vmatpush1.msra.mxu0 %v440
        %465 = vmatprep.subr.mxu0 0.0
        %466 = vmatpush1.msra.mxu0 %v441
        %467 = vmatprep.subr.mxu0 0.0
        %468 = vmatpush1.msra.mxu0 %v442
        %469 = vmatprep.subr.mxu0 0.0
        %470 = vmatpush1.msra.mxu0 %v443
        %471 = vmatprep.subr.mxu0 0.0
        %472 = vmatpush1.msra.mxu0 %v444
        %473 = vmatprep.subr.mxu0 0.0
        %474 = vmatpush1.msra.mxu0 %v445
        %475 = vmatprep.subr.mxu0 0.0
        %476 = vmatpush1.msra.mxu0 %v446
        %477 = vmatprep.subr.mxu0 0.0
        %478 = vmatpush1.msra.mxu0 %v447
        %479 = vmatprep.subr.mxu0 0.0
        %480 = vmatpush1.msra.mxu0 %v448
        %481 = vmatprep.subr.mxu0 0.0
        %482 = vmatpush1.msra.mxu0 %v449
        %483 = vmatprep.subr.mxu0 0.0
        %484 = vmatpush1.msra.mxu0 %v450
        %485 = vmatprep.subr.mxu0 0.0
        %486 = vmatpush1.msra.mxu0 %v451
        %487 = vmatprep.subr.mxu0 0.0
        %488 = vmatpush1.msra.mxu0 %v452
        %489 = vmatprep.subr.mxu0 0.0
        %490 = vmatpush1.msra.mxu0 %v453
        %491 = vmatprep.subr.mxu0 0.0
        %492 = vmatpush1.msra.mxu0 %v454
        %493 = vmatprep.subr.mxu0 0.0
        %494 = vmatpush1.msra.mxu0 %v455
        %495 = vmatprep.subr.mxu0 0.0
        %496 = vmatpush1.msra.mxu0 0.0
        %497 = vmatprep.subr.mxu0 0.0
        %498 = vmatpush1.msra.mxu0 0.0
        %499 = vmatprep.subr.mxu0 0.0
        %500 = vmatpush1.msra.mxu0 0.0
        %501 = vmatprep.subr.mxu0 0.0
        %502 = vmatpush1.msra.mxu0 0.0
        %503 = vmatprep.subr.mxu0 0.0
        %504 = vmatpush1.msra.mxu0 0.0
        %505 = vmatprep.subr.mxu0 0.0
        %506 = vmatpush1.msra.mxu0 0.0
        %507 = vmatprep.subr.mxu0 0.0
        %508 = vmatpush1.msra.mxu0 0.0
        %509 = vmatprep.subr.mxu0 0.0
        %510 = vmatpush1.msra.mxu0 0.0
        %511 = vmatprep.subr.mxu0 0.0
        %512 = vmatpush1.msra.mxu0 0.0
        %513 = vmatprep.subr.mxu0 0.0
        %514 = vmatpush1.msra.mxu0 0.0
        %515 = vmatprep.subr.mxu0 0.0
        %516 = vmatpush1.msra.mxu0 0.0
        %517 = vmatprep.subr.mxu0 0.0
        %518 = vmatpush1.msra.mxu0 0.0
        %519 = vmatprep.subr.mxu0 0.0
        %520 = vmatpush1.msra.mxu0 0.0
        %521 = vmatprep.subr.mxu0 0.0
        %522 = vmatpush1.msra.mxu0 0.0
        %523 = vmatprep.subr.mxu0 0.0
        %524 = vmatpush1.msra.mxu0 0.0
        %525 = vmatprep.subr.mxu0 0.0
        %526 = vmatpush1.msra.mxu0 0.0
        %527 = vmatprep.mubr.f32.mxu0 0.0
        %528 = vmatmul.mubr.f32.gmra.mrb[0].mxu0 %v408
        %v529 = vpop.f32.mrb[0].mxu0
        %v530 = vadd.f32 %v461, %v529
        %v531 = vpop.f32.mrb[0].mxu0
        %532 = vmatprep.mubr.f32.mxu0 0.0
        %533 = vmatmul.mubr.f32.gmra.mrb[0].mxu0 %v409
        %v534 = vpop.f32.mrb[0].mxu0
        %v535 = vadd.f32 %v461, %v534
        %v536 = vpop.f32.mrb[0].mxu0
        %537 = vmatprep.mubr.f32.mxu0 0.0
        %538 = vmatmul.mubr.f32.gmra.mrb[0].mxu0 %v410
        %v539 = vpop.f32.mrb[0].mxu0
        %v540 = vadd.f32 %v461, %v539
        %v541 = vpop.f32.mrb[0].mxu0
        %542 = vmatprep.mubr.f32.mxu0 0.0
        %543 = vmatmul.mubr.f32.gmra.mrb[0].mxu0 %v411
        %v544 = vpop.f32.mrb[0].mxu0
        %v545 = vadd.f32 %v461, %v544
        %v546 = vpop.f32.mrb[0].mxu0
        %547 = vmatprep.mubr.f32.mxu0 0.0
        %548 = vmatmul.mubr.f32.gmra.mrb[0].mxu0 %v412
        %v549 = vpop.f32.mrb[0].mxu0
        %v550 = vadd.f32 %v461, %v549
        %v551 = vpop.f32.mrb[0].mxu0
        %552 = vmatprep.mubr.f32.mxu0 0.0
        %553 = vmatmul.mubr.f32.gmra.mrb[0].mxu0 %v413
        %v554 = vpop.f32.mrb[0].mxu0
        %v555 = vadd.f32 %v461, %v554
        %v556 = vpop.f32.mrb[0].mxu0
        %557 = vmatprep.mubr.f32.mxu0 0.0
        %558 = vmatmul.mubr.f32.gmra.mrb[0].mxu0 %v414
        %v559 = vpop.f32.mrb[0].mxu0
        %v560 = vadd.f32 %v461, %v559
        %v561 = vpop.f32.mrb[0].mxu0
        %562 = vmatprep.mubr.f32.mxu0 0.0
        %563 = vmatmul.mubr.f32.gmra.mrb[0].mxu0 %v415
        %v564 = vpop.f32.mrb[0].mxu0
        %v565 = vadd.f32 %v461, %v564
        %v566 = vpop.f32.mrb[0].mxu0
        %567 = vmatprep.mubr.f32.mxu0 0.0
        %568 = vmatmul.mubr.f32.gmra.mrb[0].mxu0 %v416
        %v569 = vpop.f32.mrb[0].mxu0
        %v570 = vadd.f32 %v461, %v569
        %v571 = vpop.f32.mrb[0].mxu0
        %572 = vmatprep.mubr.f32.mxu0 0.0
        %573 = vmatmul.mubr.f32.gmra.mrb[0].mxu0 %v417
        %v574 = vpop.f32.mrb[0].mxu0
        %v575 = vadd.f32 %v461, %v574
        %v576 = vpop.f32.mrb[0].mxu0
        %577 = vmatprep.mubr.f32.mxu0 0.0
        %578 = vmatmul.mubr.f32.gmra.mrb[0].mxu0 %v418
        %v579 = vpop.f32.mrb[0].mxu0
        %v580 = vadd.f32 %v461, %v579
        %v581 = vpop.f32.mrb[0].mxu0
        %582 = vmatprep.mubr.f32.mxu0 0.0
        %583 = vmatmul.mubr.f32.gmra.mrb[0].mxu0 %v419
        %v584 = vpop.f32.mrb[0].mxu0
        %v585 = vadd.f32 %v461, %v584
        %v586 = vpop.f32.mrb[0].mxu0
        %587 = vmatprep.mubr.f32.mxu0 0.0
        %588 = vmatmul.mubr.f32.gmra.mrb[0].mxu0 %v420
        %v589 = vpop.f32.mrb[0].mxu0
        %v590 = vadd.f32 %v461, %v589
        %v591 = vpop.f32.mrb[0].mxu0
        %592 = vmatprep.mubr.f32.mxu0 0.0
        %593 = vmatmul.mubr.f32.gmra.mrb[0].mxu0 %v421
        %v594 = vpop.f32.mrb[0].mxu0
        %v595 = vadd.f32 %v461, %v594
        %v596 = vpop.f32.mrb[0].mxu0
        %597 = vmatprep.mubr.f32.mxu0 0.0
        %598 = vmatmul.mubr.f32.gmra.mrb[0].mxu0 %v422
        %v599 = vpop.f32.mrb[0].mxu0
        %v600 = vadd.f32 %v461, %v599
        %v601 = vpop.f32.mrb[0].mxu0
        %602 = vmatprep.mubr.f32.mxu0 0.0
        %603 = vmatmul.mubr.f32.gmra.mrb[0].mxu0 %v423
        %v604 = vpop.f32.mrb[0].mxu0
        %v605 = vadd.f32 %v461, %v604
        %v606 = vpop.f32.mrb[0].mxu0
        %607 = vmatprep.mubr.f32.mxu0 0.0
        %608 = vmatmul.mubr.f32.gmra.mrb[0].mxu0 %v424
        %v609 = vpop.f32.mrb[0].mxu0
        %v610 = vadd.f32 %v461, %v609
        %v611 = vpop.f32.mrb[0].mxu0
        %612 = vmatprep.mubr.f32.mxu0 0.0
        %613 = vmatmul.mubr.f32.gmra.mrb[0].mxu0 %v425
        %v614 = vpop.f32.mrb[0].mxu0
        %v615 = vadd.f32 %v461, %v614
        %v616 = vpop.f32.mrb[0].mxu0
        %617 = vmatprep.mubr.f32.mxu0 0.0
        %618 = vmatmul.mubr.f32.gmra.mrb[0].mxu0 %v426
        %v619 = vpop.f32.mrb[0].mxu0
        %v620 = vadd.f32 %v461, %v619
        %v621 = vpop.f32.mrb[0].mxu0
        %622 = vmatprep.mubr.f32.mxu0 0.0
        %623 = vmatmul.mubr.f32.gmra.mrb[0].mxu0 %v427
        %v624 = vpop.f32.mrb[0].mxu0
        %v625 = vadd.f32 %v461, %v624
        %v626 = vpop.f32.mrb[0].mxu0
        %627 = vmatprep.mubr.f32.mxu0 0.0
        %628 = vmatmul.mubr.f32.gmra.mrb[0].mxu0 %v428
        %v629 = vpop.f32.mrb[0].mxu0
        %v630 = vadd.f32 %v461, %v629
        %v631 = vpop.f32.mrb[0].mxu0
        %632 = vmatprep.mubr.f32.mxu0 0.0
        %633 = vmatmul.mubr.f32.gmra.mrb[0].mxu0 %v429
        %v634 = vpop.f32.mrb[0].mxu0
        %v635 = vadd.f32 %v461, %v634
        %v636 = vpop.f32.mrb[0].mxu0
        %637 = vmatprep.mubr.f32.mxu0 0.0
        %638 = vmatmul.mubr.f32.gmra.mrb[0].mxu0 %v430
        %v639 = vpop.f32.mrb[0].mxu0
        %v640 = vadd.f32 %v461, %v639
        %v641 = vpop.f32.mrb[0].mxu0
        %642 = vmatprep.mubr.f32.mxu0 0.0
        %643 = vmatmul.mubr.f32.gmra.mrb[0].mxu0 %v431
        %v644 = vpop.f32.mrb[0].mxu0
        %v645 = vadd.f32 %v461, %v644
        %v646 = vpop.f32.mrb[0].mxu0
        %647 = vmatprep.mubr.f32.mxu0 0.0
        %648 = vmatmul.mubr.f32.gmra.mrb[0].mxu0 %v432
        %v649 = vpop.f32.mrb[0].mxu0
        %v650 = vadd.f32 %v461, %v649
        %v651 = vpop.f32.mrb[0].mxu0
        %652 = vmatprep.mubr.f32.mxu0 0.0
        %653 = vmatmul.mubr.f32.gmra.mrb[0].mxu0 %v433
        %v654 = vpop.f32.mrb[0].mxu0
        %v655 = vadd.f32 %v461, %v654
        %v656 = vpop.f32.mrb[0].mxu0
        %657 = vmatprep.mubr.f32.mxu0 0.0
        %658 = vmatmul.mubr.f32.gmra.mrb[0].mxu0 %v434
        %v659 = vpop.f32.mrb[0].mxu0
        %v660 = vadd.f32 %v461, %v659
        %v661 = vpop.f32.mrb[0].mxu0
        %662 = vmatprep.mubr.f32.mxu0 0.0
        %663 = vmatmul.mubr.f32.gmra.mrb[0].mxu0 %v435
        %v664 = vpop.f32.mrb[0].mxu0
        %v665 = vadd.f32 %v461, %v664
        %v666 = vpop.f32.mrb[0].mxu0
        %667 = vmatprep.mubr.f32.mxu0 0.0
        %668 = vmatmul.mubr.f32.gmra.mrb[0].mxu0 %v436
        %v669 = vpop.f32.mrb[0].mxu0
        %v670 = vadd.f32 %v461, %v669
        %v671 = vpop.f32.mrb[0].mxu0
        %672 = vmatprep.mubr.f32.mxu0 0.0
        %673 = vmatmul.mubr.f32.gmra.mrb[0].mxu0 %v437
        %v674 = vpop.f32.mrb[0].mxu0
        %v675 = vadd.f32 %v461, %v674
        %v676 = vpop.f32.mrb[0].mxu0
        %677 = vmatprep.mubr.f32.mxu0 0.0
        %678 = vmatmul.mubr.f32.gmra.mrb[0].mxu0 %v438
        %v679 = vpop.f32.mrb[0].mxu0
        %v680 = vadd.f32 %v461, %v679
        %v681 = vpop.f32.mrb[0].mxu0
        %682 = vmatprep.mubr.f32.mxu0 0.0
        %683 = vmatmul.mubr.f32.gmra.mrb[0].mxu0 %v439
        %v684 = vpop.f32.mrb[0].mxu0
        %v685 = vadd.f32 %v461, %v684
        %v686 = vpop.f32.mrb[0].mxu0
        %687 = vdwg.mxu0
        %v688 = vmax.f32 %v530, 0.0
        %v689 = vmax.f32 %v535, 0.0
        %v690 = vmax.f32 %v540, 0.0
        %v691 = vmax.f32 %v545, 0.0
        %v692 = vmax.f32 %v550, 0.0
        %v693 = vmax.f32 %v555, 0.0
        %v694 = vmax.f32 %v560, 0.0
        %v695 = vmax.f32 %v565, 0.0
        %v696 = vmax.f32 %v570, 0.0
        %v697 = vmax.f32 %v575, 0.0
        %v698 = vmax.f32 %v580, 0.0
        %v699 = vmax.f32 %v585, 0.0
        %v700 = vmax.f32 %v590, 0.0
        %v701 = vmax.f32 %v595, 0.0
        %v702 = vmax.f32 %v600, 0.0
        %v703 = vmax.f32 %v605, 0.0
        %v704 = vmax.f32 %v610, 0.0
        %v705 = vmax.f32 %v615, 0.0
        %v706 = vmax.f32 %v620, 0.0
        %v707 = vmax.f32 %v625, 0.0
        %v708 = vmax.f32 %v630, 0.0
        %v709 = vmax.f32 %v635, 0.0
        %v710 = vmax.f32 %v640, 0.0
        %v711 = vmax.f32 %v645, 0.0
        %v712 = vmax.f32 %v650, 0.0
        %v713 = vmax.f32 %v655, 0.0
        %v714 = vmax.f32 %v660, 0.0
        %v715 = vmax.f32 %v665, 0.0
        %v716 = vmax.f32 %v670, 0.0
        %v717 = vmax.f32 %v675, 0.0
        %v718 = vmax.f32 %v680, 0.0
        %v719 = vmax.f32 %v685, 0.0
        %s720 = scalar_lea.vmem [#allocation2], 24
        %721 = vst [vmem:[%s720 + $0x1] sm:$0xff] %v688
        %722 = vst [vmem:[%s720 + $0x9] sm:$0xff] %v689
        %723 = vst [vmem:[%s720 + $0x19] sm:$0xff] %v690
        %724 = vst [vmem:[%s720 + $0x21] sm:$0xff] %v691
        %725 = vst [vmem:[%s720 + $0x31] sm:$0xff] %v692
        %726 = vst [vmem:[%s720 + $0x39] sm:$0xff] %v693
        %727 = vst [vmem:[%s720 + $0x49] sm:$0xff] %v694
        %728 = vst [vmem:[%s720 + $0x51] sm:$0xff] %v695
        %729 = vst [vmem:[%s720 + $0x61] sm:$0xff] %v696
        %730 = vst [vmem:[%s720 + $0x69] sm:$0xff] %v697
        %731 = vst [vmem:[%s720 + $0x79] sm:$0xff] %v698
        %732 = vst [vmem:[%s720 + $0x81] sm:$0xff] %v699
        %733 = vst [vmem:[%s720 + $0x91] sm:$0xff] %v700
        %734 = vst [vmem:[%s720 + $0x99] sm:$0xff] %v701
        %735 = vst [vmem:[%s720 + $0xa9] sm:$0xff] %v702
        %736 = vst [vmem:[%s720 + $0xb1] sm:$0xff] %v703
        %737 = vst [vmem:[%s720 + $0xc1] sm:$0xff] %v704
        %738 = vst [vmem:[%s720 + $0xc9] sm:$0xff] %v705
        %739 = vst [vmem:[%s720 + $0xd9] sm:$0xff] %v706
        %740 = vst [vmem:[%s720 + $0xe1] sm:$0xff] %v707
        %741 = vst [vmem:[%s720 + $0xf1] sm:$0xff] %v708
        %742 = vst [vmem:[%s720 + $0xf9] sm:$0xff] %v709
        %743 = vst [vmem:[%s720 + $0x109] sm:$0xff] %v710
        %744 = vst [vmem:[%s720 + $0x111] sm:$0xff] %v711
        %745 = vst [vmem:[%s720 + $0x121] sm:$0xff] %v712
        %746 = vst [vmem:[%s720 + $0x129] sm:$0xff] %v713
        %747 = vst [vmem:[%s720 + $0x139] sm:$0xff] %v714
        %748 = vst [vmem:[%s720 + $0x141] sm:$0xff] %v715
        %749 = vst [vmem:[%s720 + $0x151] sm:$0xff] %v716
        %750 = vst [vmem:[%s720 + $0x159] sm:$0xff] %v717
        %751 = vst [vmem:[%s720 + $0x169] sm:$0xff] %v718
        %752 = vst [vmem:[%s720 + $0x171] sm:$0xff] %v719
        %753 = vst [vmem:[#allocation2] sm:$0x1] 0.0
        %754 = vst [vmem:[#allocation2 + $0x18] sm:$0x1] 0.0
        %755 = vst [vmem:[#allocation2 + $0x30] sm:$0x1] 0.0
        %756 = vst [vmem:[#allocation2 + $0x48] sm:$0x1] 0.0
        %757 = vst [vmem:[#allocation2 + $0x60] sm:$0x1] 0.0
        %758 = vst [vmem:[#allocation2 + $0x78] sm:$0x1] 0.0
        %759 = vst [vmem:[#allocation2 + $0x90] sm:$0x1] 0.0
        %760 = vst [vmem:[#allocation2 + $0xa8] sm:$0x1] 0.0
        %761 = vst [vmem:[#allocation2 + $0xc0] sm:$0x1] 0.0
        %762 = vst [vmem:[#allocation2 + $0xd8] sm:$0x1] 0.0
        %763 = vst [vmem:[#allocation2 + $0xf0] sm:$0x1] 0.0
        %764 = vst [vmem:[#allocation2 + $0x108] sm:$0x1] 0.0
        %765 = vst [vmem:[#allocation2 + $0x120] sm:$0x1] 0.0
        %766 = vst [vmem:[#allocation2 + $0x138] sm:$0x1] 0.0
        %767 = vst [vmem:[#allocation2 + $0x150] sm:$0x1] 0.0
        %768 = vst [vmem:[#allocation2 + $0x168] sm:$0x1] 0.0
        %769 = vst [vmem:[#allocation2 + $0x180] sm:$0x1] 0.0
        %770 = vst [vmem:[#allocation2 + $0x198] sm:$0x1] 0.0
        %771 = vst [vmem:[#allocation2 + $0x11] sm:$0x1] 0.0
        %772 = vst [vmem:[#allocation2 + $0x29] sm:$0x1] 0.0
        %773 = vst [vmem:[#allocation2 + $0x41] sm:$0x1] 0.0
        %774 = vst [vmem:[#allocation2 + $0x59] sm:$0x1] 0.0
        %775 = vst [vmem:[#allocation2 + $0x71] sm:$0x1] 0.0
        %776 = vst [vmem:[#allocation2 + $0x89] sm:$0x1] 0.0
        %777 = vst [vmem:[#allocation2 + $0xa1] sm:$0x1] 0.0
        %778 = vst [vmem:[#allocation2 + $0xb9] sm:$0x1] 0.0
        %779 = vst [vmem:[#allocation2 + $0xd1] sm:$0x1] 0.0
        %780 = vst [vmem:[#allocation2 + $0xe9] sm:$0x1] 0.0
        %781 = vst [vmem:[#allocation2 + $0x101] sm:$0x1] 0.0
        %782 = vst [vmem:[#allocation2 + $0x119] sm:$0x1] 0.0
        %783 = vst [vmem:[#allocation2 + $0x131] sm:$0x1] 0.0
        %784 = vst [vmem:[#allocation2 + $0x149] sm:$0x1] 0.0
        %785 = vst [vmem:[#allocation2 + $0x161] sm:$0x1] 0.0
        %786 = vst [vmem:[#allocation2 + $0x179] sm:$0x1] 0.0
        %787 = vst [vmem:[#allocation2 + $0x191] sm:$0x1] 0.0
        %788 = vst [vmem:[#allocation2 + $0x1a9] sm:$0x1] 0.0
        // Predicated region
        $region81: #{tpu_custom_call.1} parent=47 // pred_check
          %p789 = pneg %p364
        $region82: #{tpu_custom_call.1} parent=47 // pred_check_branch
          %791 = sbr.rel (%p789) target = $region84
        $region83: #{tpu_custom_call.1} parent=47 // pred_region
          %s792 = smul.u32 1, 1
          %s793 = smul.u32 %s792, 16
          %s794 = smul.u32 %s793, 1
          %s795 = sshll.u32 %s794, 4
          %796 = dma.done [#allocation4], %s795
        $region84: #{tpu_custom_call.1} parent=47 // pred_fallthru
          _
        // Predicated region
        $region85: #{tpu_custom_call.1} parent=47 // pred_check
          %p797 = pneg %p385
        $region86: #{tpu_custom_call.1} parent=47 // pred_check_branch
          %799 = sbr.rel (%p797) target = $region88
        $region87: #{tpu_custom_call.1} parent=47 // pred_region
          %s800 = scalar_lea.sflag [#allocation4], 1
          %s801 = smul.u32 1, 1
          %s802 = smul.u32 %s801, 16
          %s803 = smul.u32 %s802, 1
          %s804 = sshll.u32 %s803, 4
          %805 = dma.done %s800, %s804
        $region88: #{tpu_custom_call.1} parent=47 // pred_fallthru
          _
        %v806 = vld [vmem:[#allocation3] sm:$0xff]
        %v807 = vld [vmem:[#allocation3 + $0x8] sm:$0xff]
        %v808 = vld [vmem:[#allocation3 + $0x10] sm:$0xff]
        %v809 = vld [vmem:[#allocation3 + $0x18] sm:$0xff]
        %v810 = vld [vmem:[#allocation8] sm:$0xff]
        %v811 = vld [vmem:[#allocation8 + $0x8] sm:$0xff]
        %v812 = vld [vmem:[#allocation8 + $0x10] sm:$0xff]
        %v813 = vld [vmem:[#allocation8 + $0x18] sm:$0xff]
        %v814 = vld [vmem:[#allocation8 + $0x20] sm:$0xff]
        %v815 = vld [vmem:[#allocation8 + $0x28] sm:$0xff]
        %v816 = vld [vmem:[#allocation8 + $0x30] sm:$0xff]
        %v817 = vld [vmem:[#allocation8 + $0x38] sm:$0xff]
        %v818 = vld [vmem:[#allocation8 + $0x40] sm:$0xff]
        %v819 = vld [vmem:[#allocation8 + $0x48] sm:$0xff]
        %v820 = vld [vmem:[#allocation8 + $0x50] sm:$0xff]
        %v821 = vld [vmem:[#allocation8 + $0x58] sm:$0xff]
        %v822 = vld [vmem:[#allocation8 + $0x60] sm:$0xff]
        %v823 = vld [vmem:[#allocation8 + $0x68] sm:$0xff]
        %v824 = vld [vmem:[#allocation8 + $0x70] sm:$0xff]
        %v825 = vld [vmem:[#allocation8 + $0x78] sm:$0xff]
        %v826 = vld [vmem:[%s3] sm:$0x1]
        %v828 = vlaneseq
        %v829 = vshrl.u32 %v828, 7
        %v830 = vsub.s32 0, %v829
        %v831 = vrot.slane %v826, %v830
        %833 = vmatprep.subr.mxu0 0.0
        %834 = vmatpush1.msra.mxu0 %v810
        %835 = vmatprep.subr.mxu0 0.0
        %836 = vmatpush1.msra.mxu0 %v811
        %837 = vmatprep.subr.mxu0 0.0
        %838 = vmatpush1.msra.mxu0 %v812
        %839 = vmatprep.subr.mxu0 0.0
        %840 = vmatpush1.msra.mxu0 %v813
        %841 = vmatprep.subr.mxu0 0.0
        %842 = vmatpush1.msra.mxu0 %v814
        %843 = vmatprep.subr.mxu0 0.0
        %844 = vmatpush1.msra.mxu0 %v815
        %845 = vmatprep.subr.mxu0 0.0
        %846 = vmatpush1.msra.mxu0 %v816
        %847 = vmatprep.subr.mxu0 0.0
        %848 = vmatpush1.msra.mxu0 %v817
        %849 = vmatprep.subr.mxu0 0.0
        %850 = vmatpush1.msra.mxu0 %v818
        %851 = vmatprep.subr.mxu0 0.0
        %852 = vmatpush1.msra.mxu0 %v819
        %853 = vmatprep.subr.mxu0 0.0
        %854 = vmatpush1.msra.mxu0 %v820
        %855 = vmatprep.subr.mxu0 0.0
        %856 = vmatpush1.msra.mxu0 %v821
        %857 = vmatprep.subr.mxu0 0.0
        %858 = vmatpush1.msra.mxu0 %v822
        %859 = vmatprep.subr.mxu0 0.0
        %860 = vmatpush1.msra.mxu0 %v823
        %861 = vmatprep.subr.mxu0 0.0
        %862 = vmatpush1.msra.mxu0 %v824
        %863 = vmatprep.subr.mxu0 0.0
        %864 = vmatpush1.msra.mxu0 %v825
        %865 = vmatprep.subr.mxu0 0.0
        %866 = vmatpush1.msra.mxu0 0.0
        %867 = vmatprep.subr.mxu0 0.0
        %868 = vmatpush1.msra.mxu0 0.0
        %869 = vmatprep.subr.mxu0 0.0
        %870 = vmatpush1.msra.mxu0 0.0
        %871 = vmatprep.subr.mxu0 0.0
        %872 = vmatpush1.msra.mxu0 0.0
        %873 = vmatprep.subr.mxu0 0.0
        %874 = vmatpush1.msra.mxu0 0.0
        %875 = vmatprep.subr.mxu0 0.0
        %876 = vmatpush1.msra.mxu0 0.0
        %877 = vmatprep.subr.mxu0 0.0
        %878 = vmatpush1.msra.mxu0 0.0
        %879 = vmatprep.subr.mxu0 0.0
        %880 = vmatpush1.msra.mxu0 0.0
        %881 = vmatprep.subr.mxu0 0.0
        %882 = vmatpush1.msra.mxu0 0.0
        %883 = vmatprep.subr.mxu0 0.0
        %884 = vmatpush1.msra.mxu0 0.0
        %885 = vmatprep.subr.mxu0 0.0
        %886 = vmatpush1.msra.mxu0 0.0
        %887 = vmatprep.subr.mxu0 0.0
        %888 = vmatpush1.msra.mxu0 0.0
        %889 = vmatprep.subr.mxu0 0.0
        %890 = vmatpush1.msra.mxu0 0.0
        %891 = vmatprep.subr.mxu0 0.0
        %892 = vmatpush1.msra.mxu0 0.0
        %893 = vmatprep.subr.mxu0 0.0
        %894 = vmatpush1.msra.mxu0 0.0
        %895 = vmatprep.subr.mxu0 0.0
        %896 = vmatpush1.msra.mxu0 0.0
        %897 = vmatprep.mubr.f32.mxu0 0.0
        %898 = vmatmul.mubr.f32.gmra.mrb[0].mxu0 %v806
        %v899 = vpop.f32.mrb[0].mxu0
        %v900 = vadd.f32 %v831, %v899
        %v901 = vpop.f32.mrb[0].mxu0
        %902 = vmatprep.mubr.f32.mxu0 0.0
        %903 = vmatmul.mubr.f32.gmra.mrb[0].mxu0 %v807
        %v904 = vpop.f32.mrb[0].mxu0
        %v905 = vadd.f32 %v831, %v904
        %v906 = vpop.f32.mrb[0].mxu0
        %907 = vmatprep.mubr.f32.mxu0 0.0
        %908 = vmatmul.mubr.f32.gmra.mrb[0].mxu0 %v808
        %v909 = vpop.f32.mrb[0].mxu0
        %v910 = vadd.f32 %v831, %v909
        %v911 = vpop.f32.mrb[0].mxu0
        %912 = vmatprep.mubr.f32.mxu0 0.0
        %913 = vmatmul.mubr.f32.gmra.mrb[0].mxu0 %v809
        %v914 = vpop.f32.mrb[0].mxu0
        %v915 = vadd.f32 %v831, %v914
        %v916 = vpop.f32.mrb[0].mxu0
        %917 = vdwg.mxu0
        %v918 = vmax.f32 %v900, 0.0
        %v919 = vmax.f32 %v905, 0.0
        %v920 = vmax.f32 %v910, 0.0
        %v921 = vmax.f32 %v915, 0.0
        %922 = vst [vmem:[#allocation2 + $0x1] sm:$0xff] %v918
        %923 = vst [vmem:[#allocation2 + $0x9] sm:$0xff] %v919
        %s924 = scalar_lea.vmem [#allocation2], 408
        %925 = vst [vmem:[%s924 + $0x1] sm:$0xff] %v920
        %926 = vst [vmem:[%s924 + $0x9] sm:$0xff] %v921
        %p927 = scmp.eq.s32.totalorder %s32, 0
        // Predicated region
        $region89: #{tpu_custom_call.1} parent=47 // pred_check
          %p928 = pneg %p927
        $region90: #{tpu_custom_call.1} parent=47 // pred_check_branch
          %930 = sbr.rel (%p928) target = $region92
        $region91: #{tpu_custom_call.1} parent=47 // pred_region
          %931 = vst [vmem:[#allocation2 + $0x1] sm:$0xff] 0.0
          %932 = vst [vmem:[#allocation2 + $0x9] sm:$0xff] 0.0
          %933 = vst [vmem:[%s924 + $0x1] sm:$0xff] 0.0
          %934 = vst [vmem:[%s924 + $0x9] sm:$0xff] 0.0
        $region92: #{tpu_custom_call.1} parent=47 // pred_fallthru
          _
        %v935 = vld [vmem:[#allocation2] sm:$0xff]
        %v936 = vld [vmem:[#allocation2 + $0x8] sm:$0xff]
        %v937 = vld [vmem:[#allocation2 + $0x18] sm:$0xff]
        %v938 = vld [vmem:[#allocation2 + $0x20] sm:$0xff]
        %v939 = vld [vmem:[#allocation2 + $0x30] sm:$0xff]
        %v940 = vld [vmem:[#allocation2 + $0x38] sm:$0xff]
        %v941 = vld [vmem:[#allocation2 + $0x48] sm:$0xff]
        %v942 = vld [vmem:[#allocation2 + $0x50] sm:$0xff]
        %v943 = vld [vmem:[#allocation2 + $0x60] sm:$0xff]
        %v944 = vld [vmem:[#allocation2 + $0x68] sm:$0xff]
        %v945 = vld [vmem:[#allocation2 + $0x78] sm:$0xff]
        %v946 = vld [vmem:[#allocation2 + $0x80] sm:$0xff]
        %v947 = vld [vmem:[#allocation2 + $0x90] sm:$0xff]
        %v948 = vld [vmem:[#allocation2 + $0x98] sm:$0xff]
        %v949 = vld [vmem:[#allocation2 + $0xa8] sm:$0xff]
        %v950 = vld [vmem:[#allocation2 + $0xb0] sm:$0xff]
        %v951 = vld [vmem:[#allocation2 + $0xc0] sm:$0xff]
        %v952 = vld [vmem:[#allocation2 + $0xc8] sm:$0xff]
        %v953 = vld [vmem:[#allocation2 + $0xd8] sm:$0xff]
        %v954 = vld [vmem:[#allocation2 + $0xe0] sm:$0xff]
        %v955 = vld [vmem:[#allocation2 + $0xf0] sm:$0xff]
        %v956 = vld [vmem:[#allocation2 + $0xf8] sm:$0xff]
        %v957 = vld [vmem:[#allocation2 + $0x108] sm:$0xff]
        %v958 = vld [vmem:[#allocation2 + $0x110] sm:$0xff]
        %v959 = vld [vmem:[#allocation2 + $0x120] sm:$0xff]
        %v960 = vld [vmem:[#allocation2 + $0x128] sm:$0xff]
        %v961 = vld [vmem:[#allocation2 + $0x138] sm:$0xff]
        %v962 = vld [vmem:[#allocation2 + $0x140] sm:$0xff]
        %v963 = vld [vmem:[#allocation2 + $0x150] sm:$0xff]
        %v964 = vld [vmem:[#allocation2 + $0x158] sm:$0xff]
        %v965 = vld [vmem:[#allocation2 + $0x168] sm:$0xff]
        %v966 = vld [vmem:[#allocation2 + $0x170] sm:$0xff]
        %v967 = vld [vmem:[#allocation10] sm:$0xff]
        %v968 = vld [vmem:[#allocation10 + $0x8] sm:$0xff]
        %v969 = vld [vmem:[#allocation10 + $0x10] sm:$0xff]
        %v970 = vld [vmem:[#allocation10 + $0x18] sm:$0xff]
        %v971 = vld [vmem:[#allocation10 + $0x20] sm:$0xff]
        %v972 = vld [vmem:[#allocation10 + $0x28] sm:$0xff]
        %v973 = vld [vmem:[#allocation10 + $0x30] sm:$0xff]
        %v974 = vld [vmem:[#allocation10 + $0x38] sm:$0xff]
        %v975 = vld [vmem:[#allocation10 + $0x40] sm:$0xff]
        %v976 = vld [vmem:[#allocation10 + $0x48] sm:$0xff]
        %v977 = vld [vmem:[#allocation10 + $0x50] sm:$0xff]
        %v978 = vld [vmem:[#allocation10 + $0x58] sm:$0xff]
        %v979 = vld [vmem:[#allocation10 + $0x60] sm:$0xff]
        %v980 = vld [vmem:[#allocation10 + $0x68] sm:$0xff]
        %v981 = vld [vmem:[#allocation10 + $0x70] sm:$0xff]
        %v982 = vld [vmem:[#allocation10 + $0x78] sm:$0xff]
        %v983 = vld [vmem:[#allocation2 + $0x1] sm:$0xff]
        %v984 = vld [vmem:[#allocation2 + $0x9] sm:$0xff]
        %v985 = vld [vmem:[#allocation2 + $0x19] sm:$0xff]
        %v986 = vld [vmem:[#allocation2 + $0x21] sm:$0xff]
        %v987 = vld [vmem:[#allocation2 + $0x31] sm:$0xff]
        %v988 = vld [vmem:[#allocation2 + $0x39] sm:$0xff]
        %v989 = vld [vmem:[#allocation2 + $0x49] sm:$0xff]
        %v990 = vld [vmem:[#allocation2 + $0x51] sm:$0xff]
        %v991 = vld [vmem:[#allocation2 + $0x61] sm:$0xff]
        %v992 = vld [vmem:[#allocation2 + $0x69] sm:$0xff]
        %v993 = vld [vmem:[#allocation2 + $0x79] sm:$0xff]
        %v994 = vld [vmem:[#allocation2 + $0x81] sm:$0xff]
        %v995 = vld [vmem:[#allocation2 + $0x91] sm:$0xff]
        %v996 = vld [vmem:[#allocation2 + $0x99] sm:$0xff]
        %v997 = vld [vmem:[#allocation2 + $0xa9] sm:$0xff]
        %v998 = vld [vmem:[#allocation2 + $0xb1] sm:$0xff]
        %v999 = vld [vmem:[#allocation2 + $0xc1] sm:$0xff]
        %v1000 = vld [vmem:[#allocation2 + $0xc9] sm:$0xff]
        %v1001 = vld [vmem:[#allocation2 + $0xd9] sm:$0xff]
        %v1002 = vld [vmem:[#allocation2 + $0xe1] sm:$0xff]
        %v1003 = vld [vmem:[#allocation2 + $0xf1] sm:$0xff]
        %v1004 = vld [vmem:[#allocation2 + $0xf9] sm:$0xff]
        %v1005 = vld [vmem:[#allocation2 + $0x109] sm:$0xff]
        %v1006 = vld [vmem:[#allocation2 + $0x111] sm:$0xff]
        %v1007 = vld [vmem:[#allocation2 + $0x121] sm:$0xff]
        %v1008 = vld [vmem:[#allocation2 + $0x129] sm:$0xff]
        %v1009 = vld [vmem:[#allocation2 + $0x139] sm:$0xff]
        %v1010 = vld [vmem:[#allocation2 + $0x141] sm:$0xff]
        %v1011 = vld [vmem:[#allocation2 + $0x151] sm:$0xff]
        %v1012 = vld [vmem:[#allocation2 + $0x159] sm:$0xff]
        %v1013 = vld [vmem:[#allocation2 + $0x169] sm:$0xff]
        %v1014 = vld [vmem:[#allocation2 + $0x171] sm:$0xff]
        %s1015 = scalar_lea.vmem [#allocation10], 128
        %v1016 = vld [vmem:[%s1015] sm:$0xff]
        %v1017 = vld [vmem:[%s1015 + $0x8] sm:$0xff]
        %v1018 = vld [vmem:[%s1015 + $0x10] sm:$0xff]
        %v1019 = vld [vmem:[%s1015 + $0x18] sm:$0xff]
        %v1020 = vld [vmem:[%s1015 + $0x20] sm:$0xff]
        %v1021 = vld [vmem:[%s1015 + $0x28] sm:$0xff]
        %v1022 = vld [vmem:[%s1015 + $0x30] sm:$0xff]
        %v1023 = vld [vmem:[%s1015 + $0x38] sm:$0xff]
        %v1024 = vld [vmem:[%s1015 + $0x40] sm:$0xff]
        %v1025 = vld [vmem:[%s1015 + $0x48] sm:$0xff]
        %v1026 = vld [vmem:[%s1015 + $0x50] sm:$0xff]
        %v1027 = vld [vmem:[%s1015 + $0x58] sm:$0xff]
        %v1028 = vld [vmem:[%s1015 + $0x60] sm:$0xff]
        %v1029 = vld [vmem:[%s1015 + $0x68] sm:$0xff]
        %v1030 = vld [vmem:[%s1015 + $0x70] sm:$0xff]
        %v1031 = vld [vmem:[%s1015 + $0x78] sm:$0xff]
        %1032 = vmatprep.subr.mxu0 0.0
        %1033 = vmatpush1.msra.mxu0 %v1016
        %1034 = vmatprep.subr.mxu0 0.0
        %1035 = vmatpush1.msra.mxu0 %v1017
        %1036 = vmatprep.subr.mxu0 0.0
        %1037 = vmatpush1.msra.mxu0 %v1018
        %1038 = vmatprep.subr.mxu0 0.0
        %1039 = vmatpush1.msra.mxu0 %v1019
        %1040 = vmatprep.subr.mxu0 0.0
        %1041 = vmatpush1.msra.mxu0 %v1020
        %1042 = vmatprep.subr.mxu0 0.0
        %1043 = vmatpush1.msra.mxu0 %v1021
        %1044 = vmatprep.subr.mxu0 0.0
        %1045 = vmatpush1.msra.mxu0 %v1022
        %1046 = vmatprep.subr.mxu0 0.0
        %1047 = vmatpush1.msra.mxu0 %v1023
        %1048 = vmatprep.subr.mxu0 0.0
        %1049 = vmatpush1.msra.mxu0 %v1024
        %1050 = vmatprep.subr.mxu0 0.0
        %1051 = vmatpush1.msra.mxu0 %v1025
        %1052 = vmatprep.subr.mxu0 0.0
        %1053 = vmatpush1.msra.mxu0 %v1026
        %1054 = vmatprep.subr.mxu0 0.0
        %1055 = vmatpush1.msra.mxu0 %v1027
        %1056 = vmatprep.subr.mxu0 0.0
        %1057 = vmatpush1.msra.mxu0 %v1028
        %1058 = vmatprep.subr.mxu0 0.0
        %1059 = vmatpush1.msra.mxu0 %v1029
        %1060 = vmatprep.subr.mxu0 0.0
        %1061 = vmatpush1.msra.mxu0 %v1030
        %1062 = vmatprep.subr.mxu0 0.0
        %1063 = vmatpush1.msra.mxu0 %v1031
        %1064 = vmatprep.subr.mxu0 0.0
        %1065 = vmatpush1.msra.mxu0 0.0
        %1066 = vmatprep.subr.mxu0 0.0
        %1067 = vmatpush1.msra.mxu0 0.0
        %1068 = vmatprep.subr.mxu0 0.0
        %1069 = vmatpush1.msra.mxu0 0.0
        %1070 = vmatprep.subr.mxu0 0.0
        %1071 = vmatpush1.msra.mxu0 0.0
        %1072 = vmatprep.subr.mxu0 0.0
        %1073 = vmatpush1.msra.mxu0 0.0
        %1074 = vmatprep.subr.mxu0 0.0
        %1075 = vmatpush1.msra.mxu0 0.0
        %1076 = vmatprep.subr.mxu0 0.0
        %1077 = vmatpush1.msra.mxu0 0.0
        %1078 = vmatprep.subr.mxu0 0.0
        %1079 = vmatpush1.msra.mxu0 0.0
        %1080 = vmatprep.subr.mxu0 0.0
        %1081 = vmatpush1.msra.mxu0 0.0
        %1082 = vmatprep.subr.mxu0 0.0
        %1083 = vmatpush1.msra.mxu0 0.0
        %1084 = vmatprep.subr.mxu0 0.0
        %1085 = vmatpush1.msra.mxu0 0.0
        %1086 = vmatprep.subr.mxu0 0.0
        %1087 = vmatpush1.msra.mxu0 0.0
        %1088 = vmatprep.subr.mxu0 0.0
        %1089 = vmatpush1.msra.mxu0 0.0
        %1090 = vmatprep.subr.mxu0 0.0
        %1091 = vmatpush1.msra.mxu0 0.0
        %1092 = vmatprep.subr.mxu0 0.0
        %1093 = vmatpush1.msra.mxu0 0.0
        %1094 = vmatprep.subr.mxu0 0.0
        %1095 = vmatpush1.msra.mxu0 0.0
        %1096 = vmatprep.mubr.f32.mxu0 0.0
        %1097 = vmatmul.mubr.f32.gmra.mrb[0].mxu0 %v983
        %v1098 = vpop.f32.mrb[0].mxu0
        %v1099 = vadd.f32 0.0, %v1098
        %v1100 = vpop.f32.mrb[0].mxu0
        %1101 = vmatprep.mubr.f32.mxu0 0.0
        %1102 = vmatmul.mubr.f32.gmra.mrb[0].mxu0 %v984
        %v1103 = vpop.f32.mrb[0].mxu0
        %v1104 = vadd.f32 0.0, %v1103
        %v1105 = vpop.f32.mrb[0].mxu0
        %1106 = vmatprep.mubr.f32.mxu0 0.0
        %1107 = vmatmul.mubr.f32.gmra.mrb[0].mxu0 %v985
        %v1108 = vpop.f32.mrb[0].mxu0
        %v1109 = vadd.f32 0.0, %v1108
        %v1110 = vpop.f32.mrb[0].mxu0
        %1111 = vmatprep.mubr.f32.mxu0 0.0
        %1112 = vmatmul.mubr.f32.gmra.mrb[0].mxu0 %v986
        %v1113 = vpop.f32.mrb[0].mxu0
        %v1114 = vadd.f32 0.0, %v1113
        %v1115 = vpop.f32.mrb[0].mxu0
        %1116 = vmatprep.mubr.f32.mxu0 0.0
        %1117 = vmatmul.mubr.f32.gmra.mrb[0].mxu0 %v987
        %v1118 = vpop.f32.mrb[0].mxu0
        %v1119 = vadd.f32 0.0, %v1118
        %v1120 = vpop.f32.mrb[0].mxu0
        %1121 = vmatprep.mubr.f32.mxu0 0.0
        %1122 = vmatmul.mubr.f32.gmra.mrb[0].mxu0 %v988
        %v1123 = vpop.f32.mrb[0].mxu0
        %v1124 = vadd.f32 0.0, %v1123
        %v1125 = vpop.f32.mrb[0].mxu0
        %1126 = vmatprep.mubr.f32.mxu0 0.0
        %1127 = vmatmul.mubr.f32.gmra.mrb[0].mxu0 %v989
        %v1128 = vpop.f32.mrb[0].mxu0
        %v1129 = vadd.f32 0.0, %v1128
        %v1130 = vpop.f32.mrb[0].mxu0
        %1131 = vmatprep.mubr.f32.mxu0 0.0
        %1132 = vmatmul.mubr.f32.gmra.mrb[0].mxu0 %v990
        %v1133 = vpop.f32.mrb[0].mxu0
        %v1134 = vadd.f32 0.0, %v1133
        %v1135 = vpop.f32.mrb[0].mxu0
        %1136 = vmatprep.mubr.f32.mxu0 0.0
        %1137 = vmatmul.mubr.f32.gmra.mrb[0].mxu0 %v991
        %v1138 = vpop.f32.mrb[0].mxu0
        %v1139 = vadd.f32 0.0, %v1138
        %v1140 = vpop.f32.mrb[0].mxu0
        %1141 = vmatprep.mubr.f32.mxu0 0.0
        %1142 = vmatmul.mubr.f32.gmra.mrb[0].mxu0 %v992
        %v1143 = vpop.f32.mrb[0].mxu0
        %v1144 = vadd.f32 0.0, %v1143
        %v1145 = vpop.f32.mrb[0].mxu0
        %1146 = vmatprep.mubr.f32.mxu0 0.0
        %1147 = vmatmul.mubr.f32.gmra.mrb[0].mxu0 %v993
        %v1148 = vpop.f32.mrb[0].mxu0
        %v1149 = vadd.f32 0.0, %v1148
        %v1150 = vpop.f32.mrb[0].mxu0
        %1151 = vmatprep.mubr.f32.mxu0 0.0
        %1152 = vmatmul.mubr.f32.gmra.mrb[0].mxu0 %v994
        %v1153 = vpop.f32.mrb[0].mxu0
        %v1154 = vadd.f32 0.0, %v1153
        %v1155 = vpop.f32.mrb[0].mxu0
        %1156 = vmatprep.mubr.f32.mxu0 0.0
        %1157 = vmatmul.mubr.f32.gmra.mrb[0].mxu0 %v995
        %v1158 = vpop.f32.mrb[0].mxu0
        %v1159 = vadd.f32 0.0, %v1158
        %v1160 = vpop.f32.mrb[0].mxu0
        %1161 = vmatprep.mubr.f32.mxu0 0.0
        %1162 = vmatmul.mubr.f32.gmra.mrb[0].mxu0 %v996
        %v1163 = vpop.f32.mrb[0].mxu0
        %v1164 = vadd.f32 0.0, %v1163
        %v1165 = vpop.f32.mrb[0].mxu0
        %1166 = vmatprep.mubr.f32.mxu0 0.0
        %1167 = vmatmul.mubr.f32.gmra.mrb[0].mxu0 %v997
        %v1168 = vpop.f32.mrb[0].mxu0
        %v1169 = vadd.f32 0.0, %v1168
        %v1170 = vpop.f32.mrb[0].mxu0
        %1171 = vmatprep.mubr.f32.mxu0 0.0
        %1172 = vmatmul.mubr.f32.gmra.mrb[0].mxu0 %v998
        %v1173 = vpop.f32.mrb[0].mxu0
        %v1174 = vadd.f32 0.0, %v1173
        %v1175 = vpop.f32.mrb[0].mxu0
        %1176 = vmatprep.mubr.f32.mxu0 0.0
        %1177 = vmatmul.mubr.f32.gmra.mrb[0].mxu0 %v999
        %v1178 = vpop.f32.mrb[0].mxu0
        %v1179 = vadd.f32 0.0, %v1178
        %v1180 = vpop.f32.mrb[0].mxu0
        %1181 = vmatprep.mubr.f32.mxu0 0.0
        %1182 = vmatmul.mubr.f32.gmra.mrb[0].mxu0 %v1000
        %v1183 = vpop.f32.mrb[0].mxu0
        %v1184 = vadd.f32 0.0, %v1183
        %v1185 = vpop.f32.mrb[0].mxu0
        %1186 = vmatprep.mubr.f32.mxu0 0.0
        %1187 = vmatmul.mubr.f32.gmra.mrb[0].mxu0 %v1001
        %v1188 = vpop.f32.mrb[0].mxu0
        %v1189 = vadd.f32 0.0, %v1188
        %v1190 = vpop.f32.mrb[0].mxu0
        %1191 = vmatprep.mubr.f32.mxu0 0.0
        %1192 = vmatmul.mubr.f32.gmra.mrb[0].mxu0 %v1002
        %v1193 = vpop.f32.mrb[0].mxu0
        %v1194 = vadd.f32 0.0, %v1193
        %v1195 = vpop.f32.mrb[0].mxu0
        %1196 = vmatprep.mubr.f32.mxu0 0.0
        %1197 = vmatmul.mubr.f32.gmra.mrb[0].mxu0 %v1003
        %v1198 = vpop.f32.mrb[0].mxu0
        %v1199 = vadd.f32 0.0, %v1198
        %v1200 = vpop.f32.mrb[0].mxu0
        %1201 = vmatprep.mubr.f32.mxu0 0.0
        %1202 = vmatmul.mubr.f32.gmra.mrb[0].mxu0 %v1004
        %v1203 = vpop.f32.mrb[0].mxu0
        %v1204 = vadd.f32 0.0, %v1203
        %v1205 = vpop.f32.mrb[0].mxu0
        %1206 = vmatprep.mubr.f32.mxu0 0.0
        %1207 = vmatmul.mubr.f32.gmra.mrb[0].mxu0 %v1005
        %v1208 = vpop.f32.mrb[0].mxu0
        %v1209 = vadd.f32 0.0, %v1208
        %v1210 = vpop.f32.mrb[0].mxu0
        %1211 = vmatprep.mubr.f32.mxu0 0.0
        %1212 = vmatmul.mubr.f32.gmra.mrb[0].mxu0 %v1006
        %v1213 = vpop.f32.mrb[0].mxu0
        %v1214 = vadd.f32 0.0, %v1213
        %v1215 = vpop.f32.mrb[0].mxu0
        %1216 = vmatprep.mubr.f32.mxu0 0.0
        %1217 = vmatmul.mubr.f32.gmra.mrb[0].mxu0 %v1007
        %v1218 = vpop.f32.mrb[0].mxu0
        %v1219 = vadd.f32 0.0, %v1218
        %v1220 = vpop.f32.mrb[0].mxu0
        %1221 = vmatprep.mubr.f32.mxu0 0.0
        %1222 = vmatmul.mubr.f32.gmra.mrb[0].mxu0 %v1008
        %v1223 = vpop.f32.mrb[0].mxu0
        %v1224 = vadd.f32 0.0, %v1223
        %v1225 = vpop.f32.mrb[0].mxu0
        %1226 = vmatprep.mubr.f32.mxu0 0.0
        %1227 = vmatmul.mubr.f32.gmra.mrb[0].mxu0 %v1009
        %v1228 = vpop.f32.mrb[0].mxu0
        %v1229 = vadd.f32 0.0, %v1228
        %v1230 = vpop.f32.mrb[0].mxu0
        %1231 = vmatprep.mubr.f32.mxu0 0.0
        %1232 = vmatmul.mubr.f32.gmra.mrb[0].mxu0 %v1010
        %v1233 = vpop.f32.mrb[0].mxu0
        %v1234 = vadd.f32 0.0, %v1233
        %v1235 = vpop.f32.mrb[0].mxu0
        %1236 = vmatprep.mubr.f32.mxu0 0.0
        %1237 = vmatmul.mubr.f32.gmra.mrb[0].mxu0 %v1011
        %v1238 = vpop.f32.mrb[0].mxu0
        %v1239 = vadd.f32 0.0, %v1238
        %v1240 = vpop.f32.mrb[0].mxu0
        %1241 = vmatprep.mubr.f32.mxu0 0.0
        %1242 = vmatmul.mubr.f32.gmra.mrb[0].mxu0 %v1012
        %v1243 = vpop.f32.mrb[0].mxu0
        %v1244 = vadd.f32 0.0, %v1243
        %v1245 = vpop.f32.mrb[0].mxu0
        %1246 = vmatprep.mubr.f32.mxu0 0.0
        %1247 = vmatmul.mubr.f32.gmra.mrb[0].mxu0 %v1013
        %v1248 = vpop.f32.mrb[0].mxu0
        %v1249 = vadd.f32 0.0, %v1248
        %v1250 = vpop.f32.mrb[0].mxu0
        %1251 = vmatprep.mubr.f32.mxu0 0.0
        %1252 = vmatmul.mubr.f32.gmra.mrb[0].mxu0 %v1014
        %v1253 = vpop.f32.mrb[0].mxu0
        %v1254 = vadd.f32 0.0, %v1253
        %v1255 = vpop.f32.mrb[0].mxu0
        %1256 = vdwg.mxu0
        %1257 = vmatprep.subr.mxu0 0.0
        %1258 = vmatpush1.msra.mxu0 %v967
        %1259 = vmatprep.subr.mxu0 0.0
        %1260 = vmatpush1.msra.mxu0 %v968
        %1261 = vmatprep.subr.mxu0 0.0
        %1262 = vmatpush1.msra.mxu0 %v969
        %1263 = vmatprep.subr.mxu0 0.0
        %1264 = vmatpush1.msra.mxu0 %v970
        %1265 = vmatprep.subr.mxu0 0.0
        %1266 = vmatpush1.msra.mxu0 %v971
        %1267 = vmatprep.subr.mxu0 0.0
        %1268 = vmatpush1.msra.mxu0 %v972
        %1269 = vmatprep.subr.mxu0 0.0
        %1270 = vmatpush1.msra.mxu0 %v973
        %1271 = vmatprep.subr.mxu0 0.0
        %1272 = vmatpush1.msra.mxu0 %v974
        %1273 = vmatprep.subr.mxu0 0.0
        %1274 = vmatpush1.msra.mxu0 %v975
        %1275 = vmatprep.subr.mxu0 0.0
        %1276 = vmatpush1.msra.mxu0 %v976
        %1277 = vmatprep.subr.mxu0 0.0
        %1278 = vmatpush1.msra.mxu0 %v977
        %1279 = vmatprep.subr.mxu0 0.0
        %1280 = vmatpush1.msra.mxu0 %v978
        %1281 = vmatprep.subr.mxu0 0.0
        %1282 = vmatpush1.msra.mxu0 %v979
        %1283 = vmatprep.subr.mxu0 0.0
        %1284 = vmatpush1.msra.mxu0 %v980
        %1285 = vmatprep.subr.mxu0 0.0
        %1286 = vmatpush1.msra.mxu0 %v981
        %1287 = vmatprep.subr.mxu0 0.0
        %1288 = vmatpush1.msra.mxu0 %v982
        %1289 = vmatprep.subr.mxu0 0.0
        %1290 = vmatpush1.msra.mxu0 0.0
        %1291 = vmatprep.subr.mxu0 0.0
        %1292 = vmatpush1.msra.mxu0 0.0
        %1293 = vmatprep.subr.mxu0 0.0
        %1294 = vmatpush1.msra.mxu0 0.0
        %1295 = vmatprep.subr.mxu0 0.0
        %1296 = vmatpush1.msra.mxu0 0.0
        %1297 = vmatprep.subr.mxu0 0.0
        %1298 = vmatpush1.msra.mxu0 0.0
        %1299 = vmatprep.subr.mxu0 0.0
        %1300 = vmatpush1.msra.mxu0 0.0
        %1301 = vmatprep.subr.mxu0 0.0
        %1302 = vmatpush1.msra.mxu0 0.0
        %1303 = vmatprep.subr.mxu0 0.0
        %1304 = vmatpush1.msra.mxu0 0.0
        %1305 = vmatprep.subr.mxu0 0.0
        %1306 = vmatpush1.msra.mxu0 0.0
        %1307 = vmatprep.subr.mxu0 0.0
        %1308 = vmatpush1.msra.mxu0 0.0
        %1309 = vmatprep.subr.mxu0 0.0
        %1310 = vmatpush1.msra.mxu0 0.0
        %1311 = vmatprep.subr.mxu0 0.0
        %1312 = vmatpush1.msra.mxu0 0.0
        %1313 = vmatprep.subr.mxu0 0.0
        %1314 = vmatpush1.msra.mxu0 0.0
        %1315 = vmatprep.subr.mxu0 0.0
        %1316 = vmatpush1.msra.mxu0 0.0
        %1317 = vmatprep.subr.mxu0 0.0
        %1318 = vmatpush1.msra.mxu0 0.0
        %1319 = vmatprep.subr.mxu0 0.0
        %1320 = vmatpush1.msra.mxu0 0.0
        %1321 = vmatprep.mubr.f32.mxu0 0.0
        %1322 = vmatmul.mubr.f32.gmra.mrb[0].mxu0 %v935
        %v1323 = vpop.f32.mrb[0].mxu0
        %v1324 = vadd.f32 %v1099, %v1323
        %v1325 = vpop.f32.mrb[0].mxu0
        %1326 = vmatprep.mubr.f32.mxu0 0.0
        %1327 = vmatmul.mubr.f32.gmra.mrb[0].mxu0 %v936
        %v1328 = vpop.f32.mrb[0].mxu0
        %v1329 = vadd.f32 %v1104, %v1328
        %v1330 = vpop.f32.mrb[0].mxu0
        %1331 = vmatprep.mubr.f32.mxu0 0.0
        %1332 = vmatmul.mubr.f32.gmra.mrb[0].mxu0 %v937
        %v1333 = vpop.f32.mrb[0].mxu0
        %v1334 = vadd.f32 %v1109, %v1333
        %v1335 = vpop.f32.mrb[0].mxu0
        %1336 = vmatprep.mubr.f32.mxu0 0.0
        %1337 = vmatmul.mubr.f32.gmra.mrb[0].mxu0 %v938
        %v1338 = vpop.f32.mrb[0].mxu0
        %v1339 = vadd.f32 %v1114, %v1338
        %v1340 = vpop.f32.mrb[0].mxu0
        %1341 = vmatprep.mubr.f32.mxu0 0.0
        %1342 = vmatmul.mubr.f32.gmra.mrb[0].mxu0 %v939
        %v1343 = vpop.f32.mrb[0].mxu0
        %v1344 = vadd.f32 %v1119, %v1343
        %v1345 = vpop.f32.mrb[0].mxu0
        %1346 = vmatprep.mubr.f32.mxu0 0.0
        %1347 = vmatmul.mubr.f32.gmra.mrb[0].mxu0 %v940
        %v1348 = vpop.f32.mrb[0].mxu0
        %v1349 = vadd.f32 %v1124, %v1348
        %v1350 = vpop.f32.mrb[0].mxu0
        %1351 = vmatprep.mubr.f32.mxu0 0.0
        %1352 = vmatmul.mubr.f32.gmra.mrb[0].mxu0 %v941
        %v1353 = vpop.f32.mrb[0].mxu0
        %v1354 = vadd.f32 %v1129, %v1353
        %v1355 = vpop.f32.mrb[0].mxu0
        %1356 = vmatprep.mubr.f32.mxu0 0.0
        %1357 = vmatmul.mubr.f32.gmra.mrb[0].mxu0 %v942
        %v1358 = vpop.f32.mrb[0].mxu0
        %v1359 = vadd.f32 %v1134, %v1358
        %v1360 = vpop.f32.mrb[0].mxu0
        %1361 = vmatprep.mubr.f32.mxu0 0.0
        %1362 = vmatmul.mubr.f32.gmra.mrb[0].mxu0 %v943
        %v1363 = vpop.f32.mrb[0].mxu0
        %v1364 = vadd.f32 %v1139, %v1363
        %v1365 = vpop.f32.mrb[0].mxu0
        %1366 = vmatprep.mubr.f32.mxu0 0.0
        %1367 = vmatmul.mubr.f32.gmra.mrb[0].mxu0 %v944
        %v1368 = vpop.f32.mrb[0].mxu0
        %v1369 = vadd.f32 %v1144, %v1368
        %v1370 = vpop.f32.mrb[0].mxu0
        %1371 = vmatprep.mubr.f32.mxu0 0.0
        %1372 = vmatmul.mubr.f32.gmra.mrb[0].mxu0 %v945
        %v1373 = vpop.f32.mrb[0].mxu0
        %v1374 = vadd.f32 %v1149, %v1373
        %v1375 = vpop.f32.mrb[0].mxu0
        %1376 = vmatprep.mubr.f32.mxu0 0.0
        %1377 = vmatmul.mubr.f32.gmra.mrb[0].mxu0 %v946
        %v1378 = vpop.f32.mrb[0].mxu0
        %v1379 = vadd.f32 %v1154, %v1378
        %v1380 = vpop.f32.mrb[0].mxu0
        %1381 = vmatprep.mubr.f32.mxu0 0.0
        %1382 = vmatmul.mubr.f32.gmra.mrb[0].mxu0 %v947
        %v1383 = vpop.f32.mrb[0].mxu0
        %v1384 = vadd.f32 %v1159, %v1383
        %v1385 = vpop.f32.mrb[0].mxu0
        %1386 = vmatprep.mubr.f32.mxu0 0.0
        %1387 = vmatmul.mubr.f32.gmra.mrb[0].mxu0 %v948
        %v1388 = vpop.f32.mrb[0].mxu0
        %v1389 = vadd.f32 %v1164, %v1388
        %v1390 = vpop.f32.mrb[0].mxu0
        %1391 = vmatprep.mubr.f32.mxu0 0.0
        %1392 = vmatmul.mubr.f32.gmra.mrb[0].mxu0 %v949
        %v1393 = vpop.f32.mrb[0].mxu0
        %v1394 = vadd.f32 %v1169, %v1393
        %v1395 = vpop.f32.mrb[0].mxu0
        %1396 = vmatprep.mubr.f32.mxu0 0.0
        %1397 = vmatmul.mubr.f32.gmra.mrb[0].mxu0 %v950
        %v1398 = vpop.f32.mrb[0].mxu0
        %v1399 = vadd.f32 %v1174, %v1398
        %v1400 = vpop.f32.mrb[0].mxu0
        %1401 = vmatprep.mubr.f32.mxu0 0.0
        %1402 = vmatmul.mubr.f32.gmra.mrb[0].mxu0 %v951
        %v1403 = vpop.f32.mrb[0].mxu0
        %v1404 = vadd.f32 %v1179, %v1403
        %v1405 = vpop.f32.mrb[0].mxu0
        %1406 = vmatprep.mubr.f32.mxu0 0.0
        %1407 = vmatmul.mubr.f32.gmra.mrb[0].mxu0 %v952
        %v1408 = vpop.f32.mrb[0].mxu0
        %v1409 = vadd.f32 %v1184, %v1408
        %v1410 = vpop.f32.mrb[0].mxu0
        %1411 = vmatprep.mubr.f32.mxu0 0.0
        %1412 = vmatmul.mubr.f32.gmra.mrb[0].mxu0 %v953
        %v1413 = vpop.f32.mrb[0].mxu0
        %v1414 = vadd.f32 %v1189, %v1413
        %v1415 = vpop.f32.mrb[0].mxu0
        %1416 = vmatprep.mubr.f32.mxu0 0.0
        %1417 = vmatmul.mubr.f32.gmra.mrb[0].mxu0 %v954
        %v1418 = vpop.f32.mrb[0].mxu0
        %v1419 = vadd.f32 %v1194, %v1418
        %v1420 = vpop.f32.mrb[0].mxu0
        %1421 = vmatprep.mubr.f32.mxu0 0.0
        %1422 = vmatmul.mubr.f32.gmra.mrb[0].mxu0 %v955
        %v1423 = vpop.f32.mrb[0].mxu0
        %v1424 = vadd.f32 %v1199, %v1423
        %v1425 = vpop.f32.mrb[0].mxu0
        %1426 = vmatprep.mubr.f32.mxu0 0.0
        %1427 = vmatmul.mubr.f32.gmra.mrb[0].mxu0 %v956
        %v1428 = vpop.f32.mrb[0].mxu0
        %v1429 = vadd.f32 %v1204, %v1428
        %v1430 = vpop.f32.mrb[0].mxu0
        %1431 = vmatprep.mubr.f32.mxu0 0.0
        %1432 = vmatmul.mubr.f32.gmra.mrb[0].mxu0 %v957
        %v1433 = vpop.f32.mrb[0].mxu0
        %v1434 = vadd.f32 %v1209, %v1433
        %v1435 = vpop.f32.mrb[0].mxu0
        %1436 = vmatprep.mubr.f32.mxu0 0.0
        %1437 = vmatmul.mubr.f32.gmra.mrb[0].mxu0 %v958
        %v1438 = vpop.f32.mrb[0].mxu0
        %v1439 = vadd.f32 %v1214, %v1438
        %v1440 = vpop.f32.mrb[0].mxu0
        %1441 = vmatprep.mubr.f32.mxu0 0.0
        %1442 = vmatmul.mubr.f32.gmra.mrb[0].mxu0 %v959
        %v1443 = vpop.f32.mrb[0].mxu0
        %v1444 = vadd.f32 %v1219, %v1443
        %v1445 = vpop.f32.mrb[0].mxu0
        %1446 = vmatprep.mubr.f32.mxu0 0.0
        %1447 = vmatmul.mubr.f32.gmra.mrb[0].mxu0 %v960
        %v1448 = vpop.f32.mrb[0].mxu0
        %v1449 = vadd.f32 %v1224, %v1448
        %v1450 = vpop.f32.mrb[0].mxu0
        %1451 = vmatprep.mubr.f32.mxu0 0.0
        %1452 = vmatmul.mubr.f32.gmra.mrb[0].mxu0 %v961
        %v1453 = vpop.f32.mrb[0].mxu0
        %v1454 = vadd.f32 %v1229, %v1453
        %v1455 = vpop.f32.mrb[0].mxu0
        %1456 = vmatprep.mubr.f32.mxu0 0.0
        %1457 = vmatmul.mubr.f32.gmra.mrb[0].mxu0 %v962
        %v1458 = vpop.f32.mrb[0].mxu0
        %v1459 = vadd.f32 %v1234, %v1458
        %v1460 = vpop.f32.mrb[0].mxu0
        %1461 = vmatprep.mubr.f32.mxu0 0.0
        %1462 = vmatmul.mubr.f32.gmra.mrb[0].mxu0 %v963
        %v1463 = vpop.f32.mrb[0].mxu0
        %v1464 = vadd.f32 %v1239, %v1463
        %v1465 = vpop.f32.mrb[0].mxu0
        %1466 = vmatprep.mubr.f32.mxu0 0.0
        %1467 = vmatmul.mubr.f32.gmra.mrb[0].mxu0 %v964
        %v1468 = vpop.f32.mrb[0].mxu0
        %v1469 = vadd.f32 %v1244, %v1468
        %v1470 = vpop.f32.mrb[0].mxu0
        %1471 = vmatprep.mubr.f32.mxu0 0.0
        %1472 = vmatmul.mubr.f32.gmra.mrb[0].mxu0 %v965
        %v1473 = vpop.f32.mrb[0].mxu0
        %v1474 = vadd.f32 %v1249, %v1473
        %v1475 = vpop.f32.mrb[0].mxu0
        %1476 = vmatprep.mubr.f32.mxu0 0.0
        %1477 = vmatmul.mubr.f32.gmra.mrb[0].mxu0 %v966
        %v1478 = vpop.f32.mrb[0].mxu0
        %v1479 = vadd.f32 %v1254, %v1478
        %v1480 = vpop.f32.mrb[0].mxu0
        %1481 = vdwg.mxu0
        %v1482 = vld [vmem:[#allocation2 + $0x2] sm:$0xff]
        %v1483 = vld [vmem:[#allocation2 + $0xa] sm:$0xff]
        %v1484 = vld [vmem:[#allocation2 + $0x1a] sm:$0xff]
        %v1485 = vld [vmem:[#allocation2 + $0x22] sm:$0xff]
        %v1486 = vld [vmem:[#allocation2 + $0x32] sm:$0xff]
        %v1487 = vld [vmem:[#allocation2 + $0x3a] sm:$0xff]
        %v1488 = vld [vmem:[#allocation2 + $0x4a] sm:$0xff]
        %v1489 = vld [vmem:[#allocation2 + $0x52] sm:$0xff]
        %v1490 = vld [vmem:[#allocation2 + $0x62] sm:$0xff]
        %v1491 = vld [vmem:[#allocation2 + $0x6a] sm:$0xff]
        %v1492 = vld [vmem:[#allocation2 + $0x7a] sm:$0xff]
        %v1493 = vld [vmem:[#allocation2 + $0x82] sm:$0xff]
        %v1494 = vld [vmem:[#allocation2 + $0x92] sm:$0xff]
        %v1495 = vld [vmem:[#allocation2 + $0x9a] sm:$0xff]
        %v1496 = vld [vmem:[#allocation2 + $0xaa] sm:$0xff]
        %v1497 = vld [vmem:[#allocation2 + $0xb2] sm:$0xff]
        %v1498 = vld [vmem:[#allocation2 + $0xc2] sm:$0xff]
        %v1499 = vld [vmem:[#allocation2 + $0xca] sm:$0xff]
        %v1500 = vld [vmem:[#allocation2 + $0xda] sm:$0xff]
        %v1501 = vld [vmem:[#allocation2 + $0xe2] sm:$0xff]
        %v1502 = vld [vmem:[#allocation2 + $0xf2] sm:$0xff]
        %v1503 = vld [vmem:[#allocation2 + $0xfa] sm:$0xff]
        %v1504 = vld [vmem:[#allocation2 + $0x10a] sm:$0xff]
        %v1505 = vld [vmem:[#allocation2 + $0x112] sm:$0xff]
        %v1506 = vld [vmem:[#allocation2 + $0x122] sm:$0xff]
        %v1507 = vld [vmem:[#allocation2 + $0x12a] sm:$0xff]
        %v1508 = vld [vmem:[#allocation2 + $0x13a] sm:$0xff]
        %v1509 = vld [vmem:[#allocation2 + $0x142] sm:$0xff]
        %v1510 = vld [vmem:[#allocation2 + $0x152] sm:$0xff]
        %v1511 = vld [vmem:[#allocation2 + $0x15a] sm:$0xff]
        %v1512 = vld [vmem:[#allocation2 + $0x16a] sm:$0xff]
        %v1513 = vld [vmem:[#allocation2 + $0x172] sm:$0xff]
        %s1514 = scalar_lea.vmem [#allocation10], 256
        %v1515 = vld [vmem:[%s1514] sm:$0xff]
        %v1516 = vld [vmem:[%s1514 + $0x8] sm:$0xff]
        %v1517 = vld [vmem:[%s1514 + $0x10] sm:$0xff]
        %v1518 = vld [vmem:[%s1514 + $0x18] sm:$0xff]
        %v1519 = vld [vmem:[%s1514 + $0x20] sm:$0xff]
        %v1520 = vld [vmem:[%s1514 + $0x28] sm:$0xff]
        %v1521 = vld [vmem:[%s1514 + $0x30] sm:$0xff]
        %v1522 = vld [vmem:[%s1514 + $0x38] sm:$0xff]
        %v1523 = vld [vmem:[%s1514 + $0x40] sm:$0xff]
        %v1524 = vld [vmem:[%s1514 + $0x48] sm:$0xff]
        %v1525 = vld [vmem:[%s1514 + $0x50] sm:$0xff]
        %v1526 = vld [vmem:[%s1514 + $0x58] sm:$0xff]
        %v1527 = vld [vmem:[%s1514 + $0x60] sm:$0xff]
        %v1528 = vld [vmem:[%s1514 + $0x68] sm:$0xff]
        %v1529 = vld [vmem:[%s1514 + $0x70] sm:$0xff]
        %v1530 = vld [vmem:[%s1514 + $0x78] sm:$0xff]
        %1531 = vmatprep.subr.mxu0 0.0
        %1532 = vmatpush1.msra.mxu0 %v1515
        %1533 = vmatprep.subr.mxu0 0.0
        %1534 = vmatpush1.msra.mxu0 %v1516
        %1535 = vmatprep.subr.mxu0 0.0
        %1536 = vmatpush1.msra.mxu0 %v1517
        %1537 = vmatprep.subr.mxu0 0.0
        %1538 = vmatpush1.msra.mxu0 %v1518
        %1539 = vmatprep.subr.mxu0 0.0
        %1540 = vmatpush1.msra.mxu0 %v1519
        %1541 = vmatprep.subr.mxu0 0.0
        %1542 = vmatpush1.msra.mxu0 %v1520
        %1543 = vmatprep.subr.mxu0 0.0
        %1544 = vmatpush1.msra.mxu0 %v1521
        %1545 = vmatprep.subr.mxu0 0.0
        %1546 = vmatpush1.msra.mxu0 %v1522
        %1547 = vmatprep.subr.mxu0 0.0
        %1548 = vmatpush1.msra.mxu0 %v1523
        %1549 = vmatprep.subr.mxu0 0.0
        %1550 = vmatpush1.msra.mxu0 %v1524
        %1551 = vmatprep.subr.mxu0 0.0
        %1552 = vmatpush1.msra.mxu0 %v1525
        %1553 = vmatprep.subr.mxu0 0.0
        %1554 = vmatpush1.msra.mxu0 %v1526
        %1555 = vmatprep.subr.mxu0 0.0
        %1556 = vmatpush1.msra.mxu0 %v1527
        %1557 = vmatprep.subr.mxu0 0.0
        %1558 = vmatpush1.msra.mxu0 %v1528
        %1559 = vmatprep.subr.mxu0 0.0
        %1560 = vmatpush1.msra.mxu0 %v1529
        %1561 = vmatprep.subr.mxu0 0.0
        %1562 = vmatpush1.msra.mxu0 %v1530
        %1563 = vmatprep.subr.mxu0 0.0
        %1564 = vmatpush1.msra.mxu0 0.0
        %1565 = vmatprep.subr.mxu0 0.0
        %1566 = vmatpush1.msra.mxu0 0.0
        %1567 = vmatprep.subr.mxu0 0.0
        %1568 = vmatpush1.msra.mxu0 0.0
        %1569 = vmatprep.subr.mxu0 0.0
        %1570 = vmatpush1.msra.mxu0 0.0
        %1571 = vmatprep.subr.mxu0 0.0
        %1572 = vmatpush1.msra.mxu0 0.0
        %1573 = vmatprep.subr.mxu0 0.0
        %1574 = vmatpush1.msra.mxu0 0.0
        %1575 = vmatprep.subr.mxu0 0.0
        %1576 = vmatpush1.msra.mxu0 0.0
        %1577 = vmatprep.subr.mxu0 0.0
        %1578 = vmatpush1.msra.mxu0 0.0
        %1579 = vmatprep.subr.mxu0 0.0
        %1580 = vmatpush1.msra.mxu0 0.0
        %1581 = vmatprep.subr.mxu0 0.0
        %1582 = vmatpush1.msra.mxu0 0.0
        %1583 = vmatprep.subr.mxu0 0.0
        %1584 = vmatpush1.msra.mxu0 0.0
        %1585 = vmatprep.subr.mxu0 0.0
        %1586 = vmatpush1.msra.mxu0 0.0
        %1587 = vmatprep.subr.mxu0 0.0
        %1588 = vmatpush1.msra.mxu0 0.0
        %1589 = vmatprep.subr.mxu0 0.0
        %1590 = vmatpush1.msra.mxu0 0.0
        %1591 = vmatprep.subr.mxu0 0.0
        %1592 = vmatpush1.msra.mxu0 0.0
        %1593 = vmatprep.subr.mxu0 0.0
        %1594 = vmatpush1.msra.mxu0 0.0
        %1595 = vmatprep.mubr.f32.mxu0 0.0
        %1596 = vmatmul.mubr.f32.gmra.mrb[0].mxu0 %v1482
        %v1597 = vpop.f32.mrb[0].mxu0
        %v1598 = vadd.f32 0.0, %v1597
        %v1599 = vpop.f32.mrb[0].mxu0
        %1600 = vmatprep.mubr.f32.mxu0 0.0
        %1601 = vmatmul.mubr.f32.gmra.mrb[0].mxu0 %v1483
        %v1602 = vpop.f32.mrb[0].mxu0
        %v1603 = vadd.f32 0.0, %v1602
        %v1604 = vpop.f32.mrb[0].mxu0
        %1605 = vmatprep.mubr.f32.mxu0 0.0
        %1606 = vmatmul.mubr.f32.gmra.mrb[0].mxu0 %v1484
        %v1607 = vpop.f32.mrb[0].mxu0
        %v1608 = vadd.f32 0.0, %v1607
        %v1609 = vpop.f32.mrb[0].mxu0
        %1610 = vmatprep.mubr.f32.mxu0 0.0
        %1611 = vmatmul.mubr.f32.gmra.mrb[0].mxu0 %v1485
        %v1612 = vpop.f32.mrb[0].mxu0
        %v1613 = vadd.f32 0.0, %v1612
        %v1614 = vpop.f32.mrb[0].mxu0
        %1615 = vmatprep.mubr.f32.mxu0 0.0
        %1616 = vmatmul.mubr.f32.gmra.mrb[0].mxu0 %v1486
        %v1617 = vpop.f32.mrb[0].mxu0
        %v1618 = vadd.f32 0.0, %v1617
        %v1619 = vpop.f32.mrb[0].mxu0
        %1620 = vmatprep.mubr.f32.mxu0 0.0
        %1621 = vmatmul.mubr.f32.gmra.mrb[0].mxu0 %v1487
        %v1622 = vpop.f32.mrb[0].mxu0
        %v1623 = vadd.f32 0.0, %v1622
        %v1624 = vpop.f32.mrb[0].mxu0
        %1625 = vmatprep.mubr.f32.mxu0 0.0
        %1626 = vmatmul.mubr.f32.gmra.mrb[0].mxu0 %v1488
        %v1627 = vpop.f32.mrb[0].mxu0
        %v1628 = vadd.f32 0.0, %v1627
        %v1629 = vpop.f32.mrb[0].mxu0
        %1630 = vmatprep.mubr.f32.mxu0 0.0
        %1631 = vmatmul.mubr.f32.gmra.mrb[0].mxu0 %v1489
        %v1632 = vpop.f32.mrb[0].mxu0
        %v1633 = vadd.f32 0.0, %v1632
        %v1634 = vpop.f32.mrb[0].mxu0
        %1635 = vmatprep.mubr.f32.mxu0 0.0
        %1636 = vmatmul.mubr.f32.gmra.mrb[0].mxu0 %v1490
        %v1637 = vpop.f32.mrb[0].mxu0
        %v1638 = vadd.f32 0.0, %v1637
        %v1639 = vpop.f32.mrb[0].mxu0
        %1640 = vmatprep.mubr.f32.mxu0 0.0
        %1641 = vmatmul.mubr.f32.gmra.mrb[0].mxu0 %v1491
        %v1642 = vpop.f32.mrb[0].mxu0
        %v1643 = vadd.f32 0.0, %v1642
        %v1644 = vpop.f32.mrb[0].mxu0
        %1645 = vmatprep.mubr.f32.mxu0 0.0
        %1646 = vmatmul.mubr.f32.gmra.mrb[0].mxu0 %v1492
        %v1647 = vpop.f32.mrb[0].mxu0
        %v1648 = vadd.f32 0.0, %v1647
        %v1649 = vpop.f32.mrb[0].mxu0
        %1650 = vmatprep.mubr.f32.mxu0 0.0
        %1651 = vmatmul.mubr.f32.gmra.mrb[0].mxu0 %v1493
        %v1652 = vpop.f32.mrb[0].mxu0
        %v1653 = vadd.f32 0.0, %v1652
        %v1654 = vpop.f32.mrb[0].mxu0
        %1655 = vmatprep.mubr.f32.mxu0 0.0
        %1656 = vmatmul.mubr.f32.gmra.mrb[0].mxu0 %v1494
        %v1657 = vpop.f32.mrb[0].mxu0
        %v1658 = vadd.f32 0.0, %v1657
        %v1659 = vpop.f32.mrb[0].mxu0
        %1660 = vmatprep.mubr.f32.mxu0 0.0
        %1661 = vmatmul.mubr.f32.gmra.mrb[0].mxu0 %v1495
        %v1662 = vpop.f32.mrb[0].mxu0
        %v1663 = vadd.f32 0.0, %v1662
        %v1664 = vpop.f32.mrb[0].mxu0
        %1665 = vmatprep.mubr.f32.mxu0 0.0
        %1666 = vmatmul.mubr.f32.gmra.mrb[0].mxu0 %v1496
        %v1667 = vpop.f32.mrb[0].mxu0
        %v1668 = vadd.f32 0.0, %v1667
        %v1669 = vpop.f32.mrb[0].mxu0
        %1670 = vmatprep.mubr.f32.mxu0 0.0
        %1671 = vmatmul.mubr.f32.gmra.mrb[0].mxu0 %v1497
        %v1672 = vpop.f32.mrb[0].mxu0
        %v1673 = vadd.f32 0.0, %v1672
        %v1674 = vpop.f32.mrb[0].mxu0
        %1675 = vmatprep.mubr.f32.mxu0 0.0
        %1676 = vmatmul.mubr.f32.gmra.mrb[0].mxu0 %v1498
        %v1677 = vpop.f32.mrb[0].mxu0
        %v1678 = vadd.f32 0.0, %v1677
        %v1679 = vpop.f32.mrb[0].mxu0
        %1680 = vmatprep.mubr.f32.mxu0 0.0
        %1681 = vmatmul.mubr.f32.gmra.mrb[0].mxu0 %v1499
        %v1682 = vpop.f32.mrb[0].mxu0
        %v1683 = vadd.f32 0.0, %v1682
        %v1684 = vpop.f32.mrb[0].mxu0
        %1685 = vmatprep.mubr.f32.mxu0 0.0
        %1686 = vmatmul.mubr.f32.gmra.mrb[0].mxu0 %v1500
        %v1687 = vpop.f32.mrb[0].mxu0
        %v1688 = vadd.f32 0.0, %v1687
        %v1689 = vpop.f32.mrb[0].mxu0
        %1690 = vmatprep.mubr.f32.mxu0 0.0
        %1691 = vmatmul.mubr.f32.gmra.mrb[0].mxu0 %v1501
        %v1692 = vpop.f32.mrb[0].mxu0
        %v1693 = vadd.f32 0.0, %v1692
        %v1694 = vpop.f32.mrb[0].mxu0
        %1695 = vmatprep.mubr.f32.mxu0 0.0
        %1696 = vmatmul.mubr.f32.gmra.mrb[0].mxu0 %v1502
        %v1697 = vpop.f32.mrb[0].mxu0
        %v1698 = vadd.f32 0.0, %v1697
        %v1699 = vpop.f32.mrb[0].mxu0
        %1700 = vmatprep.mubr.f32.mxu0 0.0
        %1701 = vmatmul.mubr.f32.gmra.mrb[0].mxu0 %v1503
        %v1702 = vpop.f32.mrb[0].mxu0
        %v1703 = vadd.f32 0.0, %v1702
        %v1704 = vpop.f32.mrb[0].mxu0
        %1705 = vmatprep.mubr.f32.mxu0 0.0
        %1706 = vmatmul.mubr.f32.gmra.mrb[0].mxu0 %v1504
        %v1707 = vpop.f32.mrb[0].mxu0
        %v1708 = vadd.f32 0.0, %v1707
        %v1709 = vpop.f32.mrb[0].mxu0
        %1710 = vmatprep.mubr.f32.mxu0 0.0
        %1711 = vmatmul.mubr.f32.gmra.mrb[0].mxu0 %v1505
        %v1712 = vpop.f32.mrb[0].mxu0
        %v1713 = vadd.f32 0.0, %v1712
        %v1714 = vpop.f32.mrb[0].mxu0
        %1715 = vmatprep.mubr.f32.mxu0 0.0
        %1716 = vmatmul.mubr.f32.gmra.mrb[0].mxu0 %v1506
        %v1717 = vpop.f32.mrb[0].mxu0
        %v1718 = vadd.f32 0.0, %v1717
        %v1719 = vpop.f32.mrb[0].mxu0
        %1720 = vmatprep.mubr.f32.mxu0 0.0
        %1721 = vmatmul.mubr.f32.gmra.mrb[0].mxu0 %v1507
        %v1722 = vpop.f32.mrb[0].mxu0
        %v1723 = vadd.f32 0.0, %v1722
        %v1724 = vpop.f32.mrb[0].mxu0
        %1725 = vmatprep.mubr.f32.mxu0 0.0
        %1726 = vmatmul.mubr.f32.gmra.mrb[0].mxu0 %v1508
        %v1727 = vpop.f32.mrb[0].mxu0
        %v1728 = vadd.f32 0.0, %v1727
        %v1729 = vpop.f32.mrb[0].mxu0
        %1730 = vmatprep.mubr.f32.mxu0 0.0
        %1731 = vmatmul.mubr.f32.gmra.mrb[0].mxu0 %v1509
        %v1732 = vpop.f32.mrb[0].mxu0
        %v1733 = vadd.f32 0.0, %v1732
        %v1734 = vpop.f32.mrb[0].mxu0
        %1735 = vmatprep.mubr.f32.mxu0 0.0
        %1736 = vmatmul.mubr.f32.gmra.mrb[0].mxu0 %v1510
        %v1737 = vpop.f32.mrb[0].mxu0
        %v1738 = vadd.f32 0.0, %v1737
        %v1739 = vpop.f32.mrb[0].mxu0
        %1740 = vmatprep.mubr.f32.mxu0 0.0
        %1741 = vmatmul.mubr.f32.gmra.mrb[0].mxu0 %v1511
        %v1742 = vpop.f32.mrb[0].mxu0
        %v1743 = vadd.f32 0.0, %v1742
        %v1744 = vpop.f32.mrb[0].mxu0
        %1745 = vmatprep.mubr.f32.mxu0 0.0
        %1746 = vmatmul.mubr.f32.gmra.mrb[0].mxu0 %v1512
        %v1747 = vpop.f32.mrb[0].mxu0
        %v1748 = vadd.f32 0.0, %v1747
        %v1749 = vpop.f32.mrb[0].mxu0
        %1750 = vmatprep.mubr.f32.mxu0 0.0
        %1751 = vmatmul.mubr.f32.gmra.mrb[0].mxu0 %v1513
        %v1752 = vpop.f32.mrb[0].mxu0
        %v1753 = vadd.f32 0.0, %v1752
        %v1754 = vpop.f32.mrb[0].mxu0
        %1755 = vdwg.mxu0
        %v1756 = vadd.f32 %v1324, %v1598
        %v1757 = vadd.f32 %v1329, %v1603
        %v1758 = vadd.f32 %v1334, %v1608
        %v1759 = vadd.f32 %v1339, %v1613
        %v1760 = vadd.f32 %v1344, %v1618
        %v1761 = vadd.f32 %v1349, %v1623
        %v1762 = vadd.f32 %v1354, %v1628
        %v1763 = vadd.f32 %v1359, %v1633
        %v1764 = vadd.f32 %v1364, %v1638
        %v1765 = vadd.f32 %v1369, %v1643
        %v1766 = vadd.f32 %v1374, %v1648
        %v1767 = vadd.f32 %v1379, %v1653
        %v1768 = vadd.f32 %v1384, %v1658
        %v1769 = vadd.f32 %v1389, %v1663
        %v1770 = vadd.f32 %v1394, %v1668
        %v1771 = vadd.f32 %v1399, %v1673
        %v1772 = vadd.f32 %v1404, %v1678
        %v1773 = vadd.f32 %v1409, %v1683
        %v1774 = vadd.f32 %v1414, %v1688
        %v1775 = vadd.f32 %v1419, %v1693
        %v1776 = vadd.f32 %v1424, %v1698
        %v1777 = vadd.f32 %v1429, %v1703
        %v1778 = vadd.f32 %v1434, %v1708
        %v1779 = vadd.f32 %v1439, %v1713
        %v1780 = vadd.f32 %v1444, %v1718
        %v1781 = vadd.f32 %v1449, %v1723
        %v1782 = vadd.f32 %v1454, %v1728
        %v1783 = vadd.f32 %v1459, %v1733
        %v1784 = vadd.f32 %v1464, %v1738
        %v1785 = vadd.f32 %v1469, %v1743
        %v1786 = vadd.f32 %v1474, %v1748
        %v1787 = vadd.f32 %v1479, %v1753
        %v1788 = vld [vmem:[%s720] sm:$0xff]
        %v1789 = vld [vmem:[%s720 + $0x8] sm:$0xff]
        %v1790 = vld [vmem:[%s720 + $0x18] sm:$0xff]
        %v1791 = vld [vmem:[%s720 + $0x20] sm:$0xff]
        %v1792 = vld [vmem:[%s720 + $0x30] sm:$0xff]
        %v1793 = vld [vmem:[%s720 + $0x38] sm:$0xff]
        %v1794 = vld [vmem:[%s720 + $0x48] sm:$0xff]
        %v1795 = vld [vmem:[%s720 + $0x50] sm:$0xff]
        %v1796 = vld [vmem:[%s720 + $0x60] sm:$0xff]
        %v1797 = vld [vmem:[%s720 + $0x68] sm:$0xff]
        %v1798 = vld [vmem:[%s720 + $0x78] sm:$0xff]
        %v1799 = vld [vmem:[%s720 + $0x80] sm:$0xff]
        %v1800 = vld [vmem:[%s720 + $0x90] sm:$0xff]
        %v1801 = vld [vmem:[%s720 + $0x98] sm:$0xff]
        %v1802 = vld [vmem:[%s720 + $0xa8] sm:$0xff]
        %v1803 = vld [vmem:[%s720 + $0xb0] sm:$0xff]
        %v1804 = vld [vmem:[%s720 + $0xc0] sm:$0xff]
        %v1805 = vld [vmem:[%s720 + $0xc8] sm:$0xff]
        %v1806 = vld [vmem:[%s720 + $0xd8] sm:$0xff]
        %v1807 = vld [vmem:[%s720 + $0xe0] sm:$0xff]
        %v1808 = vld [vmem:[%s720 + $0xf0] sm:$0xff]
        %v1809 = vld [vmem:[%s720 + $0xf8] sm:$0xff]
        %v1810 = vld [vmem:[%s720 + $0x108] sm:$0xff]
        %v1811 = vld [vmem:[%s720 + $0x110] sm:$0xff]
        %v1812 = vld [vmem:[%s720 + $0x120] sm:$0xff]
        %v1813 = vld [vmem:[%s720 + $0x128] sm:$0xff]
        %v1814 = vld [vmem:[%s720 + $0x138] sm:$0xff]
        %v1815 = vld [vmem:[%s720 + $0x140] sm:$0xff]
        %v1816 = vld [vmem:[%s720 + $0x150] sm:$0xff]
        %v1817 = vld [vmem:[%s720 + $0x158] sm:$0xff]
        %v1818 = vld [vmem:[%s720 + $0x168] sm:$0xff]
        %v1819 = vld [vmem:[%s720 + $0x170] sm:$0xff]
        %s1820 = scalar_lea.vmem [#allocation10], 384
        %v1821 = vld [vmem:[%s1820] sm:$0xff]
        %v1822 = vld [vmem:[%s1820 + $0x8] sm:$0xff]
        %v1823 = vld [vmem:[%s1820 + $0x10] sm:$0xff]
        %v1824 = vld [vmem:[%s1820 + $0x18] sm:$0xff]
        %v1825 = vld [vmem:[%s1820 + $0x20] sm:$0xff]
        %v1826 = vld [vmem:[%s1820 + $0x28] sm:$0xff]
        %v1827 = vld [vmem:[%s1820 + $0x30] sm:$0xff]
        %v1828 = vld [vmem:[%s1820 + $0x38] sm:$0xff]
        %v1829 = vld [vmem:[%s1820 + $0x40] sm:$0xff]
        %v1830 = vld [vmem:[%s1820 + $0x48] sm:$0xff]
        %v1831 = vld [vmem:[%s1820 + $0x50] sm:$0xff]
        %v1832 = vld [vmem:[%s1820 + $0x58] sm:$0xff]
        %v1833 = vld [vmem:[%s1820 + $0x60] sm:$0xff]
        %v1834 = vld [vmem:[%s1820 + $0x68] sm:$0xff]
        %v1835 = vld [vmem:[%s1820 + $0x70] sm:$0xff]
        %v1836 = vld [vmem:[%s1820 + $0x78] sm:$0xff]
        %1837 = vmatprep.subr.mxu0 0.0
        %1838 = vmatpush1.msra.mxu0 %v1821
        %1839 = vmatprep.subr.mxu0 0.0
        %1840 = vmatpush1.msra.mxu0 %v1822
        %1841 = vmatprep.subr.mxu0 0.0
        %1842 = vmatpush1.msra.mxu0 %v1823
        %1843 = vmatprep.subr.mxu0 0.0
        %1844 = vmatpush1.msra.mxu0 %v1824
        %1845 = vmatprep.subr.mxu0 0.0
        %1846 = vmatpush1.msra.mxu0 %v1825
        %1847 = vmatprep.subr.mxu0 0.0
        %1848 = vmatpush1.msra.mxu0 %v1826
        %1849 = vmatprep.subr.mxu0 0.0
        %1850 = vmatpush1.msra.mxu0 %v1827
        %1851 = vmatprep.subr.mxu0 0.0
        %1852 = vmatpush1.msra.mxu0 %v1828
        %1853 = vmatprep.subr.mxu0 0.0
        %1854 = vmatpush1.msra.mxu0 %v1829
        %1855 = vmatprep.subr.mxu0 0.0
        %1856 = vmatpush1.msra.mxu0 %v1830
        %1857 = vmatprep.subr.mxu0 0.0
        %1858 = vmatpush1.msra.mxu0 %v1831
        %1859 = vmatprep.subr.mxu0 0.0
        %1860 = vmatpush1.msra.mxu0 %v1832
        %1861 = vmatprep.subr.mxu0 0.0
        %1862 = vmatpush1.msra.mxu0 %v1833
        %1863 = vmatprep.subr.mxu0 0.0
        %1864 = vmatpush1.msra.mxu0 %v1834
        %1865 = vmatprep.subr.mxu0 0.0
        %1866 = vmatpush1.msra.mxu0 %v1835
        %1867 = vmatprep.subr.mxu0 0.0
        %1868 = vmatpush1.msra.mxu0 %v1836
        %1869 = vmatprep.subr.mxu0 0.0
        %1870 = vmatpush1.msra.mxu0 0.0
        %1871 = vmatprep.subr.mxu0 0.0
        %1872 = vmatpush1.msra.mxu0 0.0
        %1873 = vmatprep.subr.mxu0 0.0
        %1874 = vmatpush1.msra.mxu0 0.0
        %1875 = vmatprep.subr.mxu0 0.0
        %1876 = vmatpush1.msra.mxu0 0.0
        %1877 = vmatprep.subr.mxu0 0.0
        %1878 = vmatpush1.msra.mxu0 0.0
        %1879 = vmatprep.subr.mxu0 0.0
        %1880 = vmatpush1.msra.mxu0 0.0
        %1881 = vmatprep.subr.mxu0 0.0
        %1882 = vmatpush1.msra.mxu0 0.0
        %1883 = vmatprep.subr.mxu0 0.0
        %1884 = vmatpush1.msra.mxu0 0.0
        %1885 = vmatprep.subr.mxu0 0.0
        %1886 = vmatpush1.msra.mxu0 0.0
        %1887 = vmatprep.subr.mxu0 0.0
        %1888 = vmatpush1.msra.mxu0 0.0
        %1889 = vmatprep.subr.mxu0 0.0
        %1890 = vmatpush1.msra.mxu0 0.0
        %1891 = vmatprep.subr.mxu0 0.0
        %1892 = vmatpush1.msra.mxu0 0.0
        %1893 = vmatprep.subr.mxu0 0.0
        %1894 = vmatpush1.msra.mxu0 0.0
        %1895 = vmatprep.subr.mxu0 0.0
        %1896 = vmatpush1.msra.mxu0 0.0
        %1897 = vmatprep.subr.mxu0 0.0
        %1898 = vmatpush1.msra.mxu0 0.0
        %1899 = vmatprep.subr.mxu0 0.0
        %1900 = vmatpush1.msra.mxu0 0.0
        %1901 = vmatprep.mubr.f32.mxu0 0.0
        %1902 = vmatmul.mubr.f32.gmra.mrb[0].mxu0 %v1788
        %v1903 = vpop.f32.mrb[0].mxu0
        %v1904 = vadd.f32 0.0, %v1903
        %v1905 = vpop.f32.mrb[0].mxu0
        %1906 = vmatprep.mubr.f32.mxu0 0.0
        %1907 = vmatmul.mubr.f32.gmra.mrb[0].mxu0 %v1789
        %v1908 = vpop.f32.mrb[0].mxu0
        %v1909 = vadd.f32 0.0, %v1908
        %v1910 = vpop.f32.mrb[0].mxu0
        %1911 = vmatprep.mubr.f32.mxu0 0.0
        %1912 = vmatmul.mubr.f32.gmra.mrb[0].mxu0 %v1790
        %v1913 = vpop.f32.mrb[0].mxu0
        %v1914 = vadd.f32 0.0, %v1913
        %v1915 = vpop.f32.mrb[0].mxu0
        %1916 = vmatprep.mubr.f32.mxu0 0.0
        %1917 = vmatmul.mubr.f32.gmra.mrb[0].mxu0 %v1791
        %v1918 = vpop.f32.mrb[0].mxu0
        %v1919 = vadd.f32 0.0, %v1918
        %v1920 = vpop.f32.mrb[0].mxu0
        %1921 = vmatprep.mubr.f32.mxu0 0.0
        %1922 = vmatmul.mubr.f32.gmra.mrb[0].mxu0 %v1792
        %v1923 = vpop.f32.mrb[0].mxu0
        %v1924 = vadd.f32 0.0, %v1923
        %v1925 = vpop.f32.mrb[0].mxu0
        %1926 = vmatprep.mubr.f32.mxu0 0.0
        %1927 = vmatmul.mubr.f32.gmra.mrb[0].mxu0 %v1793
        %v1928 = vpop.f32.mrb[0].mxu0
        %v1929 = vadd.f32 0.0, %v1928
        %v1930 = vpop.f32.mrb[0].mxu0
        %1931 = vmatprep.mubr.f32.mxu0 0.0
        %1932 = vmatmul.mubr.f32.gmra.mrb[0].mxu0 %v1794
        %v1933 = vpop.f32.mrb[0].mxu0
        %v1934 = vadd.f32 0.0, %v1933
        %v1935 = vpop.f32.mrb[0].mxu0
        %1936 = vmatprep.mubr.f32.mxu0 0.0
        %1937 = vmatmul.mubr.f32.gmra.mrb[0].mxu0 %v1795
        %v1938 = vpop.f32.mrb[0].mxu0
        %v1939 = vadd.f32 0.0, %v1938
        %v1940 = vpop.f32.mrb[0].mxu0
        %1941 = vmatprep.mubr.f32.mxu0 0.0
        %1942 = vmatmul.mubr.f32.gmra.mrb[0].mxu0 %v1796
        %v1943 = vpop.f32.mrb[0].mxu0
        %v1944 = vadd.f32 0.0, %v1943
        %v1945 = vpop.f32.mrb[0].mxu0
        %1946 = vmatprep.mubr.f32.mxu0 0.0
        %1947 = vmatmul.mubr.f32.gmra.mrb[0].mxu0 %v1797
        %v1948 = vpop.f32.mrb[0].mxu0
        %v1949 = vadd.f32 0.0, %v1948
        %v1950 = vpop.f32.mrb[0].mxu0
        %1951 = vmatprep.mubr.f32.mxu0 0.0
        %1952 = vmatmul.mubr.f32.gmra.mrb[0].mxu0 %v1798
        %v1953 = vpop.f32.mrb[0].mxu0
        %v1954 = vadd.f32 0.0, %v1953
        %v1955 = vpop.f32.mrb[0].mxu0
        %1956 = vmatprep.mubr.f32.mxu0 0.0
        %1957 = vmatmul.mubr.f32.gmra.mrb[0].mxu0 %v1799
        %v1958 = vpop.f32.mrb[0].mxu0
        %v1959 = vadd.f32 0.0, %v1958
        %v1960 = vpop.f32.mrb[0].mxu0
        %1961 = vmatprep.mubr.f32.mxu0 0.0
        %1962 = vmatmul.mubr.f32.gmra.mrb[0].mxu0 %v1800
        %v1963 = vpop.f32.mrb[0].mxu0
        %v1964 = vadd.f32 0.0, %v1963
        %v1965 = vpop.f32.mrb[0].mxu0
        %1966 = vmatprep.mubr.f32.mxu0 0.0
        %1967 = vmatmul.mubr.f32.gmra.mrb[0].mxu0 %v1801
        %v1968 = vpop.f32.mrb[0].mxu0
        %v1969 = vadd.f32 0.0, %v1968
        %v1970 = vpop.f32.mrb[0].mxu0
        %1971 = vmatprep.mubr.f32.mxu0 0.0
        %1972 = vmatmul.mubr.f32.gmra.mrb[0].mxu0 %v1802
        %v1973 = vpop.f32.mrb[0].mxu0
        %v1974 = vadd.f32 0.0, %v1973
        %v1975 = vpop.f32.mrb[0].mxu0
        %1976 = vmatprep.mubr.f32.mxu0 0.0
        %1977 = vmatmul.mubr.f32.gmra.mrb[0].mxu0 %v1803
        %v1978 = vpop.f32.mrb[0].mxu0
        %v1979 = vadd.f32 0.0, %v1978
        %v1980 = vpop.f32.mrb[0].mxu0
        %1981 = vmatprep.mubr.f32.mxu0 0.0
        %1982 = vmatmul.mubr.f32.gmra.mrb[0].mxu0 %v1804
        %v1983 = vpop.f32.mrb[0].mxu0
        %v1984 = vadd.f32 0.0, %v1983
        %v1985 = vpop.f32.mrb[0].mxu0
        %1986 = vmatprep.mubr.f32.mxu0 0.0
        %1987 = vmatmul.mubr.f32.gmra.mrb[0].mxu0 %v1805
        %v1988 = vpop.f32.mrb[0].mxu0
        %v1989 = vadd.f32 0.0, %v1988
        %v1990 = vpop.f32.mrb[0].mxu0
        %1991 = vmatprep.mubr.f32.mxu0 0.0
        %1992 = vmatmul.mubr.f32.gmra.mrb[0].mxu0 %v1806
        %v1993 = vpop.f32.mrb[0].mxu0
        %v1994 = vadd.f32 0.0, %v1993
        %v1995 = vpop.f32.mrb[0].mxu0
        %1996 = vmatprep.mubr.f32.mxu0 0.0
        %1997 = vmatmul.mubr.f32.gmra.mrb[0].mxu0 %v1807
        %v1998 = vpop.f32.mrb[0].mxu0
        %v1999 = vadd.f32 0.0, %v1998
        %v2000 = vpop.f32.mrb[0].mxu0
        %2001 = vmatprep.mubr.f32.mxu0 0.0
        %2002 = vmatmul.mubr.f32.gmra.mrb[0].mxu0 %v1808
        %v2003 = vpop.f32.mrb[0].mxu0
        %v2004 = vadd.f32 0.0, %v2003
        %v2005 = vpop.f32.mrb[0].mxu0
        %2006 = vmatprep.mubr.f32.mxu0 0.0
        %2007 = vmatmul.mubr.f32.gmra.mrb[0].mxu0 %v1809
        %v2008 = vpop.f32.mrb[0].mxu0
        %v2009 = vadd.f32 0.0, %v2008
        %v2010 = vpop.f32.mrb[0].mxu0
        %2011 = vmatprep.mubr.f32.mxu0 0.0
        %2012 = vmatmul.mubr.f32.gmra.mrb[0].mxu0 %v1810
        %v2013 = vpop.f32.mrb[0].mxu0
        %v2014 = vadd.f32 0.0, %v2013
        %v2015 = vpop.f32.mrb[0].mxu0
        %2016 = vmatprep.mubr.f32.mxu0 0.0
        %2017 = vmatmul.mubr.f32.gmra.mrb[0].mxu0 %v1811
        %v2018 = vpop.f32.mrb[0].mxu0
        %v2019 = vadd.f32 0.0, %v2018
        %v2020 = vpop.f32.mrb[0].mxu0
        %2021 = vmatprep.mubr.f32.mxu0 0.0
        %2022 = vmatmul.mubr.f32.gmra.mrb[0].mxu0 %v1812
        %v2023 = vpop.f32.mrb[0].mxu0
        %v2024 = vadd.f32 0.0, %v2023
        %v2025 = vpop.f32.mrb[0].mxu0
        %2026 = vmatprep.mubr.f32.mxu0 0.0
        %2027 = vmatmul.mubr.f32.gmra.mrb[0].mxu0 %v1813
        %v2028 = vpop.f32.mrb[0].mxu0
        %v2029 = vadd.f32 0.0, %v2028
        %v2030 = vpop.f32.mrb[0].mxu0
        %2031 = vmatprep.mubr.f32.mxu0 0.0
        %2032 = vmatmul.mubr.f32.gmra.mrb[0].mxu0 %v1814
        %v2033 = vpop.f32.mrb[0].mxu0
        %v2034 = vadd.f32 0.0, %v2033
        %v2035 = vpop.f32.mrb[0].mxu0
        %2036 = vmatprep.mubr.f32.mxu0 0.0
        %2037 = vmatmul.mubr.f32.gmra.mrb[0].mxu0 %v1815
        %v2038 = vpop.f32.mrb[0].mxu0
        %v2039 = vadd.f32 0.0, %v2038
        %v2040 = vpop.f32.mrb[0].mxu0
        %2041 = vmatprep.mubr.f32.mxu0 0.0
        %2042 = vmatmul.mubr.f32.gmra.mrb[0].mxu0 %v1816
        %v2043 = vpop.f32.mrb[0].mxu0
        %v2044 = vadd.f32 0.0, %v2043
        %v2045 = vpop.f32.mrb[0].mxu0
        %2046 = vmatprep.mubr.f32.mxu0 0.0
        %2047 = vmatmul.mubr.f32.gmra.mrb[0].mxu0 %v1817
        %v2048 = vpop.f32.mrb[0].mxu0
        %v2049 = vadd.f32 0.0, %v2048
        %v2050 = vpop.f32.mrb[0].mxu0
        %2051 = vmatprep.mubr.f32.mxu0 0.0
        %2052 = vmatmul.mubr.f32.gmra.mrb[0].mxu0 %v1818
        %v2053 = vpop.f32.mrb[0].mxu0
        %v2054 = vadd.f32 0.0, %v2053
        %v2055 = vpop.f32.mrb[0].mxu0
        %2056 = vmatprep.mubr.f32.mxu0 0.0
        %2057 = vmatmul.mubr.f32.gmra.mrb[0].mxu0 %v1819
        %v2058 = vpop.f32.mrb[0].mxu0
        %v2059 = vadd.f32 0.0, %v2058
        %v2060 = vpop.f32.mrb[0].mxu0
        %2061 = vdwg.mxu0
        %v2062 = vadd.f32 %v1756, %v1904
        %v2063 = vadd.f32 %v1757, %v1909
        %v2064 = vadd.f32 %v1758, %v1914
        %v2065 = vadd.f32 %v1759, %v1919
        %v2066 = vadd.f32 %v1760, %v1924
        %v2067 = vadd.f32 %v1761, %v1929
        %v2068 = vadd.f32 %v1762, %v1934
        %v2069 = vadd.f32 %v1763, %v1939
        %v2070 = vadd.f32 %v1764, %v1944
        %v2071 = vadd.f32 %v1765, %v1949
        %v2072 = vadd.f32 %v1766, %v1954
        %v2073 = vadd.f32 %v1767, %v1959
        %v2074 = vadd.f32 %v1768, %v1964
        %v2075 = vadd.f32 %v1769, %v1969
        %v2076 = vadd.f32 %v1770, %v1974
        %v2077 = vadd.f32 %v1771, %v1979
        %v2078 = vadd.f32 %v1772, %v1984
        %v2079 = vadd.f32 %v1773, %v1989
        %v2080 = vadd.f32 %v1774, %v1994
        %v2081 = vadd.f32 %v1775, %v1999
        %v2082 = vadd.f32 %v1776, %v2004
        %v2083 = vadd.f32 %v1777, %v2009
        %v2084 = vadd.f32 %v1778, %v2014
        %v2085 = vadd.f32 %v1779, %v2019
        %v2086 = vadd.f32 %v1780, %v2024
        %v2087 = vadd.f32 %v1781, %v2029
        %v2088 = vadd.f32 %v1782, %v2034
        %v2089 = vadd.f32 %v1783, %v2039
        %v2090 = vadd.f32 %v1784, %v2044
        %v2091 = vadd.f32 %v1785, %v2049
        %v2092 = vadd.f32 %v1786, %v2054
        %v2093 = vadd.f32 %v1787, %v2059
        %v2094 = vld [vmem:[%s720 + $0x1] sm:$0xff]
        %v2095 = vld [vmem:[%s720 + $0x9] sm:$0xff]
        %v2096 = vld [vmem:[%s720 + $0x19] sm:$0xff]
        %v2097 = vld [vmem:[%s720 + $0x21] sm:$0xff]
        %v2098 = vld [vmem:[%s720 + $0x31] sm:$0xff]
        %v2099 = vld [vmem:[%s720 + $0x39] sm:$0xff]
        %v2100 = vld [vmem:[%s720 + $0x49] sm:$0xff]
        %v2101 = vld [vmem:[%s720 + $0x51] sm:$0xff]
        %v2102 = vld [vmem:[%s720 + $0x61] sm:$0xff]
        %v2103 = vld [vmem:[%s720 + $0x69] sm:$0xff]
        %v2104 = vld [vmem:[%s720 + $0x79] sm:$0xff]
        %v2105 = vld [vmem:[%s720 + $0x81] sm:$0xff]
        %v2106 = vld [vmem:[%s720 + $0x91] sm:$0xff]
        %v2107 = vld [vmem:[%s720 + $0x99] sm:$0xff]
        %v2108 = vld [vmem:[%s720 + $0xa9] sm:$0xff]
        %v2109 = vld [vmem:[%s720 + $0xb1] sm:$0xff]
        %v2110 = vld [vmem:[%s720 + $0xc1] sm:$0xff]
        %v2111 = vld [vmem:[%s720 + $0xc9] sm:$0xff]
        %v2112 = vld [vmem:[%s720 + $0xd9] sm:$0xff]
        %v2113 = vld [vmem:[%s720 + $0xe1] sm:$0xff]
        %v2114 = vld [vmem:[%s720 + $0xf1] sm:$0xff]
        %v2115 = vld [vmem:[%s720 + $0xf9] sm:$0xff]
        %v2116 = vld [vmem:[%s720 + $0x109] sm:$0xff]
        %v2117 = vld [vmem:[%s720 + $0x111] sm:$0xff]
        %v2118 = vld [vmem:[%s720 + $0x121] sm:$0xff]
        %v2119 = vld [vmem:[%s720 + $0x129] sm:$0xff]
        %v2120 = vld [vmem:[%s720 + $0x139] sm:$0xff]
        %v2121 = vld [vmem:[%s720 + $0x141] sm:$0xff]
        %v2122 = vld [vmem:[%s720 + $0x151] sm:$0xff]
        %v2123 = vld [vmem:[%s720 + $0x159] sm:$0xff]
        %v2124 = vld [vmem:[%s720 + $0x169] sm:$0xff]
        %v2125 = vld [vmem:[%s720 + $0x171] sm:$0xff]
        %s2126 = scalar_lea.vmem [#allocation10], 512
        %v2127 = vld [vmem:[%s2126] sm:$0xff]
        %v2128 = vld [vmem:[%s2126 + $0x8] sm:$0xff]
        %v2129 = vld [vmem:[%s2126 + $0x10] sm:$0xff]
        %v2130 = vld [vmem:[%s2126 + $0x18] sm:$0xff]
        %v2131 = vld [vmem:[%s2126 + $0x20] sm:$0xff]
        %v2132 = vld [vmem:[%s2126 + $0x28] sm:$0xff]
        %v2133 = vld [vmem:[%s2126 + $0x30] sm:$0xff]
        %v2134 = vld [vmem:[%s2126 + $0x38] sm:$0xff]
        %v2135 = vld [vmem:[%s2126 + $0x40] sm:$0xff]
        %v2136 = vld [vmem:[%s2126 + $0x48] sm:$0xff]
        %v2137 = vld [vmem:[%s2126 + $0x50] sm:$0xff]
        %v2138 = vld [vmem:[%s2126 + $0x58] sm:$0xff]
        %v2139 = vld [vmem:[%s2126 + $0x60] sm:$0xff]
        %v2140 = vld [vmem:[%s2126 + $0x68] sm:$0xff]
        %v2141 = vld [vmem:[%s2126 + $0x70] sm:$0xff]
        %v2142 = vld [vmem:[%s2126 + $0x78] sm:$0xff]
        %2143 = vmatprep.subr.mxu0 0.0
        %2144 = vmatpush1.msra.mxu0 %v2127
        %2145 = vmatprep.subr.mxu0 0.0
        %2146 = vmatpush1.msra.mxu0 %v2128
        %2147 = vmatprep.subr.mxu0 0.0
        %2148 = vmatpush1.msra.mxu0 %v2129
        %2149 = vmatprep.subr.mxu0 0.0
        %2150 = vmatpush1.msra.mxu0 %v2130
        %2151 = vmatprep.subr.mxu0 0.0
        %2152 = vmatpush1.msra.mxu0 %v2131
        %2153 = vmatprep.subr.mxu0 0.0
        %2154 = vmatpush1.msra.mxu0 %v2132
        %2155 = vmatprep.subr.mxu0 0.0
        %2156 = vmatpush1.msra.mxu0 %v2133
        %2157 = vmatprep.subr.mxu0 0.0
        %2158 = vmatpush1.msra.mxu0 %v2134
        %2159 = vmatprep.subr.mxu0 0.0
        %2160 = vmatpush1.msra.mxu0 %v2135
        %2161 = vmatprep.subr.mxu0 0.0
        %2162 = vmatpush1.msra.mxu0 %v2136
        %2163 = vmatprep.subr.mxu0 0.0
        %2164 = vmatpush1.msra.mxu0 %v2137
        %2165 = vmatprep.subr.mxu0 0.0
        %2166 = vmatpush1.msra.mxu0 %v2138
        %2167 = vmatprep.subr.mxu0 0.0
        %2168 = vmatpush1.msra.mxu0 %v2139
        %2169 = vmatprep.subr.mxu0 0.0
        %2170 = vmatpush1.msra.mxu0 %v2140
        %2171 = vmatprep.subr.mxu0 0.0
        %2172 = vmatpush1.msra.mxu0 %v2141
        %2173 = vmatprep.subr.mxu0 0.0
        %2174 = vmatpush1.msra.mxu0 %v2142
        %2175 = vmatprep.subr.mxu0 0.0
        %2176 = vmatpush1.msra.mxu0 0.0
        %2177 = vmatprep.subr.mxu0 0.0
        %2178 = vmatpush1.msra.mxu0 0.0
        %2179 = vmatprep.subr.mxu0 0.0
        %2180 = vmatpush1.msra.mxu0 0.0
        %2181 = vmatprep.subr.mxu0 0.0
        %2182 = vmatpush1.msra.mxu0 0.0
        %2183 = vmatprep.subr.mxu0 0.0
        %2184 = vmatpush1.msra.mxu0 0.0
        %2185 = vmatprep.subr.mxu0 0.0
        %2186 = vmatpush1.msra.mxu0 0.0
        %2187 = vmatprep.subr.mxu0 0.0
        %2188 = vmatpush1.msra.mxu0 0.0
        %2189 = vmatprep.subr.mxu0 0.0
        %2190 = vmatpush1.msra.mxu0 0.0
        %2191 = vmatprep.subr.mxu0 0.0
        %2192 = vmatpush1.msra.mxu0 0.0
        %2193 = vmatprep.subr.mxu0 0.0
        %2194 = vmatpush1.msra.mxu0 0.0
        %2195 = vmatprep.subr.mxu0 0.0
        %2196 = vmatpush1.msra.mxu0 0.0
        %2197 = vmatprep.subr.mxu0 0.0
        %2198 = vmatpush1.msra.mxu0 0.0
        %2199 = vmatprep.subr.mxu0 0.0
        %2200 = vmatpush1.msra.mxu0 0.0
        %2201 = vmatprep.subr.mxu0 0.0
        %2202 = vmatpush1.msra.mxu0 0.0
        %2203 = vmatprep.subr.mxu0 0.0
        %2204 = vmatpush1.msra.mxu0 0.0
        %2205 = vmatprep.subr.mxu0 0.0
        %2206 = vmatpush1.msra.mxu0 0.0
        %2207 = vmatprep.mubr.f32.mxu0 0.0
        %2208 = vmatmul.mubr.f32.gmra.mrb[0].mxu0 %v2094
        %v2209 = vpop.f32.mrb[0].mxu0
        %v2210 = vadd.f32 0.0, %v2209
        %v2211 = vpop.f32.mrb[0].mxu0
        %2212 = vmatprep.mubr.f32.mxu0 0.0
        %2213 = vmatmul.mubr.f32.gmra.mrb[0].mxu0 %v2095
        %v2214 = vpop.f32.mrb[0].mxu0
        %v2215 = vadd.f32 0.0, %v2214
        %v2216 = vpop.f32.mrb[0].mxu0
        %2217 = vmatprep.mubr.f32.mxu0 0.0
        %2218 = vmatmul.mubr.f32.gmra.mrb[0].mxu0 %v2096
        %v2219 = vpop.f32.mrb[0].mxu0
        %v2220 = vadd.f32 0.0, %v2219
        %v2221 = vpop.f32.mrb[0].mxu0
        %2222 = vmatprep.mubr.f32.mxu0 0.0
        %2223 = vmatmul.mubr.f32.gmra.mrb[0].mxu0 %v2097
        %v2224 = vpop.f32.mrb[0].mxu0
        %v2225 = vadd.f32 0.0, %v2224
        %v2226 = vpop.f32.mrb[0].mxu0
        %2227 = vmatprep.mubr.f32.mxu0 0.0
        %2228 = vmatmul.mubr.f32.gmra.mrb[0].mxu0 %v2098
        %v2229 = vpop.f32.mrb[0].mxu0
        %v2230 = vadd.f32 0.0, %v2229
        %v2231 = vpop.f32.mrb[0].mxu0
        %2232 = vmatprep.mubr.f32.mxu0 0.0
        %2233 = vmatmul.mubr.f32.gmra.mrb[0].mxu0 %v2099
        %v2234 = vpop.f32.mrb[0].mxu0
        %v2235 = vadd.f32 0.0, %v2234
        %v2236 = vpop.f32.mrb[0].mxu0
        %2237 = vmatprep.mubr.f32.mxu0 0.0
        %2238 = vmatmul.mubr.f32.gmra.mrb[0].mxu0 %v2100
        %v2239 = vpop.f32.mrb[0].mxu0
        %v2240 = vadd.f32 0.0, %v2239
        %v2241 = vpop.f32.mrb[0].mxu0
        %2242 = vmatprep.mubr.f32.mxu0 0.0
        %2243 = vmatmul.mubr.f32.gmra.mrb[0].mxu0 %v2101
        %v2244 = vpop.f32.mrb[0].mxu0
        %v2245 = vadd.f32 0.0, %v2244
        %v2246 = vpop.f32.mrb[0].mxu0
        %2247 = vmatprep.mubr.f32.mxu0 0.0
        %2248 = vmatmul.mubr.f32.gmra.mrb[0].mxu0 %v2102
        %v2249 = vpop.f32.mrb[0].mxu0
        %v2250 = vadd.f32 0.0, %v2249
        %v2251 = vpop.f32.mrb[0].mxu0
        %2252 = vmatprep.mubr.f32.mxu0 0.0
        %2253 = vmatmul.mubr.f32.gmra.mrb[0].mxu0 %v2103
        %v2254 = vpop.f32.mrb[0].mxu0
        %v2255 = vadd.f32 0.0, %v2254
        %v2256 = vpop.f32.mrb[0].mxu0
        %2257 = vmatprep.mubr.f32.mxu0 0.0
        %2258 = vmatmul.mubr.f32.gmra.mrb[0].mxu0 %v2104
        %v2259 = vpop.f32.mrb[0].mxu0
        %v2260 = vadd.f32 0.0, %v2259
        %v2261 = vpop.f32.mrb[0].mxu0
        %2262 = vmatprep.mubr.f32.mxu0 0.0
        %2263 = vmatmul.mubr.f32.gmra.mrb[0].mxu0 %v2105
        %v2264 = vpop.f32.mrb[0].mxu0
        %v2265 = vadd.f32 0.0, %v2264
        %v2266 = vpop.f32.mrb[0].mxu0
        %2267 = vmatprep.mubr.f32.mxu0 0.0
        %2268 = vmatmul.mubr.f32.gmra.mrb[0].mxu0 %v2106
        %v2269 = vpop.f32.mrb[0].mxu0
        %v2270 = vadd.f32 0.0, %v2269
        %v2271 = vpop.f32.mrb[0].mxu0
        %2272 = vmatprep.mubr.f32.mxu0 0.0
        %2273 = vmatmul.mubr.f32.gmra.mrb[0].mxu0 %v2107
        %v2274 = vpop.f32.mrb[0].mxu0
        %v2275 = vadd.f32 0.0, %v2274
        %v2276 = vpop.f32.mrb[0].mxu0
        %2277 = vmatprep.mubr.f32.mxu0 0.0
        %2278 = vmatmul.mubr.f32.gmra.mrb[0].mxu0 %v2108
        %v2279 = vpop.f32.mrb[0].mxu0
        %v2280 = vadd.f32 0.0, %v2279
        %v2281 = vpop.f32.mrb[0].mxu0
        %2282 = vmatprep.mubr.f32.mxu0 0.0
        %2283 = vmatmul.mubr.f32.gmra.mrb[0].mxu0 %v2109
        %v2284 = vpop.f32.mrb[0].mxu0
        %v2285 = vadd.f32 0.0, %v2284
        %v2286 = vpop.f32.mrb[0].mxu0
        %2287 = vmatprep.mubr.f32.mxu0 0.0
        %2288 = vmatmul.mubr.f32.gmra.mrb[0].mxu0 %v2110
        %v2289 = vpop.f32.mrb[0].mxu0
        %v2290 = vadd.f32 0.0, %v2289
        %v2291 = vpop.f32.mrb[0].mxu0
        %2292 = vmatprep.mubr.f32.mxu0 0.0
        %2293 = vmatmul.mubr.f32.gmra.mrb[0].mxu0 %v2111
        %v2294 = vpop.f32.mrb[0].mxu0
        %v2295 = vadd.f32 0.0, %v2294
        %v2296 = vpop.f32.mrb[0].mxu0
        %2297 = vmatprep.mubr.f32.mxu0 0.0
        %2298 = vmatmul.mubr.f32.gmra.mrb[0].mxu0 %v2112
        %v2299 = vpop.f32.mrb[0].mxu0
        %v2300 = vadd.f32 0.0, %v2299
        %v2301 = vpop.f32.mrb[0].mxu0
        %2302 = vmatprep.mubr.f32.mxu0 0.0
        %2303 = vmatmul.mubr.f32.gmra.mrb[0].mxu0 %v2113
        %v2304 = vpop.f32.mrb[0].mxu0
        %v2305 = vadd.f32 0.0, %v2304
        %v2306 = vpop.f32.mrb[0].mxu0
        %2307 = vmatprep.mubr.f32.mxu0 0.0
        %2308 = vmatmul.mubr.f32.gmra.mrb[0].mxu0 %v2114
        %v2309 = vpop.f32.mrb[0].mxu0
        %v2310 = vadd.f32 0.0, %v2309
        %v2311 = vpop.f32.mrb[0].mxu0
        %2312 = vmatprep.mubr.f32.mxu0 0.0
        %2313 = vmatmul.mubr.f32.gmra.mrb[0].mxu0 %v2115
        %v2314 = vpop.f32.mrb[0].mxu0
        %v2315 = vadd.f32 0.0, %v2314
        %v2316 = vpop.f32.mrb[0].mxu0
        %2317 = vmatprep.mubr.f32.mxu0 0.0
        %2318 = vmatmul.mubr.f32.gmra.mrb[0].mxu0 %v2116
        %v2319 = vpop.f32.mrb[0].mxu0
        %v2320 = vadd.f32 0.0, %v2319
        %v2321 = vpop.f32.mrb[0].mxu0
        %2322 = vmatprep.mubr.f32.mxu0 0.0
        %2323 = vmatmul.mubr.f32.gmra.mrb[0].mxu0 %v2117
        %v2324 = vpop.f32.mrb[0].mxu0
        %v2325 = vadd.f32 0.0, %v2324
        %v2326 = vpop.f32.mrb[0].mxu0
        %2327 = vmatprep.mubr.f32.mxu0 0.0
        %2328 = vmatmul.mubr.f32.gmra.mrb[0].mxu0 %v2118
        %v2329 = vpop.f32.mrb[0].mxu0
        %v2330 = vadd.f32 0.0, %v2329
        %v2331 = vpop.f32.mrb[0].mxu0
        %2332 = vmatprep.mubr.f32.mxu0 0.0
        %2333 = vmatmul.mubr.f32.gmra.mrb[0].mxu0 %v2119
        %v2334 = vpop.f32.mrb[0].mxu0
        %v2335 = vadd.f32 0.0, %v2334
        %v2336 = vpop.f32.mrb[0].mxu0
        %2337 = vmatprep.mubr.f32.mxu0 0.0
        %2338 = vmatmul.mubr.f32.gmra.mrb[0].mxu0 %v2120
        %v2339 = vpop.f32.mrb[0].mxu0
        %v2340 = vadd.f32 0.0, %v2339
        %v2341 = vpop.f32.mrb[0].mxu0
        %2342 = vmatprep.mubr.f32.mxu0 0.0
        %2343 = vmatmul.mubr.f32.gmra.mrb[0].mxu0 %v2121
        %v2344 = vpop.f32.mrb[0].mxu0
        %v2345 = vadd.f32 0.0, %v2344
        %v2346 = vpop.f32.mrb[0].mxu0
        %2347 = vmatprep.mubr.f32.mxu0 0.0
        %2348 = vmatmul.mubr.f32.gmra.mrb[0].mxu0 %v2122
        %v2349 = vpop.f32.mrb[0].mxu0
        %v2350 = vadd.f32 0.0, %v2349
        %v2351 = vpop.f32.mrb[0].mxu0
        %2352 = vmatprep.mubr.f32.mxu0 0.0
        %2353 = vmatmul.mubr.f32.gmra.mrb[0].mxu0 %v2123
        %v2354 = vpop.f32.mrb[0].mxu0
        %v2355 = vadd.f32 0.0, %v2354
        %v2356 = vpop.f32.mrb[0].mxu0
        %2357 = vmatprep.mubr.f32.mxu0 0.0
        %2358 = vmatmul.mubr.f32.gmra.mrb[0].mxu0 %v2124
        %v2359 = vpop.f32.mrb[0].mxu0
        %v2360 = vadd.f32 0.0, %v2359
        %v2361 = vpop.f32.mrb[0].mxu0
        %2362 = vmatprep.mubr.f32.mxu0 0.0
        %2363 = vmatmul.mubr.f32.gmra.mrb[0].mxu0 %v2125
        %v2364 = vpop.f32.mrb[0].mxu0
        %v2365 = vadd.f32 0.0, %v2364
        %v2366 = vpop.f32.mrb[0].mxu0
        %2367 = vdwg.mxu0
        %v2368 = vadd.f32 %v2062, %v2210
        %v2369 = vadd.f32 %v2063, %v2215
        %v2370 = vadd.f32 %v2064, %v2220
        %v2371 = vadd.f32 %v2065, %v2225
        %v2372 = vadd.f32 %v2066, %v2230
        %v2373 = vadd.f32 %v2067, %v2235
        %v2374 = vadd.f32 %v2068, %v2240
        %v2375 = vadd.f32 %v2069, %v2245
        %v2376 = vadd.f32 %v2070, %v2250
        %v2377 = vadd.f32 %v2071, %v2255
        %v2378 = vadd.f32 %v2072, %v2260
        %v2379 = vadd.f32 %v2073, %v2265
        %v2380 = vadd.f32 %v2074, %v2270
        %v2381 = vadd.f32 %v2075, %v2275
        %v2382 = vadd.f32 %v2076, %v2280
        %v2383 = vadd.f32 %v2077, %v2285
        %v2384 = vadd.f32 %v2078, %v2290
        %v2385 = vadd.f32 %v2079, %v2295
        %v2386 = vadd.f32 %v2080, %v2300
        %v2387 = vadd.f32 %v2081, %v2305
        %v2388 = vadd.f32 %v2082, %v2310
        %v2389 = vadd.f32 %v2083, %v2315
        %v2390 = vadd.f32 %v2084, %v2320
        %v2391 = vadd.f32 %v2085, %v2325
        %v2392 = vadd.f32 %v2086, %v2330
        %v2393 = vadd.f32 %v2087, %v2335
        %v2394 = vadd.f32 %v2088, %v2340
        %v2395 = vadd.f32 %v2089, %v2345
        %v2396 = vadd.f32 %v2090, %v2350
        %v2397 = vadd.f32 %v2091, %v2355
        %v2398 = vadd.f32 %v2092, %v2360
        %v2399 = vadd.f32 %v2093, %v2365
        %v2400 = vld [vmem:[%s720 + $0x2] sm:$0xff]
        %v2401 = vld [vmem:[%s720 + $0xa] sm:$0xff]
        %v2402 = vld [vmem:[%s720 + $0x1a] sm:$0xff]
        %v2403 = vld [vmem:[%s720 + $0x22] sm:$0xff]
        %v2404 = vld [vmem:[%s720 + $0x32] sm:$0xff]
        %v2405 = vld [vmem:[%s720 + $0x3a] sm:$0xff]
        %v2406 = vld [vmem:[%s720 + $0x4a] sm:$0xff]
        %v2407 = vld [vmem:[%s720 + $0x52] sm:$0xff]
        %v2408 = vld [vmem:[%s720 + $0x62] sm:$0xff]
        %v2409 = vld [vmem:[%s720 + $0x6a] sm:$0xff]
        %v2410 = vld [vmem:[%s720 + $0x7a] sm:$0xff]
        %v2411 = vld [vmem:[%s720 + $0x82] sm:$0xff]
        %v2412 = vld [vmem:[%s720 + $0x92] sm:$0xff]
        %v2413 = vld [vmem:[%s720 + $0x9a] sm:$0xff]
        %v2414 = vld [vmem:[%s720 + $0xaa] sm:$0xff]
        %v2415 = vld [vmem:[%s720 + $0xb2] sm:$0xff]
        %v2416 = vld [vmem:[%s720 + $0xc2] sm:$0xff]
        %v2417 = vld [vmem:[%s720 + $0xca] sm:$0xff]
        %v2418 = vld [vmem:[%s720 + $0xda] sm:$0xff]
        %v2419 = vld [vmem:[%s720 + $0xe2] sm:$0xff]
        %v2420 = vld [vmem:[%s720 + $0xf2] sm:$0xff]
        %v2421 = vld [vmem:[%s720 + $0xfa] sm:$0xff]
        %v2422 = vld [vmem:[%s720 + $0x10a] sm:$0xff]
        %v2423 = vld [vmem:[%s720 + $0x112] sm:$0xff]
        %v2424 = vld [vmem:[%s720 + $0x122] sm:$0xff]
        %v2425 = vld [vmem:[%s720 + $0x12a] sm:$0xff]
        %v2426 = vld [vmem:[%s720 + $0x13a] sm:$0xff]
        %v2427 = vld [vmem:[%s720 + $0x142] sm:$0xff]
        %v2428 = vld [vmem:[%s720 + $0x152] sm:$0xff]
        %v2429 = vld [vmem:[%s720 + $0x15a] sm:$0xff]
        %v2430 = vld [vmem:[%s720 + $0x16a] sm:$0xff]
        %v2431 = vld [vmem:[%s720 + $0x172] sm:$0xff]
        %s2432 = scalar_lea.vmem [#allocation10], 640
        %v2433 = vld [vmem:[%s2432] sm:$0xff]
        %v2434 = vld [vmem:[%s2432 + $0x8] sm:$0xff]
        %v2435 = vld [vmem:[%s2432 + $0x10] sm:$0xff]
        %v2436 = vld [vmem:[%s2432 + $0x18] sm:$0xff]
        %v2437 = vld [vmem:[%s2432 + $0x20] sm:$0xff]
        %v2438 = vld [vmem:[%s2432 + $0x28] sm:$0xff]
        %v2439 = vld [vmem:[%s2432 + $0x30] sm:$0xff]
        %v2440 = vld [vmem:[%s2432 + $0x38] sm:$0xff]
        %v2441 = vld [vmem:[%s2432 + $0x40] sm:$0xff]
        %v2442 = vld [vmem:[%s2432 + $0x48] sm:$0xff]
        %v2443 = vld [vmem:[%s2432 + $0x50] sm:$0xff]
        %v2444 = vld [vmem:[%s2432 + $0x58] sm:$0xff]
        %v2445 = vld [vmem:[%s2432 + $0x60] sm:$0xff]
        %v2446 = vld [vmem:[%s2432 + $0x68] sm:$0xff]
        %v2447 = vld [vmem:[%s2432 + $0x70] sm:$0xff]
        %v2448 = vld [vmem:[%s2432 + $0x78] sm:$0xff]
        %2449 = vmatprep.subr.mxu0 0.0
        %2450 = vmatpush1.msra.mxu0 %v2433
        %2451 = vmatprep.subr.mxu0 0.0
        %2452 = vmatpush1.msra.mxu0 %v2434
        %2453 = vmatprep.subr.mxu0 0.0
        %2454 = vmatpush1.msra.mxu0 %v2435
        %2455 = vmatprep.subr.mxu0 0.0
        %2456 = vmatpush1.msra.mxu0 %v2436
        %2457 = vmatprep.subr.mxu0 0.0
        %2458 = vmatpush1.msra.mxu0 %v2437
        %2459 = vmatprep.subr.mxu0 0.0
        %2460 = vmatpush1.msra.mxu0 %v2438
        %2461 = vmatprep.subr.mxu0 0.0
        %2462 = vmatpush1.msra.mxu0 %v2439
        %2463 = vmatprep.subr.mxu0 0.0
        %2464 = vmatpush1.msra.mxu0 %v2440
        %2465 = vmatprep.subr.mxu0 0.0
        %2466 = vmatpush1.msra.mxu0 %v2441
        %2467 = vmatprep.subr.mxu0 0.0
        %2468 = vmatpush1.msra.mxu0 %v2442
        %2469 = vmatprep.subr.mxu0 0.0
        %2470 = vmatpush1.msra.mxu0 %v2443
        %2471 = vmatprep.subr.mxu0 0.0
        %2472 = vmatpush1.msra.mxu0 %v2444
        %2473 = vmatprep.subr.mxu0 0.0
        %2474 = vmatpush1.msra.mxu0 %v2445
        %2475 = vmatprep.subr.mxu0 0.0
        %2476 = vmatpush1.msra.mxu0 %v2446
        %2477 = vmatprep.subr.mxu0 0.0
        %2478 = vmatpush1.msra.mxu0 %v2447
        %2479 = vmatprep.subr.mxu0 0.0
        %2480 = vmatpush1.msra.mxu0 %v2448
        %2481 = vmatprep.subr.mxu0 0.0
        %2482 = vmatpush1.msra.mxu0 0.0
        %2483 = vmatprep.subr.mxu0 0.0
        %2484 = vmatpush1.msra.mxu0 0.0
        %2485 = vmatprep.subr.mxu0 0.0
        %2486 = vmatpush1.msra.mxu0 0.0
        %2487 = vmatprep.subr.mxu0 0.0
        %2488 = vmatpush1.msra.mxu0 0.0
        %2489 = vmatprep.subr.mxu0 0.0
        %2490 = vmatpush1.msra.mxu0 0.0
        %2491 = vmatprep.subr.mxu0 0.0
        %2492 = vmatpush1.msra.mxu0 0.0
        %2493 = vmatprep.subr.mxu0 0.0
        %2494 = vmatpush1.msra.mxu0 0.0
        %2495 = vmatprep.subr.mxu0 0.0
        %2496 = vmatpush1.msra.mxu0 0.0
        %2497 = vmatprep.subr.mxu0 0.0
        %2498 = vmatpush1.msra.mxu0 0.0
        %2499 = vmatprep.subr.mxu0 0.0
        %2500 = vmatpush1.msra.mxu0 0.0
        %2501 = vmatprep.subr.mxu0 0.0
        %2502 = vmatpush1.msra.mxu0 0.0
        %2503 = vmatprep.subr.mxu0 0.0
        %2504 = vmatpush1.msra.mxu0 0.0
        %2505 = vmatprep.subr.mxu0 0.0
        %2506 = vmatpush1.msra.mxu0 0.0
        %2507 = vmatprep.subr.mxu0 0.0
        %2508 = vmatpush1.msra.mxu0 0.0
        %2509 = vmatprep.subr.mxu0 0.0
        %2510 = vmatpush1.msra.mxu0 0.0
        %2511 = vmatprep.subr.mxu0 0.0
        %2512 = vmatpush1.msra.mxu0 0.0
        %2513 = vmatprep.mubr.f32.mxu0 0.0
        %2514 = vmatmul.mubr.f32.gmra.mrb[0].mxu0 %v2400
        %v2515 = vpop.f32.mrb[0].mxu0
        %v2516 = vadd.f32 0.0, %v2515
        %v2517 = vpop.f32.mrb[0].mxu0
        %2518 = vmatprep.mubr.f32.mxu0 0.0
        %2519 = vmatmul.mubr.f32.gmra.mrb[0].mxu0 %v2401
        %v2520 = vpop.f32.mrb[0].mxu0
        %v2521 = vadd.f32 0.0, %v2520
        %v2522 = vpop.f32.mrb[0].mxu0
        %2523 = vmatprep.mubr.f32.mxu0 0.0
        %2524 = vmatmul.mubr.f32.gmra.mrb[0].mxu0 %v2402
        %v2525 = vpop.f32.mrb[0].mxu0
        %v2526 = vadd.f32 0.0, %v2525
        %v2527 = vpop.f32.mrb[0].mxu0
        %2528 = vmatprep.mubr.f32.mxu0 0.0
        %2529 = vmatmul.mubr.f32.gmra.mrb[0].mxu0 %v2403
        %v2530 = vpop.f32.mrb[0].mxu0
        %v2531 = vadd.f32 0.0, %v2530
        %v2532 = vpop.f32.mrb[0].mxu0
        %2533 = vmatprep.mubr.f32.mxu0 0.0
        %2534 = vmatmul.mubr.f32.gmra.mrb[0].mxu0 %v2404
        %v2535 = vpop.f32.mrb[0].mxu0
        %v2536 = vadd.f32 0.0, %v2535
        %v2537 = vpop.f32.mrb[0].mxu0
        %2538 = vmatprep.mubr.f32.mxu0 0.0
        %2539 = vmatmul.mubr.f32.gmra.mrb[0].mxu0 %v2405
        %v2540 = vpop.f32.mrb[0].mxu0
        %v2541 = vadd.f32 0.0, %v2540
        %v2542 = vpop.f32.mrb[0].mxu0
        %2543 = vmatprep.mubr.f32.mxu0 0.0
        %2544 = vmatmul.mubr.f32.gmra.mrb[0].mxu0 %v2406
        %v2545 = vpop.f32.mrb[0].mxu0
        %v2546 = vadd.f32 0.0, %v2545
        %v2547 = vpop.f32.mrb[0].mxu0
        %2548 = vmatprep.mubr.f32.mxu0 0.0
        %2549 = vmatmul.mubr.f32.gmra.mrb[0].mxu0 %v2407
        %v2550 = vpop.f32.mrb[0].mxu0
        %v2551 = vadd.f32 0.0, %v2550
        %v2552 = vpop.f32.mrb[0].mxu0
        %2553 = vmatprep.mubr.f32.mxu0 0.0
        %2554 = vmatmul.mubr.f32.gmra.mrb[0].mxu0 %v2408
        %v2555 = vpop.f32.mrb[0].mxu0
        %v2556 = vadd.f32 0.0, %v2555
        %v2557 = vpop.f32.mrb[0].mxu0
        %2558 = vmatprep.mubr.f32.mxu0 0.0
        %2559 = vmatmul.mubr.f32.gmra.mrb[0].mxu0 %v2409
        %v2560 = vpop.f32.mrb[0].mxu0
        %v2561 = vadd.f32 0.0, %v2560
        %v2562 = vpop.f32.mrb[0].mxu0
        %2563 = vmatprep.mubr.f32.mxu0 0.0
        %2564 = vmatmul.mubr.f32.gmra.mrb[0].mxu0 %v2410
        %v2565 = vpop.f32.mrb[0].mxu0
        %v2566 = vadd.f32 0.0, %v2565
        %v2567 = vpop.f32.mrb[0].mxu0
        %2568 = vmatprep.mubr.f32.mxu0 0.0
        %2569 = vmatmul.mubr.f32.gmra.mrb[0].mxu0 %v2411
        %v2570 = vpop.f32.mrb[0].mxu0
        %v2571 = vadd.f32 0.0, %v2570
        %v2572 = vpop.f32.mrb[0].mxu0
        %2573 = vmatprep.mubr.f32.mxu0 0.0
        %2574 = vmatmul.mubr.f32.gmra.mrb[0].mxu0 %v2412
        %v2575 = vpop.f32.mrb[0].mxu0
        %v2576 = vadd.f32 0.0, %v2575
        %v2577 = vpop.f32.mrb[0].mxu0
        %2578 = vmatprep.mubr.f32.mxu0 0.0
        %2579 = vmatmul.mubr.f32.gmra.mrb[0].mxu0 %v2413
        %v2580 = vpop.f32.mrb[0].mxu0
        %v2581 = vadd.f32 0.0, %v2580
        %v2582 = vpop.f32.mrb[0].mxu0
        %2583 = vmatprep.mubr.f32.mxu0 0.0
        %2584 = vmatmul.mubr.f32.gmra.mrb[0].mxu0 %v2414
        %v2585 = vpop.f32.mrb[0].mxu0
        %v2586 = vadd.f32 0.0, %v2585
        %v2587 = vpop.f32.mrb[0].mxu0
        %2588 = vmatprep.mubr.f32.mxu0 0.0
        %2589 = vmatmul.mubr.f32.gmra.mrb[0].mxu0 %v2415
        %v2590 = vpop.f32.mrb[0].mxu0
        %v2591 = vadd.f32 0.0, %v2590
        %v2592 = vpop.f32.mrb[0].mxu0
        %2593 = vmatprep.mubr.f32.mxu0 0.0
        %2594 = vmatmul.mubr.f32.gmra.mrb[0].mxu0 %v2416
        %v2595 = vpop.f32.mrb[0].mxu0
        %v2596 = vadd.f32 0.0, %v2595
        %v2597 = vpop.f32.mrb[0].mxu0
        %2598 = vmatprep.mubr.f32.mxu0 0.0
        %2599 = vmatmul.mubr.f32.gmra.mrb[0].mxu0 %v2417
        %v2600 = vpop.f32.mrb[0].mxu0
        %v2601 = vadd.f32 0.0, %v2600
        %v2602 = vpop.f32.mrb[0].mxu0
        %2603 = vmatprep.mubr.f32.mxu0 0.0
        %2604 = vmatmul.mubr.f32.gmra.mrb[0].mxu0 %v2418
        %v2605 = vpop.f32.mrb[0].mxu0
        %v2606 = vadd.f32 0.0, %v2605
        %v2607 = vpop.f32.mrb[0].mxu0
        %2608 = vmatprep.mubr.f32.mxu0 0.0
        %2609 = vmatmul.mubr.f32.gmra.mrb[0].mxu0 %v2419
        %v2610 = vpop.f32.mrb[0].mxu0
        %v2611 = vadd.f32 0.0, %v2610
        %v2612 = vpop.f32.mrb[0].mxu0
        %2613 = vmatprep.mubr.f32.mxu0 0.0
        %2614 = vmatmul.mubr.f32.gmra.mrb[0].mxu0 %v2420
        %v2615 = vpop.f32.mrb[0].mxu0
        %v2616 = vadd.f32 0.0, %v2615
        %v2617 = vpop.f32.mrb[0].mxu0
        %2618 = vmatprep.mubr.f32.mxu0 0.0
        %2619 = vmatmul.mubr.f32.gmra.mrb[0].mxu0 %v2421
        %v2620 = vpop.f32.mrb[0].mxu0
        %v2621 = vadd.f32 0.0, %v2620
        %v2622 = vpop.f32.mrb[0].mxu0
        %2623 = vmatprep.mubr.f32.mxu0 0.0
        %2624 = vmatmul.mubr.f32.gmra.mrb[0].mxu0 %v2422
        %v2625 = vpop.f32.mrb[0].mxu0
        %v2626 = vadd.f32 0.0, %v2625
        %v2627 = vpop.f32.mrb[0].mxu0
        %2628 = vmatprep.mubr.f32.mxu0 0.0
        %2629 = vmatmul.mubr.f32.gmra.mrb[0].mxu0 %v2423
        %v2630 = vpop.f32.mrb[0].mxu0
        %v2631 = vadd.f32 0.0, %v2630
        %v2632 = vpop.f32.mrb[0].mxu0
        %2633 = vmatprep.mubr.f32.mxu0 0.0
        %2634 = vmatmul.mubr.f32.gmra.mrb[0].mxu0 %v2424
        %v2635 = vpop.f32.mrb[0].mxu0
        %v2636 = vadd.f32 0.0, %v2635
        %v2637 = vpop.f32.mrb[0].mxu0
        %2638 = vmatprep.mubr.f32.mxu0 0.0
        %2639 = vmatmul.mubr.f32.gmra.mrb[0].mxu0 %v2425
        %v2640 = vpop.f32.mrb[0].mxu0
        %v2641 = vadd.f32 0.0, %v2640
        %v2642 = vpop.f32.mrb[0].mxu0
        %2643 = vmatprep.mubr.f32.mxu0 0.0
        %2644 = vmatmul.mubr.f32.gmra.mrb[0].mxu0 %v2426
        %v2645 = vpop.f32.mrb[0].mxu0
        %v2646 = vadd.f32 0.0, %v2645
        %v2647 = vpop.f32.mrb[0].mxu0
        %2648 = vmatprep.mubr.f32.mxu0 0.0
        %2649 = vmatmul.mubr.f32.gmra.mrb[0].mxu0 %v2427
        %v2650 = vpop.f32.mrb[0].mxu0
        %v2651 = vadd.f32 0.0, %v2650
        %v2652 = vpop.f32.mrb[0].mxu0
        %2653 = vmatprep.mubr.f32.mxu0 0.0
        %2654 = vmatmul.mubr.f32.gmra.mrb[0].mxu0 %v2428
        %v2655 = vpop.f32.mrb[0].mxu0
        %v2656 = vadd.f32 0.0, %v2655
        %v2657 = vpop.f32.mrb[0].mxu0
        %2658 = vmatprep.mubr.f32.mxu0 0.0
        %2659 = vmatmul.mubr.f32.gmra.mrb[0].mxu0 %v2429
        %v2660 = vpop.f32.mrb[0].mxu0
        %v2661 = vadd.f32 0.0, %v2660
        %v2662 = vpop.f32.mrb[0].mxu0
        %2663 = vmatprep.mubr.f32.mxu0 0.0
        %2664 = vmatmul.mubr.f32.gmra.mrb[0].mxu0 %v2430
        %v2665 = vpop.f32.mrb[0].mxu0
        %v2666 = vadd.f32 0.0, %v2665
        %v2667 = vpop.f32.mrb[0].mxu0
        %2668 = vmatprep.mubr.f32.mxu0 0.0
        %2669 = vmatmul.mubr.f32.gmra.mrb[0].mxu0 %v2431
        %v2670 = vpop.f32.mrb[0].mxu0
        %v2671 = vadd.f32 0.0, %v2670
        %v2672 = vpop.f32.mrb[0].mxu0
        %2673 = vdwg.mxu0
        %v2674 = vadd.f32 %v2368, %v2516
        %v2675 = vadd.f32 %v2369, %v2521
        %v2676 = vadd.f32 %v2370, %v2526
        %v2677 = vadd.f32 %v2371, %v2531
        %v2678 = vadd.f32 %v2372, %v2536
        %v2679 = vadd.f32 %v2373, %v2541
        %v2680 = vadd.f32 %v2374, %v2546
        %v2681 = vadd.f32 %v2375, %v2551
        %v2682 = vadd.f32 %v2376, %v2556
        %v2683 = vadd.f32 %v2377, %v2561
        %v2684 = vadd.f32 %v2378, %v2566
        %v2685 = vadd.f32 %v2379, %v2571
        %v2686 = vadd.f32 %v2380, %v2576
        %v2687 = vadd.f32 %v2381, %v2581
        %v2688 = vadd.f32 %v2382, %v2586
        %v2689 = vadd.f32 %v2383, %v2591
        %v2690 = vadd.f32 %v2384, %v2596
        %v2691 = vadd.f32 %v2385, %v2601
        %v2692 = vadd.f32 %v2386, %v2606
        %v2693 = vadd.f32 %v2387, %v2611
        %v2694 = vadd.f32 %v2388, %v2616
        %v2695 = vadd.f32 %v2389, %v2621
        %v2696 = vadd.f32 %v2390, %v2626
        %v2697 = vadd.f32 %v2391, %v2631
        %v2698 = vadd.f32 %v2392, %v2636
        %v2699 = vadd.f32 %v2393, %v2641
        %v2700 = vadd.f32 %v2394, %v2646
        %v2701 = vadd.f32 %v2395, %v2651
        %v2702 = vadd.f32 %v2396, %v2656
        %v2703 = vadd.f32 %v2397, %v2661
        %v2704 = vadd.f32 %v2398, %v2666
        %v2705 = vadd.f32 %v2399, %v2671
        %s2706 = scalar_lea.vmem [#allocation2], 48
        %v2707 = vld [vmem:[%s2706] sm:$0xff]
        %v2708 = vld [vmem:[%s2706 + $0x8] sm:$0xff]
        %v2709 = vld [vmem:[%s2706 + $0x18] sm:$0xff]
        %v2710 = vld [vmem:[%s2706 + $0x20] sm:$0xff]
        %v2711 = vld [vmem:[%s2706 + $0x30] sm:$0xff]
        %v2712 = vld [vmem:[%s2706 + $0x38] sm:$0xff]
        %v2713 = vld [vmem:[%s2706 + $0x48] sm:$0xff]
        %v2714 = vld [vmem:[%s2706 + $0x50] sm:$0xff]
        %v2715 = vld [vmem:[%s2706 + $0x60] sm:$0xff]
        %v2716 = vld [vmem:[%s2706 + $0x68] sm:$0xff]
        %v2717 = vld [vmem:[%s2706 + $0x78] sm:$0xff]
        %v2718 = vld [vmem:[%s2706 + $0x80] sm:$0xff]
        %v2719 = vld [vmem:[%s2706 + $0x90] sm:$0xff]
        %v2720 = vld [vmem:[%s2706 + $0x98] sm:$0xff]
        %v2721 = vld [vmem:[%s2706 + $0xa8] sm:$0xff]
        %v2722 = vld [vmem:[%s2706 + $0xb0] sm:$0xff]
        %v2723 = vld [vmem:[%s2706 + $0xc0] sm:$0xff]
        %v2724 = vld [vmem:[%s2706 + $0xc8] sm:$0xff]
        %v2725 = vld [vmem:[%s2706 + $0xd8] sm:$0xff]
        %v2726 = vld [vmem:[%s2706 + $0xe0] sm:$0xff]
        %v2727 = vld [vmem:[%s2706 + $0xf0] sm:$0xff]
        %v2728 = vld [vmem:[%s2706 + $0xf8] sm:$0xff]
        %v2729 = vld [vmem:[%s2706 + $0x108] sm:$0xff]
        %v2730 = vld [vmem:[%s2706 + $0x110] sm:$0xff]
        %v2731 = vld [vmem:[%s2706 + $0x120] sm:$0xff]
        %v2732 = vld [vmem:[%s2706 + $0x128] sm:$0xff]
        %v2733 = vld [vmem:[%s2706 + $0x138] sm:$0xff]
        %v2734 = vld [vmem:[%s2706 + $0x140] sm:$0xff]
        %v2735 = vld [vmem:[%s2706 + $0x150] sm:$0xff]
        %v2736 = vld [vmem:[%s2706 + $0x158] sm:$0xff]
        %v2737 = vld [vmem:[%s2706 + $0x168] sm:$0xff]
        %v2738 = vld [vmem:[%s2706 + $0x170] sm:$0xff]
        %s2739 = scalar_lea.vmem [#allocation10], 768
        %v2740 = vld [vmem:[%s2739] sm:$0xff]
        %v2741 = vld [vmem:[%s2739 + $0x8] sm:$0xff]
        %v2742 = vld [vmem:[%s2739 + $0x10] sm:$0xff]
        %v2743 = vld [vmem:[%s2739 + $0x18] sm:$0xff]
        %v2744 = vld [vmem:[%s2739 + $0x20] sm:$0xff]
        %v2745 = vld [vmem:[%s2739 + $0x28] sm:$0xff]
        %v2746 = vld [vmem:[%s2739 + $0x30] sm:$0xff]
        %v2747 = vld [vmem:[%s2739 + $0x38] sm:$0xff]
        %v2748 = vld [vmem:[%s2739 + $0x40] sm:$0xff]
        %v2749 = vld [vmem:[%s2739 + $0x48] sm:$0xff]
        %v2750 = vld [vmem:[%s2739 + $0x50] sm:$0xff]
        %v2751 = vld [vmem:[%s2739 + $0x58] sm:$0xff]
        %v2752 = vld [vmem:[%s2739 + $0x60] sm:$0xff]
        %v2753 = vld [vmem:[%s2739 + $0x68] sm:$0xff]
        %v2754 = vld [vmem:[%s2739 + $0x70] sm:$0xff]
        %v2755 = vld [vmem:[%s2739 + $0x78] sm:$0xff]
        %2756 = vmatprep.subr.mxu0 0.0
        %2757 = vmatpush1.msra.mxu0 %v2740
        %2758 = vmatprep.subr.mxu0 0.0
        %2759 = vmatpush1.msra.mxu0 %v2741
        %2760 = vmatprep.subr.mxu0 0.0
        %2761 = vmatpush1.msra.mxu0 %v2742
        %2762 = vmatprep.subr.mxu0 0.0
        %2763 = vmatpush1.msra.mxu0 %v2743
        %2764 = vmatprep.subr.mxu0 0.0
        %2765 = vmatpush1.msra.mxu0 %v2744
        %2766 = vmatprep.subr.mxu0 0.0
        %2767 = vmatpush1.msra.mxu0 %v2745
        %2768 = vmatprep.subr.mxu0 0.0
        %2769 = vmatpush1.msra.mxu0 %v2746
        %2770 = vmatprep.subr.mxu0 0.0
        %2771 = vmatpush1.msra.mxu0 %v2747
        %2772 = vmatprep.subr.mxu0 0.0
        %2773 = vmatpush1.msra.mxu0 %v2748
        %2774 = vmatprep.subr.mxu0 0.0
        %2775 = vmatpush1.msra.mxu0 %v2749
        %2776 = vmatprep.subr.mxu0 0.0
        %2777 = vmatpush1.msra.mxu0 %v2750
        %2778 = vmatprep.subr.mxu0 0.0
        %2779 = vmatpush1.msra.mxu0 %v2751
        %2780 = vmatprep.subr.mxu0 0.0
        %2781 = vmatpush1.msra.mxu0 %v2752
        %2782 = vmatprep.subr.mxu0 0.0
        %2783 = vmatpush1.msra.mxu0 %v2753
        %2784 = vmatprep.subr.mxu0 0.0
        %2785 = vmatpush1.msra.mxu0 %v2754
        %2786 = vmatprep.subr.mxu0 0.0
        %2787 = vmatpush1.msra.mxu0 %v2755
        %2788 = vmatprep.subr.mxu0 0.0
        %2789 = vmatpush1.msra.mxu0 0.0
        %2790 = vmatprep.subr.mxu0 0.0
        %2791 = vmatpush1.msra.mxu0 0.0
        %2792 = vmatprep.subr.mxu0 0.0
        %2793 = vmatpush1.msra.mxu0 0.0
        %2794 = vmatprep.subr.mxu0 0.0
        %2795 = vmatpush1.msra.mxu0 0.0
        %2796 = vmatprep.subr.mxu0 0.0
        %2797 = vmatpush1.msra.mxu0 0.0
        %2798 = vmatprep.subr.mxu0 0.0
        %2799 = vmatpush1.msra.mxu0 0.0
        %2800 = vmatprep.subr.mxu0 0.0
        %2801 = vmatpush1.msra.mxu0 0.0
        %2802 = vmatprep.subr.mxu0 0.0
        %2803 = vmatpush1.msra.mxu0 0.0
        %2804 = vmatprep.subr.mxu0 0.0
        %2805 = vmatpush1.msra.mxu0 0.0
        %2806 = vmatprep.subr.mxu0 0.0
        %2807 = vmatpush1.msra.mxu0 0.0
        %2808 = vmatprep.subr.mxu0 0.0
        %2809 = vmatpush1.msra.mxu0 0.0
        %2810 = vmatprep.subr.mxu0 0.0
        %2811 = vmatpush1.msra.mxu0 0.0
        %2812 = vmatprep.subr.mxu0 0.0
        %2813 = vmatpush1.msra.mxu0 0.0
        %2814 = vmatprep.subr.mxu0 0.0
        %2815 = vmatpush1.msra.mxu0 0.0
        %2816 = vmatprep.subr.mxu0 0.0
        %2817 = vmatpush1.msra.mxu0 0.0
        %2818 = vmatprep.subr.mxu0 0.0
        %2819 = vmatpush1.msra.mxu0 0.0
        %2820 = vmatprep.mubr.f32.mxu0 0.0
        %2821 = vmatmul.mubr.f32.gmra.mrb[0].mxu0 %v2707
        %v2822 = vpop.f32.mrb[0].mxu0
        %v2823 = vadd.f32 0.0, %v2822
        %v2824 = vpop.f32.mrb[0].mxu0
        %2825 = vmatprep.mubr.f32.mxu0 0.0
        %2826 = vmatmul.mubr.f32.gmra.mrb[0].mxu0 %v2708
        %v2827 = vpop.f32.mrb[0].mxu0
        %v2828 = vadd.f32 0.0, %v2827
        %v2829 = vpop.f32.mrb[0].mxu0
        %2830 = vmatprep.mubr.f32.mxu0 0.0
        %2831 = vmatmul.mubr.f32.gmra.mrb[0].mxu0 %v2709
        %v2832 = vpop.f32.mrb[0].mxu0
        %v2833 = vadd.f32 0.0, %v2832
        %v2834 = vpop.f32.mrb[0].mxu0
        %2835 = vmatprep.mubr.f32.mxu0 0.0
        %2836 = vmatmul.mubr.f32.gmra.mrb[0].mxu0 %v2710
        %v2837 = vpop.f32.mrb[0].mxu0
        %v2838 = vadd.f32 0.0, %v2837
        %v2839 = vpop.f32.mrb[0].mxu0
        %2840 = vmatprep.mubr.f32.mxu0 0.0
        %2841 = vmatmul.mubr.f32.gmra.mrb[0].mxu0 %v2711
        %v2842 = vpop.f32.mrb[0].mxu0
        %v2843 = vadd.f32 0.0, %v2842
        %v2844 = vpop.f32.mrb[0].mxu0
        %2845 = vmatprep.mubr.f32.mxu0 0.0
        %2846 = vmatmul.mubr.f32.gmra.mrb[0].mxu0 %v2712
        %v2847 = vpop.f32.mrb[0].mxu0
        %v2848 = vadd.f32 0.0, %v2847
        %v2849 = vpop.f32.mrb[0].mxu0
        %2850 = vmatprep.mubr.f32.mxu0 0.0
        %2851 = vmatmul.mubr.f32.gmra.mrb[0].mxu0 %v2713
        %v2852 = vpop.f32.mrb[0].mxu0
        %v2853 = vadd.f32 0.0, %v2852
        %v2854 = vpop.f32.mrb[0].mxu0
        %2855 = vmatprep.mubr.f32.mxu0 0.0
        %2856 = vmatmul.mubr.f32.gmra.mrb[0].mxu0 %v2714
        %v2857 = vpop.f32.mrb[0].mxu0
        %v2858 = vadd.f32 0.0, %v2857
        %v2859 = vpop.f32.mrb[0].mxu0
        %2860 = vmatprep.mubr.f32.mxu0 0.0
        %2861 = vmatmul.mubr.f32.gmra.mrb[0].mxu0 %v2715
        %v2862 = vpop.f32.mrb[0].mxu0
        %v2863 = vadd.f32 0.0, %v2862
        %v2864 = vpop.f32.mrb[0].mxu0
        %2865 = vmatprep.mubr.f32.mxu0 0.0
        %2866 = vmatmul.mubr.f32.gmra.mrb[0].mxu0 %v2716
        %v2867 = vpop.f32.mrb[0].mxu0
        %v2868 = vadd.f32 0.0, %v2867
        %v2869 = vpop.f32.mrb[0].mxu0
        %2870 = vmatprep.mubr.f32.mxu0 0.0
        %2871 = vmatmul.mubr.f32.gmra.mrb[0].mxu0 %v2717
        %v2872 = vpop.f32.mrb[0].mxu0
        %v2873 = vadd.f32 0.0, %v2872
        %v2874 = vpop.f32.mrb[0].mxu0
        %2875 = vmatprep.mubr.f32.mxu0 0.0
        %2876 = vmatmul.mubr.f32.gmra.mrb[0].mxu0 %v2718
        %v2877 = vpop.f32.mrb[0].mxu0
        %v2878 = vadd.f32 0.0, %v2877
        %v2879 = vpop.f32.mrb[0].mxu0
        %2880 = vmatprep.mubr.f32.mxu0 0.0
        %2881 = vmatmul.mubr.f32.gmra.mrb[0].mxu0 %v2719
        %v2882 = vpop.f32.mrb[0].mxu0
        %v2883 = vadd.f32 0.0, %v2882
        %v2884 = vpop.f32.mrb[0].mxu0
        %2885 = vmatprep.mubr.f32.mxu0 0.0
        %2886 = vmatmul.mubr.f32.gmra.mrb[0].mxu0 %v2720
        %v2887 = vpop.f32.mrb[0].mxu0
        %v2888 = vadd.f32 0.0, %v2887
        %v2889 = vpop.f32.mrb[0].mxu0
        %2890 = vmatprep.mubr.f32.mxu0 0.0
        %2891 = vmatmul.mubr.f32.gmra.mrb[0].mxu0 %v2721
        %v2892 = vpop.f32.mrb[0].mxu0
        %v2893 = vadd.f32 0.0, %v2892
        %v2894 = vpop.f32.mrb[0].mxu0
        %2895 = vmatprep.mubr.f32.mxu0 0.0
        %2896 = vmatmul.mubr.f32.gmra.mrb[0].mxu0 %v2722
        %v2897 = vpop.f32.mrb[0].mxu0
        %v2898 = vadd.f32 0.0, %v2897
        %v2899 = vpop.f32.mrb[0].mxu0
        %2900 = vmatprep.mubr.f32.mxu0 0.0
        %2901 = vmatmul.mubr.f32.gmra.mrb[0].mxu0 %v2723
        %v2902 = vpop.f32.mrb[0].mxu0
        %v2903 = vadd.f32 0.0, %v2902
        %v2904 = vpop.f32.mrb[0].mxu0
        %2905 = vmatprep.mubr.f32.mxu0 0.0
        %2906 = vmatmul.mubr.f32.gmra.mrb[0].mxu0 %v2724
        %v2907 = vpop.f32.mrb[0].mxu0
        %v2908 = vadd.f32 0.0, %v2907
        %v2909 = vpop.f32.mrb[0].mxu0
        %2910 = vmatprep.mubr.f32.mxu0 0.0
        %2911 = vmatmul.mubr.f32.gmra.mrb[0].mxu0 %v2725
        %v2912 = vpop.f32.mrb[0].mxu0
        %v2913 = vadd.f32 0.0, %v2912
        %v2914 = vpop.f32.mrb[0].mxu0
        %2915 = vmatprep.mubr.f32.mxu0 0.0
        %2916 = vmatmul.mubr.f32.gmra.mrb[0].mxu0 %v2726
        %v2917 = vpop.f32.mrb[0].mxu0
        %v2918 = vadd.f32 0.0, %v2917
        %v2919 = vpop.f32.mrb[0].mxu0
        %2920 = vmatprep.mubr.f32.mxu0 0.0
        %2921 = vmatmul.mubr.f32.gmra.mrb[0].mxu0 %v2727
        %v2922 = vpop.f32.mrb[0].mxu0
        %v2923 = vadd.f32 0.0, %v2922
        %v2924 = vpop.f32.mrb[0].mxu0
        %2925 = vmatprep.mubr.f32.mxu0 0.0
        %2926 = vmatmul.mubr.f32.gmra.mrb[0].mxu0 %v2728
        %v2927 = vpop.f32.mrb[0].mxu0
        %v2928 = vadd.f32 0.0, %v2927
        %v2929 = vpop.f32.mrb[0].mxu0
        %2930 = vmatprep.mubr.f32.mxu0 0.0
        %2931 = vmatmul.mubr.f32.gmra.mrb[0].mxu0 %v2729
        %v2932 = vpop.f32.mrb[0].mxu0
        %v2933 = vadd.f32 0.0, %v2932
        %v2934 = vpop.f32.mrb[0].mxu0
        %2935 = vmatprep.mubr.f32.mxu0 0.0
        %2936 = vmatmul.mubr.f32.gmra.mrb[0].mxu0 %v2730
        %v2937 = vpop.f32.mrb[0].mxu0
        %v2938 = vadd.f32 0.0, %v2937
        %v2939 = vpop.f32.mrb[0].mxu0
        %2940 = vmatprep.mubr.f32.mxu0 0.0
        %2941 = vmatmul.mubr.f32.gmra.mrb[0].mxu0 %v2731
        %v2942 = vpop.f32.mrb[0].mxu0
        %v2943 = vadd.f32 0.0, %v2942
        %v2944 = vpop.f32.mrb[0].mxu0
        %2945 = vmatprep.mubr.f32.mxu0 0.0
        %2946 = vmatmul.mubr.f32.gmra.mrb[0].mxu0 %v2732
        %v2947 = vpop.f32.mrb[0].mxu0
        %v2948 = vadd.f32 0.0, %v2947
        %v2949 = vpop.f32.mrb[0].mxu0
        %2950 = vmatprep.mubr.f32.mxu0 0.0
        %2951 = vmatmul.mubr.f32.gmra.mrb[0].mxu0 %v2733
        %v2952 = vpop.f32.mrb[0].mxu0
        %v2953 = vadd.f32 0.0, %v2952
        %v2954 = vpop.f32.mrb[0].mxu0
        %2955 = vmatprep.mubr.f32.mxu0 0.0
        %2956 = vmatmul.mubr.f32.gmra.mrb[0].mxu0 %v2734
        %v2957 = vpop.f32.mrb[0].mxu0
        %v2958 = vadd.f32 0.0, %v2957
        %v2959 = vpop.f32.mrb[0].mxu0
        %2960 = vmatprep.mubr.f32.mxu0 0.0
        %2961 = vmatmul.mubr.f32.gmra.mrb[0].mxu0 %v2735
        %v2962 = vpop.f32.mrb[0].mxu0
        %v2963 = vadd.f32 0.0, %v2962
        %v2964 = vpop.f32.mrb[0].mxu0
        %2965 = vmatprep.mubr.f32.mxu0 0.0
        %2966 = vmatmul.mubr.f32.gmra.mrb[0].mxu0 %v2736
        %v2967 = vpop.f32.mrb[0].mxu0
        %v2968 = vadd.f32 0.0, %v2967
        %v2969 = vpop.f32.mrb[0].mxu0
        %2970 = vmatprep.mubr.f32.mxu0 0.0
        %2971 = vmatmul.mubr.f32.gmra.mrb[0].mxu0 %v2737
        %v2972 = vpop.f32.mrb[0].mxu0
        %v2973 = vadd.f32 0.0, %v2972
        %v2974 = vpop.f32.mrb[0].mxu0
        %2975 = vmatprep.mubr.f32.mxu0 0.0
        %2976 = vmatmul.mubr.f32.gmra.mrb[0].mxu0 %v2738
        %v2977 = vpop.f32.mrb[0].mxu0
        %v2978 = vadd.f32 0.0, %v2977
        %v2979 = vpop.f32.mrb[0].mxu0
        %2980 = vdwg.mxu0
        %v2981 = vadd.f32 %v2674, %v2823
        %v2982 = vadd.f32 %v2675, %v2828
        %v2983 = vadd.f32 %v2676, %v2833
        %v2984 = vadd.f32 %v2677, %v2838
        %v2985 = vadd.f32 %v2678, %v2843
        %v2986 = vadd.f32 %v2679, %v2848
        %v2987 = vadd.f32 %v2680, %v2853
        %v2988 = vadd.f32 %v2681, %v2858
        %v2989 = vadd.f32 %v2682, %v2863
        %v2990 = vadd.f32 %v2683, %v2868
        %v2991 = vadd.f32 %v2684, %v2873
        %v2992 = vadd.f32 %v2685, %v2878
        %v2993 = vadd.f32 %v2686, %v2883
        %v2994 = vadd.f32 %v2687, %v2888
        %v2995 = vadd.f32 %v2688, %v2893
        %v2996 = vadd.f32 %v2689, %v2898
        %v2997 = vadd.f32 %v2690, %v2903
        %v2998 = vadd.f32 %v2691, %v2908
        %v2999 = vadd.f32 %v2692, %v2913
        %v3000 = vadd.f32 %v2693, %v2918
        %v3001 = vadd.f32 %v2694, %v2923
        %v3002 = vadd.f32 %v2695, %v2928
        %v3003 = vadd.f32 %v2696, %v2933
        %v3004 = vadd.f32 %v2697, %v2938
        %v3005 = vadd.f32 %v2698, %v2943
        %v3006 = vadd.f32 %v2699, %v2948
        %v3007 = vadd.f32 %v2700, %v2953
        %v3008 = vadd.f32 %v2701, %v2958
        %v3009 = vadd.f32 %v2702, %v2963
        %v3010 = vadd.f32 %v2703, %v2968
        %v3011 = vadd.f32 %v2704, %v2973
        %v3012 = vadd.f32 %v2705, %v2978
        %v3013 = vld [vmem:[%s2706 + $0x1] sm:$0xff]
        %v3014 = vld [vmem:[%s2706 + $0x9] sm:$0xff]
        %v3015 = vld [vmem:[%s2706 + $0x19] sm:$0xff]
        %v3016 = vld [vmem:[%s2706 + $0x21] sm:$0xff]
        %v3017 = vld [vmem:[%s2706 + $0x31] sm:$0xff]
        %v3018 = vld [vmem:[%s2706 + $0x39] sm:$0xff]
        %v3019 = vld [vmem:[%s2706 + $0x49] sm:$0xff]
        %v3020 = vld [vmem:[%s2706 + $0x51] sm:$0xff]
        %v3021 = vld [vmem:[%s2706 + $0x61] sm:$0xff]
        %v3022 = vld [vmem:[%s2706 + $0x69] sm:$0xff]
        %v3023 = vld [vmem:[%s2706 + $0x79] sm:$0xff]
        %v3024 = vld [vmem:[%s2706 + $0x81] sm:$0xff]
        %v3025 = vld [vmem:[%s2706 + $0x91] sm:$0xff]
        %v3026 = vld [vmem:[%s2706 + $0x99] sm:$0xff]
        %v3027 = vld [vmem:[%s2706 + $0xa9] sm:$0xff]
        %v3028 = vld [vmem:[%s2706 + $0xb1] sm:$0xff]
        %v3029 = vld [vmem:[%s2706 + $0xc1] sm:$0xff]
        %v3030 = vld [vmem:[%s2706 + $0xc9] sm:$0xff]
        %v3031 = vld [vmem:[%s2706 + $0xd9] sm:$0xff]
        %v3032 = vld [vmem:[%s2706 + $0xe1] sm:$0xff]
        %v3033 = vld [vmem:[%s2706 + $0xf1] sm:$0xff]
        %v3034 = vld [vmem:[%s2706 + $0xf9] sm:$0xff]
        %v3035 = vld [vmem:[%s2706 + $0x109] sm:$0xff]
        %v3036 = vld [vmem:[%s2706 + $0x111] sm:$0xff]
        %v3037 = vld [vmem:[%s2706 + $0x121] sm:$0xff]
        %v3038 = vld [vmem:[%s2706 + $0x129] sm:$0xff]
        %v3039 = vld [vmem:[%s2706 + $0x139] sm:$0xff]
        %v3040 = vld [vmem:[%s2706 + $0x141] sm:$0xff]
        %v3041 = vld [vmem:[%s2706 + $0x151] sm:$0xff]
        %v3042 = vld [vmem:[%s2706 + $0x159] sm:$0xff]
        %v3043 = vld [vmem:[%s2706 + $0x169] sm:$0xff]
        %v3044 = vld [vmem:[%s2706 + $0x171] sm:$0xff]
        %s3045 = scalar_lea.vmem [#allocation10], 896
        %v3046 = vld [vmem:[%s3045] sm:$0xff]
        %v3047 = vld [vmem:[%s3045 + $0x8] sm:$0xff]
        %v3048 = vld [vmem:[%s3045 + $0x10] sm:$0xff]
        %v3049 = vld [vmem:[%s3045 + $0x18] sm:$0xff]
        %v3050 = vld [vmem:[%s3045 + $0x20] sm:$0xff]
        %v3051 = vld [vmem:[%s3045 + $0x28] sm:$0xff]
        %v3052 = vld [vmem:[%s3045 + $0x30] sm:$0xff]
        %v3053 = vld [vmem:[%s3045 + $0x38] sm:$0xff]
        %v3054 = vld [vmem:[%s3045 + $0x40] sm:$0xff]
        %v3055 = vld [vmem:[%s3045 + $0x48] sm:$0xff]
        %v3056 = vld [vmem:[%s3045 + $0x50] sm:$0xff]
        %v3057 = vld [vmem:[%s3045 + $0x58] sm:$0xff]
        %v3058 = vld [vmem:[%s3045 + $0x60] sm:$0xff]
        %v3059 = vld [vmem:[%s3045 + $0x68] sm:$0xff]
        %v3060 = vld [vmem:[%s3045 + $0x70] sm:$0xff]
        %v3061 = vld [vmem:[%s3045 + $0x78] sm:$0xff]
        %3062 = vmatprep.subr.mxu0 0.0
        %3063 = vmatpush1.msra.mxu0 %v3046
        %3064 = vmatprep.subr.mxu0 0.0
        %3065 = vmatpush1.msra.mxu0 %v3047
        %3066 = vmatprep.subr.mxu0 0.0
        %3067 = vmatpush1.msra.mxu0 %v3048
        %3068 = vmatprep.subr.mxu0 0.0
        %3069 = vmatpush1.msra.mxu0 %v3049
        %3070 = vmatprep.subr.mxu0 0.0
        %3071 = vmatpush1.msra.mxu0 %v3050
        %3072 = vmatprep.subr.mxu0 0.0
        %3073 = vmatpush1.msra.mxu0 %v3051
        %3074 = vmatprep.subr.mxu0 0.0
        %3075 = vmatpush1.msra.mxu0 %v3052
        %3076 = vmatprep.subr.mxu0 0.0
        %3077 = vmatpush1.msra.mxu0 %v3053
        %3078 = vmatprep.subr.mxu0 0.0
        %3079 = vmatpush1.msra.mxu0 %v3054
        %3080 = vmatprep.subr.mxu0 0.0
        %3081 = vmatpush1.msra.mxu0 %v3055
        %3082 = vmatprep.subr.mxu0 0.0
        %3083 = vmatpush1.msra.mxu0 %v3056
        %3084 = vmatprep.subr.mxu0 0.0
        %3085 = vmatpush1.msra.mxu0 %v3057
        %3086 = vmatprep.subr.mxu0 0.0
        %3087 = vmatpush1.msra.mxu0 %v3058
        %3088 = vmatprep.subr.mxu0 0.0
        %3089 = vmatpush1.msra.mxu0 %v3059
        %3090 = vmatprep.subr.mxu0 0.0
        %3091 = vmatpush1.msra.mxu0 %v3060
        %3092 = vmatprep.subr.mxu0 0.0
        %3093 = vmatpush1.msra.mxu0 %v3061
        %3094 = vmatprep.subr.mxu0 0.0
        %3095 = vmatpush1.msra.mxu0 0.0
        %3096 = vmatprep.subr.mxu0 0.0
        %3097 = vmatpush1.msra.mxu0 0.0
        %3098 = vmatprep.subr.mxu0 0.0
        %3099 = vmatpush1.msra.mxu0 0.0
        %3100 = vmatprep.subr.mxu0 0.0
        %3101 = vmatpush1.msra.mxu0 0.0
        %3102 = vmatprep.subr.mxu0 0.0
        %3103 = vmatpush1.msra.mxu0 0.0
        %3104 = vmatprep.subr.mxu0 0.0
        %3105 = vmatpush1.msra.mxu0 0.0
        %3106 = vmatprep.subr.mxu0 0.0
        %3107 = vmatpush1.msra.mxu0 0.0
        %3108 = vmatprep.subr.mxu0 0.0
        %3109 = vmatpush1.msra.mxu0 0.0
        %3110 = vmatprep.subr.mxu0 0.0
        %3111 = vmatpush1.msra.mxu0 0.0
        %3112 = vmatprep.subr.mxu0 0.0
        %3113 = vmatpush1.msra.mxu0 0.0
        %3114 = vmatprep.subr.mxu0 0.0
        %3115 = vmatpush1.msra.mxu0 0.0
        %3116 = vmatprep.subr.mxu0 0.0
        %3117 = vmatpush1.msra.mxu0 0.0
        %3118 = vmatprep.subr.mxu0 0.0
        %3119 = vmatpush1.msra.mxu0 0.0
        %3120 = vmatprep.subr.mxu0 0.0
        %3121 = vmatpush1.msra.mxu0 0.0
        %3122 = vmatprep.subr.mxu0 0.0
        %3123 = vmatpush1.msra.mxu0 0.0
        %3124 = vmatprep.subr.mxu0 0.0
        %3125 = vmatpush1.msra.mxu0 0.0
        %3126 = vmatprep.mubr.f32.mxu0 0.0
        %3127 = vmatmul.mubr.f32.gmra.mrb[0].mxu0 %v3013
        %v3128 = vpop.f32.mrb[0].mxu0
        %v3129 = vadd.f32 0.0, %v3128
        %v3130 = vpop.f32.mrb[0].mxu0
        %3131 = vmatprep.mubr.f32.mxu0 0.0
        %3132 = vmatmul.mubr.f32.gmra.mrb[0].mxu0 %v3014
        %v3133 = vpop.f32.mrb[0].mxu0
        %v3134 = vadd.f32 0.0, %v3133
        %v3135 = vpop.f32.mrb[0].mxu0
        %3136 = vmatprep.mubr.f32.mxu0 0.0
        %3137 = vmatmul.mubr.f32.gmra.mrb[0].mxu0 %v3015
        %v3138 = vpop.f32.mrb[0].mxu0
        %v3139 = vadd.f32 0.0, %v3138
        %v3140 = vpop.f32.mrb[0].mxu0
        %3141 = vmatprep.mubr.f32.mxu0 0.0
        %3142 = vmatmul.mubr.f32.gmra.mrb[0].mxu0 %v3016
        %v3143 = vpop.f32.mrb[0].mxu0
        %v3144 = vadd.f32 0.0, %v3143
        %v3145 = vpop.f32.mrb[0].mxu0
        %3146 = vmatprep.mubr.f32.mxu0 0.0
        %3147 = vmatmul.mubr.f32.gmra.mrb[0].mxu0 %v3017
        %v3148 = vpop.f32.mrb[0].mxu0
        %v3149 = vadd.f32 0.0, %v3148
        %v3150 = vpop.f32.mrb[0].mxu0
        %3151 = vmatprep.mubr.f32.mxu0 0.0
        %3152 = vmatmul.mubr.f32.gmra.mrb[0].mxu0 %v3018
        %v3153 = vpop.f32.mrb[0].mxu0
        %v3154 = vadd.f32 0.0, %v3153
        %v3155 = vpop.f32.mrb[0].mxu0
        %3156 = vmatprep.mubr.f32.mxu0 0.0
        %3157 = vmatmul.mubr.f32.gmra.mrb[0].mxu0 %v3019
        %v3158 = vpop.f32.mrb[0].mxu0
        %v3159 = vadd.f32 0.0, %v3158
        %v3160 = vpop.f32.mrb[0].mxu0
        %3161 = vmatprep.mubr.f32.mxu0 0.0
        %3162 = vmatmul.mubr.f32.gmra.mrb[0].mxu0 %v3020
        %v3163 = vpop.f32.mrb[0].mxu0
        %v3164 = vadd.f32 0.0, %v3163
        %v3165 = vpop.f32.mrb[0].mxu0
        %3166 = vmatprep.mubr.f32.mxu0 0.0
        %3167 = vmatmul.mubr.f32.gmra.mrb[0].mxu0 %v3021
        %v3168 = vpop.f32.mrb[0].mxu0
        %v3169 = vadd.f32 0.0, %v3168
        %v3170 = vpop.f32.mrb[0].mxu0
        %3171 = vmatprep.mubr.f32.mxu0 0.0
        %3172 = vmatmul.mubr.f32.gmra.mrb[0].mxu0 %v3022
        %v3173 = vpop.f32.mrb[0].mxu0
        %v3174 = vadd.f32 0.0, %v3173
        %v3175 = vpop.f32.mrb[0].mxu0
        %3176 = vmatprep.mubr.f32.mxu0 0.0
        %3177 = vmatmul.mubr.f32.gmra.mrb[0].mxu0 %v3023
        %v3178 = vpop.f32.mrb[0].mxu0
        %v3179 = vadd.f32 0.0, %v3178
        %v3180 = vpop.f32.mrb[0].mxu0
        %3181 = vmatprep.mubr.f32.mxu0 0.0
        %3182 = vmatmul.mubr.f32.gmra.mrb[0].mxu0 %v3024
        %v3183 = vpop.f32.mrb[0].mxu0
        %v3184 = vadd.f32 0.0, %v3183
        %v3185 = vpop.f32.mrb[0].mxu0
        %3186 = vmatprep.mubr.f32.mxu0 0.0
        %3187 = vmatmul.mubr.f32.gmra.mrb[0].mxu0 %v3025
        %v3188 = vpop.f32.mrb[0].mxu0
        %v3189 = vadd.f32 0.0, %v3188
        %v3190 = vpop.f32.mrb[0].mxu0
        %3191 = vmatprep.mubr.f32.mxu0 0.0
        %3192 = vmatmul.mubr.f32.gmra.mrb[0].mxu0 %v3026
        %v3193 = vpop.f32.mrb[0].mxu0
        %v3194 = vadd.f32 0.0, %v3193
        %v3195 = vpop.f32.mrb[0].mxu0
        %3196 = vmatprep.mubr.f32.mxu0 0.0
        %3197 = vmatmul.mubr.f32.gmra.mrb[0].mxu0 %v3027
        %v3198 = vpop.f32.mrb[0].mxu0
        %v3199 = vadd.f32 0.0, %v3198
        %v3200 = vpop.f32.mrb[0].mxu0
        %3201 = vmatprep.mubr.f32.mxu0 0.0
        %3202 = vmatmul.mubr.f32.gmra.mrb[0].mxu0 %v3028
        %v3203 = vpop.f32.mrb[0].mxu0
        %v3204 = vadd.f32 0.0, %v3203
        %v3205 = vpop.f32.mrb[0].mxu0
        %3206 = vmatprep.mubr.f32.mxu0 0.0
        %3207 = vmatmul.mubr.f32.gmra.mrb[0].mxu0 %v3029
        %v3208 = vpop.f32.mrb[0].mxu0
        %v3209 = vadd.f32 0.0, %v3208
        %v3210 = vpop.f32.mrb[0].mxu0
        %3211 = vmatprep.mubr.f32.mxu0 0.0
        %3212 = vmatmul.mubr.f32.gmra.mrb[0].mxu0 %v3030
        %v3213 = vpop.f32.mrb[0].mxu0
        %v3214 = vadd.f32 0.0, %v3213
        %v3215 = vpop.f32.mrb[0].mxu0
        %3216 = vmatprep.mubr.f32.mxu0 0.0
        %3217 = vmatmul.mubr.f32.gmra.mrb[0].mxu0 %v3031
        %v3218 = vpop.f32.mrb[0].mxu0
        %v3219 = vadd.f32 0.0, %v3218
        %v3220 = vpop.f32.mrb[0].mxu0
        %3221 = vmatprep.mubr.f32.mxu0 0.0
        %3222 = vmatmul.mubr.f32.gmra.mrb[0].mxu0 %v3032
        %v3223 = vpop.f32.mrb[0].mxu0
        %v3224 = vadd.f32 0.0, %v3223
        %v3225 = vpop.f32.mrb[0].mxu0
        %3226 = vmatprep.mubr.f32.mxu0 0.0
        %3227 = vmatmul.mubr.f32.gmra.mrb[0].mxu0 %v3033
        %v3228 = vpop.f32.mrb[0].mxu0
        %v3229 = vadd.f32 0.0, %v3228
        %v3230 = vpop.f32.mrb[0].mxu0
        %3231 = vmatprep.mubr.f32.mxu0 0.0
        %3232 = vmatmul.mubr.f32.gmra.mrb[0].mxu0 %v3034
        %v3233 = vpop.f32.mrb[0].mxu0
        %v3234 = vadd.f32 0.0, %v3233
        %v3235 = vpop.f32.mrb[0].mxu0
        %3236 = vmatprep.mubr.f32.mxu0 0.0
        %3237 = vmatmul.mubr.f32.gmra.mrb[0].mxu0 %v3035
        %v3238 = vpop.f32.mrb[0].mxu0
        %v3239 = vadd.f32 0.0, %v3238
        %v3240 = vpop.f32.mrb[0].mxu0
        %3241 = vmatprep.mubr.f32.mxu0 0.0
        %3242 = vmatmul.mubr.f32.gmra.mrb[0].mxu0 %v3036
        %v3243 = vpop.f32.mrb[0].mxu0
        %v3244 = vadd.f32 0.0, %v3243
        %v3245 = vpop.f32.mrb[0].mxu0
        %3246 = vmatprep.mubr.f32.mxu0 0.0
        %3247 = vmatmul.mubr.f32.gmra.mrb[0].mxu0 %v3037
        %v3248 = vpop.f32.mrb[0].mxu0
        %v3249 = vadd.f32 0.0, %v3248
        %v3250 = vpop.f32.mrb[0].mxu0
        %3251 = vmatprep.mubr.f32.mxu0 0.0
        %3252 = vmatmul.mubr.f32.gmra.mrb[0].mxu0 %v3038
        %v3253 = vpop.f32.mrb[0].mxu0
        %v3254 = vadd.f32 0.0, %v3253
        %v3255 = vpop.f32.mrb[0].mxu0
        %3256 = vmatprep.mubr.f32.mxu0 0.0
        %3257 = vmatmul.mubr.f32.gmra.mrb[0].mxu0 %v3039
        %v3258 = vpop.f32.mrb[0].mxu0
        %v3259 = vadd.f32 0.0, %v3258
        %v3260 = vpop.f32.mrb[0].mxu0
        %3261 = vmatprep.mubr.f32.mxu0 0.0
        %3262 = vmatmul.mubr.f32.gmra.mrb[0].mxu0 %v3040
        %v3263 = vpop.f32.mrb[0].mxu0
        %v3264 = vadd.f32 0.0, %v3263
        %v3265 = vpop.f32.mrb[0].mxu0
        %3266 = vmatprep.mubr.f32.mxu0 0.0
        %3267 = vmatmul.mubr.f32.gmra.mrb[0].mxu0 %v3041
        %v3268 = vpop.f32.mrb[0].mxu0
        %v3269 = vadd.f32 0.0, %v3268
        %v3270 = vpop.f32.mrb[0].mxu0
        %3271 = vmatprep.mubr.f32.mxu0 0.0
        %3272 = vmatmul.mubr.f32.gmra.mrb[0].mxu0 %v3042
        %v3273 = vpop.f32.mrb[0].mxu0
        %v3274 = vadd.f32 0.0, %v3273
        %v3275 = vpop.f32.mrb[0].mxu0
        %3276 = vmatprep.mubr.f32.mxu0 0.0
        %3277 = vmatmul.mubr.f32.gmra.mrb[0].mxu0 %v3043
        %v3278 = vpop.f32.mrb[0].mxu0
        %v3279 = vadd.f32 0.0, %v3278
        %v3280 = vpop.f32.mrb[0].mxu0
        %3281 = vmatprep.mubr.f32.mxu0 0.0
        %3282 = vmatmul.mubr.f32.gmra.mrb[0].mxu0 %v3044
        %v3283 = vpop.f32.mrb[0].mxu0
        %v3284 = vadd.f32 0.0, %v3283
        %v3285 = vpop.f32.mrb[0].mxu0
        %3286 = vdwg.mxu0
        %v3287 = vadd.f32 %v2981, %v3129
        %v3288 = vadd.f32 %v2982, %v3134
        %v3289 = vadd.f32 %v2983, %v3139
        %v3290 = vadd.f32 %v2984, %v3144
        %v3291 = vadd.f32 %v2985, %v3149
        %v3292 = vadd.f32 %v2986, %v3154
        %v3293 = vadd.f32 %v2987, %v3159
        %v3294 = vadd.f32 %v2988, %v3164
        %v3295 = vadd.f32 %v2989, %v3169
        %v3296 = vadd.f32 %v2990, %v3174
        %v3297 = vadd.f32 %v2991, %v3179
        %v3298 = vadd.f32 %v2992, %v3184
        %v3299 = vadd.f32 %v2993, %v3189
        %v3300 = vadd.f32 %v2994, %v3194
        %v3301 = vadd.f32 %v2995, %v3199
        %v3302 = vadd.f32 %v2996, %v3204
        %v3303 = vadd.f32 %v2997, %v3209
        %v3304 = vadd.f32 %v2998, %v3214
        %v3305 = vadd.f32 %v2999, %v3219
        %v3306 = vadd.f32 %v3000, %v3224
        %v3307 = vadd.f32 %v3001, %v3229
        %v3308 = vadd.f32 %v3002, %v3234
        %v3309 = vadd.f32 %v3003, %v3239
        %v3310 = vadd.f32 %v3004, %v3244
        %v3311 = vadd.f32 %v3005, %v3249
        %v3312 = vadd.f32 %v3006, %v3254
        %v3313 = vadd.f32 %v3007, %v3259
        %v3314 = vadd.f32 %v3008, %v3264
        %v3315 = vadd.f32 %v3009, %v3269
        %v3316 = vadd.f32 %v3010, %v3274
        %v3317 = vadd.f32 %v3011, %v3279
        %v3318 = vadd.f32 %v3012, %v3284
        %v3319 = vld [vmem:[%s2706 + $0x2] sm:$0xff]
        %v3320 = vld [vmem:[%s2706 + $0xa] sm:$0xff]
        %v3321 = vld [vmem:[%s2706 + $0x1a] sm:$0xff]
        %v3322 = vld [vmem:[%s2706 + $0x22] sm:$0xff]
        %v3323 = vld [vmem:[%s2706 + $0x32] sm:$0xff]
        %v3324 = vld [vmem:[%s2706 + $0x3a] sm:$0xff]
        %v3325 = vld [vmem:[%s2706 + $0x4a] sm:$0xff]
        %v3326 = vld [vmem:[%s2706 + $0x52] sm:$0xff]
        %v3327 = vld [vmem:[%s2706 + $0x62] sm:$0xff]
        %v3328 = vld [vmem:[%s2706 + $0x6a] sm:$0xff]
        %v3329 = vld [vmem:[%s2706 + $0x7a] sm:$0xff]
        %v3330 = vld [vmem:[%s2706 + $0x82] sm:$0xff]
        %v3331 = vld [vmem:[%s2706 + $0x92] sm:$0xff]
        %v3332 = vld [vmem:[%s2706 + $0x9a] sm:$0xff]
        %v3333 = vld [vmem:[%s2706 + $0xaa] sm:$0xff]
        %v3334 = vld [vmem:[%s2706 + $0xb2] sm:$0xff]
        %v3335 = vld [vmem:[%s2706 + $0xc2] sm:$0xff]
        %v3336 = vld [vmem:[%s2706 + $0xca] sm:$0xff]
        %v3337 = vld [vmem:[%s2706 + $0xda] sm:$0xff]
        %v3338 = vld [vmem:[%s2706 + $0xe2] sm:$0xff]
        %v3339 = vld [vmem:[%s2706 + $0xf2] sm:$0xff]
        %v3340 = vld [vmem:[%s2706 + $0xfa] sm:$0xff]
        %v3341 = vld [vmem:[%s2706 + $0x10a] sm:$0xff]
        %v3342 = vld [vmem:[%s2706 + $0x112] sm:$0xff]
        %v3343 = vld [vmem:[%s2706 + $0x122] sm:$0xff]
        %v3344 = vld [vmem:[%s2706 + $0x12a] sm:$0xff]
        %v3345 = vld [vmem:[%s2706 + $0x13a] sm:$0xff]
        %v3346 = vld [vmem:[%s2706 + $0x142] sm:$0xff]
        %v3347 = vld [vmem:[%s2706 + $0x152] sm:$0xff]
        %v3348 = vld [vmem:[%s2706 + $0x15a] sm:$0xff]
        %v3349 = vld [vmem:[%s2706 + $0x16a] sm:$0xff]
        %v3350 = vld [vmem:[%s2706 + $0x172] sm:$0xff]
        %s3351 = scalar_lea.vmem [#allocation10], 1024
        %v3352 = vld [vmem:[%s3351] sm:$0xff]
        %v3353 = vld [vmem:[%s3351 + $0x8] sm:$0xff]
        %v3354 = vld [vmem:[%s3351 + $0x10] sm:$0xff]
        %v3355 = vld [vmem:[%s3351 + $0x18] sm:$0xff]
        %v3356 = vld [vmem:[%s3351 + $0x20] sm:$0xff]
        %v3357 = vld [vmem:[%s3351 + $0x28] sm:$0xff]
        %v3358 = vld [vmem:[%s3351 + $0x30] sm:$0xff]
        %v3359 = vld [vmem:[%s3351 + $0x38] sm:$0xff]
        %v3360 = vld [vmem:[%s3351 + $0x40] sm:$0xff]
        %v3361 = vld [vmem:[%s3351 + $0x48] sm:$0xff]
        %v3362 = vld [vmem:[%s3351 + $0x50] sm:$0xff]
        %v3363 = vld [vmem:[%s3351 + $0x58] sm:$0xff]
        %v3364 = vld [vmem:[%s3351 + $0x60] sm:$0xff]
        %v3365 = vld [vmem:[%s3351 + $0x68] sm:$0xff]
        %v3366 = vld [vmem:[%s3351 + $0x70] sm:$0xff]
        %v3367 = vld [vmem:[%s3351 + $0x78] sm:$0xff]
        %3368 = vmatprep.subr.mxu0 0.0
        %3369 = vmatpush1.msra.mxu0 %v3352
        %3370 = vmatprep.subr.mxu0 0.0
        %3371 = vmatpush1.msra.mxu0 %v3353
        %3372 = vmatprep.subr.mxu0 0.0
        %3373 = vmatpush1.msra.mxu0 %v3354
        %3374 = vmatprep.subr.mxu0 0.0
        %3375 = vmatpush1.msra.mxu0 %v3355
        %3376 = vmatprep.subr.mxu0 0.0
        %3377 = vmatpush1.msra.mxu0 %v3356
        %3378 = vmatprep.subr.mxu0 0.0
        %3379 = vmatpush1.msra.mxu0 %v3357
        %3380 = vmatprep.subr.mxu0 0.0
        %3381 = vmatpush1.msra.mxu0 %v3358
        %3382 = vmatprep.subr.mxu0 0.0
        %3383 = vmatpush1.msra.mxu0 %v3359
        %3384 = vmatprep.subr.mxu0 0.0
        %3385 = vmatpush1.msra.mxu0 %v3360
        %3386 = vmatprep.subr.mxu0 0.0
        %3387 = vmatpush1.msra.mxu0 %v3361
        %3388 = vmatprep.subr.mxu0 0.0
        %3389 = vmatpush1.msra.mxu0 %v3362
        %3390 = vmatprep.subr.mxu0 0.0
        %3391 = vmatpush1.msra.mxu0 %v3363
        %3392 = vmatprep.subr.mxu0 0.0
        %3393 = vmatpush1.msra.mxu0 %v3364
        %3394 = vmatprep.subr.mxu0 0.0
        %3395 = vmatpush1.msra.mxu0 %v3365
        %3396 = vmatprep.subr.mxu0 0.0
        %3397 = vmatpush1.msra.mxu0 %v3366
        %3398 = vmatprep.subr.mxu0 0.0
        %3399 = vmatpush1.msra.mxu0 %v3367
        %3400 = vmatprep.subr.mxu0 0.0
        %3401 = vmatpush1.msra.mxu0 0.0
        %3402 = vmatprep.subr.mxu0 0.0
        %3403 = vmatpush1.msra.mxu0 0.0
        %3404 = vmatprep.subr.mxu0 0.0
        %3405 = vmatpush1.msra.mxu0 0.0
        %3406 = vmatprep.subr.mxu0 0.0
        %3407 = vmatpush1.msra.mxu0 0.0
        %3408 = vmatprep.subr.mxu0 0.0
        %3409 = vmatpush1.msra.mxu0 0.0
        %3410 = vmatprep.subr.mxu0 0.0
        %3411 = vmatpush1.msra.mxu0 0.0
        %3412 = vmatprep.subr.mxu0 0.0
        %3413 = vmatpush1.msra.mxu0 0.0
        %3414 = vmatprep.subr.mxu0 0.0
        %3415 = vmatpush1.msra.mxu0 0.0
        %3416 = vmatprep.subr.mxu0 0.0
        %3417 = vmatpush1.msra.mxu0 0.0
        %3418 = vmatprep.subr.mxu0 0.0
        %3419 = vmatpush1.msra.mxu0 0.0
        %3420 = vmatprep.subr.mxu0 0.0
        %3421 = vmatpush1.msra.mxu0 0.0
        %3422 = vmatprep.subr.mxu0 0.0
        %3423 = vmatpush1.msra.mxu0 0.0
        %3424 = vmatprep.subr.mxu0 0.0
        %3425 = vmatpush1.msra.mxu0 0.0
        %3426 = vmatprep.subr.mxu0 0.0
        %3427 = vmatpush1.msra.mxu0 0.0
        %3428 = vmatprep.subr.mxu0 0.0
        %3429 = vmatpush1.msra.mxu0 0.0
        %3430 = vmatprep.subr.mxu0 0.0
        %3431 = vmatpush1.msra.mxu0 0.0
        %3432 = vmatprep.mubr.f32.mxu0 0.0
        %3433 = vmatmul.mubr.f32.gmra.mrb[0].mxu0 %v3319
        %v3434 = vpop.f32.mrb[0].mxu0
        %v3435 = vadd.f32 0.0, %v3434
        %v3436 = vpop.f32.mrb[0].mxu0
        %3437 = vmatprep.mubr.f32.mxu0 0.0
        %3438 = vmatmul.mubr.f32.gmra.mrb[0].mxu0 %v3320
        %v3439 = vpop.f32.mrb[0].mxu0
        %v3440 = vadd.f32 0.0, %v3439
        %v3441 = vpop.f32.mrb[0].mxu0
        %3442 = vmatprep.mubr.f32.mxu0 0.0
        %3443 = vmatmul.mubr.f32.gmra.mrb[0].mxu0 %v3321
        %v3444 = vpop.f32.mrb[0].mxu0
        %v3445 = vadd.f32 0.0, %v3444
        %v3446 = vpop.f32.mrb[0].mxu0
        %3447 = vmatprep.mubr.f32.mxu0 0.0
        %3448 = vmatmul.mubr.f32.gmra.mrb[0].mxu0 %v3322
        %v3449 = vpop.f32.mrb[0].mxu0
        %v3450 = vadd.f32 0.0, %v3449
        %v3451 = vpop.f32.mrb[0].mxu0
        %3452 = vmatprep.mubr.f32.mxu0 0.0
        %3453 = vmatmul.mubr.f32.gmra.mrb[0].mxu0 %v3323
        %v3454 = vpop.f32.mrb[0].mxu0
        %v3455 = vadd.f32 0.0, %v3454
        %v3456 = vpop.f32.mrb[0].mxu0
        %3457 = vmatprep.mubr.f32.mxu0 0.0
        %3458 = vmatmul.mubr.f32.gmra.mrb[0].mxu0 %v3324
        %v3459 = vpop.f32.mrb[0].mxu0
        %v3460 = vadd.f32 0.0, %v3459
        %v3461 = vpop.f32.mrb[0].mxu0
        %3462 = vmatprep.mubr.f32.mxu0 0.0
        %3463 = vmatmul.mubr.f32.gmra.mrb[0].mxu0 %v3325
        %v3464 = vpop.f32.mrb[0].mxu0
        %v3465 = vadd.f32 0.0, %v3464
        %v3466 = vpop.f32.mrb[0].mxu0
        %3467 = vmatprep.mubr.f32.mxu0 0.0
        %3468 = vmatmul.mubr.f32.gmra.mrb[0].mxu0 %v3326
        %v3469 = vpop.f32.mrb[0].mxu0
        %v3470 = vadd.f32 0.0, %v3469
        %v3471 = vpop.f32.mrb[0].mxu0
        %3472 = vmatprep.mubr.f32.mxu0 0.0
        %3473 = vmatmul.mubr.f32.gmra.mrb[0].mxu0 %v3327
        %v3474 = vpop.f32.mrb[0].mxu0
        %v3475 = vadd.f32 0.0, %v3474
        %v3476 = vpop.f32.mrb[0].mxu0
        %3477 = vmatprep.mubr.f32.mxu0 0.0
        %3478 = vmatmul.mubr.f32.gmra.mrb[0].mxu0 %v3328
        %v3479 = vpop.f32.mrb[0].mxu0
        %v3480 = vadd.f32 0.0, %v3479
        %v3481 = vpop.f32.mrb[0].mxu0
        %3482 = vmatprep.mubr.f32.mxu0 0.0
        %3483 = vmatmul.mubr.f32.gmra.mrb[0].mxu0 %v3329
        %v3484 = vpop.f32.mrb[0].mxu0
        %v3485 = vadd.f32 0.0, %v3484
        %v3486 = vpop.f32.mrb[0].mxu0
        %3487 = vmatprep.mubr.f32.mxu0 0.0
        %3488 = vmatmul.mubr.f32.gmra.mrb[0].mxu0 %v3330
        %v3489 = vpop.f32.mrb[0].mxu0
        %v3490 = vadd.f32 0.0, %v3489
        %v3491 = vpop.f32.mrb[0].mxu0
        %3492 = vmatprep.mubr.f32.mxu0 0.0
        %3493 = vmatmul.mubr.f32.gmra.mrb[0].mxu0 %v3331
        %v3494 = vpop.f32.mrb[0].mxu0
        %v3495 = vadd.f32 0.0, %v3494
        %v3496 = vpop.f32.mrb[0].mxu0
        %3497 = vmatprep.mubr.f32.mxu0 0.0
        %3498 = vmatmul.mubr.f32.gmra.mrb[0].mxu0 %v3332
        %v3499 = vpop.f32.mrb[0].mxu0
        %v3500 = vadd.f32 0.0, %v3499
        %v3501 = vpop.f32.mrb[0].mxu0
        %3502 = vmatprep.mubr.f32.mxu0 0.0
        %3503 = vmatmul.mubr.f32.gmra.mrb[0].mxu0 %v3333
        %v3504 = vpop.f32.mrb[0].mxu0
        %v3505 = vadd.f32 0.0, %v3504
        %v3506 = vpop.f32.mrb[0].mxu0
        %3507 = vmatprep.mubr.f32.mxu0 0.0
        %3508 = vmatmul.mubr.f32.gmra.mrb[0].mxu0 %v3334
        %v3509 = vpop.f32.mrb[0].mxu0
        %v3510 = vadd.f32 0.0, %v3509
        %v3511 = vpop.f32.mrb[0].mxu0
        %3512 = vmatprep.mubr.f32.mxu0 0.0
        %3513 = vmatmul.mubr.f32.gmra.mrb[0].mxu0 %v3335
        %v3514 = vpop.f32.mrb[0].mxu0
        %v3515 = vadd.f32 0.0, %v3514
        %v3516 = vpop.f32.mrb[0].mxu0
        %3517 = vmatprep.mubr.f32.mxu0 0.0
        %3518 = vmatmul.mubr.f32.gmra.mrb[0].mxu0 %v3336
        %v3519 = vpop.f32.mrb[0].mxu0
        %v3520 = vadd.f32 0.0, %v3519
        %v3521 = vpop.f32.mrb[0].mxu0
        %3522 = vmatprep.mubr.f32.mxu0 0.0
        %3523 = vmatmul.mubr.f32.gmra.mrb[0].mxu0 %v3337
        %v3524 = vpop.f32.mrb[0].mxu0
        %v3525 = vadd.f32 0.0, %v3524
        %v3526 = vpop.f32.mrb[0].mxu0
        %3527 = vmatprep.mubr.f32.mxu0 0.0
        %3528 = vmatmul.mubr.f32.gmra.mrb[0].mxu0 %v3338
        %v3529 = vpop.f32.mrb[0].mxu0
        %v3530 = vadd.f32 0.0, %v3529
        %v3531 = vpop.f32.mrb[0].mxu0
        %3532 = vmatprep.mubr.f32.mxu0 0.0
        %3533 = vmatmul.mubr.f32.gmra.mrb[0].mxu0 %v3339
        %v3534 = vpop.f32.mrb[0].mxu0
        %v3535 = vadd.f32 0.0, %v3534
        %v3536 = vpop.f32.mrb[0].mxu0
        %3537 = vmatprep.mubr.f32.mxu0 0.0
        %3538 = vmatmul.mubr.f32.gmra.mrb[0].mxu0 %v3340
        %v3539 = vpop.f32.mrb[0].mxu0
        %v3540 = vadd.f32 0.0, %v3539
        %v3541 = vpop.f32.mrb[0].mxu0
        %3542 = vmatprep.mubr.f32.mxu0 0.0
        %3543 = vmatmul.mubr.f32.gmra.mrb[0].mxu0 %v3341
        %v3544 = vpop.f32.mrb[0].mxu0
        %v3545 = vadd.f32 0.0, %v3544
        %v3546 = vpop.f32.mrb[0].mxu0
        %3547 = vmatprep.mubr.f32.mxu0 0.0
        %3548 = vmatmul.mubr.f32.gmra.mrb[0].mxu0 %v3342
        %v3549 = vpop.f32.mrb[0].mxu0
        %v3550 = vadd.f32 0.0, %v3549
        %v3551 = vpop.f32.mrb[0].mxu0
        %3552 = vmatprep.mubr.f32.mxu0 0.0
        %3553 = vmatmul.mubr.f32.gmra.mrb[0].mxu0 %v3343
        %v3554 = vpop.f32.mrb[0].mxu0
        %v3555 = vadd.f32 0.0, %v3554
        %v3556 = vpop.f32.mrb[0].mxu0
        %3557 = vmatprep.mubr.f32.mxu0 0.0
        %3558 = vmatmul.mubr.f32.gmra.mrb[0].mxu0 %v3344
        %v3559 = vpop.f32.mrb[0].mxu0
        %v3560 = vadd.f32 0.0, %v3559
        %v3561 = vpop.f32.mrb[0].mxu0
        %3562 = vmatprep.mubr.f32.mxu0 0.0
        %3563 = vmatmul.mubr.f32.gmra.mrb[0].mxu0 %v3345
        %v3564 = vpop.f32.mrb[0].mxu0
        %v3565 = vadd.f32 0.0, %v3564
        %v3566 = vpop.f32.mrb[0].mxu0
        %3567 = vmatprep.mubr.f32.mxu0 0.0
        %3568 = vmatmul.mubr.f32.gmra.mrb[0].mxu0 %v3346
        %v3569 = vpop.f32.mrb[0].mxu0
        %v3570 = vadd.f32 0.0, %v3569
        %v3571 = vpop.f32.mrb[0].mxu0
        %3572 = vmatprep.mubr.f32.mxu0 0.0
        %3573 = vmatmul.mubr.f32.gmra.mrb[0].mxu0 %v3347
        %v3574 = vpop.f32.mrb[0].mxu0
        %v3575 = vadd.f32 0.0, %v3574
        %v3576 = vpop.f32.mrb[0].mxu0
        %3577 = vmatprep.mubr.f32.mxu0 0.0
        %3578 = vmatmul.mubr.f32.gmra.mrb[0].mxu0 %v3348
        %v3579 = vpop.f32.mrb[0].mxu0
        %v3580 = vadd.f32 0.0, %v3579
        %v3581 = vpop.f32.mrb[0].mxu0
        %3582 = vmatprep.mubr.f32.mxu0 0.0
        %3583 = vmatmul.mubr.f32.gmra.mrb[0].mxu0 %v3349
        %v3584 = vpop.f32.mrb[0].mxu0
        %v3585 = vadd.f32 0.0, %v3584
        %v3586 = vpop.f32.mrb[0].mxu0
        %3587 = vmatprep.mubr.f32.mxu0 0.0
        %3588 = vmatmul.mubr.f32.gmra.mrb[0].mxu0 %v3350
        %v3589 = vpop.f32.mrb[0].mxu0
        %v3590 = vadd.f32 0.0, %v3589
        %v3591 = vpop.f32.mrb[0].mxu0
        %3592 = vdwg.mxu0
        %v3593 = vadd.f32 %v3287, %v3435
        %v3594 = vadd.f32 %v3288, %v3440
        %v3595 = vadd.f32 %v3289, %v3445
        %v3596 = vadd.f32 %v3290, %v3450
        %v3597 = vadd.f32 %v3291, %v3455
        %v3598 = vadd.f32 %v3292, %v3460
        %v3599 = vadd.f32 %v3293, %v3465
        %v3600 = vadd.f32 %v3294, %v3470
        %v3601 = vadd.f32 %v3295, %v3475
        %v3602 = vadd.f32 %v3296, %v3480
        %v3603 = vadd.f32 %v3297, %v3485
        %v3604 = vadd.f32 %v3298, %v3490
        %v3605 = vadd.f32 %v3299, %v3495
        %v3606 = vadd.f32 %v3300, %v3500
        %v3607 = vadd.f32 %v3301, %v3505
        %v3608 = vadd.f32 %v3302, %v3510
        %v3609 = vadd.f32 %v3303, %v3515
        %v3610 = vadd.f32 %v3304, %v3520
        %v3611 = vadd.f32 %v3305, %v3525
        %v3612 = vadd.f32 %v3306, %v3530
        %v3613 = vadd.f32 %v3307, %v3535
        %v3614 = vadd.f32 %v3308, %v3540
        %v3615 = vadd.f32 %v3309, %v3545
        %v3616 = vadd.f32 %v3310, %v3550
        %v3617 = vadd.f32 %v3311, %v3555
        %v3618 = vadd.f32 %v3312, %v3560
        %v3619 = vadd.f32 %v3313, %v3565
        %v3620 = vadd.f32 %v3314, %v3570
        %v3621 = vadd.f32 %v3315, %v3575
        %v3622 = vadd.f32 %v3316, %v3580
        %v3623 = vadd.f32 %v3317, %v3585
        %v3624 = vadd.f32 %v3318, %v3590
        %v3625 = vld [vmem:[%s5] sm:$0x1]
        %v3627 = vlaneseq
        %v3628 = vshrl.u32 %v3627, 7
        %v3629 = vsub.s32 0, %v3628
        %v3630 = vrot.slane %v3625, %v3629
        %v3632 = vadd.f32 %v3593, %v3630
        %v3633 = vadd.f32 %v3594, %v3630
        %v3634 = vadd.f32 %v3595, %v3630
        %v3635 = vadd.f32 %v3596, %v3630
        %v3636 = vadd.f32 %v3597, %v3630
        %v3637 = vadd.f32 %v3598, %v3630
        %v3638 = vadd.f32 %v3599, %v3630
        %v3639 = vadd.f32 %v3600, %v3630
        %v3640 = vadd.f32 %v3601, %v3630
        %v3641 = vadd.f32 %v3602, %v3630
        %v3642 = vadd.f32 %v3603, %v3630
        %v3643 = vadd.f32 %v3604, %v3630
        %v3644 = vadd.f32 %v3605, %v3630
        %v3645 = vadd.f32 %v3606, %v3630
        %v3646 = vadd.f32 %v3607, %v3630
        %v3647 = vadd.f32 %v3608, %v3630
        %v3648 = vadd.f32 %v3609, %v3630
        %v3649 = vadd.f32 %v3610, %v3630
        %v3650 = vadd.f32 %v3611, %v3630
        %v3651 = vadd.f32 %v3612, %v3630
        %v3652 = vadd.f32 %v3613, %v3630
        %v3653 = vadd.f32 %v3614, %v3630
        %v3654 = vadd.f32 %v3615, %v3630
        %v3655 = vadd.f32 %v3616, %v3630
        %v3656 = vadd.f32 %v3617, %v3630
        %v3657 = vadd.f32 %v3618, %v3630
        %v3658 = vadd.f32 %v3619, %v3630
        %v3659 = vadd.f32 %v3620, %v3630
        %v3660 = vadd.f32 %v3621, %v3630
        %v3661 = vadd.f32 %v3622, %v3630
        %v3662 = vadd.f32 %v3623, %v3630
        %v3663 = vadd.f32 %v3624, %v3630
        %v3664 = vmax.f32 %v3632, 0.0
        %v3665 = vmax.f32 %v3633, 0.0
        %v3666 = vmax.f32 %v3634, 0.0
        %v3667 = vmax.f32 %v3635, 0.0
        %v3668 = vmax.f32 %v3636, 0.0
        %v3669 = vmax.f32 %v3637, 0.0
        %v3670 = vmax.f32 %v3638, 0.0
        %v3671 = vmax.f32 %v3639, 0.0
        %v3672 = vmax.f32 %v3640, 0.0
        %v3673 = vmax.f32 %v3641, 0.0
        %v3674 = vmax.f32 %v3642, 0.0
        %v3675 = vmax.f32 %v3643, 0.0
        %v3676 = vmax.f32 %v3644, 0.0
        %v3677 = vmax.f32 %v3645, 0.0
        %v3678 = vmax.f32 %v3646, 0.0
        %v3679 = vmax.f32 %v3647, 0.0
        %v3680 = vmax.f32 %v3648, 0.0
        %v3681 = vmax.f32 %v3649, 0.0
        %v3682 = vmax.f32 %v3650, 0.0
        %v3683 = vmax.f32 %v3651, 0.0
        %v3684 = vmax.f32 %v3652, 0.0
        %v3685 = vmax.f32 %v3653, 0.0
        %v3686 = vmax.f32 %v3654, 0.0
        %v3687 = vmax.f32 %v3655, 0.0
        %v3688 = vmax.f32 %v3656, 0.0
        %v3689 = vmax.f32 %v3657, 0.0
        %v3690 = vmax.f32 %v3658, 0.0
        %v3691 = vmax.f32 %v3659, 0.0
        %v3692 = vmax.f32 %v3660, 0.0
        %v3693 = vmax.f32 %v3661, 0.0
        %v3694 = vmax.f32 %v3662, 0.0
        %v3695 = vmax.f32 %v3663, 0.0
        %v3696 = vld [vmem:[#allocation11] sm:$0xff]
        %v3697 = vld [vmem:[#allocation11 + $0x8] sm:$0xff]
        %v3698 = vld [vmem:[#allocation11 + $0x10] sm:$0xff]
        %v3699 = vld [vmem:[#allocation11 + $0x18] sm:$0xff]
        %v3700 = vld [vmem:[#allocation11 + $0x20] sm:$0xff]
        %v3701 = vld [vmem:[#allocation11 + $0x28] sm:$0xff]
        %v3702 = vld [vmem:[#allocation11 + $0x30] sm:$0xff]
        %v3703 = vld [vmem:[#allocation11 + $0x38] sm:$0xff]
        %v3704 = vld [vmem:[#allocation11 + $0x40] sm:$0xff]
        %v3705 = vld [vmem:[#allocation11 + $0x48] sm:$0xff]
        %v3706 = vld [vmem:[#allocation11 + $0x50] sm:$0xff]
        %v3707 = vld [vmem:[#allocation11 + $0x58] sm:$0xff]
        %v3708 = vld [vmem:[#allocation11 + $0x60] sm:$0xff]
        %v3709 = vld [vmem:[#allocation11 + $0x68] sm:$0xff]
        %v3710 = vld [vmem:[#allocation11 + $0x70] sm:$0xff]
        %v3711 = vld [vmem:[#allocation11 + $0x78] sm:$0xff]
        %v3712 = vld [vmem:[%s7] sm:$0x1]
        %v3714 = vlaneseq
        %v3715 = vshrl.u32 %v3714, 7
        %v3716 = vsub.s32 0, %v3715
        %v3717 = vrot.slane %v3712, %v3716
        %3719 = vmatprep.subr.mxu0 0.0
        %3720 = vmatpush1.msra.mxu0 %v3696
        %3721 = vmatprep.subr.mxu0 0.0
        %3722 = vmatpush1.msra.mxu0 %v3697
        %3723 = vmatprep.subr.mxu0 0.0
        %3724 = vmatpush1.msra.mxu0 %v3698
        %3725 = vmatprep.subr.mxu0 0.0
        %3726 = vmatpush1.msra.mxu0 %v3699
        %3727 = vmatprep.subr.mxu0 0.0
        %3728 = vmatpush1.msra.mxu0 %v3700
        %3729 = vmatprep.subr.mxu0 0.0
        %3730 = vmatpush1.msra.mxu0 %v3701
        %3731 = vmatprep.subr.mxu0 0.0
        %3732 = vmatpush1.msra.mxu0 %v3702
        %3733 = vmatprep.subr.mxu0 0.0
        %3734 = vmatpush1.msra.mxu0 %v3703
        %3735 = vmatprep.subr.mxu0 0.0
        %3736 = vmatpush1.msra.mxu0 %v3704
        %3737 = vmatprep.subr.mxu0 0.0
        %3738 = vmatpush1.msra.mxu0 %v3705
        %3739 = vmatprep.subr.mxu0 0.0
        %3740 = vmatpush1.msra.mxu0 %v3706
        %3741 = vmatprep.subr.mxu0 0.0
        %3742 = vmatpush1.msra.mxu0 %v3707
        %3743 = vmatprep.subr.mxu0 0.0
        %3744 = vmatpush1.msra.mxu0 %v3708
        %3745 = vmatprep.subr.mxu0 0.0
        %3746 = vmatpush1.msra.mxu0 %v3709
        %3747 = vmatprep.subr.mxu0 0.0
        %3748 = vmatpush1.msra.mxu0 %v3710
        %3749 = vmatprep.subr.mxu0 0.0
        %3750 = vmatpush1.msra.mxu0 %v3711
        %3751 = vmatprep.subr.mxu0 0.0
        %3752 = vmatpush1.msra.mxu0 0.0
        %3753 = vmatprep.subr.mxu0 0.0
        %3754 = vmatpush1.msra.mxu0 0.0
        %3755 = vmatprep.subr.mxu0 0.0
        %3756 = vmatpush1.msra.mxu0 0.0
        %3757 = vmatprep.subr.mxu0 0.0
        %3758 = vmatpush1.msra.mxu0 0.0
        %3759 = vmatprep.subr.mxu0 0.0
        %3760 = vmatpush1.msra.mxu0 0.0
        %3761 = vmatprep.subr.mxu0 0.0
        %3762 = vmatpush1.msra.mxu0 0.0
        %3763 = vmatprep.subr.mxu0 0.0
        %3764 = vmatpush1.msra.mxu0 0.0
        %3765 = vmatprep.subr.mxu0 0.0
        %3766 = vmatpush1.msra.mxu0 0.0
        %3767 = vmatprep.subr.mxu0 0.0
        %3768 = vmatpush1.msra.mxu0 0.0
        %3769 = vmatprep.subr.mxu0 0.0
        %3770 = vmatpush1.msra.mxu0 0.0
        %3771 = vmatprep.subr.mxu0 0.0
        %3772 = vmatpush1.msra.mxu0 0.0
        %3773 = vmatprep.subr.mxu0 0.0
        %3774 = vmatpush1.msra.mxu0 0.0
        %3775 = vmatprep.subr.mxu0 0.0
        %3776 = vmatpush1.msra.mxu0 0.0
        %3777 = vmatprep.subr.mxu0 0.0
        %3778 = vmatpush1.msra.mxu0 0.0
        %3779 = vmatprep.subr.mxu0 0.0
        %3780 = vmatpush1.msra.mxu0 0.0
        %3781 = vmatprep.subr.mxu0 0.0
        %3782 = vmatpush1.msra.mxu0 0.0
        %3783 = vmatprep.mubr.f32.mxu0 0.0
        %3784 = vmatmul.mubr.f32.gmra.mrb[0].mxu0 %v3664
        %v3785 = vpop.f32.mrb[0].mxu0
        %v3786 = vadd.f32 %v3717, %v3785
        %v3787 = vpop.f32.mrb[0].mxu0
        %3788 = vmatprep.mubr.f32.mxu0 0.0
        %3789 = vmatmul.mubr.f32.gmra.mrb[0].mxu0 %v3665
        %v3790 = vpop.f32.mrb[0].mxu0
        %v3791 = vadd.f32 %v3717, %v3790
        %v3792 = vpop.f32.mrb[0].mxu0
        %3793 = vmatprep.mubr.f32.mxu0 0.0
        %3794 = vmatmul.mubr.f32.gmra.mrb[0].mxu0 %v3666
        %v3795 = vpop.f32.mrb[0].mxu0
        %v3796 = vadd.f32 %v3717, %v3795
        %v3797 = vpop.f32.mrb[0].mxu0
        %3798 = vmatprep.mubr.f32.mxu0 0.0
        %3799 = vmatmul.mubr.f32.gmra.mrb[0].mxu0 %v3667
        %v3800 = vpop.f32.mrb[0].mxu0
        %v3801 = vadd.f32 %v3717, %v3800
        %v3802 = vpop.f32.mrb[0].mxu0
        %3803 = vmatprep.mubr.f32.mxu0 0.0
        %3804 = vmatmul.mubr.f32.gmra.mrb[0].mxu0 %v3668
        %v3805 = vpop.f32.mrb[0].mxu0
        %v3806 = vadd.f32 %v3717, %v3805
        %v3807 = vpop.f32.mrb[0].mxu0
        %3808 = vmatprep.mubr.f32.mxu0 0.0
        %3809 = vmatmul.mubr.f32.gmra.mrb[0].mxu0 %v3669
        %v3810 = vpop.f32.mrb[0].mxu0
        %v3811 = vadd.f32 %v3717, %v3810
        %v3812 = vpop.f32.mrb[0].mxu0
        %3813 = vmatprep.mubr.f32.mxu0 0.0
        %3814 = vmatmul.mubr.f32.gmra.mrb[0].mxu0 %v3670
        %v3815 = vpop.f32.mrb[0].mxu0
        %v3816 = vadd.f32 %v3717, %v3815
        %v3817 = vpop.f32.mrb[0].mxu0
        %3818 = vmatprep.mubr.f32.mxu0 0.0
        %3819 = vmatmul.mubr.f32.gmra.mrb[0].mxu0 %v3671
        %v3820 = vpop.f32.mrb[0].mxu0
        %v3821 = vadd.f32 %v3717, %v3820
        %v3822 = vpop.f32.mrb[0].mxu0
        %3823 = vmatprep.mubr.f32.mxu0 0.0
        %3824 = vmatmul.mubr.f32.gmra.mrb[0].mxu0 %v3672
        %v3825 = vpop.f32.mrb[0].mxu0
        %v3826 = vadd.f32 %v3717, %v3825
        %v3827 = vpop.f32.mrb[0].mxu0
        %3828 = vmatprep.mubr.f32.mxu0 0.0
        %3829 = vmatmul.mubr.f32.gmra.mrb[0].mxu0 %v3673
        %v3830 = vpop.f32.mrb[0].mxu0
        %v3831 = vadd.f32 %v3717, %v3830
        %v3832 = vpop.f32.mrb[0].mxu0
        %3833 = vmatprep.mubr.f32.mxu0 0.0
        %3834 = vmatmul.mubr.f32.gmra.mrb[0].mxu0 %v3674
        %v3835 = vpop.f32.mrb[0].mxu0
        %v3836 = vadd.f32 %v3717, %v3835
        %v3837 = vpop.f32.mrb[0].mxu0
        %3838 = vmatprep.mubr.f32.mxu0 0.0
        %3839 = vmatmul.mubr.f32.gmra.mrb[0].mxu0 %v3675
        %v3840 = vpop.f32.mrb[0].mxu0
        %v3841 = vadd.f32 %v3717, %v3840
        %v3842 = vpop.f32.mrb[0].mxu0
        %3843 = vmatprep.mubr.f32.mxu0 0.0
        %3844 = vmatmul.mubr.f32.gmra.mrb[0].mxu0 %v3676
        %v3845 = vpop.f32.mrb[0].mxu0
        %v3846 = vadd.f32 %v3717, %v3845
        %v3847 = vpop.f32.mrb[0].mxu0
        %3848 = vmatprep.mubr.f32.mxu0 0.0
        %3849 = vmatmul.mubr.f32.gmra.mrb[0].mxu0 %v3677
        %v3850 = vpop.f32.mrb[0].mxu0
        %v3851 = vadd.f32 %v3717, %v3850
        %v3852 = vpop.f32.mrb[0].mxu0
        %3853 = vmatprep.mubr.f32.mxu0 0.0
        %3854 = vmatmul.mubr.f32.gmra.mrb[0].mxu0 %v3678
        %v3855 = vpop.f32.mrb[0].mxu0
        %v3856 = vadd.f32 %v3717, %v3855
        %v3857 = vpop.f32.mrb[0].mxu0
        %3858 = vmatprep.mubr.f32.mxu0 0.0
        %3859 = vmatmul.mubr.f32.gmra.mrb[0].mxu0 %v3679
        %v3860 = vpop.f32.mrb[0].mxu0
        %v3861 = vadd.f32 %v3717, %v3860
        %v3862 = vpop.f32.mrb[0].mxu0
        %3863 = vmatprep.mubr.f32.mxu0 0.0
        %3864 = vmatmul.mubr.f32.gmra.mrb[0].mxu0 %v3680
        %v3865 = vpop.f32.mrb[0].mxu0
        %v3866 = vadd.f32 %v3717, %v3865
        %v3867 = vpop.f32.mrb[0].mxu0
        %3868 = vmatprep.mubr.f32.mxu0 0.0
        %3869 = vmatmul.mubr.f32.gmra.mrb[0].mxu0 %v3681
        %v3870 = vpop.f32.mrb[0].mxu0
        %v3871 = vadd.f32 %v3717, %v3870
        %v3872 = vpop.f32.mrb[0].mxu0
        %3873 = vmatprep.mubr.f32.mxu0 0.0
        %3874 = vmatmul.mubr.f32.gmra.mrb[0].mxu0 %v3682
        %v3875 = vpop.f32.mrb[0].mxu0
        %v3876 = vadd.f32 %v3717, %v3875
        %v3877 = vpop.f32.mrb[0].mxu0
        %3878 = vmatprep.mubr.f32.mxu0 0.0
        %3879 = vmatmul.mubr.f32.gmra.mrb[0].mxu0 %v3683
        %v3880 = vpop.f32.mrb[0].mxu0
        %v3881 = vadd.f32 %v3717, %v3880
        %v3882 = vpop.f32.mrb[0].mxu0
        %3883 = vmatprep.mubr.f32.mxu0 0.0
        %3884 = vmatmul.mubr.f32.gmra.mrb[0].mxu0 %v3684
        %v3885 = vpop.f32.mrb[0].mxu0
        %v3886 = vadd.f32 %v3717, %v3885
        %v3887 = vpop.f32.mrb[0].mxu0
        %3888 = vmatprep.mubr.f32.mxu0 0.0
        %3889 = vmatmul.mubr.f32.gmra.mrb[0].mxu0 %v3685
        %v3890 = vpop.f32.mrb[0].mxu0
        %v3891 = vadd.f32 %v3717, %v3890
        %v3892 = vpop.f32.mrb[0].mxu0
        %3893 = vmatprep.mubr.f32.mxu0 0.0
        %3894 = vmatmul.mubr.f32.gmra.mrb[0].mxu0 %v3686
        %v3895 = vpop.f32.mrb[0].mxu0
        %v3896 = vadd.f32 %v3717, %v3895
        %v3897 = vpop.f32.mrb[0].mxu0
        %3898 = vmatprep.mubr.f32.mxu0 0.0
        %3899 = vmatmul.mubr.f32.gmra.mrb[0].mxu0 %v3687
        %v3900 = vpop.f32.mrb[0].mxu0
        %v3901 = vadd.f32 %v3717, %v3900
        %v3902 = vpop.f32.mrb[0].mxu0
        %3903 = vmatprep.mubr.f32.mxu0 0.0
        %3904 = vmatmul.mubr.f32.gmra.mrb[0].mxu0 %v3688
        %v3905 = vpop.f32.mrb[0].mxu0
        %v3906 = vadd.f32 %v3717, %v3905
        %v3907 = vpop.f32.mrb[0].mxu0
        %3908 = vmatprep.mubr.f32.mxu0 0.0
        %3909 = vmatmul.mubr.f32.gmra.mrb[0].mxu0 %v3689
        %v3910 = vpop.f32.mrb[0].mxu0
        %v3911 = vadd.f32 %v3717, %v3910
        %v3912 = vpop.f32.mrb[0].mxu0
        %3913 = vmatprep.mubr.f32.mxu0 0.0
        %3914 = vmatmul.mubr.f32.gmra.mrb[0].mxu0 %v3690
        %v3915 = vpop.f32.mrb[0].mxu0
        %v3916 = vadd.f32 %v3717, %v3915
        %v3917 = vpop.f32.mrb[0].mxu0
        %3918 = vmatprep.mubr.f32.mxu0 0.0
        %3919 = vmatmul.mubr.f32.gmra.mrb[0].mxu0 %v3691
        %v3920 = vpop.f32.mrb[0].mxu0
        %v3921 = vadd.f32 %v3717, %v3920
        %v3922 = vpop.f32.mrb[0].mxu0
        %3923 = vmatprep.mubr.f32.mxu0 0.0
        %3924 = vmatmul.mubr.f32.gmra.mrb[0].mxu0 %v3692
        %v3925 = vpop.f32.mrb[0].mxu0
        %v3926 = vadd.f32 %v3717, %v3925
        %v3927 = vpop.f32.mrb[0].mxu0
        %3928 = vmatprep.mubr.f32.mxu0 0.0
        %3929 = vmatmul.mubr.f32.gmra.mrb[0].mxu0 %v3693
        %v3930 = vpop.f32.mrb[0].mxu0
        %v3931 = vadd.f32 %v3717, %v3930
        %v3932 = vpop.f32.mrb[0].mxu0
        %3933 = vmatprep.mubr.f32.mxu0 0.0
        %3934 = vmatmul.mubr.f32.gmra.mrb[0].mxu0 %v3694
        %v3935 = vpop.f32.mrb[0].mxu0
        %v3936 = vadd.f32 %v3717, %v3935
        %v3937 = vpop.f32.mrb[0].mxu0
        %3938 = vmatprep.mubr.f32.mxu0 0.0
        %3939 = vmatmul.mubr.f32.gmra.mrb[0].mxu0 %v3695
        %v3940 = vpop.f32.mrb[0].mxu0
        %v3941 = vadd.f32 %v3717, %v3940
        %v3942 = vpop.f32.mrb[0].mxu0
        %3943 = vdwg.mxu0
        %v3944 = vld [vmem:[%s318] sm:$0xff]
        %v3945 = vld [vmem:[%s318 + $0x8] sm:$0xff]
        %v3946 = vld [vmem:[%s318 + $0x10] sm:$0xff]
        %v3947 = vld [vmem:[%s318 + $0x18] sm:$0xff]
        %v3948 = vld [vmem:[%s318 + $0x20] sm:$0xff]
        %v3949 = vld [vmem:[%s318 + $0x28] sm:$0xff]
        %v3950 = vld [vmem:[%s318 + $0x30] sm:$0xff]
        %v3951 = vld [vmem:[%s318 + $0x38] sm:$0xff]
        %v3952 = vld [vmem:[%s318 + $0x40] sm:$0xff]
        %v3953 = vld [vmem:[%s318 + $0x48] sm:$0xff]
        %v3954 = vld [vmem:[%s318 + $0x50] sm:$0xff]
        %v3955 = vld [vmem:[%s318 + $0x58] sm:$0xff]
        %v3956 = vld [vmem:[%s318 + $0x60] sm:$0xff]
        %v3957 = vld [vmem:[%s318 + $0x68] sm:$0xff]
        %v3958 = vld [vmem:[%s318 + $0x70] sm:$0xff]
        %v3959 = vld [vmem:[%s318 + $0x78] sm:$0xff]
        %v3960 = vld [vmem:[%s318 + $0x80] sm:$0xff]
        %v3961 = vld [vmem:[%s318 + $0x88] sm:$0xff]
        %v3962 = vld [vmem:[%s318 + $0x90] sm:$0xff]
        %v3963 = vld [vmem:[%s318 + $0x98] sm:$0xff]
        %v3964 = vld [vmem:[%s318 + $0xa0] sm:$0xff]
        %v3965 = vld [vmem:[%s318 + $0xa8] sm:$0xff]
        %v3966 = vld [vmem:[%s318 + $0xb0] sm:$0xff]
        %v3967 = vld [vmem:[%s318 + $0xb8] sm:$0xff]
        %v3968 = vld [vmem:[%s318 + $0xc0] sm:$0xff]
        %v3969 = vld [vmem:[%s318 + $0xc8] sm:$0xff]
        %v3970 = vld [vmem:[%s318 + $0xd0] sm:$0xff]
        %v3971 = vld [vmem:[%s318 + $0xd8] sm:$0xff]
        %v3972 = vld [vmem:[%s318 + $0xe0] sm:$0xff]
        %v3973 = vld [vmem:[%s318 + $0xe8] sm:$0xff]
        %v3974 = vld [vmem:[%s318 + $0xf0] sm:$0xff]
        %v3975 = vld [vmem:[%s318 + $0xf8] sm:$0xff]
        %v3976 = vadd.f32 %v3786, %v3944
        %v3977 = vadd.f32 %v3791, %v3945
        %v3978 = vadd.f32 %v3796, %v3946
        %v3979 = vadd.f32 %v3801, %v3947
        %v3980 = vadd.f32 %v3806, %v3948
        %v3981 = vadd.f32 %v3811, %v3949
        %v3982 = vadd.f32 %v3816, %v3950
        %v3983 = vadd.f32 %v3821, %v3951
        %v3984 = vadd.f32 %v3826, %v3952
        %v3985 = vadd.f32 %v3831, %v3953
        %v3986 = vadd.f32 %v3836, %v3954
        %v3987 = vadd.f32 %v3841, %v3955
        %v3988 = vadd.f32 %v3846, %v3956
        %v3989 = vadd.f32 %v3851, %v3957
        %v3990 = vadd.f32 %v3856, %v3958
        %v3991 = vadd.f32 %v3861, %v3959
        %v3992 = vadd.f32 %v3866, %v3960
        %v3993 = vadd.f32 %v3871, %v3961
        %v3994 = vadd.f32 %v3876, %v3962
        %v3995 = vadd.f32 %v3881, %v3963
        %v3996 = vadd.f32 %v3886, %v3964
        %v3997 = vadd.f32 %v3891, %v3965
        %v3998 = vadd.f32 %v3896, %v3966
        %v3999 = vadd.f32 %v3901, %v3967
        %v4000 = vadd.f32 %v3906, %v3968
        %v4001 = vadd.f32 %v3911, %v3969
        %v4002 = vadd.f32 %v3916, %v3970
        %v4003 = vadd.f32 %v3921, %v3971
        %v4004 = vadd.f32 %v3926, %v3972
        %v4005 = vadd.f32 %v3931, %v3973
        %v4006 = vadd.f32 %v3936, %v3974
        %v4007 = vadd.f32 %v3941, %v3975
        %v4008 = vmax.f32 %v3976, 0.0
        %v4009 = vmax.f32 %v3977, 0.0
        %v4010 = vmax.f32 %v3978, 0.0
        %v4011 = vmax.f32 %v3979, 0.0
        %v4012 = vmax.f32 %v3980, 0.0
        %v4013 = vmax.f32 %v3981, 0.0
        %v4014 = vmax.f32 %v3982, 0.0
        %v4015 = vmax.f32 %v3983, 0.0
        %v4016 = vmax.f32 %v3984, 0.0
        %v4017 = vmax.f32 %v3985, 0.0
        %v4018 = vmax.f32 %v3986, 0.0
        %v4019 = vmax.f32 %v3987, 0.0
        %v4020 = vmax.f32 %v3988, 0.0
        %v4021 = vmax.f32 %v3989, 0.0
        %v4022 = vmax.f32 %v3990, 0.0
        %v4023 = vmax.f32 %v3991, 0.0
        %v4024 = vmax.f32 %v3992, 0.0
        %v4025 = vmax.f32 %v3993, 0.0
        %v4026 = vmax.f32 %v3994, 0.0
        %v4027 = vmax.f32 %v3995, 0.0
        %v4028 = vmax.f32 %v3996, 0.0
        %v4029 = vmax.f32 %v3997, 0.0
        %v4030 = vmax.f32 %v3998, 0.0
        %v4031 = vmax.f32 %v3999, 0.0
        %v4032 = vmax.f32 %v4000, 0.0
        %v4033 = vmax.f32 %v4001, 0.0
        %v4034 = vmax.f32 %v4002, 0.0
        %v4035 = vmax.f32 %v4003, 0.0
        %v4036 = vmax.f32 %v4004, 0.0
        %v4037 = vmax.f32 %v4005, 0.0
        %v4038 = vmax.f32 %v4006, 0.0
        %v4039 = vmax.f32 %v4007, 0.0
        %4040 = vst [vmem:[%s360] sm:$0xff] %v4008
        %4041 = vst [vmem:[%s360 + $0x8] sm:$0xff] %v4009
        %4042 = vst [vmem:[%s360 + $0x10] sm:$0xff] %v4010
        %4043 = vst [vmem:[%s360 + $0x18] sm:$0xff] %v4011
        %4044 = vst [vmem:[%s360 + $0x20] sm:$0xff] %v4012
        %4045 = vst [vmem:[%s360 + $0x28] sm:$0xff] %v4013
        %4046 = vst [vmem:[%s360 + $0x30] sm:$0xff] %v4014
        %4047 = vst [vmem:[%s360 + $0x38] sm:$0xff] %v4015
        %4048 = vst [vmem:[%s360 + $0x40] sm:$0xff] %v4016
        %4049 = vst [vmem:[%s360 + $0x48] sm:$0xff] %v4017
        %4050 = vst [vmem:[%s360 + $0x50] sm:$0xff] %v4018
        %4051 = vst [vmem:[%s360 + $0x58] sm:$0xff] %v4019
        %4052 = vst [vmem:[%s360 + $0x60] sm:$0xff] %v4020
        %4053 = vst [vmem:[%s360 + $0x68] sm:$0xff] %v4021
        %4054 = vst [vmem:[%s360 + $0x70] sm:$0xff] %v4022
        %4055 = vst [vmem:[%s360 + $0x78] sm:$0xff] %v4023
        %4056 = vst [vmem:[%s360 + $0x80] sm:$0xff] %v4024
        %4057 = vst [vmem:[%s360 + $0x88] sm:$0xff] %v4025
        %4058 = vst [vmem:[%s360 + $0x90] sm:$0xff] %v4026
        %4059 = vst [vmem:[%s360 + $0x98] sm:$0xff] %v4027
        %4060 = vst [vmem:[%s360 + $0xa0] sm:$0xff] %v4028
        %4061 = vst [vmem:[%s360 + $0xa8] sm:$0xff] %v4029
        %4062 = vst [vmem:[%s360 + $0xb0] sm:$0xff] %v4030
        %4063 = vst [vmem:[%s360 + $0xb8] sm:$0xff] %v4031
        %4064 = vst [vmem:[%s360 + $0xc0] sm:$0xff] %v4032
        %4065 = vst [vmem:[%s360 + $0xc8] sm:$0xff] %v4033
        %4066 = vst [vmem:[%s360 + $0xd0] sm:$0xff] %v4034
        %4067 = vst [vmem:[%s360 + $0xd8] sm:$0xff] %v4035
        %4068 = vst [vmem:[%s360 + $0xe0] sm:$0xff] %v4036
        %4069 = vst [vmem:[%s360 + $0xe8] sm:$0xff] %v4037
        %4070 = vst [vmem:[%s360 + $0xf0] sm:$0xff] %v4038
        %4071 = vst [vmem:[%s360 + $0xf8] sm:$0xff] %v4039
        %s4072 = sand.u32 %s203, 1
        %s4073 = scalar_lea.sflag [#allocation7], %s4072
        %s4074 = sand.u32 %s203, 1
        %s4075 = smul.addr %s4074, 256
        %s4076 = scalar_lea.vmem [#allocation13], %s4075
        // Predicated region
        $region93: #{tpu_custom_call.1} parent=47 // pred_check
          %p4077 = pneg %p213
        $region94: #{tpu_custom_call.1} parent=47 // pred_check_branch
          %4079 = sbr.rel (%p4077) target = $region96
        $region95: #{tpu_custom_call.1} parent=47 // pred_region
          %s4080 = smul.u32 16, %s32
          %s4082 = ssub.s32 4096, 4096
          %4083 = vsyncadd %s4073, %s4082
          %s4084 = smul.addr %s4080, 2
          %s4085 = smul.addr %s31, 32
          %s4086 = sadd.s32 %s4084, %s4085
          %s4087 = smul.addr %s4086, 128
          %s4088 = scalar_lea.hbm %s8, %s4087
          %s4089 = sshll.u32 %s4076, 4
          %s4090 = int_to_ptr.vmem [resolvable:$true] %s4089
          %4095 = dma.vmem_to_hbm [thread:$0]  %s4090, 4096, %s4088, %s4073, 128, 128, 8
        $region96: #{tpu_custom_call.1} parent=47 // pred_fallthru
          _
      $region48: #{tpu_custom_call.1} parent=5 // pred_fallthru
        _
      %p4096 = scmp.le.s32.totalorder 2, %s22
      // Predicated region
      $region97: #{tpu_custom_call.1} parent=5 // pred_check
        %p4097 = pneg %p4096
      $region98: #{tpu_custom_call.1} parent=5 // pred_check_branch
        %4099 = sbr.rel (%p4097) target = $region100
      $region99: #{tpu_custom_call.1} parent=5 // pred_region
        %s4100 = ssub.s32 %s22, 2
        // Predicated region
        $region101: #{tpu_custom_call.1} parent=99 // pred_check
          %p4101 = pneg %p219
        $region102: #{tpu_custom_call.1} parent=99 // pred_check_branch
          %4103 = sbr.rel (%p4101) target = $region104
        $region103: #{tpu_custom_call.1} parent=99 // pred_region
          %s4104 = sand.u32 %s204, 1
          %s4105 = scalar_lea.sflag [#allocation7], %s4104
          %s4106 = sand.u32 %s204, 1
          %s4107 = smul.addr %s4106, 256
          %s4108 = scalar_lea.vmem [#allocation13], %s4107
          %4109 = dma.done %s4105, 4096
        $region104: #{tpu_custom_call.1} parent=99 // pred_fallthru
          _
      $region100: #{tpu_custom_call.1} parent=5 // pred_fallthru
        _
    $region6: #{tpu_custom_call.1} parent=1 // loop_footer
      %s26 = sadd.s32 1, %s22
    $region7: #{tpu_custom_call.1} parent=1 // loop_footer_branch
      %21 = sbr.rel target = $region3
    $region8: #{tpu_custom_call.1} parent=1 // loop_exit
      _
    %4110 = vsyncpa [#allocation6], 1
    %s4111 = scalar_lea.sflag [#allocation6], 1
    %4112 = vsyncpa %s4111, 1
    %4113 = vsyncpa [#allocation9], 1
    %4114 = vsyncpa [#allocation12], 1
    %4115 = vsyncpa [#allocation7], 1
    %s4116 = scalar_lea.sflag [#allocation7], 1
    %4117 = vsyncpa %s4116, 1
  %4118 = vsyncmov [#allocation4]
  %s4119 = vpop.sfrf %4118
  %p4120 = scmp.eq.s32.totalorder %s4119, 0
  %p4121 = pneg %p4120
  %4123 = shalt.err (%p4121)
  %s4124 = scalar_lea.sflag [#allocation4], 1
  %4125 = vsyncmov %s4124
  %s4126 = vpop.sfrf %4125
  %p4127 = scmp.eq.s32.totalorder %s4126, 0
  %p4128 = pneg %p4127
  %4130 = shalt.err (%p4128)

// kernel: tpu_custom_call.1
$region0: #{tpu_custom_call.1}
  #allocation0 [shape = 'u32[]', space=smem, size = 0x4, offset = 0x4, fixed_abs, tag = 'smem constant byte address 0x4 - core index']
  #allocation1 [shape = 'u32[144,128]{1,0:T(1,128)}', space=vmem, size = 0x12000, scoped, tag = 'internal scratch']
  #allocation2 [shape = 'f32[18,24,128]{2,1,0:T(8,128)}', space=vmem, size = 0x36000, scoped, tag = 'scratch operand']
  #allocation3 [shape = 'f32[2,1,16,128]{3,2,1,0:T(8,128)}', space=vmem, size = 0x4000, scoped, tag = 'scratch operand']
  #allocation4 [shape = 's32[2]{0}', space=sflag, size = 0x8, scoped, tag = 'scratch operand']
  #allocation14 [shape = 's32[]', space=sflag, size = 0x4, offset = 0, fixed_abs, tag = 'sflag constant byte address 0x0 - dummy sync flag']
  #allocation15 [shape = 's32[]', space=sflag, size = 0x4, offset = 0, fixed_abs, tag = 'sflag constant byte address 0x0 - dummy sync flag']
  #allocation16 [shape = 'u32[]', space=smem, size = 0x4, offset = 0x44, fixed_abs, tag = 'smem constant byte address 0x44 - assertion arg 0']
  #allocation17 [shape = 'u32[]', space=smem, size = 0x4, offset = 0x48, fixed_abs, tag = 'smem constant byte address 0x48 - assertion arg 1']
  #allocation18 [shape = 's32[]', space=sflag, size = 0x4, offset = 0, fixed_abs, tag = 'sflag constant byte address 0x0 - dummy sync flag']
  #allocation19 [shape = 's32[]', space=sflag, size = 0x4, offset = 0, fixed_abs, tag = 'sflag constant byte address 0x0 - dummy sync flag']
  %s0 = inlined_call_operand.hbm [shape: f32[2,16,16,128], index: 0, kind: input, shape index: {}]
  %s1 = inlined_call_operand.hbm [shape: f32[2,16,16,128], index: 1, kind: input, shape index: {}]
  %s2 = inlined_call_operand.hbm [shape: f32[128,128], index: 2, kind: input, shape index: {}]
  %s3 = inlined_call_operand.vmem [shape: f32[1,128], index: 3, kind: input, shape index: {}]
  %s4 = inlined_call_operand.hbm [shape: f32[9,128,128], index: 4, kind: input, shape index: {}]
  %s5 = inlined_call_operand.vmem [shape: f32[1,128], index: 5, kind: input, shape index: {}]
  %s6 = inlined_call_operand.hbm [shape: f32[128,128], index: 6, kind: input, shape index: {}]
  %s7 = inlined_call_operand.vmem [shape: f32[1,128], index: 7, kind: input, shape index: {}]
  %s8 = inlined_call_operand.hbm [shape: f32[2,16,16,128], index: 8, kind: output, shape index: {}]
  %s9 = sld [smem:[#allocation0]]
  $region105: #{tpu_custom_call.1} parent=0
    _
  %s11 = ssub.s32 1, %s9
  %s12 = scalar_select 0, %s11, %s9
  $region1: #{tpu_custom_call.1} parent=0
    #allocation5 [shape = 'u8[262144]{0}', space=vmem, size = 0x40000, scoped, tag = 'input window, operand 0']
    #allocation6 [shape = 's32[2]{0}', space=sflag, size = 0x8, scoped, tag = 'scoped memory for tpu_custom_call.1']
    #allocation7 [shape = 's32[2]{0}', space=sflag, size = 0x8, scoped, tag = 'scoped memory for tpu_custom_call.1']
    #allocation8 [shape = 'u8[65536]{0}', space=vmem, size = 0x10000, scoped, tag = 'input window, operand 2, single buffered']
    #allocation9 [shape = 's32[1]{0}', space=sflag, size = 0x4, scoped, tag = 'scoped memory for tpu_custom_call.1']
    #allocation10 [shape = 'u8[589824]{0}', space=vmem, size = 0x90000, scoped, tag = 'input window, operand 4, single buffered']
    #allocation11 [shape = 'u8[65536]{0}', space=vmem, size = 0x10000, scoped, tag = 'input window, operand 6, single buffered']
    #allocation12 [shape = 's32[1]{0}', space=sflag, size = 0x4, scoped, tag = 'scoped memory for tpu_custom_call.1']
    #allocation13 [shape = 'u8[262144]{0}', space=vmem, size = 0x40000, scoped, tag = 'output window, operand 0']
    %13 = vsyncpa [#allocation6], 0
    %s14 = scalar_lea.sflag [#allocation6], 1
    %15 = vsyncpa %s14, 0
    %16 = vsyncpa [#allocation9], 0
    %17 = vsyncpa [#allocation12], 0
    %18 = vsyncpa [#allocation7], 0
    %s19 = scalar_lea.sflag [#allocation7], 1
    %20 = vsyncpa %s19, 0
    loop: start=0, step=1, limit=4
    $region2: #{tpu_custom_call.1} parent=1 // loop_pre_header
      _
    $region3: #{tpu_custom_call.1} parent=1 // loop_header
      %s22 = sphi 0, %s26
      %p23 = scmp.ge.s32.totalorder %s22, 4
      %s29 = sphi 0, %s41
      %s30 = sphi 0, %s37
      %s31 = sphi 0, %s29
      %s32 = sphi 0, %s30
      %s33 = sphi 0, %s31
      %s34 = sphi 0, %s32
      %s46 = sphi 0, %s48
      %s49 = sphi 0, %s46
      %s50 = sphi 0, %s49
      %s66 = sphi 0, %s50
      %s70 = sphi 0, %s70
      %s72 = sphi 0, %s70
      %s73 = sphi 0, %s72
      %s87 = sphi 0, %s73
      %s91 = sphi 0, %s91
      %s93 = sphi 0, %s91
      %s94 = sphi 0, %s93
      %s108 = sphi 0, %s94
      %s112 = sphi 0, %s112
      %s114 = sphi 0, %s112
      %s115 = sphi 0, %s114
      %s129 = sphi 0, %s115
      %s133 = sphi 0, %s133
      %s135 = sphi 0, %s133
      %s136 = sphi 0, %s135
      %s150 = sphi 0, %s136
      %s154 = sphi 0, %s154
      %s156 = sphi 0, %s154
      %s157 = sphi 0, %s156
      %s171 = sphi 0, %s157
      %s175 = sphi 0, %s175
      %s177 = sphi 0, %s175
      %s178 = sphi 0, %s177
      %s192 = sphi 0, %s178
      %s200 = sphi 0, %s202
      %s203 = sphi 0, %s200
      %s204 = sphi 0, %s203
      %s220 = sphi 0, %s204
    $region4: #{tpu_custom_call.1} parent=1 // loop_header_branch
      %25 = sbr.rel (%p23) target = $region8
    $region5: #{tpu_custom_call.1} parent=1 // loop_body
      %s27 = ssub.s32 %s22, 1
      %s28 = ssub.s32 %s22, 2
      %s35 = sadd.s32 1, %s30
      %p36 = scmp.ge.s32.totalorder %s35, 1
      %s37 = scalar_select %p36, 0, %s35
      %s38 = sadd.s32 1, %s29
      %s39 = scalar_select %p36, %s38, %s29
      %p40 = scmp.ge.s32.totalorder %s39, 2
      %s41 = scalar_select %p40, 0, %s39
      %s42 = ssub.s32 %s29, %s41
      %s43 = ssub.s32 %s30, %s37
      %s44 = sor.u32 %s42, %s43
      %p45 = scmp.eq.s32.totalorder %s44, 0
      %s47 = sadd.s32 %s46, 1
      %s48 = scalar_select %p45, %s46, %s47
      %p51 = pneg %p45
      %p52 = scmp.eq.s32.totalorder %s22, 1
      %p53 = por %p51, %p52
      %p54 = scmp.ne.s32.totalorder %s46, %s49
      %p55 = scmp.eq.s32.totalorder %s22, 0
      %p56 = por %p54, %p55
      %p57 = scmp.ne.s32.totalorder %s46, %s49
      %p58 = scmp.eq.s32.totalorder %s27, 1
      %p59 = por %p57, %p58
      %p60 = scmp.ne.s32.totalorder %s49, %s50
      %p61 = scmp.eq.s32.totalorder %s27, 0
      %p62 = por %p60, %p61
      %p63 = scmp.ne.s32.totalorder %s49, %s50
      %p64 = scmp.eq.s32.totalorder %s28, 1
      %p65 = por %p63, %p64
      %p67 = scmp.ne.s32.totalorder %s50, %s66
      %p68 = scmp.eq.s32.totalorder %s28, 0
      %p69 = por %p67, %p68
      %s71 = sadd.s32 %s70, 1
      %p74 = scmp.eq.s32.totalorder %s22, 1
      %p75 = scmp.ne.s32.totalorder %s70, %s72
      %p76 = scmp.eq.s32.totalorder %s22, 0
      %p77 = por %p75, %p76
      %p78 = scmp.ne.s32.totalorder %s70, %s72
      %p79 = scmp.eq.s32.totalorder %s27, 1
      %p80 = por %p78, %p79
      %p81 = scmp.ne.s32.totalorder %s72, %s73
      %p82 = scmp.eq.s32.totalorder %s27, 0
      %p83 = por %p81, %p82
      %p84 = scmp.ne.s32.totalorder %s72, %s73
      %p85 = scmp.eq.s32.totalorder %s28, 1
      %p86 = por %p84, %p85
      %p88 = scmp.ne.s32.totalorder %s73, %s87
      %p89 = scmp.eq.s32.totalorder %s28, 0
      %p90 = por %p88, %p89
      %s92 = sadd.s32 %s91, 1
      %p95 = scmp.eq.s32.totalorder %s22, 1
      %p96 = scmp.ne.s32.totalorder %s91, %s93
      %p97 = scmp.eq.s32.totalorder %s22, 0
      %p98 = por %p96, %p97
      %p99 = scmp.ne.s32.totalorder %s91, %s93
      %p100 = scmp.eq.s32.totalorder %s27, 1
      %p101 = por %p99, %p100
      %p102 = scmp.ne.s32.totalorder %s93, %s94
      %p103 = scmp.eq.s32.totalorder %s27, 0
      %p104 = por %p102, %p103
      %p105 = scmp.ne.s32.totalorder %s93, %s94
      %p106 = scmp.eq.s32.totalorder %s28, 1
      %p107 = por %p105, %p106
      %p109 = scmp.ne.s32.totalorder %s94, %s108
      %p110 = scmp.eq.s32.totalorder %s28, 0
      %p111 = por %p109, %p110
      %s113 = sadd.s32 %s112, 1
      %p116 = scmp.eq.s32.totalorder %s22, 1
      %p117 = scmp.ne.s32.totalorder %s112, %s114
      %p118 = scmp.eq.s32.totalorder %s22, 0
      %p119 = por %p117, %p118
      %p120 = scmp.ne.s32.totalorder %s112, %s114
      %p121 = scmp.eq.s32.totalorder %s27, 1
      %p122 = por %p120, %p121
      %p123 = scmp.ne.s32.totalorder %s114, %s115
      %p124 = scmp.eq.s32.totalorder %s27, 0
      %p125 = por %p123, %p124
      %p126 = scmp.ne.s32.totalorder %s114, %s115
      %p127 = scmp.eq.s32.totalorder %s28, 1
      %p128 = por %p126, %p127
      %p130 = scmp.ne.s32.totalorder %s115, %s129
      %p131 = scmp.eq.s32.totalorder %s28, 0
      %p132 = por %p130, %p131
      %s134 = sadd.s32 %s133, 1
      %p137 = scmp.eq.s32.totalorder %s22, 1
      %p138 = scmp.ne.s32.totalorder %s133, %s135
      %p139 = scmp.eq.s32.totalorder %s22, 0
      %p140 = por %p138, %p139
      %p141 = scmp.ne.s32.totalorder %s133, %s135
      %p142 = scmp.eq.s32.totalorder %s27, 1
      %p143 = por %p141, %p142
      %p144 = scmp.ne.s32.totalorder %s135, %s136
      %p145 = scmp.eq.s32.totalorder %s27, 0
      %p146 = por %p144, %p145
      %p147 = scmp.ne.s32.totalorder %s135, %s136
      %p148 = scmp.eq.s32.totalorder %s28, 1
      %p149 = por %p147, %p148
      %p151 = scmp.ne.s32.totalorder %s136, %s150
      %p152 = scmp.eq.s32.totalorder %s28, 0
      %p153 = por %p151, %p152
      %s155 = sadd.s32 %s154, 1
      %p158 = scmp.eq.s32.totalorder %s22, 1
      %p159 = scmp.ne.s32.totalorder %s154, %s156
      %p160 = scmp.eq.s32.totalorder %s22, 0
      %p161 = por %p159, %p160
      %p162 = scmp.ne.s32.totalorder %s154, %s156
      %p163 = scmp.eq.s32.totalorder %s27, 1
      %p164 = por %p162, %p163
      %p165 = scmp.ne.s32.totalorder %s156, %s157
      %p166 = scmp.eq.s32.totalorder %s27, 0
      %p167 = por %p165, %p166
      %p168 = scmp.ne.s32.totalorder %s156, %s157
      %p169 = scmp.eq.s32.totalorder %s28, 1
      %p170 = por %p168, %p169
      %p172 = scmp.ne.s32.totalorder %s157, %s171
      %p173 = scmp.eq.s32.totalorder %s28, 0
      %p174 = por %p172, %p173
      %s176 = sadd.s32 %s175, 1
      %p179 = scmp.eq.s32.totalorder %s22, 1
      %p180 = scmp.ne.s32.totalorder %s175, %s177
      %p181 = scmp.eq.s32.totalorder %s22, 0
      %p182 = por %p180, %p181
      %p183 = scmp.ne.s32.totalorder %s175, %s177
      %p184 = scmp.eq.s32.totalorder %s27, 1
      %p185 = por %p183, %p184
      %p186 = scmp.ne.s32.totalorder %s177, %s178
      %p187 = scmp.eq.s32.totalorder %s27, 0
      %p188 = por %p186, %p187
      %p189 = scmp.ne.s32.totalorder %s177, %s178
      %p190 = scmp.eq.s32.totalorder %s28, 1
      %p191 = por %p189, %p190
      %p193 = scmp.ne.s32.totalorder %s178, %s192
      %p194 = scmp.eq.s32.totalorder %s28, 0
      %p195 = por %p193, %p194
      %s196 = ssub.s32 %s29, %s41
      %s197 = ssub.s32 %s30, %s37
      %s198 = sor.u32 %s196, %s197
      %p199 = scmp.eq.s32.totalorder %s198, 0
      %s201 = sadd.s32 %s200, 1
      %s202 = scalar_select %p199, %s200, %s201
      %p205 = pneg %p199
      %p206 = scmp.eq.s32.totalorder %s22, 1
      %p207 = por %p205, %p206
      %p208 = scmp.ne.s32.totalorder %s200, %s203
      %p209 = scmp.eq.s32.totalorder %s22, 0
      %p210 = por %p208, %p209
      %p211 = scmp.ne.s32.totalorder %s200, %s203
      %p212 = scmp.eq.s32.totalorder %s27, 1
      %p213 = por %p211, %p212
      %p214 = scmp.ne.s32.totalorder %s203, %s204
      %p215 = scmp.eq.s32.totalorder %s27, 0
      %p216 = por %p214, %p215
      %p217 = scmp.ne.s32.totalorder %s203, %s204
      %p218 = scmp.eq.s32.totalorder %s28, 1
      %p219 = por %p217, %p218
      %p221 = scmp.ne.s32.totalorder %s204, %s220
      %p222 = scmp.eq.s32.totalorder %s28, 0
      %p223 = por %p221, %p222
      %p224 = scmp.le.s32.totalorder 1, %s22
      %p225 = scmp.lt.s32.totalorder %s22, 3
      %p226 = pnand %p224, %p225
      %p227 = pneg %p226
      // Predicated region
      $region9: #{tpu_custom_call.1} parent=5 // pred_check
        _
      $region10: #{tpu_custom_call.1} parent=5 // pred_check_branch
        %229 = sbr.rel (%p226) target = $region12
      $region11: #{tpu_custom_call.1} parent=5 // pred_region
        %s230 = ssub.s32 %s22, 1
        // Predicated region
        $region13: #{tpu_custom_call.1} parent=11 // pred_check
          %p231 = pneg %p83
        $region14: #{tpu_custom_call.1} parent=11 // pred_check_branch
          %233 = sbr.rel (%p231) target = $region16
        $region15: #{tpu_custom_call.1} parent=11 // pred_region
          %s235 = ssub.s32 2048, 2048
          %236 = vsyncadd [#allocation9], %s235
          %s237 = sshll.u32 [#allocation8], 4
          %s238 = int_to_ptr.vmem [resolvable:$true] %s237
          %243 = dma.hbm_to_vmem [thread:$0]  %s2, 2048, %s238, [#allocation9], 128, 128, 8
        $region16: #{tpu_custom_call.1} parent=11 // pred_fallthru
          _
        // Predicated region
        $region17: #{tpu_custom_call.1} parent=11 // pred_check
          %p244 = pneg %p104
        $region18: #{tpu_custom_call.1} parent=11 // pred_check_branch
          %246 = sbr.rel (%p244) target = $region20
        $region19: #{tpu_custom_call.1} parent=11 // pred_region
          _
        $region20: #{tpu_custom_call.1} parent=11 // pred_fallthru
          _
        // Predicated region
        $region21: #{tpu_custom_call.1} parent=11 // pred_check
          %p247 = pneg %p125
        $region22: #{tpu_custom_call.1} parent=11 // pred_check_branch
          %249 = sbr.rel (%p247) target = $region24
        $region23: #{tpu_custom_call.1} parent=11 // pred_region
          %s251 = ssub.s32 18432, 18432
          %252 = vsyncadd [#allocation9], %s251
          %s253 = sshll.u32 [#allocation10], 4
          %s254 = int_to_ptr.vmem [resolvable:$true] %s253
          %259 = dma.hbm_to_vmem [thread:$0]  %s4, 18432, %s254, [#allocation9], 128, 128, 8
        $region24: #{tpu_custom_call.1} parent=11 // pred_fallthru
          _
        // Predicated region
        $region25: #{tpu_custom_call.1} parent=11 // pred_check
          %p260 = pneg %p146
        $region26: #{tpu_custom_call.1} parent=11 // pred_check_branch
          %262 = sbr.rel (%p260) target = $region28
        $region27: #{tpu_custom_call.1} parent=11 // pred_region
          _
        $region28: #{tpu_custom_call.1} parent=11 // pred_fallthru
          _
        // Predicated region
        $region29: #{tpu_custom_call.1} parent=11 // pred_check
          %p263 = pneg %p167
        $region30: #{tpu_custom_call.1} parent=11 // pred_check_branch
          %265 = sbr.rel (%p263) target = $region32
        $region31: #{tpu_custom_call.1} parent=11 // pred_region
          %s267 = ssub.s32 2048, 2048
          %268 = vsyncadd [#allocation12], %s267
          %s269 = sshll.u32 [#allocation11], 4
          %s270 = int_to_ptr.vmem [resolvable:$true] %s269
          %275 = dma.hbm_to_vmem [thread:$0]  %s6, 2048, %s270, [#allocation12], 128, 128, 8
        $region32: #{tpu_custom_call.1} parent=11 // pred_fallthru
          _
        // Predicated region
        $region33: #{tpu_custom_call.1} parent=11 // pred_check
          %p276 = pneg %p188
        $region34: #{tpu_custom_call.1} parent=11 // pred_check_branch
          %278 = sbr.rel (%p276) target = $region36
        $region35: #{tpu_custom_call.1} parent=11 // pred_region
          _
        $region36: #{tpu_custom_call.1} parent=11 // pred_fallthru
          _
      $region12: #{tpu_custom_call.1} parent=5 // pred_fallthru
        _
      %p279 = scmp.lt.s32.totalorder %s22, 2
      // Predicated region
      $region37: #{tpu_custom_call.1} parent=5 // pred_check
        %p280 = pneg %p279
      $region38: #{tpu_custom_call.1} parent=5 // pred_check_branch
        %282 = sbr.rel (%p280) target = $region40
      $region39: #{tpu_custom_call.1} parent=5 // pred_region
        // Predicated region
        $region41: #{tpu_custom_call.1} parent=39 // pred_check
          %p283 = pneg %p56
        $region42: #{tpu_custom_call.1} parent=39 // pred_check_branch
          %285 = sbr.rel (%p283) target = $region44
        $region43: #{tpu_custom_call.1} parent=39 // pred_region
          %s286 = sand.u32 %s46, 1
          %s287 = scalar_lea.sflag [#allocation6], %s286
          %s288 = sand.u32 %s46, 1
          %s289 = smul.addr %s288, 256
          %s290 = scalar_lea.vmem [#allocation5], %s289
          %s291 = smul.u32 16, %s30
          %s293 = ssub.s32 4096, 4096
          %294 = vsyncadd %s287, %s293
          %s295 = smul.addr %s291, 2
          %s296 = smul.addr %s29, 32
          %s297 = sadd.s32 %s295, %s296
          %s298 = smul.addr %s297, 128
          %s299 = scalar_lea.hbm %s0, %s298
          %s300 = sshll.u32 %s290, 4
          %s301 = int_to_ptr.vmem [resolvable:$true] %s300
          %306 = dma.hbm_to_vmem [thread:$0]  %s299, 4096, %s301, %s287, 128, 128, 8
        $region44: #{tpu_custom_call.1} parent=39 // pred_fallthru
          _
      $region40: #{tpu_custom_call.1} parent=5 // pred_fallthru
        _
      %p307 = scmp.le.s32.totalorder 1, %s22
      %p308 = scmp.lt.s32.totalorder %s22, 3
      %p309 = pnand %p307, %p308
      %p310 = pneg %p309
      // Predicated region
      $region45: #{tpu_custom_call.1} parent=5 // pred_check
        _
      $region46: #{tpu_custom_call.1} parent=5 // pred_check_branch
        %312 = sbr.rel (%p309) target = $region48
      $region47: #{tpu_custom_call.1} parent=5 // pred_region
        %s313 = ssub.s32 %s22, 1
        %s314 = sand.u32 %s49, 1
        %s315 = scalar_lea.sflag [#allocation6], %s314
        %s316 = sand.u32 %s49, 1
        %s317 = smul.addr %s316, 256
        %s318 = scalar_lea.vmem [#allocation5], %s317
        // Predicated region
        $region49: #{tpu_custom_call.1} parent=47 // pred_check
          %p319 = pneg %p62
        $region50: #{tpu_custom_call.1} parent=47 // pred_check_branch
          %321 = sbr.rel (%p319) target = $region52
        $region51: #{tpu_custom_call.1} parent=47 // pred_region
          %322 = dma.done %s315, 4096
        $region52: #{tpu_custom_call.1} parent=47 // pred_fallthru
          _
        // Predicated region
        $region53: #{tpu_custom_call.1} parent=47 // pred_check
          %p323 = pneg %p83
        $region54: #{tpu_custom_call.1} parent=47 // pred_check_branch
          %325 = sbr.rel (%p323) target = $region56
        $region55: #{tpu_custom_call.1} parent=47 // pred_region
          %326 = dma.done [#allocation9], 2048
        $region56: #{tpu_custom_call.1} parent=47 // pred_fallthru
          _
        // Predicated region
        $region57: #{tpu_custom_call.1} parent=47 // pred_check
          %p327 = pneg %p125
        $region58: #{tpu_custom_call.1} parent=47 // pred_check_branch
          %329 = sbr.rel (%p327) target = $region60
        $region59: #{tpu_custom_call.1} parent=47 // pred_region
          %330 = dma.done [#allocation9], 18432
        $region60: #{tpu_custom_call.1} parent=47 // pred_fallthru
          _
        // Predicated region
        $region61: #{tpu_custom_call.1} parent=47 // pred_check
          %p331 = pneg %p167
        $region62: #{tpu_custom_call.1} parent=47 // pred_check_branch
          %333 = sbr.rel (%p331) target = $region64
        $region63: #{tpu_custom_call.1} parent=47 // pred_region
          %334 = dma.done [#allocation12], 2048
        $region64: #{tpu_custom_call.1} parent=47 // pred_fallthru
          _
        %s335 = sand.u32 %s49, 1
        %s336 = scalar_lea.sflag [#allocation6], %s335
        %s337 = sand.u32 %s49, 1
        %s338 = smul.addr %s337, 256
        %s339 = scalar_lea.vmem [#allocation5], %s338
        %p340 = pneg %p62
        %p341 = pneg %p59
        %p342 = pneg %p83
        %p343 = pneg %p80
        %p344 = pneg %p104
        %p345 = pneg %p101
        %p346 = pneg %p125
        %p347 = pneg %p122
        %p348 = pneg %p146
        %p349 = pneg %p143
        %p350 = pneg %p167
        %p351 = pneg %p164
        %p352 = pneg %p188
        %p353 = pneg %p185
        %p354 = pneg %p216
        %p355 = pneg %p213
        %s356 = sand.u32 %s203, 1
        %s357 = scalar_lea.sflag [#allocation7], %s356
        %s358 = sand.u32 %s203, 1
        %s359 = smul.addr %s358, 256
        %s360 = scalar_lea.vmem [#allocation13], %s359
        %s361 = smul.u32 16, %s32
        %s362 = smul.u32 16, %s32
        %s363 = smul.u32 %s32, 16
        %p364 = scmp.gt.s32.totalorder %s32, 0
        // Predicated region
        $region65: #{tpu_custom_call.1} parent=47 // pred_check
          %p365 = pneg %p364
        $region66: #{tpu_custom_call.1} parent=47 // pred_check_branch
          %367 = sbr.rel (%p365) target = $region68
        $region67: #{tpu_custom_call.1} parent=47 // pred_region
          %s368 = ssub.s32 %s363, 1
          %s369 = smul.u32 %s368, 16
          %s370 = smul.u32 %s31, 256
          %s371 = sadd.s32 %s369, %s370
          %s372 = smul.addr %s371, 16
          %s373 = scalar_lea.hbm %s1, %s372
          // Predicated region
          $region69: #{tpu_custom_call.1} parent=67 // pred_check
            _
          $region70: #{tpu_custom_call.1} parent=67 // pred_check_branch
            %375 = sbr.rel target = $region72
          $region71: #{tpu_custom_call.1} parent=67 // pred_region
            %376 = sst [smem:[#allocation16]] [#allocation15]
            %377 = sst [smem:[#allocation17]] [#allocation14]
          $region72: #{tpu_custom_call.1} parent=67 // pred_fallthru
            _
          %379 = shalt.err (0)
          %s381 = sshll.u32 [#allocation3], 4
          %s382 = int_to_ptr.vmem [resolvable:$true] %s381
          %384 = dma.hbm_to_vmem [thread:$0]  %s373, 256, %s382, [#allocation4]
        $region68: #{tpu_custom_call.1} parent=47 // pred_fallthru
          _
        %p385 = scmp.lt.s32.totalorder %s32, 0
        // Predicated region
        $region73: #{tpu_custom_call.1} parent=47 // pred_check
          %p386 = pneg %p385
        $region74: #{tpu_custom_call.1} parent=47 // pred_check_branch
          %388 = sbr.rel (%p386) target = $region76
        $region75: #{tpu_custom_call.1} parent=47 // pred_region
          %s389 = sadd.s32 %s363, 16
          %s390 = smul.u32 %s389, 16
          %s391 = smul.u32 %s31, 256
          %s392 = sadd.s32 %s390, %s391
          %s393 = smul.addr %s392, 16
          %s394 = scalar_lea.hbm %s1, %s393
          %s395 = scalar_lea.vmem [#allocation3], 16
          %s396 = scalar_lea.sflag [#allocation4], 1
          // Predicated region
          $region77: #{tpu_custom_call.1} parent=75 // pred_check
            _
          $region78: #{tpu_custom_call.1} parent=75 // pred_check_branch
            %398 = sbr.rel target = $region80
          $region79: #{tpu_custom_call.1} parent=75 // pred_region
            %399 = sst [smem:[#allocation16]] [#allocation19]
            %400 = sst [smem:[#allocation17]] [#allocation18]
          $region80: #{tpu_custom_call.1} parent=75 // pred_fallthru
            _
          %402 = shalt.err (0)
          %s404 = sshll.u32 %s395, 4
          %s405 = int_to_ptr.vmem [resolvable:$true] %s404
          %407 = dma.hbm_to_vmem [thread:$0]  %s394, 256, %s405, %s396
        $region76: #{tpu_custom_call.1} parent=47 // pred_fallthru
          _
        %v408 = vld [vmem:[%s318] sm:$0xff]
        %v409 = vld [vmem:[%s318 + $0x8] sm:$0xff]
        %v410 = vld [vmem:[%s318 + $0x10] sm:$0xff]
        %v411 = vld [vmem:[%s318 + $0x18] sm:$0xff]
        %v412 = vld [vmem:[%s318 + $0x20] sm:$0xff]
        %v413 = vld [vmem:[%s318 + $0x28] sm:$0xff]
        %v414 = vld [vmem:[%s318 + $0x30] sm:$0xff]
        %v415 = vld [vmem:[%s318 + $0x38] sm:$0xff]
        %v416 = vld [vmem:[%s318 + $0x40] sm:$0xff]
        %v417 = vld [vmem:[%s318 + $0x48] sm:$0xff]
        %v418 = vld [vmem:[%s318 + $0x50] sm:$0xff]
        %v419 = vld [vmem:[%s318 + $0x58] sm:$0xff]
        %v420 = vld [vmem:[%s318 + $0x60] sm:$0xff]
        %v421 = vld [vmem:[%s318 + $0x68] sm:$0xff]
        %v422 = vld [vmem:[%s318 + $0x70] sm:$0xff]
        %v423 = vld [vmem:[%s318 + $0x78] sm:$0xff]
        %v424 = vld [vmem:[%s318 + $0x80] sm:$0xff]
        %v425 = vld [vmem:[%s318 + $0x88] sm:$0xff]
        %v426 = vld [vmem:[%s318 + $0x90] sm:$0xff]
        %v427 = vld [vmem:[%s318 + $0x98] sm:$0xff]
        %v428 = vld [vmem:[%s318 + $0xa0] sm:$0xff]
        %v429 = vld [vmem:[%s318 + $0xa8] sm:$0xff]
        %v430 = vld [vmem:[%s318 + $0xb0] sm:$0xff]
        %v431 = vld [vmem:[%s318 + $0xb8] sm:$0xff]
        %v432 = vld [vmem:[%s318 + $0xc0] sm:$0xff]
        %v433 = vld [vmem:[%s318 + $0xc8] sm:$0xff]
        %v434 = vld [vmem:[%s318 + $0xd0] sm:$0xff]
        %v435 = vld [vmem:[%s318 + $0xd8] sm:$0xff]
        %v436 = vld [vmem:[%s318 + $0xe0] sm:$0xff]
        %v437 = vld [vmem:[%s318 + $0xe8] sm:$0xff]
        %v438 = vld [vmem:[%s318 + $0xf0] sm:$0xff]
        %v439 = vld [vmem:[%s318 + $0xf8] sm:$0xff]
        %v440 = vld [vmem:[#allocation8] sm:$0xff]
        %v441 = vld [vmem:[#allocation8 + $0x8] sm:$0xff]
        %v442 = vld [vmem:[#allocation8 + $0x10] sm:$0xff]
        %v443 = vld [vmem:[#allocation8 + $0x18] sm:$0xff]
        %v444 = vld [vmem:[#allocation8 + $0x20] sm:$0xff]
        %v445 = vld [vmem:[#allocation8 + $0x28] sm:$0xff]
        %v446 = vld [vmem:[#allocation8 + $0x30] sm:$0xff]
        %v447 = vld [vmem:[#allocation8 + $0x38] sm:$0xff]
        %v448 = vld [vmem:[#allocation8 + $0x40] sm:$0xff]
        %v449 = vld [vmem:[#allocation8 + $0x48] sm:$0xff]
        %v450 = vld [vmem:[#allocation8 + $0x50] sm:$0xff]
        %v451 = vld [vmem:[#allocation8 + $0x58] sm:$0xff]
        %v452 = vld [vmem:[#allocation8 + $0x60] sm:$0xff]
        %v453 = vld [vmem:[#allocation8 + $0x68] sm:$0xff]
        %v454 = vld [vmem:[#allocation8 + $0x70] sm:$0xff]
        %v455 = vld [vmem:[#allocation8 + $0x78] sm:$0xff]
        %v456 = vld [vmem:[%s3] sm:$0x1]
        %v458 = vlaneseq
        %v459 = vshrl.u32 %v458, 7
        %v460 = vsub.s32 0, %v459
        %v461 = vrot.slane %v456, %v460
        %463 = vmatprep.subr.mxu0 0.0
        %464 = vmatpush1.msra.mxu0 %v440
        %465 = vmatprep.subr.mxu0 0.0
        %466 = vmatpush1.msra.mxu0 %v441
        %467 = vmatprep.subr.mxu0 0.0
        %468 = vmatpush1.msra.mxu0 %v442
        %469 = vmatprep.subr.mxu0 0.0
        %470 = vmatpush1.msra.mxu0 %v443
        %471 = vmatprep.subr.mxu0 0.0
        %472 = vmatpush1.msra.mxu0 %v444
        %473 = vmatprep.subr.mxu0 0.0
        %474 = vmatpush1.msra.mxu0 %v445
        %475 = vmatprep.subr.mxu0 0.0
        %476 = vmatpush1.msra.mxu0 %v446
        %477 = vmatprep.subr.mxu0 0.0
        %478 = vmatpush1.msra.mxu0 %v447
        %479 = vmatprep.subr.mxu0 0.0
        %480 = vmatpush1.msra.mxu0 %v448
        %481 = vmatprep.subr.mxu0 0.0
        %482 = vmatpush1.msra.mxu0 %v449
        %483 = vmatprep.subr.mxu0 0.0
        %484 = vmatpush1.msra.mxu0 %v450
        %485 = vmatprep.subr.mxu0 0.0
        %486 = vmatpush1.msra.mxu0 %v451
        %487 = vmatprep.subr.mxu0 0.0
        %488 = vmatpush1.msra.mxu0 %v452
        %489 = vmatprep.subr.mxu0 0.0
        %490 = vmatpush1.msra.mxu0 %v453
        %491 = vmatprep.subr.mxu0 0.0
        %492 = vmatpush1.msra.mxu0 %v454
        %493 = vmatprep.subr.mxu0 0.0
        %494 = vmatpush1.msra.mxu0 %v455
        %495 = vmatprep.subr.mxu0 0.0
        %496 = vmatpush1.msra.mxu0 0.0
        %497 = vmatprep.subr.mxu0 0.0
        %498 = vmatpush1.msra.mxu0 0.0
        %499 = vmatprep.subr.mxu0 0.0
        %500 = vmatpush1.msra.mxu0 0.0
        %501 = vmatprep.subr.mxu0 0.0
        %502 = vmatpush1.msra.mxu0 0.0
        %503 = vmatprep.subr.mxu0 0.0
        %504 = vmatpush1.msra.mxu0 0.0
        %505 = vmatprep.subr.mxu0 0.0
        %506 = vmatpush1.msra.mxu0 0.0
        %507 = vmatprep.subr.mxu0 0.0
        %508 = vmatpush1.msra.mxu0 0.0
        %509 = vmatprep.subr.mxu0 0.0
        %510 = vmatpush1.msra.mxu0 0.0
        %511 = vmatprep.subr.mxu0 0.0
        %512 = vmatpush1.msra.mxu0 0.0
        %513 = vmatprep.subr.mxu0 0.0
        %514 = vmatpush1.msra.mxu0 0.0
        %515 = vmatprep.subr.mxu0 0.0
        %516 = vmatpush1.msra.mxu0 0.0
        %517 = vmatprep.subr.mxu0 0.0
        %518 = vmatpush1.msra.mxu0 0.0
        %519 = vmatprep.subr.mxu0 0.0
        %520 = vmatpush1.msra.mxu0 0.0
        %521 = vmatprep.subr.mxu0 0.0
        %522 = vmatpush1.msra.mxu0 0.0
        %523 = vmatprep.subr.mxu0 0.0
        %524 = vmatpush1.msra.mxu0 0.0
        %525 = vmatprep.subr.mxu0 0.0
        %526 = vmatpush1.msra.mxu0 0.0
        %527 = vmatprep.mubr.f32.mxu0 0.0
        %528 = vmatmul.mubr.f32.gmra.mrb[0].mxu0 %v408
        %v529 = vpop.f32.mrb[0].mxu0
        %v530 = vadd.f32 %v461, %v529
        %v531 = vpop.f32.mrb[0].mxu0
        %532 = vmatprep.mubr.f32.mxu0 0.0
        %533 = vmatmul.mubr.f32.gmra.mrb[0].mxu0 %v409
        %v534 = vpop.f32.mrb[0].mxu0
        %v535 = vadd.f32 %v461, %v534
        %v536 = vpop.f32.mrb[0].mxu0
        %537 = vmatprep.mubr.f32.mxu0 0.0
        %538 = vmatmul.mubr.f32.gmra.mrb[0].mxu0 %v410
        %v539 = vpop.f32.mrb[0].mxu0
        %v540 = vadd.f32 %v461, %v539
        %v541 = vpop.f32.mrb[0].mxu0
        %542 = vmatprep.mubr.f32.mxu0 0.0
        %543 = vmatmul.mubr.f32.gmra.mrb[0].mxu0 %v411
        %v544 = vpop.f32.mrb[0].mxu0
        %v545 = vadd.f32 %v461, %v544
        %v546 = vpop.f32.mrb[0].mxu0
        %547 = vmatprep.mubr.f32.mxu0 0.0
        %548 = vmatmul.mubr.f32.gmra.mrb[0].mxu0 %v412
        %v549 = vpop.f32.mrb[0].mxu0
        %v550 = vadd.f32 %v461, %v549
        %v551 = vpop.f32.mrb[0].mxu0
        %552 = vmatprep.mubr.f32.mxu0 0.0
        %553 = vmatmul.mubr.f32.gmra.mrb[0].mxu0 %v413
        %v554 = vpop.f32.mrb[0].mxu0
        %v555 = vadd.f32 %v461, %v554
        %v556 = vpop.f32.mrb[0].mxu0
        %557 = vmatprep.mubr.f32.mxu0 0.0
        %558 = vmatmul.mubr.f32.gmra.mrb[0].mxu0 %v414
        %v559 = vpop.f32.mrb[0].mxu0
        %v560 = vadd.f32 %v461, %v559
        %v561 = vpop.f32.mrb[0].mxu0
        %562 = vmatprep.mubr.f32.mxu0 0.0
        %563 = vmatmul.mubr.f32.gmra.mrb[0].mxu0 %v415
        %v564 = vpop.f32.mrb[0].mxu0
        %v565 = vadd.f32 %v461, %v564
        %v566 = vpop.f32.mrb[0].mxu0
        %567 = vmatprep.mubr.f32.mxu0 0.0
        %568 = vmatmul.mubr.f32.gmra.mrb[0].mxu0 %v416
        %v569 = vpop.f32.mrb[0].mxu0
        %v570 = vadd.f32 %v461, %v569
        %v571 = vpop.f32.mrb[0].mxu0
        %572 = vmatprep.mubr.f32.mxu0 0.0
        %573 = vmatmul.mubr.f32.gmra.mrb[0].mxu0 %v417
        %v574 = vpop.f32.mrb[0].mxu0
        %v575 = vadd.f32 %v461, %v574
        %v576 = vpop.f32.mrb[0].mxu0
        %577 = vmatprep.mubr.f32.mxu0 0.0
        %578 = vmatmul.mubr.f32.gmra.mrb[0].mxu0 %v418
        %v579 = vpop.f32.mrb[0].mxu0
        %v580 = vadd.f32 %v461, %v579
        %v581 = vpop.f32.mrb[0].mxu0
        %582 = vmatprep.mubr.f32.mxu0 0.0
        %583 = vmatmul.mubr.f32.gmra.mrb[0].mxu0 %v419
        %v584 = vpop.f32.mrb[0].mxu0
        %v585 = vadd.f32 %v461, %v584
        %v586 = vpop.f32.mrb[0].mxu0
        %587 = vmatprep.mubr.f32.mxu0 0.0
        %588 = vmatmul.mubr.f32.gmra.mrb[0].mxu0 %v420
        %v589 = vpop.f32.mrb[0].mxu0
        %v590 = vadd.f32 %v461, %v589
        %v591 = vpop.f32.mrb[0].mxu0
        %592 = vmatprep.mubr.f32.mxu0 0.0
        %593 = vmatmul.mubr.f32.gmra.mrb[0].mxu0 %v421
        %v594 = vpop.f32.mrb[0].mxu0
        %v595 = vadd.f32 %v461, %v594
        %v596 = vpop.f32.mrb[0].mxu0
        %597 = vmatprep.mubr.f32.mxu0 0.0
        %598 = vmatmul.mubr.f32.gmra.mrb[0].mxu0 %v422
        %v599 = vpop.f32.mrb[0].mxu0
        %v600 = vadd.f32 %v461, %v599
        %v601 = vpop.f32.mrb[0].mxu0
        %602 = vmatprep.mubr.f32.mxu0 0.0
        %603 = vmatmul.mubr.f32.gmra.mrb[0].mxu0 %v423
        %v604 = vpop.f32.mrb[0].mxu0
        %v605 = vadd.f32 %v461, %v604
        %v606 = vpop.f32.mrb[0].mxu0
        %607 = vmatprep.mubr.f32.mxu0 0.0
        %608 = vmatmul.mubr.f32.gmra.mrb[0].mxu0 %v424
        %v609 = vpop.f32.mrb[0].mxu0
        %v610 = vadd.f32 %v461, %v609
        %v611 = vpop.f32.mrb[0].mxu0
        %612 = vmatprep.mubr.f32.mxu0 0.0
        %613 = vmatmul.mubr.f32.gmra.mrb[0].mxu0 %v425
        %v614 = vpop.f32.mrb[0].mxu0
        %v615 = vadd.f32 %v461, %v614
        %v616 = vpop.f32.mrb[0].mxu0
        %617 = vmatprep.mubr.f32.mxu0 0.0
        %618 = vmatmul.mubr.f32.gmra.mrb[0].mxu0 %v426
        %v619 = vpop.f32.mrb[0].mxu0
        %v620 = vadd.f32 %v461, %v619
        %v621 = vpop.f32.mrb[0].mxu0
        %622 = vmatprep.mubr.f32.mxu0 0.0
        %623 = vmatmul.mubr.f32.gmra.mrb[0].mxu0 %v427
        %v624 = vpop.f32.mrb[0].mxu0
        %v625 = vadd.f32 %v461, %v624
        %v626 = vpop.f32.mrb[0].mxu0
        %627 = vmatprep.mubr.f32.mxu0 0.0
        %628 = vmatmul.mubr.f32.gmra.mrb[0].mxu0 %v428
        %v629 = vpop.f32.mrb[0].mxu0
        %v630 = vadd.f32 %v461, %v629
        %v631 = vpop.f32.mrb[0].mxu0
        %632 = vmatprep.mubr.f32.mxu0 0.0
        %633 = vmatmul.mubr.f32.gmra.mrb[0].mxu0 %v429
        %v634 = vpop.f32.mrb[0].mxu0
        %v635 = vadd.f32 %v461, %v634
        %v636 = vpop.f32.mrb[0].mxu0
        %637 = vmatprep.mubr.f32.mxu0 0.0
        %638 = vmatmul.mubr.f32.gmra.mrb[0].mxu0 %v430
        %v639 = vpop.f32.mrb[0].mxu0
        %v640 = vadd.f32 %v461, %v639
        %v641 = vpop.f32.mrb[0].mxu0
        %642 = vmatprep.mubr.f32.mxu0 0.0
        %643 = vmatmul.mubr.f32.gmra.mrb[0].mxu0 %v431
        %v644 = vpop.f32.mrb[0].mxu0
        %v645 = vadd.f32 %v461, %v644
        %v646 = vpop.f32.mrb[0].mxu0
        %647 = vmatprep.mubr.f32.mxu0 0.0
        %648 = vmatmul.mubr.f32.gmra.mrb[0].mxu0 %v432
        %v649 = vpop.f32.mrb[0].mxu0
        %v650 = vadd.f32 %v461, %v649
        %v651 = vpop.f32.mrb[0].mxu0
        %652 = vmatprep.mubr.f32.mxu0 0.0
        %653 = vmatmul.mubr.f32.gmra.mrb[0].mxu0 %v433
        %v654 = vpop.f32.mrb[0].mxu0
        %v655 = vadd.f32 %v461, %v654
        %v656 = vpop.f32.mrb[0].mxu0
        %657 = vmatprep.mubr.f32.mxu0 0.0
        %658 = vmatmul.mubr.f32.gmra.mrb[0].mxu0 %v434
        %v659 = vpop.f32.mrb[0].mxu0
        %v660 = vadd.f32 %v461, %v659
        %v661 = vpop.f32.mrb[0].mxu0
        %662 = vmatprep.mubr.f32.mxu0 0.0
        %663 = vmatmul.mubr.f32.gmra.mrb[0].mxu0 %v435
        %v664 = vpop.f32.mrb[0].mxu0
        %v665 = vadd.f32 %v461, %v664
        %v666 = vpop.f32.mrb[0].mxu0
        %667 = vmatprep.mubr.f32.mxu0 0.0
        %668 = vmatmul.mubr.f32.gmra.mrb[0].mxu0 %v436
        %v669 = vpop.f32.mrb[0].mxu0
        %v670 = vadd.f32 %v461, %v669
        %v671 = vpop.f32.mrb[0].mxu0
        %672 = vmatprep.mubr.f32.mxu0 0.0
        %673 = vmatmul.mubr.f32.gmra.mrb[0].mxu0 %v437
        %v674 = vpop.f32.mrb[0].mxu0
        %v675 = vadd.f32 %v461, %v674
        %v676 = vpop.f32.mrb[0].mxu0
        %677 = vmatprep.mubr.f32.mxu0 0.0
        %678 = vmatmul.mubr.f32.gmra.mrb[0].mxu0 %v438
        %v679 = vpop.f32.mrb[0].mxu0
        %v680 = vadd.f32 %v461, %v679
        %v681 = vpop.f32.mrb[0].mxu0
        %682 = vmatprep.mubr.f32.mxu0 0.0
        %683 = vmatmul.mubr.f32.gmra.mrb[0].mxu0 %v439
        %v684 = vpop.f32.mrb[0].mxu0
        %v685 = vadd.f32 %v461, %v684
        %v686 = vpop.f32.mrb[0].mxu0
        %687 = vdwg.mxu0
        %v688 = vmax.f32 %v530, 0.0
        %v689 = vmax.f32 %v535, 0.0
        %v690 = vmax.f32 %v540, 0.0
        %v691 = vmax.f32 %v545, 0.0
        %v692 = vmax.f32 %v550, 0.0
        %v693 = vmax.f32 %v555, 0.0
        %v694 = vmax.f32 %v560, 0.0
        %v695 = vmax.f32 %v565, 0.0
        %v696 = vmax.f32 %v570, 0.0
        %v697 = vmax.f32 %v575, 0.0
        %v698 = vmax.f32 %v580, 0.0
        %v699 = vmax.f32 %v585, 0.0
        %v700 = vmax.f32 %v590, 0.0
        %v701 = vmax.f32 %v595, 0.0
        %v702 = vmax.f32 %v600, 0.0
        %v703 = vmax.f32 %v605, 0.0
        %v704 = vmax.f32 %v610, 0.0
        %v705 = vmax.f32 %v615, 0.0
        %v706 = vmax.f32 %v620, 0.0
        %v707 = vmax.f32 %v625, 0.0
        %v708 = vmax.f32 %v630, 0.0
        %v709 = vmax.f32 %v635, 0.0
        %v710 = vmax.f32 %v640, 0.0
        %v711 = vmax.f32 %v645, 0.0
        %v712 = vmax.f32 %v650, 0.0
        %v713 = vmax.f32 %v655, 0.0
        %v714 = vmax.f32 %v660, 0.0
        %v715 = vmax.f32 %v665, 0.0
        %v716 = vmax.f32 %v670, 0.0
        %v717 = vmax.f32 %v675, 0.0
        %v718 = vmax.f32 %v680, 0.0
        %v719 = vmax.f32 %v685, 0.0
        %s720 = scalar_lea.vmem [#allocation2], 24
        %721 = vst [vmem:[%s720 + $0x1] sm:$0xff] %v688
        %722 = vst [vmem:[%s720 + $0x9] sm:$0xff] %v689
        %723 = vst [vmem:[%s720 + $0x19] sm:$0xff] %v690
        %724 = vst [vmem:[%s720 + $0x21] sm:$0xff] %v691
        %725 = vst [vmem:[%s720 + $0x31] sm:$0xff] %v692
        %726 = vst [vmem:[%s720 + $0x39] sm:$0xff] %v693
        %727 = vst [vmem:[%s720 + $0x49] sm:$0xff] %v694
        %728 = vst [vmem:[%s720 + $0x51] sm:$0xff] %v695
        %729 = vst [vmem:[%s720 + $0x61] sm:$0xff] %v696
        %730 = vst [vmem:[%s720 + $0x69] sm:$0xff] %v697
        %731 = vst [vmem:[%s720 + $0x79] sm:$0xff] %v698
        %732 = vst [vmem:[%s720 + $0x81] sm:$0xff] %v699
        %733 = vst [vmem:[%s720 + $0x91] sm:$0xff] %v700
        %734 = vst [vmem:[%s720 + $0x99] sm:$0xff] %v701
        %735 = vst [vmem:[%s720 + $0xa9] sm:$0xff] %v702
        %736 = vst [vmem:[%s720 + $0xb1] sm:$0xff] %v703
        %737 = vst [vmem:[%s720 + $0xc1] sm:$0xff] %v704
        %738 = vst [vmem:[%s720 + $0xc9] sm:$0xff] %v705
        %739 = vst [vmem:[%s720 + $0xd9] sm:$0xff] %v706
        %740 = vst [vmem:[%s720 + $0xe1] sm:$0xff] %v707
        %741 = vst [vmem:[%s720 + $0xf1] sm:$0xff] %v708
        %742 = vst [vmem:[%s720 + $0xf9] sm:$0xff] %v709
        %743 = vst [vmem:[%s720 + $0x109] sm:$0xff] %v710
        %744 = vst [vmem:[%s720 + $0x111] sm:$0xff] %v711
        %745 = vst [vmem:[%s720 + $0x121] sm:$0xff] %v712
        %746 = vst [vmem:[%s720 + $0x129] sm:$0xff] %v713
        %747 = vst [vmem:[%s720 + $0x139] sm:$0xff] %v714
        %748 = vst [vmem:[%s720 + $0x141] sm:$0xff] %v715
        %749 = vst [vmem:[%s720 + $0x151] sm:$0xff] %v716
        %750 = vst [vmem:[%s720 + $0x159] sm:$0xff] %v717
        %751 = vst [vmem:[%s720 + $0x169] sm:$0xff] %v718
        %752 = vst [vmem:[%s720 + $0x171] sm:$0xff] %v719
        %753 = vst [vmem:[#allocation2] sm:$0x1] 0.0
        %754 = vst [vmem:[#allocation2 + $0x18] sm:$0x1] 0.0
        %755 = vst [vmem:[#allocation2 + $0x30] sm:$0x1] 0.0
        %756 = vst [vmem:[#allocation2 + $0x48] sm:$0x1] 0.0
        %757 = vst [vmem:[#allocation2 + $0x60] sm:$0x1] 0.0
        %758 = vst [vmem:[#allocation2 + $0x78] sm:$0x1] 0.0
        %759 = vst [vmem:[#allocation2 + $0x90] sm:$0x1] 0.0
        %760 = vst [vmem:[#allocation2 + $0xa8] sm:$0x1] 0.0
        %761 = vst [vmem:[#allocation2 + $0xc0] sm:$0x1] 0.0
        %762 = vst [vmem:[#allocation2 + $0xd8] sm:$0x1] 0.0
        %763 = vst [vmem:[#allocation2 + $0xf0] sm:$0x1] 0.0
        %764 = vst [vmem:[#allocation2 + $0x108] sm:$0x1] 0.0
        %765 = vst [vmem:[#allocation2 + $0x120] sm:$0x1] 0.0
        %766 = vst [vmem:[#allocation2 + $0x138] sm:$0x1] 0.0
        %767 = vst [vmem:[#allocation2 + $0x150] sm:$0x1] 0.0
        %768 = vst [vmem:[#allocation2 + $0x168] sm:$0x1] 0.0
        %769 = vst [vmem:[#allocation2 + $0x180] sm:$0x1] 0.0
        %770 = vst [vmem:[#allocation2 + $0x198] sm:$0x1] 0.0
        %771 = vst [vmem:[#allocation2 + $0x11] sm:$0x1] 0.0
        %772 = vst [vmem:[#allocation2 + $0x29] sm:$0x1] 0.0
        %773 = vst [vmem:[#allocation2 + $0x41] sm:$0x1] 0.0
        %774 = vst [vmem:[#allocation2 + $0x59] sm:$0x1] 0.0
        %775 = vst [vmem:[#allocation2 + $0x71] sm:$0x1] 0.0
        %776 = vst [vmem:[#allocation2 + $0x89] sm:$0x1] 0.0
        %777 = vst [vmem:[#allocation2 + $0xa1] sm:$0x1] 0.0
        %778 = vst [vmem:[#allocation2 + $0xb9] sm:$0x1] 0.0
        %779 = vst [vmem:[#allocation2 + $0xd1] sm:$0x1] 0.0
        %780 = vst [vmem:[#allocation2 + $0xe9] sm:$0x1] 0.0
        %781 = vst [vmem:[#allocation2 + $0x101] sm:$0x1] 0.0
        %782 = vst [vmem:[#allocation2 + $0x119] sm:$0x1] 0.0
        %783 = vst [vmem:[#allocation2 + $0x131] sm:$0x1] 0.0
        %784 = vst [vmem:[#allocation2 + $0x149] sm:$0x1] 0.0
        %785 = vst [vmem:[#allocation2 + $0x161] sm:$0x1] 0.0
        %786 = vst [vmem:[#allocation2 + $0x179] sm:$0x1] 0.0
        %787 = vst [vmem:[#allocation2 + $0x191] sm:$0x1] 0.0
        %788 = vst [vmem:[#allocation2 + $0x1a9] sm:$0x1] 0.0
        // Predicated region
        $region81: #{tpu_custom_call.1} parent=47 // pred_check
          %p789 = pneg %p364
        $region82: #{tpu_custom_call.1} parent=47 // pred_check_branch
          %791 = sbr.rel (%p789) target = $region84
        $region83: #{tpu_custom_call.1} parent=47 // pred_region
          %s792 = smul.u32 1, 1
          %s793 = smul.u32 %s792, 16
          %s794 = smul.u32 %s793, 1
          %s795 = sshll.u32 %s794, 4
          %796 = dma.done [#allocation4], %s795
        $region84: #{tpu_custom_call.1} parent=47 // pred_fallthru
          _
        // Predicated region
        $region85: #{tpu_custom_call.1} parent=47 // pred_check
          %p797 = pneg %p385
        $region86: #{tpu_custom_call.1} parent=47 // pred_check_branch
          %799 = sbr.rel (%p797) target = $region88
        $region87: #{tpu_custom_call.1} parent=47 // pred_region
          %s800 = scalar_lea.sflag [#allocation4], 1
          %s801 = smul.u32 1, 1
          %s802 = smul.u32 %s801, 16
          %s803 = smul.u32 %s802, 1
          %s804 = sshll.u32 %s803, 4
          %805 = dma.done %s800, %s804
        $region88: #{tpu_custom_call.1} parent=47 // pred_fallthru
          _
        %v806 = vld [vmem:[#allocation3] sm:$0xff]
        %v807 = vld [vmem:[#allocation3 + $0x8] sm:$0xff]
        %v808 = vld [vmem:[#allocation3 + $0x10] sm:$0xff]
        %v809 = vld [vmem:[#allocation3 + $0x18] sm:$0xff]
        %v810 = vld [vmem:[#allocation8] sm:$0xff]
        %v811 = vld [vmem:[#allocation8 + $0x8] sm:$0xff]
        %v812 = vld [vmem:[#allocation8 + $0x10] sm:$0xff]
        %v813 = vld [vmem:[#allocation8 + $0x18] sm:$0xff]
        %v814 = vld [vmem:[#allocation8 + $0x20] sm:$0xff]
        %v815 = vld [vmem:[#allocation8 + $0x28] sm:$0xff]
        %v816 = vld [vmem:[#allocation8 + $0x30] sm:$0xff]
        %v817 = vld [vmem:[#allocation8 + $0x38] sm:$0xff]
        %v818 = vld [vmem:[#allocation8 + $0x40] sm:$0xff]
        %v819 = vld [vmem:[#allocation8 + $0x48] sm:$0xff]
        %v820 = vld [vmem:[#allocation8 + $0x50] sm:$0xff]
        %v821 = vld [vmem:[#allocation8 + $0x58] sm:$0xff]
        %v822 = vld [vmem:[#allocation8 + $0x60] sm:$0xff]
        %v823 = vld [vmem:[#allocation8 + $0x68] sm:$0xff]
        %v824 = vld [vmem:[#allocation8 + $0x70] sm:$0xff]
        %v825 = vld [vmem:[#allocation8 + $0x78] sm:$0xff]
        %v826 = vld [vmem:[%s3] sm:$0x1]
        %v828 = vlaneseq
        %v829 = vshrl.u32 %v828, 7
        %v830 = vsub.s32 0, %v829
        %v831 = vrot.slane %v826, %v830
        %833 = vmatprep.subr.mxu0 0.0
        %834 = vmatpush1.msra.mxu0 %v810
        %835 = vmatprep.subr.mxu0 0.0
        %836 = vmatpush1.msra.mxu0 %v811
        %837 = vmatprep.subr.mxu0 0.0
        %838 = vmatpush1.msra.mxu0 %v812
        %839 = vmatprep.subr.mxu0 0.0
        %840 = vmatpush1.msra.mxu0 %v813
        %841 = vmatprep.subr.mxu0 0.0
        %842 = vmatpush1.msra.mxu0 %v814
        %843 = vmatprep.subr.mxu0 0.0
        %844 = vmatpush1.msra.mxu0 %v815
        %845 = vmatprep.subr.mxu0 0.0
        %846 = vmatpush1.msra.mxu0 %v816
        %847 = vmatprep.subr.mxu0 0.0
        %848 = vmatpush1.msra.mxu0 %v817
        %849 = vmatprep.subr.mxu0 0.0
        %850 = vmatpush1.msra.mxu0 %v818
        %851 = vmatprep.subr.mxu0 0.0
        %852 = vmatpush1.msra.mxu0 %v819
        %853 = vmatprep.subr.mxu0 0.0
        %854 = vmatpush1.msra.mxu0 %v820
        %855 = vmatprep.subr.mxu0 0.0
        %856 = vmatpush1.msra.mxu0 %v821
        %857 = vmatprep.subr.mxu0 0.0
        %858 = vmatpush1.msra.mxu0 %v822
        %859 = vmatprep.subr.mxu0 0.0
        %860 = vmatpush1.msra.mxu0 %v823
        %861 = vmatprep.subr.mxu0 0.0
        %862 = vmatpush1.msra.mxu0 %v824
        %863 = vmatprep.subr.mxu0 0.0
        %864 = vmatpush1.msra.mxu0 %v825
        %865 = vmatprep.subr.mxu0 0.0
        %866 = vmatpush1.msra.mxu0 0.0
        %867 = vmatprep.subr.mxu0 0.0
        %868 = vmatpush1.msra.mxu0 0.0
        %869 = vmatprep.subr.mxu0 0.0
        %870 = vmatpush1.msra.mxu0 0.0
        %871 = vmatprep.subr.mxu0 0.0
        %872 = vmatpush1.msra.mxu0 0.0
        %873 = vmatprep.subr.mxu0 0.0
        %874 = vmatpush1.msra.mxu0 0.0
        %875 = vmatprep.subr.mxu0 0.0
        %876 = vmatpush1.msra.mxu0 0.0
        %877 = vmatprep.subr.mxu0 0.0
        %878 = vmatpush1.msra.mxu0 0.0
        %879 = vmatprep.subr.mxu0 0.0
        %880 = vmatpush1.msra.mxu0 0.0
        %881 = vmatprep.subr.mxu0 0.0
        %882 = vmatpush1.msra.mxu0 0.0
        %883 = vmatprep.subr.mxu0 0.0
        %884 = vmatpush1.msra.mxu0 0.0
        %885 = vmatprep.subr.mxu0 0.0
        %886 = vmatpush1.msra.mxu0 0.0
        %887 = vmatprep.subr.mxu0 0.0
        %888 = vmatpush1.msra.mxu0 0.0
        %889 = vmatprep.subr.mxu0 0.0
        %890 = vmatpush1.msra.mxu0 0.0
        %891 = vmatprep.subr.mxu0 0.0
        %892 = vmatpush1.msra.mxu0 0.0
        %893 = vmatprep.subr.mxu0 0.0
        %894 = vmatpush1.msra.mxu0 0.0
        %895 = vmatprep.subr.mxu0 0.0
        %896 = vmatpush1.msra.mxu0 0.0
        %897 = vmatprep.mubr.f32.mxu0 0.0
        %898 = vmatmul.mubr.f32.gmra.mrb[0].mxu0 %v806
        %v899 = vpop.f32.mrb[0].mxu0
        %v900 = vadd.f32 %v831, %v899
        %v901 = vpop.f32.mrb[0].mxu0
        %902 = vmatprep.mubr.f32.mxu0 0.0
        %903 = vmatmul.mubr.f32.gmra.mrb[0].mxu0 %v807
        %v904 = vpop.f32.mrb[0].mxu0
        %v905 = vadd.f32 %v831, %v904
        %v906 = vpop.f32.mrb[0].mxu0
        %907 = vmatprep.mubr.f32.mxu0 0.0
        %908 = vmatmul.mubr.f32.gmra.mrb[0].mxu0 %v808
        %v909 = vpop.f32.mrb[0].mxu0
        %v910 = vadd.f32 %v831, %v909
        %v911 = vpop.f32.mrb[0].mxu0
        %912 = vmatprep.mubr.f32.mxu0 0.0
        %913 = vmatmul.mubr.f32.gmra.mrb[0].mxu0 %v809
        %v914 = vpop.f32.mrb[0].mxu0
        %v915 = vadd.f32 %v831, %v914
        %v916 = vpop.f32.mrb[0].mxu0
        %917 = vdwg.mxu0
        %v918 = vmax.f32 %v900, 0.0
        %v919 = vmax.f32 %v905, 0.0
        %v920 = vmax.f32 %v910, 0.0
        %v921 = vmax.f32 %v915, 0.0
        %922 = vst [vmem:[#allocation2 + $0x1] sm:$0xff] %v918
        %923 = vst [vmem:[#allocation2 + $0x9] sm:$0xff] %v919
        %s924 = scalar_lea.vmem [#allocation2], 408
        %925 = vst [vmem:[%s924 + $0x1] sm:$0xff] %v920
        %926 = vst [vmem:[%s924 + $0x9] sm:$0xff] %v921
        %p927 = scmp.eq.s32.totalorder %s32, 0
        // Predicated region
        $region89: #{tpu_custom_call.1} parent=47 // pred_check
          %p928 = pneg %p927
        $region90: #{tpu_custom_call.1} parent=47 // pred_check_branch
          %930 = sbr.rel (%p928) target = $region92
        $region91: #{tpu_custom_call.1} parent=47 // pred_region
          %931 = vst [vmem:[#allocation2 + $0x1] sm:$0xff] 0.0
          %932 = vst [vmem:[#allocation2 + $0x9] sm:$0xff] 0.0
          %933 = vst [vmem:[%s924 + $0x1] sm:$0xff] 0.0
          %934 = vst [vmem:[%s924 + $0x9] sm:$0xff] 0.0
        $region92: #{tpu_custom_call.1} parent=47 // pred_fallthru
          _
        %v935 = vld [vmem:[#allocation2] sm:$0xff]
        %v936 = vld [vmem:[#allocation2 + $0x8] sm:$0xff]
        %v937 = vld [vmem:[#allocation2 + $0x18] sm:$0xff]
        %v938 = vld [vmem:[#allocation2 + $0x20] sm:$0xff]
        %v939 = vld [vmem:[#allocation2 + $0x30] sm:$0xff]
        %v940 = vld [vmem:[#allocation2 + $0x38] sm:$0xff]
        %v941 = vld [vmem:[#allocation2 + $0x48] sm:$0xff]
        %v942 = vld [vmem:[#allocation2 + $0x50] sm:$0xff]
        %v943 = vld [vmem:[#allocation2 + $0x60] sm:$0xff]
        %v944 = vld [vmem:[#allocation2 + $0x68] sm:$0xff]
        %v945 = vld [vmem:[#allocation2 + $0x78] sm:$0xff]
        %v946 = vld [vmem:[#allocation2 + $0x80] sm:$0xff]
        %v947 = vld [vmem:[#allocation2 + $0x90] sm:$0xff]
        %v948 = vld [vmem:[#allocation2 + $0x98] sm:$0xff]
        %v949 = vld [vmem:[#allocation2 + $0xa8] sm:$0xff]
        %v950 = vld [vmem:[#allocation2 + $0xb0] sm:$0xff]
        %v951 = vld [vmem:[#allocation2 + $0xc0] sm:$0xff]
        %v952 = vld [vmem:[#allocation2 + $0xc8] sm:$0xff]
        %v953 = vld [vmem:[#allocation2 + $0xd8] sm:$0xff]
        %v954 = vld [vmem:[#allocation2 + $0xe0] sm:$0xff]
        %v955 = vld [vmem:[#allocation2 + $0xf0] sm:$0xff]
        %v956 = vld [vmem:[#allocation2 + $0xf8] sm:$0xff]
        %v957 = vld [vmem:[#allocation2 + $0x108] sm:$0xff]
        %v958 = vld [vmem:[#allocation2 + $0x110] sm:$0xff]
        %v959 = vld [vmem:[#allocation2 + $0x120] sm:$0xff]
        %v960 = vld [vmem:[#allocation2 + $0x128] sm:$0xff]
        %v961 = vld [vmem:[#allocation2 + $0x138] sm:$0xff]
        %v962 = vld [vmem:[#allocation2 + $0x140] sm:$0xff]
        %v963 = vld [vmem:[#allocation2 + $0x150] sm:$0xff]
        %v964 = vld [vmem:[#allocation2 + $0x158] sm:$0xff]
        %v965 = vld [vmem:[#allocation2 + $0x168] sm:$0xff]
        %v966 = vld [vmem:[#allocation2 + $0x170] sm:$0xff]
        %v967 = vld [vmem:[#allocation10] sm:$0xff]
        %v968 = vld [vmem:[#allocation10 + $0x8] sm:$0xff]
        %v969 = vld [vmem:[#allocation10 + $0x10] sm:$0xff]
        %v970 = vld [vmem:[#allocation10 + $0x18] sm:$0xff]
        %v971 = vld [vmem:[#allocation10 + $0x20] sm:$0xff]
        %v972 = vld [vmem:[#allocation10 + $0x28] sm:$0xff]
        %v973 = vld [vmem:[#allocation10 + $0x30] sm:$0xff]
        %v974 = vld [vmem:[#allocation10 + $0x38] sm:$0xff]
        %v975 = vld [vmem:[#allocation10 + $0x40] sm:$0xff]
        %v976 = vld [vmem:[#allocation10 + $0x48] sm:$0xff]
        %v977 = vld [vmem:[#allocation10 + $0x50] sm:$0xff]
        %v978 = vld [vmem:[#allocation10 + $0x58] sm:$0xff]
        %v979 = vld [vmem:[#allocation10 + $0x60] sm:$0xff]
        %v980 = vld [vmem:[#allocation10 + $0x68] sm:$0xff]
        %v981 = vld [vmem:[#allocation10 + $0x70] sm:$0xff]
        %v982 = vld [vmem:[#allocation10 + $0x78] sm:$0xff]
        %v983 = vld [vmem:[#allocation2 + $0x1] sm:$0xff]
        %v984 = vld [vmem:[#allocation2 + $0x9] sm:$0xff]
        %v985 = vld [vmem:[#allocation2 + $0x19] sm:$0xff]
        %v986 = vld [vmem:[#allocation2 + $0x21] sm:$0xff]
        %v987 = vld [vmem:[#allocation2 + $0x31] sm:$0xff]
        %v988 = vld [vmem:[#allocation2 + $0x39] sm:$0xff]
        %v989 = vld [vmem:[#allocation2 + $0x49] sm:$0xff]
        %v990 = vld [vmem:[#allocation2 + $0x51] sm:$0xff]
        %v991 = vld [vmem:[#allocation2 + $0x61] sm:$0xff]
        %v992 = vld [vmem:[#allocation2 + $0x69] sm:$0xff]
        %v993 = vld [vmem:[#allocation2 + $0x79] sm:$0xff]
        %v994 = vld [vmem:[#allocation2 + $0x81] sm:$0xff]
        %v995 = vld [vmem:[#allocation2 + $0x91] sm:$0xff]
        %v996 = vld [vmem:[#allocation2 + $0x99] sm:$0xff]
        %v997 = vld [vmem:[#allocation2 + $0xa9] sm:$0xff]
        %v998 = vld [vmem:[#allocation2 + $0xb1] sm:$0xff]
        %v999 = vld [vmem:[#allocation2 + $0xc1] sm:$0xff]
        %v1000 = vld [vmem:[#allocation2 + $0xc9] sm:$0xff]
        %v1001 = vld [vmem:[#allocation2 + $0xd9] sm:$0xff]
        %v1002 = vld [vmem:[#allocation2 + $0xe1] sm:$0xff]
        %v1003 = vld [vmem:[#allocation2 + $0xf1] sm:$0xff]
        %v1004 = vld [vmem:[#allocation2 + $0xf9] sm:$0xff]
        %v1005 = vld [vmem:[#allocation2 + $0x109] sm:$0xff]
        %v1006 = vld [vmem:[#allocation2 + $0x111] sm:$0xff]
        %v1007 = vld [vmem:[#allocation2 + $0x121] sm:$0xff]
        %v1008 = vld [vmem:[#allocation2 + $0x129] sm:$0xff]
        %v1009 = vld [vmem:[#allocation2 + $0x139] sm:$0xff]
        %v1010 = vld [vmem:[#allocation2 + $0x141] sm:$0xff]
        %v1011 = vld [vmem:[#allocation2 + $0x151] sm:$0xff]
        %v1012 = vld [vmem:[#allocation2 + $0x159] sm:$0xff]
        %v1013 = vld [vmem:[#allocation2 + $0x169] sm:$0xff]
        %v1014 = vld [vmem:[#allocation2 + $0x171] sm:$0xff]
        %s1015 = scalar_lea.vmem [#allocation10], 128
        %v1016 = vld [vmem:[%s1015] sm:$0xff]
        %v1017 = vld [vmem:[%s1015 + $0x8] sm:$0xff]
        %v1018 = vld [vmem:[%s1015 + $0x10] sm:$0xff]
        %v1019 = vld [vmem:[%s1015 + $0x18] sm:$0xff]
        %v1020 = vld [vmem:[%s1015 + $0x20] sm:$0xff]
        %v1021 = vld [vmem:[%s1015 + $0x28] sm:$0xff]
        %v1022 = vld [vmem:[%s1015 + $0x30] sm:$0xff]
        %v1023 = vld [vmem:[%s1015 + $0x38] sm:$0xff]
        %v1024 = vld [vmem:[%s1015 + $0x40] sm:$0xff]
        %v1025 = vld [vmem:[%s1015 + $0x48] sm:$0xff]
        %v1026 = vld [vmem:[%s1015 + $0x50] sm:$0xff]
        %v1027 = vld [vmem:[%s1015 + $0x58] sm:$0xff]
        %v1028 = vld [vmem:[%s1015 + $0x60] sm:$0xff]
        %v1029 = vld [vmem:[%s1015 + $0x68] sm:$0xff]
        %v1030 = vld [vmem:[%s1015 + $0x70] sm:$0xff]
        %v1031 = vld [vmem:[%s1015 + $0x78] sm:$0xff]
        %1032 = vmatprep.subr.mxu0 0.0
        %1033 = vmatpush1.msra.mxu0 %v1016
        %1034 = vmatprep.subr.mxu0 0.0
        %1035 = vmatpush1.msra.mxu0 %v1017
        %1036 = vmatprep.subr.mxu0 0.0
        %1037 = vmatpush1.msra.mxu0 %v1018
        %1038 = vmatprep.subr.mxu0 0.0
        %1039 = vmatpush1.msra.mxu0 %v1019
        %1040 = vmatprep.subr.mxu0 0.0
        %1041 = vmatpush1.msra.mxu0 %v1020
        %1042 = vmatprep.subr.mxu0 0.0
        %1043 = vmatpush1.msra.mxu0 %v1021
        %1044 = vmatprep.subr.mxu0 0.0
        %1045 = vmatpush1.msra.mxu0 %v1022
        %1046 = vmatprep.subr.mxu0 0.0
        %1047 = vmatpush1.msra.mxu0 %v1023
        %1048 = vmatprep.subr.mxu0 0.0
        %1049 = vmatpush1.msra.mxu0 %v1024
        %1050 = vmatprep.subr.mxu0 0.0
        %1051 = vmatpush1.msra.mxu0 %v1025
        %1052 = vmatprep.subr.mxu0 0.0
        %1053 = vmatpush1.msra.mxu0 %v1026
        %1054 = vmatprep.subr.mxu0 0.0
        %1055 = vmatpush1.msra.mxu0 %v1027
        %1056 = vmatprep.subr.mxu0 0.0
        %1057 = vmatpush1.msra.mxu0 %v1028
        %1058 = vmatprep.subr.mxu0 0.0
        %1059 = vmatpush1.msra.mxu0 %v1029
        %1060 = vmatprep.subr.mxu0 0.0
        %1061 = vmatpush1.msra.mxu0 %v1030
        %1062 = vmatprep.subr.mxu0 0.0
        %1063 = vmatpush1.msra.mxu0 %v1031
        %1064 = vmatprep.subr.mxu0 0.0
        %1065 = vmatpush1.msra.mxu0 0.0
        %1066 = vmatprep.subr.mxu0 0.0
        %1067 = vmatpush1.msra.mxu0 0.0
        %1068 = vmatprep.subr.mxu0 0.0
        %1069 = vmatpush1.msra.mxu0 0.0
        %1070 = vmatprep.subr.mxu0 0.0
        %1071 = vmatpush1.msra.mxu0 0.0
        %1072 = vmatprep.subr.mxu0 0.0
        %1073 = vmatpush1.msra.mxu0 0.0
        %1074 = vmatprep.subr.mxu0 0.0
        %1075 = vmatpush1.msra.mxu0 0.0
        %1076 = vmatprep.subr.mxu0 0.0
        %1077 = vmatpush1.msra.mxu0 0.0
        %1078 = vmatprep.subr.mxu0 0.0
        %1079 = vmatpush1.msra.mxu0 0.0
        %1080 = vmatprep.subr.mxu0 0.0
        %1081 = vmatpush1.msra.mxu0 0.0
        %1082 = vmatprep.subr.mxu0 0.0
        %1083 = vmatpush1.msra.mxu0 0.0
        %1084 = vmatprep.subr.mxu0 0.0
        %1085 = vmatpush1.msra.mxu0 0.0
        %1086 = vmatprep.subr.mxu0 0.0
        %1087 = vmatpush1.msra.mxu0 0.0
        %1088 = vmatprep.subr.mxu0 0.0
        %1089 = vmatpush1.msra.mxu0 0.0
        %1090 = vmatprep.subr.mxu0 0.0
        %1091 = vmatpush1.msra.mxu0 0.0
        %1092 = vmatprep.subr.mxu0 0.0
        %1093 = vmatpush1.msra.mxu0 0.0
        %1094 = vmatprep.subr.mxu0 0.0
        %1095 = vmatpush1.msra.mxu0 0.0
        %1096 = vmatprep.mubr.f32.mxu0 0.0
        %1097 = vmatmul.mubr.f32.gmra.mrb[0].mxu0 %v983
        %v1098 = vpop.f32.mrb[0].mxu0
        %v1099 = vadd.f32 0.0, %v1098
        %v1100 = vpop.f32.mrb[0].mxu0
        %1101 = vmatprep.mubr.f32.mxu0 0.0
        %1102 = vmatmul.mubr.f32.gmra.mrb[0].mxu0 %v984
        %v1103 = vpop.f32.mrb[0].mxu0
        %v1104 = vadd.f32 0.0, %v1103
        %v1105 = vpop.f32.mrb[0].mxu0
        %1106 = vmatprep.mubr.f32.mxu0 0.0
        %1107 = vmatmul.mubr.f32.gmra.mrb[0].mxu0 %v985
        %v1108 = vpop.f32.mrb[0].mxu0
        %v1109 = vadd.f32 0.0, %v1108
        %v1110 = vpop.f32.mrb[0].mxu0
        %1111 = vmatprep.mubr.f32.mxu0 0.0
        %1112 = vmatmul.mubr.f32.gmra.mrb[0].mxu0 %v986
        %v1113 = vpop.f32.mrb[0].mxu0
        %v1114 = vadd.f32 0.0, %v1113
        %v1115 = vpop.f32.mrb[0].mxu0
        %1116 = vmatprep.mubr.f32.mxu0 0.0
        %1117 = vmatmul.mubr.f32.gmra.mrb[0].mxu0 %v987
        %v1118 = vpop.f32.mrb[0].mxu0
        %v1119 = vadd.f32 0.0, %v1118
        %v1120 = vpop.f32.mrb[0].mxu0
        %1121 = vmatprep.mubr.f32.mxu0 0.0
        %1122 = vmatmul.mubr.f32.gmra.mrb[0].mxu0 %v988
        %v1123 = vpop.f32.mrb[0].mxu0
        %v1124 = vadd.f32 0.0, %v1123
        %v1125 = vpop.f32.mrb[0].mxu0
        %1126 = vmatprep.mubr.f32.mxu0 0.0
        %1127 = vmatmul.mubr.f32.gmra.mrb[0].mxu0 %v989
        %v1128 = vpop.f32.mrb[0].mxu0
        %v1129 = vadd.f32 0.0, %v1128
        %v1130 = vpop.f32.mrb[0].mxu0
        %1131 = vmatprep.mubr.f32.mxu0 0.0
        %1132 = vmatmul.mubr.f32.gmra.mrb[0].mxu0 %v990
        %v1133 = vpop.f32.mrb[0].mxu0
        %v1134 = vadd.f32 0.0, %v1133
        %v1135 = vpop.f32.mrb[0].mxu0
        %1136 = vmatprep.mubr.f32.mxu0 0.0
        %1137 = vmatmul.mubr.f32.gmra.mrb[0].mxu0 %v991
        %v1138 = vpop.f32.mrb[0].mxu0
        %v1139 = vadd.f32 0.0, %v1138
        %v1140 = vpop.f32.mrb[0].mxu0
        %1141 = vmatprep.mubr.f32.mxu0 0.0
        %1142 = vmatmul.mubr.f32.gmra.mrb[0].mxu0 %v992
        %v1143 = vpop.f32.mrb[0].mxu0
        %v1144 = vadd.f32 0.0, %v1143
        %v1145 = vpop.f32.mrb[0].mxu0
        %1146 = vmatprep.mubr.f32.mxu0 0.0
        %1147 = vmatmul.mubr.f32.gmra.mrb[0].mxu0 %v993
        %v1148 = vpop.f32.mrb[0].mxu0
        %v1149 = vadd.f32 0.0, %v1148
        %v1150 = vpop.f32.mrb[0].mxu0
        %1151 = vmatprep.mubr.f32.mxu0 0.0
        %1152 = vmatmul.mubr.f32.gmra.mrb[0].mxu0 %v994
        %v1153 = vpop.f32.mrb[0].mxu0
        %v1154 = vadd.f32 0.0, %v1153
        %v1155 = vpop.f32.mrb[0].mxu0
        %1156 = vmatprep.mubr.f32.mxu0 0.0
        %1157 = vmatmul.mubr.f32.gmra.mrb[0].mxu0 %v995
        %v1158 = vpop.f32.mrb[0].mxu0
        %v1159 = vadd.f32 0.0, %v1158
        %v1160 = vpop.f32.mrb[0].mxu0
        %1161 = vmatprep.mubr.f32.mxu0 0.0
        %1162 = vmatmul.mubr.f32.gmra.mrb[0].mxu0 %v996
        %v1163 = vpop.f32.mrb[0].mxu0
        %v1164 = vadd.f32 0.0, %v1163
        %v1165 = vpop.f32.mrb[0].mxu0
        %1166 = vmatprep.mubr.f32.mxu0 0.0
        %1167 = vmatmul.mubr.f32.gmra.mrb[0].mxu0 %v997
        %v1168 = vpop.f32.mrb[0].mxu0
        %v1169 = vadd.f32 0.0, %v1168
        %v1170 = vpop.f32.mrb[0].mxu0
        %1171 = vmatprep.mubr.f32.mxu0 0.0
        %1172 = vmatmul.mubr.f32.gmra.mrb[0].mxu0 %v998
        %v1173 = vpop.f32.mrb[0].mxu0
        %v1174 = vadd.f32 0.0, %v1173
        %v1175 = vpop.f32.mrb[0].mxu0
        %1176 = vmatprep.mubr.f32.mxu0 0.0
        %1177 = vmatmul.mubr.f32.gmra.mrb[0].mxu0 %v999
        %v1178 = vpop.f32.mrb[0].mxu0
        %v1179 = vadd.f32 0.0, %v1178
        %v1180 = vpop.f32.mrb[0].mxu0
        %1181 = vmatprep.mubr.f32.mxu0 0.0
        %1182 = vmatmul.mubr.f32.gmra.mrb[0].mxu0 %v1000
        %v1183 = vpop.f32.mrb[0].mxu0
        %v1184 = vadd.f32 0.0, %v1183
        %v1185 = vpop.f32.mrb[0].mxu0
        %1186 = vmatprep.mubr.f32.mxu0 0.0
        %1187 = vmatmul.mubr.f32.gmra.mrb[0].mxu0 %v1001
        %v1188 = vpop.f32.mrb[0].mxu0
        %v1189 = vadd.f32 0.0, %v1188
        %v1190 = vpop.f32.mrb[0].mxu0
        %1191 = vmatprep.mubr.f32.mxu0 0.0
        %1192 = vmatmul.mubr.f32.gmra.mrb[0].mxu0 %v1002
        %v1193 = vpop.f32.mrb[0].mxu0
        %v1194 = vadd.f32 0.0, %v1193
        %v1195 = vpop.f32.mrb[0].mxu0
        %1196 = vmatprep.mubr.f32.mxu0 0.0
        %1197 = vmatmul.mubr.f32.gmra.mrb[0].mxu0 %v1003
        %v1198 = vpop.f32.mrb[0].mxu0
        %v1199 = vadd.f32 0.0, %v1198
        %v1200 = vpop.f32.mrb[0].mxu0
        %1201 = vmatprep.mubr.f32.mxu0 0.0
        %1202 = vmatmul.mubr.f32.gmra.mrb[0].mxu0 %v1004
        %v1203 = vpop.f32.mrb[0].mxu0
        %v1204 = vadd.f32 0.0, %v1203
        %v1205 = vpop.f32.mrb[0].mxu0
        %1206 = vmatprep.mubr.f32.mxu0 0.0
        %1207 = vmatmul.mubr.f32.gmra.mrb[0].mxu0 %v1005
        %v1208 = vpop.f32.mrb[0].mxu0
        %v1209 = vadd.f32 0.0, %v1208
        %v1210 = vpop.f32.mrb[0].mxu0
        %1211 = vmatprep.mubr.f32.mxu0 0.0
        %1212 = vmatmul.mubr.f32.gmra.mrb[0].mxu0 %v1006
        %v1213 = vpop.f32.mrb[0].mxu0
        %v1214 = vadd.f32 0.0, %v1213
        %v1215 = vpop.f32.mrb[0].mxu0
        %1216 = vmatprep.mubr.f32.mxu0 0.0
        %1217 = vmatmul.mubr.f32.gmra.mrb[0].mxu0 %v1007
        %v1218 = vpop.f32.mrb[0].mxu0
        %v1219 = vadd.f32 0.0, %v1218
        %v1220 = vpop.f32.mrb[0].mxu0
        %1221 = vmatprep.mubr.f32.mxu0 0.0
        %1222 = vmatmul.mubr.f32.gmra.mrb[0].mxu0 %v1008
        %v1223 = vpop.f32.mrb[0].mxu0
        %v1224 = vadd.f32 0.0, %v1223
        %v1225 = vpop.f32.mrb[0].mxu0
        %1226 = vmatprep.mubr.f32.mxu0 0.0
        %1227 = vmatmul.mubr.f32.gmra.mrb[0].mxu0 %v1009
        %v1228 = vpop.f32.mrb[0].mxu0
        %v1229 = vadd.f32 0.0, %v1228
        %v1230 = vpop.f32.mrb[0].mxu0
        %1231 = vmatprep.mubr.f32.mxu0 0.0
        %1232 = vmatmul.mubr.f32.gmra.mrb[0].mxu0 %v1010
        %v1233 = vpop.f32.mrb[0].mxu0
        %v1234 = vadd.f32 0.0, %v1233
        %v1235 = vpop.f32.mrb[0].mxu0
        %1236 = vmatprep.mubr.f32.mxu0 0.0
        %1237 = vmatmul.mubr.f32.gmra.mrb[0].mxu0 %v1011
        %v1238 = vpop.f32.mrb[0].mxu0
        %v1239 = vadd.f32 0.0, %v1238
        %v1240 = vpop.f32.mrb[0].mxu0
        %1241 = vmatprep.mubr.f32.mxu0 0.0
        %1242 = vmatmul.mubr.f32.gmra.mrb[0].mxu0 %v1012
        %v1243 = vpop.f32.mrb[0].mxu0
        %v1244 = vadd.f32 0.0, %v1243
        %v1245 = vpop.f32.mrb[0].mxu0
        %1246 = vmatprep.mubr.f32.mxu0 0.0
        %1247 = vmatmul.mubr.f32.gmra.mrb[0].mxu0 %v1013
        %v1248 = vpop.f32.mrb[0].mxu0
        %v1249 = vadd.f32 0.0, %v1248
        %v1250 = vpop.f32.mrb[0].mxu0
        %1251 = vmatprep.mubr.f32.mxu0 0.0
        %1252 = vmatmul.mubr.f32.gmra.mrb[0].mxu0 %v1014
        %v1253 = vpop.f32.mrb[0].mxu0
        %v1254 = vadd.f32 0.0, %v1253
        %v1255 = vpop.f32.mrb[0].mxu0
        %1256 = vdwg.mxu0
        %1257 = vmatprep.subr.mxu0 0.0
        %1258 = vmatpush1.msra.mxu0 %v967
        %1259 = vmatprep.subr.mxu0 0.0
        %1260 = vmatpush1.msra.mxu0 %v968
        %1261 = vmatprep.subr.mxu0 0.0
        %1262 = vmatpush1.msra.mxu0 %v969
        %1263 = vmatprep.subr.mxu0 0.0
        %1264 = vmatpush1.msra.mxu0 %v970
        %1265 = vmatprep.subr.mxu0 0.0
        %1266 = vmatpush1.msra.mxu0 %v971
        %1267 = vmatprep.subr.mxu0 0.0
        %1268 = vmatpush1.msra.mxu0 %v972
        %1269 = vmatprep.subr.mxu0 0.0
        %1270 = vmatpush1.msra.mxu0 %v973
        %1271 = vmatprep.subr.mxu0 0.0
        %1272 = vmatpush1.msra.mxu0 %v974
        %1273 = vmatprep.subr.mxu0 0.0
        %1274 = vmatpush1.msra.mxu0 %v975
        %1275 = vmatprep.subr.mxu0 0.0
        %1276 = vmatpush1.msra.mxu0 %v976
        %1277 = vmatprep.subr.mxu0 0.0
        %1278 = vmatpush1.msra.mxu0 %v977
        %1279 = vmatprep.subr.mxu0 0.0
        %1280 = vmatpush1.msra.mxu0 %v978
        %1281 = vmatprep.subr.mxu0 0.0
        %1282 = vmatpush1.msra.mxu0 %v979
        %1283 = vmatprep.subr.mxu0 0.0
        %1284 = vmatpush1.msra.mxu0 %v980
        %1285 = vmatprep.subr.mxu0 0.0
        %1286 = vmatpush1.msra.mxu0 %v981
        %1287 = vmatprep.subr.mxu0 0.0
        %1288 = vmatpush1.msra.mxu0 %v982
        %1289 = vmatprep.subr.mxu0 0.0
        %1290 = vmatpush1.msra.mxu0 0.0
        %1291 = vmatprep.subr.mxu0 0.0
        %1292 = vmatpush1.msra.mxu0 0.0
        %1293 = vmatprep.subr.mxu0 0.0
        %1294 = vmatpush1.msra.mxu0 0.0
        %1295 = vmatprep.subr.mxu0 0.0
        %1296 = vmatpush1.msra.mxu0 0.0
        %1297 = vmatprep.subr.mxu0 0.0
        %1298 = vmatpush1.msra.mxu0 0.0
        %1299 = vmatprep.subr.mxu0 0.0
        %1300 = vmatpush1.msra.mxu0 0.0
        %1301 = vmatprep.subr.mxu0 0.0
        %1302 = vmatpush1.msra.mxu0 0.0
        %1303 = vmatprep.subr.mxu0 0.0
        %1304 = vmatpush1.msra.mxu0 0.0
        %1305 = vmatprep.subr.mxu0 0.0
        %1306 = vmatpush1.msra.mxu0 0.0
        %1307 = vmatprep.subr.mxu0 0.0
        %1308 = vmatpush1.msra.mxu0 0.0
        %1309 = vmatprep.subr.mxu0 0.0
        %1310 = vmatpush1.msra.mxu0 0.0
        %1311 = vmatprep.subr.mxu0 0.0
        %1312 = vmatpush1.msra.mxu0 0.0
        %1313 = vmatprep.subr.mxu0 0.0
        %1314 = vmatpush1.msra.mxu0 0.0
        %1315 = vmatprep.subr.mxu0 0.0
        %1316 = vmatpush1.msra.mxu0 0.0
        %1317 = vmatprep.subr.mxu0 0.0
        %1318 = vmatpush1.msra.mxu0 0.0
        %1319 = vmatprep.subr.mxu0 0.0
        %1320 = vmatpush1.msra.mxu0 0.0
        %1321 = vmatprep.mubr.f32.mxu0 0.0
        %1322 = vmatmul.mubr.f32.gmra.mrb[0].mxu0 %v935
        %v1323 = vpop.f32.mrb[0].mxu0
        %v1324 = vadd.f32 %v1099, %v1323
        %v1325 = vpop.f32.mrb[0].mxu0
        %1326 = vmatprep.mubr.f32.mxu0 0.0
        %1327 = vmatmul.mubr.f32.gmra.mrb[0].mxu0 %v936
        %v1328 = vpop.f32.mrb[0].mxu0
        %v1329 = vadd.f32 %v1104, %v1328
        %v1330 = vpop.f32.mrb[0].mxu0
        %1331 = vmatprep.mubr.f32.mxu0 0.0
        %1332 = vmatmul.mubr.f32.gmra.mrb[0].mxu0 %v937
        %v1333 = vpop.f32.mrb[0].mxu0
        %v1334 = vadd.f32 %v1109, %v1333
        %v1335 = vpop.f32.mrb[0].mxu0
        %1336 = vmatprep.mubr.f32.mxu0 0.0
        %1337 = vmatmul.mubr.f32.gmra.mrb[0].mxu0 %v938
        %v1338 = vpop.f32.mrb[0].mxu0
        %v1339 = vadd.f32 %v1114, %v1338
        %v1340 = vpop.f32.mrb[0].mxu0
        %1341 = vmatprep.mubr.f32.mxu0 0.0
        %1342 = vmatmul.mubr.f32.gmra.mrb[0].mxu0 %v939
        %v1343 = vpop.f32.mrb[0].mxu0
        %v1344 = vadd.f32 %v1119, %v1343
        %v1345 = vpop.f32.mrb[0].mxu0
        %1346 = vmatprep.mubr.f32.mxu0 0.0
        %1347 = vmatmul.mubr.f32.gmra.mrb[0].mxu0 %v940
        %v1348 = vpop.f32.mrb[0].mxu0
        %v1349 = vadd.f32 %v1124, %v1348
        %v1350 = vpop.f32.mrb[0].mxu0
        %1351 = vmatprep.mubr.f32.mxu0 0.0
        %1352 = vmatmul.mubr.f32.gmra.mrb[0].mxu0 %v941
        %v1353 = vpop.f32.mrb[0].mxu0
        %v1354 = vadd.f32 %v1129, %v1353
        %v1355 = vpop.f32.mrb[0].mxu0
        %1356 = vmatprep.mubr.f32.mxu0 0.0
        %1357 = vmatmul.mubr.f32.gmra.mrb[0].mxu0 %v942
        %v1358 = vpop.f32.mrb[0].mxu0
        %v1359 = vadd.f32 %v1134, %v1358
        %v1360 = vpop.f32.mrb[0].mxu0
        %1361 = vmatprep.mubr.f32.mxu0 0.0
        %1362 = vmatmul.mubr.f32.gmra.mrb[0].mxu0 %v943
        %v1363 = vpop.f32.mrb[0].mxu0
        %v1364 = vadd.f32 %v1139, %v1363
        %v1365 = vpop.f32.mrb[0].mxu0
        %1366 = vmatprep.mubr.f32.mxu0 0.0
        %1367 = vmatmul.mubr.f32.gmra.mrb[0].mxu0 %v944
        %v1368 = vpop.f32.mrb[0].mxu0
        %v1369 = vadd.f32 %v1144, %v1368
        %v1370 = vpop.f32.mrb[0].mxu0
        %1371 = vmatprep.mubr.f32.mxu0 0.0
        %1372 = vmatmul.mubr.f32.gmra.mrb[0].mxu0 %v945
        %v1373 = vpop.f32.mrb[0].mxu0
        %v1374 = vadd.f32 %v1149, %v1373
        %v1375 = vpop.f32.mrb[0].mxu0
        %1376 = vmatprep.mubr.f32.mxu0 0.0
        %1377 = vmatmul.mubr.f32.gmra.mrb[0].mxu0 %v946
        %v1378 = vpop.f32.mrb[0].mxu0
        %v1379 = vadd.f32 %v1154, %v1378
        %v1380 = vpop.f32.mrb[0].mxu0
        %1381 = vmatprep.mubr.f32.mxu0 0.0
        %1382 = vmatmul.mubr.f32.gmra.mrb[0].mxu0 %v947
        %v1383 = vpop.f32.mrb[0].mxu0
        %v1384 = vadd.f32 %v1159, %v1383
        %v1385 = vpop.f32.mrb[0].mxu0
        %1386 = vmatprep.mubr.f32.mxu0 0.0
        %1387 = vmatmul.mubr.f32.gmra.mrb[0].mxu0 %v948
        %v1388 = vpop.f32.mrb[0].mxu0
        %v1389 = vadd.f32 %v1164, %v1388
        %v1390 = vpop.f32.mrb[0].mxu0
        %1391 = vmatprep.mubr.f32.mxu0 0.0
        %1392 = vmatmul.mubr.f32.gmra.mrb[0].mxu0 %v949
        %v1393 = vpop.f32.mrb[0].mxu0
        %v1394 = vadd.f32 %v1169, %v1393
        %v1395 = vpop.f32.mrb[0].mxu0
        %1396 = vmatprep.mubr.f32.mxu0 0.0
        %1397 = vmatmul.mubr.f32.gmra.mrb[0].mxu0 %v950
        %v1398 = vpop.f32.mrb[0].mxu0
        %v1399 = vadd.f32 %v1174, %v1398
        %v1400 = vpop.f32.mrb[0].mxu0
        %1401 = vmatprep.mubr.f32.mxu0 0.0
        %1402 = vmatmul.mubr.f32.gmra.mrb[0].mxu0 %v951
        %v1403 = vpop.f32.mrb[0].mxu0
        %v1404 = vadd.f32 %v1179, %v1403
        %v1405 = vpop.f32.mrb[0].mxu0
        %1406 = vmatprep.mubr.f32.mxu0 0.0
        %1407 = vmatmul.mubr.f32.gmra.mrb[0].mxu0 %v952
        %v1408 = vpop.f32.mrb[0].mxu0
        %v1409 = vadd.f32 %v1184, %v1408
        %v1410 = vpop.f32.mrb[0].mxu0
        %1411 = vmatprep.mubr.f32.mxu0 0.0
        %1412 = vmatmul.mubr.f32.gmra.mrb[0].mxu0 %v953
        %v1413 = vpop.f32.mrb[0].mxu0
        %v1414 = vadd.f32 %v1189, %v1413
        %v1415 = vpop.f32.mrb[0].mxu0
        %1416 = vmatprep.mubr.f32.mxu0 0.0
        %1417 = vmatmul.mubr.f32.gmra.mrb[0].mxu0 %v954
        %v1418 = vpop.f32.mrb[0].mxu0
        %v1419 = vadd.f32 %v1194, %v1418
        %v1420 = vpop.f32.mrb[0].mxu0
        %1421 = vmatprep.mubr.f32.mxu0 0.0
        %1422 = vmatmul.mubr.f32.gmra.mrb[0].mxu0 %v955
        %v1423 = vpop.f32.mrb[0].mxu0
        %v1424 = vadd.f32 %v1199, %v1423
        %v1425 = vpop.f32.mrb[0].mxu0
        %1426 = vmatprep.mubr.f32.mxu0 0.0
        %1427 = vmatmul.mubr.f32.gmra.mrb[0].mxu0 %v956
        %v1428 = vpop.f32.mrb[0].mxu0
        %v1429 = vadd.f32 %v1204, %v1428
        %v1430 = vpop.f32.mrb[0].mxu0
        %1431 = vmatprep.mubr.f32.mxu0 0.0
        %1432 = vmatmul.mubr.f32.gmra.mrb[0].mxu0 %v957
        %v1433 = vpop.f32.mrb[0].mxu0
        %v1434 = vadd.f32 %v1209, %v1433
        %v1435 = vpop.f32.mrb[0].mxu0
        %1436 = vmatprep.mubr.f32.mxu0 0.0
        %1437 = vmatmul.mubr.f32.gmra.mrb[0].mxu0 %v958
        %v1438 = vpop.f32.mrb[0].mxu0
        %v1439 = vadd.f32 %v1214, %v1438
        %v1440 = vpop.f32.mrb[0].mxu0
        %1441 = vmatprep.mubr.f32.mxu0 0.0
        %1442 = vmatmul.mubr.f32.gmra.mrb[0].mxu0 %v959
        %v1443 = vpop.f32.mrb[0].mxu0
        %v1444 = vadd.f32 %v1219, %v1443
        %v1445 = vpop.f32.mrb[0].mxu0
        %1446 = vmatprep.mubr.f32.mxu0 0.0
        %1447 = vmatmul.mubr.f32.gmra.mrb[0].mxu0 %v960
        %v1448 = vpop.f32.mrb[0].mxu0
        %v1449 = vadd.f32 %v1224, %v1448
        %v1450 = vpop.f32.mrb[0].mxu0
        %1451 = vmatprep.mubr.f32.mxu0 0.0
        %1452 = vmatmul.mubr.f32.gmra.mrb[0].mxu0 %v961
        %v1453 = vpop.f32.mrb[0].mxu0
        %v1454 = vadd.f32 %v1229, %v1453
        %v1455 = vpop.f32.mrb[0].mxu0
        %1456 = vmatprep.mubr.f32.mxu0 0.0
        %1457 = vmatmul.mubr.f32.gmra.mrb[0].mxu0 %v962
        %v1458 = vpop.f32.mrb[0].mxu0
        %v1459 = vadd.f32 %v1234, %v1458
        %v1460 = vpop.f32.mrb[0].mxu0
        %1461 = vmatprep.mubr.f32.mxu0 0.0
        %1462 = vmatmul.mubr.f32.gmra.mrb[0].mxu0 %v963
        %v1463 = vpop.f32.mrb[0].mxu0
        %v1464 = vadd.f32 %v1239, %v1463
        %v1465 = vpop.f32.mrb[0].mxu0
        %1466 = vmatprep.mubr.f32.mxu0 0.0
        %1467 = vmatmul.mubr.f32.gmra.mrb[0].mxu0 %v964
        %v1468 = vpop.f32.mrb[0].mxu0
        %v1469 = vadd.f32 %v1244, %v1468
        %v1470 = vpop.f32.mrb[0].mxu0
        %1471 = vmatprep.mubr.f32.mxu0 0.0
        %1472 = vmatmul.mubr.f32.gmra.mrb[0].mxu0 %v965
        %v1473 = vpop.f32.mrb[0].mxu0
        %v1474 = vadd.f32 %v1249, %v1473
        %v1475 = vpop.f32.mrb[0].mxu0
        %1476 = vmatprep.mubr.f32.mxu0 0.0
        %1477 = vmatmul.mubr.f32.gmra.mrb[0].mxu0 %v966
        %v1478 = vpop.f32.mrb[0].mxu0
        %v1479 = vadd.f32 %v1254, %v1478
        %v1480 = vpop.f32.mrb[0].mxu0
        %1481 = vdwg.mxu0
        %v1482 = vld [vmem:[#allocation2 + $0x2] sm:$0xff]
        %v1483 = vld [vmem:[#allocation2 + $0xa] sm:$0xff]
        %v1484 = vld [vmem:[#allocation2 + $0x1a] sm:$0xff]
        %v1485 = vld [vmem:[#allocation2 + $0x22] sm:$0xff]
        %v1486 = vld [vmem:[#allocation2 + $0x32] sm:$0xff]
        %v1487 = vld [vmem:[#allocation2 + $0x3a] sm:$0xff]
        %v1488 = vld [vmem:[#allocation2 + $0x4a] sm:$0xff]
        %v1489 = vld [vmem:[#allocation2 + $0x52] sm:$0xff]
        %v1490 = vld [vmem:[#allocation2 + $0x62] sm:$0xff]
        %v1491 = vld [vmem:[#allocation2 + $0x6a] sm:$0xff]
        %v1492 = vld [vmem:[#allocation2 + $0x7a] sm:$0xff]
        %v1493 = vld [vmem:[#allocation2 + $0x82] sm:$0xff]
        %v1494 = vld [vmem:[#allocation2 + $0x92] sm:$0xff]
        %v1495 = vld [vmem:[#allocation2 + $0x9a] sm:$0xff]
        %v1496 = vld [vmem:[#allocation2 + $0xaa] sm:$0xff]
        %v1497 = vld [vmem:[#allocation2 + $0xb2] sm:$0xff]
        %v1498 = vld [vmem:[#allocation2 + $0xc2] sm:$0xff]
        %v1499 = vld [vmem:[#allocation2 + $0xca] sm:$0xff]
        %v1500 = vld [vmem:[#allocation2 + $0xda] sm:$0xff]
        %v1501 = vld [vmem:[#allocation2 + $0xe2] sm:$0xff]
        %v1502 = vld [vmem:[#allocation2 + $0xf2] sm:$0xff]
        %v1503 = vld [vmem:[#allocation2 + $0xfa] sm:$0xff]
        %v1504 = vld [vmem:[#allocation2 + $0x10a] sm:$0xff]
        %v1505 = vld [vmem:[#allocation2 + $0x112] sm:$0xff]
        %v1506 = vld [vmem:[#allocation2 + $0x122] sm:$0xff]
        %v1507 = vld [vmem:[#allocation2 + $0x12a] sm:$0xff]
        %v1508 = vld [vmem:[#allocation2 + $0x13a] sm:$0xff]
        %v1509 = vld [vmem:[#allocation2 + $0x142] sm:$0xff]
        %v1510 = vld [vmem:[#allocation2 + $0x152] sm:$0xff]
        %v1511 = vld [vmem:[#allocation2 + $0x15a] sm:$0xff]
        %v1512 = vld [vmem:[#allocation2 + $0x16a] sm:$0xff]
        %v1513 = vld [vmem:[#allocation2 + $0x172] sm:$0xff]
        %s1514 = scalar_lea.vmem [#allocation10], 256
        %v1515 = vld [vmem:[%s1514] sm:$0xff]
        %v1516 = vld [vmem:[%s1514 + $0x8] sm:$0xff]
        %v1517 = vld [vmem:[%s1514 + $0x10] sm:$0xff]
        %v1518 = vld [vmem:[%s1514 + $0x18] sm:$0xff]
        %v1519 = vld [vmem:[%s1514 + $0x20] sm:$0xff]
        %v1520 = vld [vmem:[%s1514 + $0x28] sm:$0xff]
        %v1521 = vld [vmem:[%s1514 + $0x30] sm:$0xff]
        %v1522 = vld [vmem:[%s1514 + $0x38] sm:$0xff]
        %v1523 = vld [vmem:[%s1514 + $0x40] sm:$0xff]
        %v1524 = vld [vmem:[%s1514 + $0x48] sm:$0xff]
        %v1525 = vld [vmem:[%s1514 + $0x50] sm:$0xff]
        %v1526 = vld [vmem:[%s1514 + $0x58] sm:$0xff]
        %v1527 = vld [vmem:[%s1514 + $0x60] sm:$0xff]
        %v1528 = vld [vmem:[%s1514 + $0x68] sm:$0xff]
        %v1529 = vld [vmem:[%s1514 + $0x70] sm:$0xff]
        %v1530 = vld [vmem:[%s1514 + $0x78] sm:$0xff]
        %1531 = vmatprep.subr.mxu0 0.0
        %1532 = vmatpush1.msra.mxu0 %v1515
        %1533 = vmatprep.subr.mxu0 0.0
        %1534 = vmatpush1.msra.mxu0 %v1516
        %1535 = vmatprep.subr.mxu0 0.0
        %1536 = vmatpush1.msra.mxu0 %v1517
        %1537 = vmatprep.subr.mxu0 0.0
        %1538 = vmatpush1.msra.mxu0 %v1518
        %1539 = vmatprep.subr.mxu0 0.0
        %1540 = vmatpush1.msra.mxu0 %v1519
        %1541 = vmatprep.subr.mxu0 0.0
        %1542 = vmatpush1.msra.mxu0 %v1520
        %1543 = vmatprep.subr.mxu0 0.0
        %1544 = vmatpush1.msra.mxu0 %v1521
        %1545 = vmatprep.subr.mxu0 0.0
        %1546 = vmatpush1.msra.mxu0 %v1522
        %1547 = vmatprep.subr.mxu0 0.0
        %1548 = vmatpush1.msra.mxu0 %v1523
        %1549 = vmatprep.subr.mxu0 0.0
        %1550 = vmatpush1.msra.mxu0 %v1524
        %1551 = vmatprep.subr.mxu0 0.0
        %1552 = vmatpush1.msra.mxu0 %v1525
        %1553 = vmatprep.subr.mxu0 0.0
        %1554 = vmatpush1.msra.mxu0 %v1526
        %1555 = vmatprep.subr.mxu0 0.0
        %1556 = vmatpush1.msra.mxu0 %v1527
        %1557 = vmatprep.subr.mxu0 0.0
        %1558 = vmatpush1.msra.mxu0 %v1528
        %1559 = vmatprep.subr.mxu0 0.0
        %1560 = vmatpush1.msra.mxu0 %v1529
        %1561 = vmatprep.subr.mxu0 0.0
        %1562 = vmatpush1.msra.mxu0 %v1530
        %1563 = vmatprep.subr.mxu0 0.0
        %1564 = vmatpush1.msra.mxu0 0.0
        %1565 = vmatprep.subr.mxu0 0.0
        %1566 = vmatpush1.msra.mxu0 0.0
        %1567 = vmatprep.subr.mxu0 0.0
        %1568 = vmatpush1.msra.mxu0 0.0
        %1569 = vmatprep.subr.mxu0 0.0
        %1570 = vmatpush1.msra.mxu0 0.0
        %1571 = vmatprep.subr.mxu0 0.0
        %1572 = vmatpush1.msra.mxu0 0.0
        %1573 = vmatprep.subr.mxu0 0.0
        %1574 = vmatpush1.msra.mxu0 0.0
        %1575 = vmatprep.subr.mxu0 0.0
        %1576 = vmatpush1.msra.mxu0 0.0
        %1577 = vmatprep.subr.mxu0 0.0
        %1578 = vmatpush1.msra.mxu0 0.0
        %1579 = vmatprep.subr.mxu0 0.0
        %1580 = vmatpush1.msra.mxu0 0.0
        %1581 = vmatprep.subr.mxu0 0.0
        %1582 = vmatpush1.msra.mxu0 0.0
        %1583 = vmatprep.subr.mxu0 0.0
        %1584 = vmatpush1.msra.mxu0 0.0
        %1585 = vmatprep.subr.mxu0 0.0
        %1586 = vmatpush1.msra.mxu0 0.0
        %1587 = vmatprep.subr.mxu0 0.0
        %1588 = vmatpush1.msra.mxu0 0.0
        %1589 = vmatprep.subr.mxu0 0.0
        %1590 = vmatpush1.msra.mxu0 0.0
        %1591 = vmatprep.subr.mxu0 0.0
        %1592 = vmatpush1.msra.mxu0 0.0
        %1593 = vmatprep.subr.mxu0 0.0
        %1594 = vmatpush1.msra.mxu0 0.0
        %1595 = vmatprep.mubr.f32.mxu0 0.0
        %1596 = vmatmul.mubr.f32.gmra.mrb[0].mxu0 %v1482
        %v1597 = vpop.f32.mrb[0].mxu0
        %v1598 = vadd.f32 0.0, %v1597
        %v1599 = vpop.f32.mrb[0].mxu0
        %1600 = vmatprep.mubr.f32.mxu0 0.0
        %1601 = vmatmul.mubr.f32.gmra.mrb[0].mxu0 %v1483
        %v1602 = vpop.f32.mrb[0].mxu0
        %v1603 = vadd.f32 0.0, %v1602
        %v1604 = vpop.f32.mrb[0].mxu0
        %1605 = vmatprep.mubr.f32.mxu0 0.0
        %1606 = vmatmul.mubr.f32.gmra.mrb[0].mxu0 %v1484
        %v1607 = vpop.f32.mrb[0].mxu0
        %v1608 = vadd.f32 0.0, %v1607
        %v1609 = vpop.f32.mrb[0].mxu0
        %1610 = vmatprep.mubr.f32.mxu0 0.0
        %1611 = vmatmul.mubr.f32.gmra.mrb[0].mxu0 %v1485
        %v1612 = vpop.f32.mrb[0].mxu0
        %v1613 = vadd.f32 0.0, %v1612
        %v1614 = vpop.f32.mrb[0].mxu0
        %1615 = vmatprep.mubr.f32.mxu0 0.0
        %1616 = vmatmul.mubr.f32.gmra.mrb[0].mxu0 %v1486
        %v1617 = vpop.f32.mrb[0].mxu0
        %v1618 = vadd.f32 0.0, %v1617
        %v1619 = vpop.f32.mrb[0].mxu0
        %1620 = vmatprep.mubr.f32.mxu0 0.0
        %1621 = vmatmul.mubr.f32.gmra.mrb[0].mxu0 %v1487
        %v1622 = vpop.f32.mrb[0].mxu0
        %v1623 = vadd.f32 0.0, %v1622
        %v1624 = vpop.f32.mrb[0].mxu0
        %1625 = vmatprep.mubr.f32.mxu0 0.0
        %1626 = vmatmul.mubr.f32.gmra.mrb[0].mxu0 %v1488
        %v1627 = vpop.f32.mrb[0].mxu0
        %v1628 = vadd.f32 0.0, %v1627
        %v1629 = vpop.f32.mrb[0].mxu0
        %1630 = vmatprep.mubr.f32.mxu0 0.0
        %1631 = vmatmul.mubr.f32.gmra.mrb[0].mxu0 %v1489
        %v1632 = vpop.f32.mrb[0].mxu0
        %v1633 = vadd.f32 0.0, %v1632
        %v1634 = vpop.f32.mrb[0].mxu0
        %1635 = vmatprep.mubr.f32.mxu0 0.0
        %1636 = vmatmul.mubr.f32.gmra.mrb[0].mxu0 %v1490
        %v1637 = vpop.f32.mrb[0].mxu0
        %v1638 = vadd.f32 0.0, %v1637
        %v1639 = vpop.f32.mrb[0].mxu0
        %1640 = vmatprep.mubr.f32.mxu0 0.0
        %1641 = vmatmul.mubr.f32.gmra.mrb[0].mxu0 %v1491
        %v1642 = vpop.f32.mrb[0].mxu0
        %v1643 = vadd.f32 0.0, %v1642
        %v1644 = vpop.f32.mrb[0].mxu0
        %1645 = vmatprep.mubr.f32.mxu0 0.0
        %1646 = vmatmul.mubr.f32.gmra.mrb[0].mxu0 %v1492
        %v1647 = vpop.f32.mrb[0].mxu0
        %v1648 = vadd.f32 0.0, %v1647
        %v1649 = vpop.f32.mrb[0].mxu0
        %1650 = vmatprep.mubr.f32.mxu0 0.0
        %1651 = vmatmul.mubr.f32.gmra.mrb[0].mxu0 %v1493
        %v1652 = vpop.f32.mrb[0].mxu0
        %v1653 = vadd.f32 0.0, %v1652
        %v1654 = vpop.f32.mrb[0].mxu0
        %1655 = vmatprep.mubr.f32.mxu0 0.0
        %1656 = vmatmul.mubr.f32.gmra.mrb[0].mxu0 %v1494
        %v1657 = vpop.f32.mrb[0].mxu0
        %v1658 = vadd.f32 0.0, %v1657
        %v1659 = vpop.f32.mrb[0].mxu0
        %1660 = vmatprep.mubr.f32.mxu0 0.0
        %1661 = vmatmul.mubr.f32.gmra.mrb[0].mxu0 %v1495
        %v1662 = vpop.f32.mrb[0].mxu0
        %v1663 = vadd.f32 0.0, %v1662
        %v1664 = vpop.f32.mrb[0].mxu0
        %1665 = vmatprep.mubr.f32.mxu0 0.0
        %1666 = vmatmul.mubr.f32.gmra.mrb[0].mxu0 %v1496
        %v1667 = vpop.f32.mrb[0].mxu0
        %v1668 = vadd.f32 0.0, %v1667
        %v1669 = vpop.f32.mrb[0].mxu0
        %1670 = vmatprep.mubr.f32.mxu0 0.0
        %1671 = vmatmul.mubr.f32.gmra.mrb[0].mxu0 %v1497
        %v1672 = vpop.f32.mrb[0].mxu0
        %v1673 = vadd.f32 0.0, %v1672
        %v1674 = vpop.f32.mrb[0].mxu0
        %1675 = vmatprep.mubr.f32.mxu0 0.0
        %1676 = vmatmul.mubr.f32.gmra.mrb[0].mxu0 %v1498
        %v1677 = vpop.f32.mrb[0].mxu0
        %v1678 = vadd.f32 0.0, %v1677
        %v1679 = vpop.f32.mrb[0].mxu0
        %1680 = vmatprep.mubr.f32.mxu0 0.0
        %1681 = vmatmul.mubr.f32.gmra.mrb[0].mxu0 %v1499
        %v1682 = vpop.f32.mrb[0].mxu0
        %v1683 = vadd.f32 0.0, %v1682
        %v1684 = vpop.f32.mrb[0].mxu0
        %1685 = vmatprep.mubr.f32.mxu0 0.0
        %1686 = vmatmul.mubr.f32.gmra.mrb[0].mxu0 %v1500
        %v1687 = vpop.f32.mrb[0].mxu0
        %v1688 = vadd.f32 0.0, %v1687
        %v1689 = vpop.f32.mrb[0].mxu0
        %1690 = vmatprep.mubr.f32.mxu0 0.0
        %1691 = vmatmul.mubr.f32.gmra.mrb[0].mxu0 %v1501
        %v1692 = vpop.f32.mrb[0].mxu0
        %v1693 = vadd.f32 0.0, %v1692
        %v1694 = vpop.f32.mrb[0].mxu0
        %1695 = vmatprep.mubr.f32.mxu0 0.0
        %1696 = vmatmul.mubr.f32.gmra.mrb[0].mxu0 %v1502
        %v1697 = vpop.f32.mrb[0].mxu0
        %v1698 = vadd.f32 0.0, %v1697
        %v1699 = vpop.f32.mrb[0].mxu0
        %1700 = vmatprep.mubr.f32.mxu0 0.0
        %1701 = vmatmul.mubr.f32.gmra.mrb[0].mxu0 %v1503
        %v1702 = vpop.f32.mrb[0].mxu0
        %v1703 = vadd.f32 0.0, %v1702
        %v1704 = vpop.f32.mrb[0].mxu0
        %1705 = vmatprep.mubr.f32.mxu0 0.0
        %1706 = vmatmul.mubr.f32.gmra.mrb[0].mxu0 %v1504
        %v1707 = vpop.f32.mrb[0].mxu0
        %v1708 = vadd.f32 0.0, %v1707
        %v1709 = vpop.f32.mrb[0].mxu0
        %1710 = vmatprep.mubr.f32.mxu0 0.0
        %1711 = vmatmul.mubr.f32.gmra.mrb[0].mxu0 %v1505
        %v1712 = vpop.f32.mrb[0].mxu0
        %v1713 = vadd.f32 0.0, %v1712
        %v1714 = vpop.f32.mrb[0].mxu0
        %1715 = vmatprep.mubr.f32.mxu0 0.0
        %1716 = vmatmul.mubr.f32.gmra.mrb[0].mxu0 %v1506
        %v1717 = vpop.f32.mrb[0].mxu0
        %v1718 = vadd.f32 0.0, %v1717
        %v1719 = vpop.f32.mrb[0].mxu0
        %1720 = vmatprep.mubr.f32.mxu0 0.0
        %1721 = vmatmul.mubr.f32.gmra.mrb[0].mxu0 %v1507
        %v1722 = vpop.f32.mrb[0].mxu0
        %v1723 = vadd.f32 0.0, %v1722
        %v1724 = vpop.f32.mrb[0].mxu0
        %1725 = vmatprep.mubr.f32.mxu0 0.0
        %1726 = vmatmul.mubr.f32.gmra.mrb[0].mxu0 %v1508
        %v1727 = vpop.f32.mrb[0].mxu0
        %v1728 = vadd.f32 0.0, %v1727
        %v1729 = vpop.f32.mrb[0].mxu0
        %1730 = vmatprep.mubr.f32.mxu0 0.0
        %1731 = vmatmul.mubr.f32.gmra.mrb[0].mxu0 %v1509
        %v1732 = vpop.f32.mrb[0].mxu0
        %v1733 = vadd.f32 0.0, %v1732
        %v1734 = vpop.f32.mrb[0].mxu0
        %1735 = vmatprep.mubr.f32.mxu0 0.0
        %1736 = vmatmul.mubr.f32.gmra.mrb[0].mxu0 %v1510
        %v1737 = vpop.f32.mrb[0].mxu0
        %v1738 = vadd.f32 0.0, %v1737
        %v1739 = vpop.f32.mrb[0].mxu0
        %1740 = vmatprep.mubr.f32.mxu0 0.0
        %1741 = vmatmul.mubr.f32.gmra.mrb[0].mxu0 %v1511
        %v1742 = vpop.f32.mrb[0].mxu0
        %v1743 = vadd.f32 0.0, %v1742
        %v1744 = vpop.f32.mrb[0].mxu0
        %1745 = vmatprep.mubr.f32.mxu0 0.0
        %1746 = vmatmul.mubr.f32.gmra.mrb[0].mxu0 %v1512
        %v1747 = vpop.f32.mrb[0].mxu0
        %v1748 = vadd.f32 0.0, %v1747
        %v1749 = vpop.f32.mrb[0].mxu0
        %1750 = vmatprep.mubr.f32.mxu0 0.0
        %1751 = vmatmul.mubr.f32.gmra.mrb[0].mxu0 %v1513
        %v1752 = vpop.f32.mrb[0].mxu0
        %v1753 = vadd.f32 0.0, %v1752
        %v1754 = vpop.f32.mrb[0].mxu0
        %1755 = vdwg.mxu0
        %v1756 = vadd.f32 %v1324, %v1598
        %v1757 = vadd.f32 %v1329, %v1603
        %v1758 = vadd.f32 %v1334, %v1608
        %v1759 = vadd.f32 %v1339, %v1613
        %v1760 = vadd.f32 %v1344, %v1618
        %v1761 = vadd.f32 %v1349, %v1623
        %v1762 = vadd.f32 %v1354, %v1628
        %v1763 = vadd.f32 %v1359, %v1633
        %v1764 = vadd.f32 %v1364, %v1638
        %v1765 = vadd.f32 %v1369, %v1643
        %v1766 = vadd.f32 %v1374, %v1648
        %v1767 = vadd.f32 %v1379, %v1653
        %v1768 = vadd.f32 %v1384, %v1658
        %v1769 = vadd.f32 %v1389, %v1663
        %v1770 = vadd.f32 %v1394, %v1668
        %v1771 = vadd.f32 %v1399, %v1673
        %v1772 = vadd.f32 %v1404, %v1678
        %v1773 = vadd.f32 %v1409, %v1683
        %v1774 = vadd.f32 %v1414, %v1688
        %v1775 = vadd.f32 %v1419, %v1693
        %v1776 = vadd.f32 %v1424, %v1698
        %v1777 = vadd.f32 %v1429, %v1703
        %v1778 = vadd.f32 %v1434, %v1708
        %v1779 = vadd.f32 %v1439, %v1713
        %v1780 = vadd.f32 %v1444, %v1718
        %v1781 = vadd.f32 %v1449, %v1723
        %v1782 = vadd.f32 %v1454, %v1728
        %v1783 = vadd.f32 %v1459, %v1733
        %v1784 = vadd.f32 %v1464, %v1738
        %v1785 = vadd.f32 %v1469, %v1743
        %v1786 = vadd.f32 %v1474, %v1748
        %v1787 = vadd.f32 %v1479, %v1753
        %v1788 = vld [vmem:[%s720] sm:$0xff]
        %v1789 = vld [vmem:[%s720 + $0x8] sm:$0xff]
        %v1790 = vld [vmem:[%s720 + $0x18] sm:$0xff]
        %v1791 = vld [vmem:[%s720 + $0x20] sm:$0xff]
        %v1792 = vld [vmem:[%s720 + $0x30] sm:$0xff]
        %v1793 = vld [vmem:[%s720 + $0x38] sm:$0xff]
        %v1794 = vld [vmem:[%s720 + $0x48] sm:$0xff]
        %v1795 = vld [vmem:[%s720 + $0x50] sm:$0xff]
        %v1796 = vld [vmem:[%s720 + $0x60] sm:$0xff]
        %v1797 = vld [vmem:[%s720 + $0x68] sm:$0xff]
        %v1798 = vld [vmem:[%s720 + $0x78] sm:$0xff]
        %v1799 = vld [vmem:[%s720 + $0x80] sm:$0xff]
        %v1800 = vld [vmem:[%s720 + $0x90] sm:$0xff]
        %v1801 = vld [vmem:[%s720 + $0x98] sm:$0xff]
        %v1802 = vld [vmem:[%s720 + $0xa8] sm:$0xff]
        %v1803 = vld [vmem:[%s720 + $0xb0] sm:$0xff]
        %v1804 = vld [vmem:[%s720 + $0xc0] sm:$0xff]
        %v1805 = vld [vmem:[%s720 + $0xc8] sm:$0xff]
        %v1806 = vld [vmem:[%s720 + $0xd8] sm:$0xff]
        %v1807 = vld [vmem:[%s720 + $0xe0] sm:$0xff]
        %v1808 = vld [vmem:[%s720 + $0xf0] sm:$0xff]
        %v1809 = vld [vmem:[%s720 + $0xf8] sm:$0xff]
        %v1810 = vld [vmem:[%s720 + $0x108] sm:$0xff]
        %v1811 = vld [vmem:[%s720 + $0x110] sm:$0xff]
        %v1812 = vld [vmem:[%s720 + $0x120] sm:$0xff]
        %v1813 = vld [vmem:[%s720 + $0x128] sm:$0xff]
        %v1814 = vld [vmem:[%s720 + $0x138] sm:$0xff]
        %v1815 = vld [vmem:[%s720 + $0x140] sm:$0xff]
        %v1816 = vld [vmem:[%s720 + $0x150] sm:$0xff]
        %v1817 = vld [vmem:[%s720 + $0x158] sm:$0xff]
        %v1818 = vld [vmem:[%s720 + $0x168] sm:$0xff]
        %v1819 = vld [vmem:[%s720 + $0x170] sm:$0xff]
        %s1820 = scalar_lea.vmem [#allocation10], 384
        %v1821 = vld [vmem:[%s1820] sm:$0xff]
        %v1822 = vld [vmem:[%s1820 + $0x8] sm:$0xff]
        %v1823 = vld [vmem:[%s1820 + $0x10] sm:$0xff]
        %v1824 = vld [vmem:[%s1820 + $0x18] sm:$0xff]
        %v1825 = vld [vmem:[%s1820 + $0x20] sm:$0xff]
        %v1826 = vld [vmem:[%s1820 + $0x28] sm:$0xff]
        %v1827 = vld [vmem:[%s1820 + $0x30] sm:$0xff]
        %v1828 = vld [vmem:[%s1820 + $0x38] sm:$0xff]
        %v1829 = vld [vmem:[%s1820 + $0x40] sm:$0xff]
        %v1830 = vld [vmem:[%s1820 + $0x48] sm:$0xff]
        %v1831 = vld [vmem:[%s1820 + $0x50] sm:$0xff]
        %v1832 = vld [vmem:[%s1820 + $0x58] sm:$0xff]
        %v1833 = vld [vmem:[%s1820 + $0x60] sm:$0xff]
        %v1834 = vld [vmem:[%s1820 + $0x68] sm:$0xff]
        %v1835 = vld [vmem:[%s1820 + $0x70] sm:$0xff]
        %v1836 = vld [vmem:[%s1820 + $0x78] sm:$0xff]
        %1837 = vmatprep.subr.mxu0 0.0
        %1838 = vmatpush1.msra.mxu0 %v1821
        %1839 = vmatprep.subr.mxu0 0.0
        %1840 = vmatpush1.msra.mxu0 %v1822
        %1841 = vmatprep.subr.mxu0 0.0
        %1842 = vmatpush1.msra.mxu0 %v1823
        %1843 = vmatprep.subr.mxu0 0.0
        %1844 = vmatpush1.msra.mxu0 %v1824
        %1845 = vmatprep.subr.mxu0 0.0
        %1846 = vmatpush1.msra.mxu0 %v1825
        %1847 = vmatprep.subr.mxu0 0.0
        %1848 = vmatpush1.msra.mxu0 %v1826
        %1849 = vmatprep.subr.mxu0 0.0
        %1850 = vmatpush1.msra.mxu0 %v1827
        %1851 = vmatprep.subr.mxu0 0.0
        %1852 = vmatpush1.msra.mxu0 %v1828
        %1853 = vmatprep.subr.mxu0 0.0
        %1854 = vmatpush1.msra.mxu0 %v1829
        %1855 = vmatprep.subr.mxu0 0.0
        %1856 = vmatpush1.msra.mxu0 %v1830
        %1857 = vmatprep.subr.mxu0 0.0
        %1858 = vmatpush1.msra.mxu0 %v1831
        %1859 = vmatprep.subr.mxu0 0.0
        %1860 = vmatpush1.msra.mxu0 %v1832
        %1861 = vmatprep.subr.mxu0 0.0
        %1862 = vmatpush1.msra.mxu0 %v1833
        %1863 = vmatprep.subr.mxu0 0.0
        %1864 = vmatpush1.msra.mxu0 %v1834
        %1865 = vmatprep.subr.mxu0 0.0
        %1866 = vmatpush1.msra.mxu0 %v1835
        %1867 = vmatprep.subr.mxu0 0.0
        %1868 = vmatpush1.msra.mxu0 %v1836
        %1869 = vmatprep.subr.mxu0 0.0
        %1870 = vmatpush1.msra.mxu0 0.0
        %1871 = vmatprep.subr.mxu0 0.0
        %1872 = vmatpush1.msra.mxu0 0.0
        %1873 = vmatprep.subr.mxu0 0.0
        %1874 = vmatpush1.msra.mxu0 0.0
        %1875 = vmatprep.subr.mxu0 0.0
        %1876 = vmatpush1.msra.mxu0 0.0
        %1877 = vmatprep.subr.mxu0 0.0
        %1878 = vmatpush1.msra.mxu0 0.0
        %1879 = vmatprep.subr.mxu0 0.0
        %1880 = vmatpush1.msra.mxu0 0.0
        %1881 = vmatprep.subr.mxu0 0.0
        %1882 = vmatpush1.msra.mxu0 0.0
        %1883 = vmatprep.subr.mxu0 0.0
        %1884 = vmatpush1.msra.mxu0 0.0
        %1885 = vmatprep.subr.mxu0 0.0
        %1886 = vmatpush1.msra.mxu0 0.0
        %1887 = vmatprep.subr.mxu0 0.0
        %1888 = vmatpush1.msra.mxu0 0.0
        %1889 = vmatprep.subr.mxu0 0.0
        %1890 = vmatpush1.msra.mxu0 0.0
        %1891 = vmatprep.subr.mxu0 0.0
        %1892 = vmatpush1.msra.mxu0 0.0
        %1893 = vmatprep.subr.mxu0 0.0
        %1894 = vmatpush1.msra.mxu0 0.0
        %1895 = vmatprep.subr.mxu0 0.0
        %1896 = vmatpush1.msra.mxu0 0.0
        %1897 = vmatprep.subr.mxu0 0.0
        %1898 = vmatpush1.msra.mxu0 0.0
        %1899 = vmatprep.subr.mxu0 0.0
        %1900 = vmatpush1.msra.mxu0 0.0
        %1901 = vmatprep.mubr.f32.mxu0 0.0
        %1902 = vmatmul.mubr.f32.gmra.mrb[0].mxu0 %v1788
        %v1903 = vpop.f32.mrb[0].mxu0
        %v1904 = vadd.f32 0.0, %v1903
        %v1905 = vpop.f32.mrb[0].mxu0
        %1906 = vmatprep.mubr.f32.mxu0 0.0
        %1907 = vmatmul.mubr.f32.gmra.mrb[0].mxu0 %v1789
        %v1908 = vpop.f32.mrb[0].mxu0
        %v1909 = vadd.f32 0.0, %v1908
        %v1910 = vpop.f32.mrb[0].mxu0
        %1911 = vmatprep.mubr.f32.mxu0 0.0
        %1912 = vmatmul.mubr.f32.gmra.mrb[0].mxu0 %v1790
        %v1913 = vpop.f32.mrb[0].mxu0
        %v1914 = vadd.f32 0.0, %v1913
        %v1915 = vpop.f32.mrb[0].mxu0
        %1916 = vmatprep.mubr.f32.mxu0 0.0
        %1917 = vmatmul.mubr.f32.gmra.mrb[0].mxu0 %v1791
        %v1918 = vpop.f32.mrb[0].mxu0
        %v1919 = vadd.f32 0.0, %v1918
        %v1920 = vpop.f32.mrb[0].mxu0
        %1921 = vmatprep.mubr.f32.mxu0 0.0
        %1922 = vmatmul.mubr.f32.gmra.mrb[0].mxu0 %v1792
        %v1923 = vpop.f32.mrb[0].mxu0
        %v1924 = vadd.f32 0.0, %v1923
        %v1925 = vpop.f32.mrb[0].mxu0
        %1926 = vmatprep.mubr.f32.mxu0 0.0
        %1927 = vmatmul.mubr.f32.gmra.mrb[0].mxu0 %v1793
        %v1928 = vpop.f32.mrb[0].mxu0
        %v1929 = vadd.f32 0.0, %v1928
        %v1930 = vpop.f32.mrb[0].mxu0
        %1931 = vmatprep.mubr.f32.mxu0 0.0
        %1932 = vmatmul.mubr.f32.gmra.mrb[0].mxu0 %v1794
        %v1933 = vpop.f32.mrb[0].mxu0
        %v1934 = vadd.f32 0.0, %v1933
        %v1935 = vpop.f32.mrb[0].mxu0
        %1936 = vmatprep.mubr.f32.mxu0 0.0
        %1937 = vmatmul.mubr.f32.gmra.mrb[0].mxu0 %v1795
        %v1938 = vpop.f32.mrb[0].mxu0
        %v1939 = vadd.f32 0.0, %v1938
        %v1940 = vpop.f32.mrb[0].mxu0
        %1941 = vmatprep.mubr.f32.mxu0 0.0
        %1942 = vmatmul.mubr.f32.gmra.mrb[0].mxu0 %v1796
        %v1943 = vpop.f32.mrb[0].mxu0
        %v1944 = vadd.f32 0.0, %v1943
        %v1945 = vpop.f32.mrb[0].mxu0
        %1946 = vmatprep.mubr.f32.mxu0 0.0
        %1947 = vmatmul.mubr.f32.gmra.mrb[0].mxu0 %v1797
        %v1948 = vpop.f32.mrb[0].mxu0
        %v1949 = vadd.f32 0.0, %v1948
        %v1950 = vpop.f32.mrb[0].mxu0
        %1951 = vmatprep.mubr.f32.mxu0 0.0
        %1952 = vmatmul.mubr.f32.gmra.mrb[0].mxu0 %v1798
        %v1953 = vpop.f32.mrb[0].mxu0
        %v1954 = vadd.f32 0.0, %v1953
        %v1955 = vpop.f32.mrb[0].mxu0
        %1956 = vmatprep.mubr.f32.mxu0 0.0
        %1957 = vmatmul.mubr.f32.gmra.mrb[0].mxu0 %v1799
        %v1958 = vpop.f32.mrb[0].mxu0
        %v1959 = vadd.f32 0.0, %v1958
        %v1960 = vpop.f32.mrb[0].mxu0
        %1961 = vmatprep.mubr.f32.mxu0 0.0
        %1962 = vmatmul.mubr.f32.gmra.mrb[0].mxu0 %v1800
        %v1963 = vpop.f32.mrb[0].mxu0
        %v1964 = vadd.f32 0.0, %v1963
        %v1965 = vpop.f32.mrb[0].mxu0
        %1966 = vmatprep.mubr.f32.mxu0 0.0
        %1967 = vmatmul.mubr.f32.gmra.mrb[0].mxu0 %v1801
        %v1968 = vpop.f32.mrb[0].mxu0
        %v1969 = vadd.f32 0.0, %v1968
        %v1970 = vpop.f32.mrb[0].mxu0
        %1971 = vmatprep.mubr.f32.mxu0 0.0
        %1972 = vmatmul.mubr.f32.gmra.mrb[0].mxu0 %v1802
        %v1973 = vpop.f32.mrb[0].mxu0
        %v1974 = vadd.f32 0.0, %v1973
        %v1975 = vpop.f32.mrb[0].mxu0
        %1976 = vmatprep.mubr.f32.mxu0 0.0
        %1977 = vmatmul.mubr.f32.gmra.mrb[0].mxu0 %v1803
        %v1978 = vpop.f32.mrb[0].mxu0
        %v1979 = vadd.f32 0.0, %v1978
        %v1980 = vpop.f32.mrb[0].mxu0
        %1981 = vmatprep.mubr.f32.mxu0 0.0
        %1982 = vmatmul.mubr.f32.gmra.mrb[0].mxu0 %v1804
        %v1983 = vpop.f32.mrb[0].mxu0
        %v1984 = vadd.f32 0.0, %v1983
        %v1985 = vpop.f32.mrb[0].mxu0
        %1986 = vmatprep.mubr.f32.mxu0 0.0
        %1987 = vmatmul.mubr.f32.gmra.mrb[0].mxu0 %v1805
        %v1988 = vpop.f32.mrb[0].mxu0
        %v1989 = vadd.f32 0.0, %v1988
        %v1990 = vpop.f32.mrb[0].mxu0
        %1991 = vmatprep.mubr.f32.mxu0 0.0
        %1992 = vmatmul.mubr.f32.gmra.mrb[0].mxu0 %v1806
        %v1993 = vpop.f32.mrb[0].mxu0
        %v1994 = vadd.f32 0.0, %v1993
        %v1995 = vpop.f32.mrb[0].mxu0
        %1996 = vmatprep.mubr.f32.mxu0 0.0
        %1997 = vmatmul.mubr.f32.gmra.mrb[0].mxu0 %v1807
        %v1998 = vpop.f32.mrb[0].mxu0
        %v1999 = vadd.f32 0.0, %v1998
        %v2000 = vpop.f32.mrb[0].mxu0
        %2001 = vmatprep.mubr.f32.mxu0 0.0
        %2002 = vmatmul.mubr.f32.gmra.mrb[0].mxu0 %v1808
        %v2003 = vpop.f32.mrb[0].mxu0
        %v2004 = vadd.f32 0.0, %v2003
        %v2005 = vpop.f32.mrb[0].mxu0
        %2006 = vmatprep.mubr.f32.mxu0 0.0
        %2007 = vmatmul.mubr.f32.gmra.mrb[0].mxu0 %v1809
        %v2008 = vpop.f32.mrb[0].mxu0
        %v2009 = vadd.f32 0.0, %v2008
        %v2010 = vpop.f32.mrb[0].mxu0
        %2011 = vmatprep.mubr.f32.mxu0 0.0
        %2012 = vmatmul.mubr.f32.gmra.mrb[0].mxu0 %v1810
        %v2013 = vpop.f32.mrb[0].mxu0
        %v2014 = vadd.f32 0.0, %v2013
        %v2015 = vpop.f32.mrb[0].mxu0
        %2016 = vmatprep.mubr.f32.mxu0 0.0
        %2017 = vmatmul.mubr.f32.gmra.mrb[0].mxu0 %v1811
        %v2018 = vpop.f32.mrb[0].mxu0
        %v2019 = vadd.f32 0.0, %v2018
        %v2020 = vpop.f32.mrb[0].mxu0
        %2021 = vmatprep.mubr.f32.mxu0 0.0
        %2022 = vmatmul.mubr.f32.gmra.mrb[0].mxu0 %v1812
        %v2023 = vpop.f32.mrb[0].mxu0
        %v2024 = vadd.f32 0.0, %v2023
        %v2025 = vpop.f32.mrb[0].mxu0
        %2026 = vmatprep.mubr.f32.mxu0 0.0
        %2027 = vmatmul.mubr.f32.gmra.mrb[0].mxu0 %v1813
        %v2028 = vpop.f32.mrb[0].mxu0
        %v2029 = vadd.f32 0.0, %v2028
        %v2030 = vpop.f32.mrb[0].mxu0
        %2031 = vmatprep.mubr.f32.mxu0 0.0
        %2032 = vmatmul.mubr.f32.gmra.mrb[0].mxu0 %v1814
        %v2033 = vpop.f32.mrb[0].mxu0
        %v2034 = vadd.f32 0.0, %v2033
        %v2035 = vpop.f32.mrb[0].mxu0
        %2036 = vmatprep.mubr.f32.mxu0 0.0
        %2037 = vmatmul.mubr.f32.gmra.mrb[0].mxu0 %v1815
        %v2038 = vpop.f32.mrb[0].mxu0
        %v2039 = vadd.f32 0.0, %v2038
        %v2040 = vpop.f32.mrb[0].mxu0
        %2041 = vmatprep.mubr.f32.mxu0 0.0
        %2042 = vmatmul.mubr.f32.gmra.mrb[0].mxu0 %v1816
        %v2043 = vpop.f32.mrb[0].mxu0
        %v2044 = vadd.f32 0.0, %v2043
        %v2045 = vpop.f32.mrb[0].mxu0
        %2046 = vmatprep.mubr.f32.mxu0 0.0
        %2047 = vmatmul.mubr.f32.gmra.mrb[0].mxu0 %v1817
        %v2048 = vpop.f32.mrb[0].mxu0
        %v2049 = vadd.f32 0.0, %v2048
        %v2050 = vpop.f32.mrb[0].mxu0
        %2051 = vmatprep.mubr.f32.mxu0 0.0
        %2052 = vmatmul.mubr.f32.gmra.mrb[0].mxu0 %v1818
        %v2053 = vpop.f32.mrb[0].mxu0
        %v2054 = vadd.f32 0.0, %v2053
        %v2055 = vpop.f32.mrb[0].mxu0
        %2056 = vmatprep.mubr.f32.mxu0 0.0
        %2057 = vmatmul.mubr.f32.gmra.mrb[0].mxu0 %v1819
        %v2058 = vpop.f32.mrb[0].mxu0
        %v2059 = vadd.f32 0.0, %v2058
        %v2060 = vpop.f32.mrb[0].mxu0
        %2061 = vdwg.mxu0
        %v2062 = vadd.f32 %v1756, %v1904
        %v2063 = vadd.f32 %v1757, %v1909
        %v2064 = vadd.f32 %v1758, %v1914
        %v2065 = vadd.f32 %v1759, %v1919
        %v2066 = vadd.f32 %v1760, %v1924
        %v2067 = vadd.f32 %v1761, %v1929
        %v2068 = vadd.f32 %v1762, %v1934
        %v2069 = vadd.f32 %v1763, %v1939
        %v2070 = vadd.f32 %v1764, %v1944
        %v2071 = vadd.f32 %v1765, %v1949
        %v2072 = vadd.f32 %v1766, %v1954
        %v2073 = vadd.f32 %v1767, %v1959
        %v2074 = vadd.f32 %v1768, %v1964
        %v2075 = vadd.f32 %v1769, %v1969
        %v2076 = vadd.f32 %v1770, %v1974
        %v2077 = vadd.f32 %v1771, %v1979
        %v2078 = vadd.f32 %v1772, %v1984
        %v2079 = vadd.f32 %v1773, %v1989
        %v2080 = vadd.f32 %v1774, %v1994
        %v2081 = vadd.f32 %v1775, %v1999
        %v2082 = vadd.f32 %v1776, %v2004
        %v2083 = vadd.f32 %v1777, %v2009
        %v2084 = vadd.f32 %v1778, %v2014
        %v2085 = vadd.f32 %v1779, %v2019
        %v2086 = vadd.f32 %v1780, %v2024
        %v2087 = vadd.f32 %v1781, %v2029
        %v2088 = vadd.f32 %v1782, %v2034
        %v2089 = vadd.f32 %v1783, %v2039
        %v2090 = vadd.f32 %v1784, %v2044
        %v2091 = vadd.f32 %v1785, %v2049
        %v2092 = vadd.f32 %v1786, %v2054
        %v2093 = vadd.f32 %v1787, %v2059
        %v2094 = vld [vmem:[%s720 + $0x1] sm:$0xff]
        %v2095 = vld [vmem:[%s720 + $0x9] sm:$0xff]
        %v2096 = vld [vmem:[%s720 + $0x19] sm:$0xff]
        %v2097 = vld [vmem:[%s720 + $0x21] sm:$0xff]
        %v2098 = vld [vmem:[%s720 + $0x31] sm:$0xff]
        %v2099 = vld [vmem:[%s720 + $0x39] sm:$0xff]
        %v2100 = vld [vmem:[%s720 + $0x49] sm:$0xff]
        %v2101 = vld [vmem:[%s720 + $0x51] sm:$0xff]
        %v2102 = vld [vmem:[%s720 + $0x61] sm:$0xff]
        %v2103 = vld [vmem:[%s720 + $0x69] sm:$0xff]
        %v2104 = vld [vmem:[%s720 + $0x79] sm:$0xff]
        %v2105 = vld [vmem:[%s720 + $0x81] sm:$0xff]
        %v2106 = vld [vmem:[%s720 + $0x91] sm:$0xff]
        %v2107 = vld [vmem:[%s720 + $0x99] sm:$0xff]
        %v2108 = vld [vmem:[%s720 + $0xa9] sm:$0xff]
        %v2109 = vld [vmem:[%s720 + $0xb1] sm:$0xff]
        %v2110 = vld [vmem:[%s720 + $0xc1] sm:$0xff]
        %v2111 = vld [vmem:[%s720 + $0xc9] sm:$0xff]
        %v2112 = vld [vmem:[%s720 + $0xd9] sm:$0xff]
        %v2113 = vld [vmem:[%s720 + $0xe1] sm:$0xff]
        %v2114 = vld [vmem:[%s720 + $0xf1] sm:$0xff]
        %v2115 = vld [vmem:[%s720 + $0xf9] sm:$0xff]
        %v2116 = vld [vmem:[%s720 + $0x109] sm:$0xff]
        %v2117 = vld [vmem:[%s720 + $0x111] sm:$0xff]
        %v2118 = vld [vmem:[%s720 + $0x121] sm:$0xff]
        %v2119 = vld [vmem:[%s720 + $0x129] sm:$0xff]
        %v2120 = vld [vmem:[%s720 + $0x139] sm:$0xff]
        %v2121 = vld [vmem:[%s720 + $0x141] sm:$0xff]
        %v2122 = vld [vmem:[%s720 + $0x151] sm:$0xff]
        %v2123 = vld [vmem:[%s720 + $0x159] sm:$0xff]
        %v2124 = vld [vmem:[%s720 + $0x169] sm:$0xff]
        %v2125 = vld [vmem:[%s720 + $0x171] sm:$0xff]
        %s2126 = scalar_lea.vmem [#allocation10], 512
        %v2127 = vld [vmem:[%s2126] sm:$0xff]
        %v2128 = vld [vmem:[%s2126 + $0x8] sm:$0xff]
        %v2129 = vld [vmem:[%s2126 + $0x10] sm:$0xff]
        %v2130 = vld [vmem:[%s2126 + $0x18] sm:$0xff]
        %v2131 = vld [vmem:[%s2126 + $0x20] sm:$0xff]
        %v2132 = vld [vmem:[%s2126 + $0x28] sm:$0xff]
        %v2133 = vld [vmem:[%s2126 + $0x30] sm:$0xff]
        %v2134 = vld [vmem:[%s2126 + $0x38] sm:$0xff]
        %v2135 = vld [vmem:[%s2126 + $0x40] sm:$0xff]
        %v2136 = vld [vmem:[%s2126 + $0x48] sm:$0xff]
        %v2137 = vld [vmem:[%s2126 + $0x50] sm:$0xff]
        %v2138 = vld [vmem:[%s2126 + $0x58] sm:$0xff]
        %v2139 = vld [vmem:[%s2126 + $0x60] sm:$0xff]
        %v2140 = vld [vmem:[%s2126 + $0x68] sm:$0xff]
        %v2141 = vld [vmem:[%s2126 + $0x70] sm:$0xff]
        %v2142 = vld [vmem:[%s2126 + $0x78] sm:$0xff]
        %2143 = vmatprep.subr.mxu0 0.0
        %2144 = vmatpush1.msra.mxu0 %v2127
        %2145 = vmatprep.subr.mxu0 0.0
        %2146 = vmatpush1.msra.mxu0 %v2128
        %2147 = vmatprep.subr.mxu0 0.0
        %2148 = vmatpush1.msra.mxu0 %v2129
        %2149 = vmatprep.subr.mxu0 0.0
        %2150 = vmatpush1.msra.mxu0 %v2130
        %2151 = vmatprep.subr.mxu0 0.0
        %2152 = vmatpush1.msra.mxu0 %v2131
        %2153 = vmatprep.subr.mxu0 0.0
        %2154 = vmatpush1.msra.mxu0 %v2132
        %2155 = vmatprep.subr.mxu0 0.0
        %2156 = vmatpush1.msra.mxu0 %v2133
        %2157 = vmatprep.subr.mxu0 0.0
        %2158 = vmatpush1.msra.mxu0 %v2134
        %2159 = vmatprep.subr.mxu0 0.0
        %2160 = vmatpush1.msra.mxu0 %v2135
        %2161 = vmatprep.subr.mxu0 0.0
        %2162 = vmatpush1.msra.mxu0 %v2136
        %2163 = vmatprep.subr.mxu0 0.0
        %2164 = vmatpush1.msra.mxu0 %v2137
        %2165 = vmatprep.subr.mxu0 0.0
        %2166 = vmatpush1.msra.mxu0 %v2138
        %2167 = vmatprep.subr.mxu0 0.0
        %2168 = vmatpush1.msra.mxu0 %v2139
        %2169 = vmatprep.subr.mxu0 0.0
        %2170 = vmatpush1.msra.mxu0 %v2140
        %2171 = vmatprep.subr.mxu0 0.0
        %2172 = vmatpush1.msra.mxu0 %v2141
        %2173 = vmatprep.subr.mxu0 0.0
        %2174 = vmatpush1.msra.mxu0 %v2142
        %2175 = vmatprep.subr.mxu0 0.0
        %2176 = vmatpush1.msra.mxu0 0.0
        %2177 = vmatprep.subr.mxu0 0.0
        %2178 = vmatpush1.msra.mxu0 0.0
        %2179 = vmatprep.subr.mxu0 0.0
        %2180 = vmatpush1.msra.mxu0 0.0
        %2181 = vmatprep.subr.mxu0 0.0
        %2182 = vmatpush1.msra.mxu0 0.0
        %2183 = vmatprep.subr.mxu0 0.0
        %2184 = vmatpush1.msra.mxu0 0.0
        %2185 = vmatprep.subr.mxu0 0.0
        %2186 = vmatpush1.msra.mxu0 0.0
        %2187 = vmatprep.subr.mxu0 0.0
        %2188 = vmatpush1.msra.mxu0 0.0
        %2189 = vmatprep.subr.mxu0 0.0
        %2190 = vmatpush1.msra.mxu0 0.0
        %2191 = vmatprep.subr.mxu0 0.0
        %2192 = vmatpush1.msra.mxu0 0.0
        %2193 = vmatprep.subr.mxu0 0.0
        %2194 = vmatpush1.msra.mxu0 0.0
        %2195 = vmatprep.subr.mxu0 0.0
        %2196 = vmatpush1.msra.mxu0 0.0
        %2197 = vmatprep.subr.mxu0 0.0
        %2198 = vmatpush1.msra.mxu0 0.0
        %2199 = vmatprep.subr.mxu0 0.0
        %2200 = vmatpush1.msra.mxu0 0.0
        %2201 = vmatprep.subr.mxu0 0.0
        %2202 = vmatpush1.msra.mxu0 0.0
        %2203 = vmatprep.subr.mxu0 0.0
        %2204 = vmatpush1.msra.mxu0 0.0
        %2205 = vmatprep.subr.mxu0 0.0
        %2206 = vmatpush1.msra.mxu0 0.0
        %2207 = vmatprep.mubr.f32.mxu0 0.0
        %2208 = vmatmul.mubr.f32.gmra.mrb[0].mxu0 %v2094
        %v2209 = vpop.f32.mrb[0].mxu0
        %v2210 = vadd.f32 0.0, %v2209
        %v2211 = vpop.f32.mrb[0].mxu0
        %2212 = vmatprep.mubr.f32.mxu0 0.0
        %2213 = vmatmul.mubr.f32.gmra.mrb[0].mxu0 %v2095
        %v2214 = vpop.f32.mrb[0].mxu0
        %v2215 = vadd.f32 0.0, %v2214
        %v2216 = vpop.f32.mrb[0].mxu0
        %2217 = vmatprep.mubr.f32.mxu0 0.0
        %2218 = vmatmul.mubr.f32.gmra.mrb[0].mxu0 %v2096
        %v2219 = vpop.f32.mrb[0].mxu0
        %v2220 = vadd.f32 0.0, %v2219
        %v2221 = vpop.f32.mrb[0].mxu0
        %2222 = vmatprep.mubr.f32.mxu0 0.0
        %2223 = vmatmul.mubr.f32.gmra.mrb[0].mxu0 %v2097
        %v2224 = vpop.f32.mrb[0].mxu0
        %v2225 = vadd.f32 0.0, %v2224
        %v2226 = vpop.f32.mrb[0].mxu0
        %2227 = vmatprep.mubr.f32.mxu0 0.0
        %2228 = vmatmul.mubr.f32.gmra.mrb[0].mxu0 %v2098
        %v2229 = vpop.f32.mrb[0].mxu0
        %v2230 = vadd.f32 0.0, %v2229
        %v2231 = vpop.f32.mrb[0].mxu0
        %2232 = vmatprep.mubr.f32.mxu0 0.0
        %2233 = vmatmul.mubr.f32.gmra.mrb[0].mxu0 %v2099
        %v2234 = vpop.f32.mrb[0].mxu0
        %v2235 = vadd.f32 0.0, %v2234
        %v2236 = vpop.f32.mrb[0].mxu0
        %2237 = vmatprep.mubr.f32.mxu0 0.0
        %2238 = vmatmul.mubr.f32.gmra.mrb[0].mxu0 %v2100
        %v2239 = vpop.f32.mrb[0].mxu0
        %v2240 = vadd.f32 0.0, %v2239
        %v2241 = vpop.f32.mrb[0].mxu0
        %2242 = vmatprep.mubr.f32.mxu0 0.0
        %2243 = vmatmul.mubr.f32.gmra.mrb[0].mxu0 %v2101
        %v2244 = vpop.f32.mrb[0].mxu0
        %v2245 = vadd.f32 0.0, %v2244
        %v2246 = vpop.f32.mrb[0].mxu0
        %2247 = vmatprep.mubr.f32.mxu0 0.0
        %2248 = vmatmul.mubr.f32.gmra.mrb[0].mxu0 %v2102
        %v2249 = vpop.f32.mrb[0].mxu0
        %v2250 = vadd.f32 0.0, %v2249
        %v2251 = vpop.f32.mrb[0].mxu0
        %2252 = vmatprep.mubr.f32.mxu0 0.0
        %2253 = vmatmul.mubr.f32.gmra.mrb[0].mxu0 %v2103
        %v2254 = vpop.f32.mrb[0].mxu0
        %v2255 = vadd.f32 0.0, %v2254
        %v2256 = vpop.f32.mrb[0].mxu0
        %2257 = vmatprep.mubr.f32.mxu0 0.0
        %2258 = vmatmul.mubr.f32.gmra.mrb[0].mxu0 %v2104
        %v2259 = vpop.f32.mrb[0].mxu0
        %v2260 = vadd.f32 0.0, %v2259
        %v2261 = vpop.f32.mrb[0].mxu0
        %2262 = vmatprep.mubr.f32.mxu0 0.0
        %2263 = vmatmul.mubr.f32.gmra.mrb[0].mxu0 %v2105
        %v2264 = vpop.f32.mrb[0].mxu0
        %v2265 = vadd.f32 0.0, %v2264
        %v2266 = vpop.f32.mrb[0].mxu0
        %2267 = vmatprep.mubr.f32.mxu0 0.0
        %2268 = vmatmul.mubr.f32.gmra.mrb[0].mxu0 %v2106
        %v2269 = vpop.f32.mrb[0].mxu0
        %v2270 = vadd.f32 0.0, %v2269
        %v2271 = vpop.f32.mrb[0].mxu0
        %2272 = vmatprep.mubr.f32.mxu0 0.0
        %2273 = vmatmul.mubr.f32.gmra.mrb[0].mxu0 %v2107
        %v2274 = vpop.f32.mrb[0].mxu0
        %v2275 = vadd.f32 0.0, %v2274
        %v2276 = vpop.f32.mrb[0].mxu0
        %2277 = vmatprep.mubr.f32.mxu0 0.0
        %2278 = vmatmul.mubr.f32.gmra.mrb[0].mxu0 %v2108
        %v2279 = vpop.f32.mrb[0].mxu0
        %v2280 = vadd.f32 0.0, %v2279
        %v2281 = vpop.f32.mrb[0].mxu0
        %2282 = vmatprep.mubr.f32.mxu0 0.0
        %2283 = vmatmul.mubr.f32.gmra.mrb[0].mxu0 %v2109
        %v2284 = vpop.f32.mrb[0].mxu0
        %v2285 = vadd.f32 0.0, %v2284
        %v2286 = vpop.f32.mrb[0].mxu0
        %2287 = vmatprep.mubr.f32.mxu0 0.0
        %2288 = vmatmul.mubr.f32.gmra.mrb[0].mxu0 %v2110
        %v2289 = vpop.f32.mrb[0].mxu0
        %v2290 = vadd.f32 0.0, %v2289
        %v2291 = vpop.f32.mrb[0].mxu0
        %2292 = vmatprep.mubr.f32.mxu0 0.0
        %2293 = vmatmul.mubr.f32.gmra.mrb[0].mxu0 %v2111
        %v2294 = vpop.f32.mrb[0].mxu0
        %v2295 = vadd.f32 0.0, %v2294
        %v2296 = vpop.f32.mrb[0].mxu0
        %2297 = vmatprep.mubr.f32.mxu0 0.0
        %2298 = vmatmul.mubr.f32.gmra.mrb[0].mxu0 %v2112
        %v2299 = vpop.f32.mrb[0].mxu0
        %v2300 = vadd.f32 0.0, %v2299
        %v2301 = vpop.f32.mrb[0].mxu0
        %2302 = vmatprep.mubr.f32.mxu0 0.0
        %2303 = vmatmul.mubr.f32.gmra.mrb[0].mxu0 %v2113
        %v2304 = vpop.f32.mrb[0].mxu0
        %v2305 = vadd.f32 0.0, %v2304
        %v2306 = vpop.f32.mrb[0].mxu0
        %2307 = vmatprep.mubr.f32.mxu0 0.0
        %2308 = vmatmul.mubr.f32.gmra.mrb[0].mxu0 %v2114
        %v2309 = vpop.f32.mrb[0].mxu0
        %v2310 = vadd.f32 0.0, %v2309
        %v2311 = vpop.f32.mrb[0].mxu0
        %2312 = vmatprep.mubr.f32.mxu0 0.0
        %2313 = vmatmul.mubr.f32.gmra.mrb[0].mxu0 %v2115
        %v2314 = vpop.f32.mrb[0].mxu0
        %v2315 = vadd.f32 0.0, %v2314
        %v2316 = vpop.f32.mrb[0].mxu0
        %2317 = vmatprep.mubr.f32.mxu0 0.0
        %2318 = vmatmul.mubr.f32.gmra.mrb[0].mxu0 %v2116
        %v2319 = vpop.f32.mrb[0].mxu0
        %v2320 = vadd.f32 0.0, %v2319
        %v2321 = vpop.f32.mrb[0].mxu0
        %2322 = vmatprep.mubr.f32.mxu0 0.0
        %2323 = vmatmul.mubr.f32.gmra.mrb[0].mxu0 %v2117
        %v2324 = vpop.f32.mrb[0].mxu0
        %v2325 = vadd.f32 0.0, %v2324
        %v2326 = vpop.f32.mrb[0].mxu0
        %2327 = vmatprep.mubr.f32.mxu0 0.0
        %2328 = vmatmul.mubr.f32.gmra.mrb[0].mxu0 %v2118
        %v2329 = vpop.f32.mrb[0].mxu0
        %v2330 = vadd.f32 0.0, %v2329
        %v2331 = vpop.f32.mrb[0].mxu0
        %2332 = vmatprep.mubr.f32.mxu0 0.0
        %2333 = vmatmul.mubr.f32.gmra.mrb[0].mxu0 %v2119
        %v2334 = vpop.f32.mrb[0].mxu0
        %v2335 = vadd.f32 0.0, %v2334
        %v2336 = vpop.f32.mrb[0].mxu0
        %2337 = vmatprep.mubr.f32.mxu0 0.0
        %2338 = vmatmul.mubr.f32.gmra.mrb[0].mxu0 %v2120
        %v2339 = vpop.f32.mrb[0].mxu0
        %v2340 = vadd.f32 0.0, %v2339
        %v2341 = vpop.f32.mrb[0].mxu0
        %2342 = vmatprep.mubr.f32.mxu0 0.0
        %2343 = vmatmul.mubr.f32.gmra.mrb[0].mxu0 %v2121
        %v2344 = vpop.f32.mrb[0].mxu0
        %v2345 = vadd.f32 0.0, %v2344
        %v2346 = vpop.f32.mrb[0].mxu0
        %2347 = vmatprep.mubr.f32.mxu0 0.0
        %2348 = vmatmul.mubr.f32.gmra.mrb[0].mxu0 %v2122
        %v2349 = vpop.f32.mrb[0].mxu0
        %v2350 = vadd.f32 0.0, %v2349
        %v2351 = vpop.f32.mrb[0].mxu0
        %2352 = vmatprep.mubr.f32.mxu0 0.0
        %2353 = vmatmul.mubr.f32.gmra.mrb[0].mxu0 %v2123
        %v2354 = vpop.f32.mrb[0].mxu0
        %v2355 = vadd.f32 0.0, %v2354
        %v2356 = vpop.f32.mrb[0].mxu0
        %2357 = vmatprep.mubr.f32.mxu0 0.0
        %2358 = vmatmul.mubr.f32.gmra.mrb[0].mxu0 %v2124
        %v2359 = vpop.f32.mrb[0].mxu0
        %v2360 = vadd.f32 0.0, %v2359
        %v2361 = vpop.f32.mrb[0].mxu0
        %2362 = vmatprep.mubr.f32.mxu0 0.0
        %2363 = vmatmul.mubr.f32.gmra.mrb[0].mxu0 %v2125
        %v2364 = vpop.f32.mrb[0].mxu0
        %v2365 = vadd.f32 0.0, %v2364
        %v2366 = vpop.f32.mrb[0].mxu0
        %2367 = vdwg.mxu0
        %v2368 = vadd.f32 %v2062, %v2210
        %v2369 = vadd.f32 %v2063, %v2215
        %v2370 = vadd.f32 %v2064, %v2220
        %v2371 = vadd.f32 %v2065, %v2225
        %v2372 = vadd.f32 %v2066, %v2230
        %v2373 = vadd.f32 %v2067, %v2235
        %v2374 = vadd.f32 %v2068, %v2240
        %v2375 = vadd.f32 %v2069, %v2245
        %v2376 = vadd.f32 %v2070, %v2250
        %v2377 = vadd.f32 %v2071, %v2255
        %v2378 = vadd.f32 %v2072, %v2260
        %v2379 = vadd.f32 %v2073, %v2265
        %v2380 = vadd.f32 %v2074, %v2270
        %v2381 = vadd.f32 %v2075, %v2275
        %v2382 = vadd.f32 %v2076, %v2280
        %v2383 = vadd.f32 %v2077, %v2285
        %v2384 = vadd.f32 %v2078, %v2290
        %v2385 = vadd.f32 %v2079, %v2295
        %v2386 = vadd.f32 %v2080, %v2300
        %v2387 = vadd.f32 %v2081, %v2305
        %v2388 = vadd.f32 %v2082, %v2310
        %v2389 = vadd.f32 %v2083, %v2315
        %v2390 = vadd.f32 %v2084, %v2320
        %v2391 = vadd.f32 %v2085, %v2325
        %v2392 = vadd.f32 %v2086, %v2330
        %v2393 = vadd.f32 %v2087, %v2335
        %v2394 = vadd.f32 %v2088, %v2340
        %v2395 = vadd.f32 %v2089, %v2345
        %v2396 = vadd.f32 %v2090, %v2350
        %v2397 = vadd.f32 %v2091, %v2355
        %v2398 = vadd.f32 %v2092, %v2360
        %v2399 = vadd.f32 %v2093, %v2365
        %v2400 = vld [vmem:[%s720 + $0x2] sm:$0xff]
        %v2401 = vld [vmem:[%s720 + $0xa] sm:$0xff]
        %v2402 = vld [vmem:[%s720 + $0x1a] sm:$0xff]
        %v2403 = vld [vmem:[%s720 + $0x22] sm:$0xff]
        %v2404 = vld [vmem:[%s720 + $0x32] sm:$0xff]
        %v2405 = vld [vmem:[%s720 + $0x3a] sm:$0xff]
        %v2406 = vld [vmem:[%s720 + $0x4a] sm:$0xff]
        %v2407 = vld [vmem:[%s720 + $0x52] sm:$0xff]
        %v2408 = vld [vmem:[%s720 + $0x62] sm:$0xff]
        %v2409 = vld [vmem:[%s720 + $0x6a] sm:$0xff]
        %v2410 = vld [vmem:[%s720 + $0x7a] sm:$0xff]
        %v2411 = vld [vmem:[%s720 + $0x82] sm:$0xff]
        %v2412 = vld [vmem:[%s720 + $0x92] sm:$0xff]
        %v2413 = vld [vmem:[%s720 + $0x9a] sm:$0xff]
        %v2414 = vld [vmem:[%s720 + $0xaa] sm:$0xff]
        %v2415 = vld [vmem:[%s720 + $0xb2] sm:$0xff]
        %v2416 = vld [vmem:[%s720 + $0xc2] sm:$0xff]
        %v2417 = vld [vmem:[%s720 + $0xca] sm:$0xff]
        %v2418 = vld [vmem:[%s720 + $0xda] sm:$0xff]
        %v2419 = vld [vmem:[%s720 + $0xe2] sm:$0xff]
        %v2420 = vld [vmem:[%s720 + $0xf2] sm:$0xff]
        %v2421 = vld [vmem:[%s720 + $0xfa] sm:$0xff]
        %v2422 = vld [vmem:[%s720 + $0x10a] sm:$0xff]
        %v2423 = vld [vmem:[%s720 + $0x112] sm:$0xff]
        %v2424 = vld [vmem:[%s720 + $0x122] sm:$0xff]
        %v2425 = vld [vmem:[%s720 + $0x12a] sm:$0xff]
        %v2426 = vld [vmem:[%s720 + $0x13a] sm:$0xff]
        %v2427 = vld [vmem:[%s720 + $0x142] sm:$0xff]
        %v2428 = vld [vmem:[%s720 + $0x152] sm:$0xff]
        %v2429 = vld [vmem:[%s720 + $0x15a] sm:$0xff]
        %v2430 = vld [vmem:[%s720 + $0x16a] sm:$0xff]
        %v2431 = vld [vmem:[%s720 + $0x172] sm:$0xff]
        %s2432 = scalar_lea.vmem [#allocation10], 640
        %v2433 = vld [vmem:[%s2432] sm:$0xff]
        %v2434 = vld [vmem:[%s2432 + $0x8] sm:$0xff]
        %v2435 = vld [vmem:[%s2432 + $0x10] sm:$0xff]
        %v2436 = vld [vmem:[%s2432 + $0x18] sm:$0xff]
        %v2437 = vld [vmem:[%s2432 + $0x20] sm:$0xff]
        %v2438 = vld [vmem:[%s2432 + $0x28] sm:$0xff]
        %v2439 = vld [vmem:[%s2432 + $0x30] sm:$0xff]
        %v2440 = vld [vmem:[%s2432 + $0x38] sm:$0xff]
        %v2441 = vld [vmem:[%s2432 + $0x40] sm:$0xff]
        %v2442 = vld [vmem:[%s2432 + $0x48] sm:$0xff]
        %v2443 = vld [vmem:[%s2432 + $0x50] sm:$0xff]
        %v2444 = vld [vmem:[%s2432 + $0x58] sm:$0xff]
        %v2445 = vld [vmem:[%s2432 + $0x60] sm:$0xff]
        %v2446 = vld [vmem:[%s2432 + $0x68] sm:$0xff]
        %v2447 = vld [vmem:[%s2432 + $0x70] sm:$0xff]
        %v2448 = vld [vmem:[%s2432 + $0x78] sm:$0xff]
        %2449 = vmatprep.subr.mxu0 0.0
        %2450 = vmatpush1.msra.mxu0 %v2433
        %2451 = vmatprep.subr.mxu0 0.0
        %2452 = vmatpush1.msra.mxu0 %v2434
        %2453 = vmatprep.subr.mxu0 0.0
        %2454 = vmatpush1.msra.mxu0 %v2435
        %2455 = vmatprep.subr.mxu0 0.0
        %2456 = vmatpush1.msra.mxu0 %v2436
        %2457 = vmatprep.subr.mxu0 0.0
        %2458 = vmatpush1.msra.mxu0 %v2437
        %2459 = vmatprep.subr.mxu0 0.0
        %2460 = vmatpush1.msra.mxu0 %v2438
        %2461 = vmatprep.subr.mxu0 0.0
        %2462 = vmatpush1.msra.mxu0 %v2439
        %2463 = vmatprep.subr.mxu0 0.0
        %2464 = vmatpush1.msra.mxu0 %v2440
        %2465 = vmatprep.subr.mxu0 0.0
        %2466 = vmatpush1.msra.mxu0 %v2441
        %2467 = vmatprep.subr.mxu0 0.0
        %2468 = vmatpush1.msra.mxu0 %v2442
        %2469 = vmatprep.subr.mxu0 0.0
        %2470 = vmatpush1.msra.mxu0 %v2443
        %2471 = vmatprep.subr.mxu0 0.0
        %2472 = vmatpush1.msra.mxu0 %v2444
        %2473 = vmatprep.subr.mxu0 0.0
        %2474 = vmatpush1.msra.mxu0 %v2445
        %2475 = vmatprep.subr.mxu0 0.0
        %2476 = vmatpush1.msra.mxu0 %v2446
        %2477 = vmatprep.subr.mxu0 0.0
        %2478 = vmatpush1.msra.mxu0 %v2447
        %2479 = vmatprep.subr.mxu0 0.0
        %2480 = vmatpush1.msra.mxu0 %v2448
        %2481 = vmatprep.subr.mxu0 0.0
        %2482 = vmatpush1.msra.mxu0 0.0
        %2483 = vmatprep.subr.mxu0 0.0
        %2484 = vmatpush1.msra.mxu0 0.0
        %2485 = vmatprep.subr.mxu0 0.0
        %2486 = vmatpush1.msra.mxu0 0.0
        %2487 = vmatprep.subr.mxu0 0.0
        %2488 = vmatpush1.msra.mxu0 0.0
        %2489 = vmatprep.subr.mxu0 0.0
        %2490 = vmatpush1.msra.mxu0 0.0
        %2491 = vmatprep.subr.mxu0 0.0
        %2492 = vmatpush1.msra.mxu0 0.0
        %2493 = vmatprep.subr.mxu0 0.0
        %2494 = vmatpush1.msra.mxu0 0.0
        %2495 = vmatprep.subr.mxu0 0.0
        %2496 = vmatpush1.msra.mxu0 0.0
        %2497 = vmatprep.subr.mxu0 0.0
        %2498 = vmatpush1.msra.mxu0 0.0
        %2499 = vmatprep.subr.mxu0 0.0
        %2500 = vmatpush1.msra.mxu0 0.0
        %2501 = vmatprep.subr.mxu0 0.0
        %2502 = vmatpush1.msra.mxu0 0.0
        %2503 = vmatprep.subr.mxu0 0.0
        %2504 = vmatpush1.msra.mxu0 0.0
        %2505 = vmatprep.subr.mxu0 0.0
        %2506 = vmatpush1.msra.mxu0 0.0
        %2507 = vmatprep.subr.mxu0 0.0
        %2508 = vmatpush1.msra.mxu0 0.0
        %2509 = vmatprep.subr.mxu0 0.0
        %2510 = vmatpush1.msra.mxu0 0.0
        %2511 = vmatprep.subr.mxu0 0.0
        %2512 = vmatpush1.msra.mxu0 0.0
        %2513 = vmatprep.mubr.f32.mxu0 0.0
        %2514 = vmatmul.mubr.f32.gmra.mrb[0].mxu0 %v2400
        %v2515 = vpop.f32.mrb[0].mxu0
        %v2516 = vadd.f32 0.0, %v2515
        %v2517 = vpop.f32.mrb[0].mxu0
        %2518 = vmatprep.mubr.f32.mxu0 0.0
        %2519 = vmatmul.mubr.f32.gmra.mrb[0].mxu0 %v2401
        %v2520 = vpop.f32.mrb[0].mxu0
        %v2521 = vadd.f32 0.0, %v2520
        %v2522 = vpop.f32.mrb[0].mxu0
        %2523 = vmatprep.mubr.f32.mxu0 0.0
        %2524 = vmatmul.mubr.f32.gmra.mrb[0].mxu0 %v2402
        %v2525 = vpop.f32.mrb[0].mxu0
        %v2526 = vadd.f32 0.0, %v2525
        %v2527 = vpop.f32.mrb[0].mxu0
        %2528 = vmatprep.mubr.f32.mxu0 0.0
        %2529 = vmatmul.mubr.f32.gmra.mrb[0].mxu0 %v2403
        %v2530 = vpop.f32.mrb[0].mxu0
        %v2531 = vadd.f32 0.0, %v2530
        %v2532 = vpop.f32.mrb[0].mxu0
        %2533 = vmatprep.mubr.f32.mxu0 0.0
        %2534 = vmatmul.mubr.f32.gmra.mrb[0].mxu0 %v2404
        %v2535 = vpop.f32.mrb[0].mxu0
        %v2536 = vadd.f32 0.0, %v2535
        %v2537 = vpop.f32.mrb[0].mxu0
        %2538 = vmatprep.mubr.f32.mxu0 0.0
        %2539 = vmatmul.mubr.f32.gmra.mrb[0].mxu0 %v2405
        %v2540 = vpop.f32.mrb[0].mxu0
        %v2541 = vadd.f32 0.0, %v2540
        %v2542 = vpop.f32.mrb[0].mxu0
        %2543 = vmatprep.mubr.f32.mxu0 0.0
        %2544 = vmatmul.mubr.f32.gmra.mrb[0].mxu0 %v2406
        %v2545 = vpop.f32.mrb[0].mxu0
        %v2546 = vadd.f32 0.0, %v2545
        %v2547 = vpop.f32.mrb[0].mxu0
        %2548 = vmatprep.mubr.f32.mxu0 0.0
        %2549 = vmatmul.mubr.f32.gmra.mrb[0].mxu0 %v2407
        %v2550 = vpop.f32.mrb[0].mxu0
        %v2551 = vadd.f32 0.0, %v2550
        %v2552 = vpop.f32.mrb[0].mxu0
        %2553 = vmatprep.mubr.f32.mxu0 0.0
        %2554 = vmatmul.mubr.f32.gmra.mrb[0].mxu0 %v2408
        %v2555 = vpop.f32.mrb[0].mxu0
        %v2556 = vadd.f32 0.0, %v2555
        %v2557 = vpop.f32.mrb[0].mxu0
        %2558 = vmatprep.mubr.f32.mxu0 0.0
        %2559 = vmatmul.mubr.f32.gmra.mrb[0].mxu0 %v2409
        %v2560 = vpop.f32.mrb[0].mxu0
        %v2561 = vadd.f32 0.0, %v2560
        %v2562 = vpop.f32.mrb[0].mxu0
        %2563 = vmatprep.mubr.f32.mxu0 0.0
        %2564 = vmatmul.mubr.f32.gmra.mrb[0].mxu0 %v2410
        %v2565 = vpop.f32.mrb[0].mxu0
        %v2566 = vadd.f32 0.0, %v2565
        %v2567 = vpop.f32.mrb[0].mxu0
        %2568 = vmatprep.mubr.f32.mxu0 0.0
        %2569 = vmatmul.mubr.f32.gmra.mrb[0].mxu0 %v2411
        %v2570 = vpop.f32.mrb[0].mxu0
        %v2571 = vadd.f32 0.0, %v2570
        %v2572 = vpop.f32.mrb[0].mxu0
        %2573 = vmatprep.mubr.f32.mxu0 0.0
        %2574 = vmatmul.mubr.f32.gmra.mrb[0].mxu0 %v2412
        %v2575 = vpop.f32.mrb[0].mxu0
        %v2576 = vadd.f32 0.0, %v2575
        %v2577 = vpop.f32.mrb[0].mxu0
        %2578 = vmatprep.mubr.f32.mxu0 0.0
        %2579 = vmatmul.mubr.f32.gmra.mrb[0].mxu0 %v2413
        %v2580 = vpop.f32.mrb[0].mxu0
        %v2581 = vadd.f32 0.0, %v2580
        %v2582 = vpop.f32.mrb[0].mxu0
        %2583 = vmatprep.mubr.f32.mxu0 0.0
        %2584 = vmatmul.mubr.f32.gmra.mrb[0].mxu0 %v2414
        %v2585 = vpop.f32.mrb[0].mxu0
        %v2586 = vadd.f32 0.0, %v2585
        %v2587 = vpop.f32.mrb[0].mxu0
        %2588 = vmatprep.mubr.f32.mxu0 0.0
        %2589 = vmatmul.mubr.f32.gmra.mrb[0].mxu0 %v2415
        %v2590 = vpop.f32.mrb[0].mxu0
        %v2591 = vadd.f32 0.0, %v2590
        %v2592 = vpop.f32.mrb[0].mxu0
        %2593 = vmatprep.mubr.f32.mxu0 0.0
        %2594 = vmatmul.mubr.f32.gmra.mrb[0].mxu0 %v2416
        %v2595 = vpop.f32.mrb[0].mxu0
        %v2596 = vadd.f32 0.0, %v2595
        %v2597 = vpop.f32.mrb[0].mxu0
        %2598 = vmatprep.mubr.f32.mxu0 0.0
        %2599 = vmatmul.mubr.f32.gmra.mrb[0].mxu0 %v2417
        %v2600 = vpop.f32.mrb[0].mxu0
        %v2601 = vadd.f32 0.0, %v2600
        %v2602 = vpop.f32.mrb[0].mxu0
        %2603 = vmatprep.mubr.f32.mxu0 0.0
        %2604 = vmatmul.mubr.f32.gmra.mrb[0].mxu0 %v2418
        %v2605 = vpop.f32.mrb[0].mxu0
        %v2606 = vadd.f32 0.0, %v2605
        %v2607 = vpop.f32.mrb[0].mxu0
        %2608 = vmatprep.mubr.f32.mxu0 0.0
        %2609 = vmatmul.mubr.f32.gmra.mrb[0].mxu0 %v2419
        %v2610 = vpop.f32.mrb[0].mxu0
        %v2611 = vadd.f32 0.0, %v2610
        %v2612 = vpop.f32.mrb[0].mxu0
        %2613 = vmatprep.mubr.f32.mxu0 0.0
        %2614 = vmatmul.mubr.f32.gmra.mrb[0].mxu0 %v2420
        %v2615 = vpop.f32.mrb[0].mxu0
        %v2616 = vadd.f32 0.0, %v2615
        %v2617 = vpop.f32.mrb[0].mxu0
        %2618 = vmatprep.mubr.f32.mxu0 0.0
        %2619 = vmatmul.mubr.f32.gmra.mrb[0].mxu0 %v2421
        %v2620 = vpop.f32.mrb[0].mxu0
        %v2621 = vadd.f32 0.0, %v2620
        %v2622 = vpop.f32.mrb[0].mxu0
        %2623 = vmatprep.mubr.f32.mxu0 0.0
        %2624 = vmatmul.mubr.f32.gmra.mrb[0].mxu0 %v2422
        %v2625 = vpop.f32.mrb[0].mxu0
        %v2626 = vadd.f32 0.0, %v2625
        %v2627 = vpop.f32.mrb[0].mxu0
        %2628 = vmatprep.mubr.f32.mxu0 0.0
        %2629 = vmatmul.mubr.f32.gmra.mrb[0].mxu0 %v2423
        %v2630 = vpop.f32.mrb[0].mxu0
        %v2631 = vadd.f32 0.0, %v2630
        %v2632 = vpop.f32.mrb[0].mxu0
        %2633 = vmatprep.mubr.f32.mxu0 0.0
        %2634 = vmatmul.mubr.f32.gmra.mrb[0].mxu0 %v2424
        %v2635 = vpop.f32.mrb[0].mxu0
        %v2636 = vadd.f32 0.0, %v2635
        %v2637 = vpop.f32.mrb[0].mxu0
        %2638 = vmatprep.mubr.f32.mxu0 0.0
        %2639 = vmatmul.mubr.f32.gmra.mrb[0].mxu0 %v2425
        %v2640 = vpop.f32.mrb[0].mxu0
        %v2641 = vadd.f32 0.0, %v2640
        %v2642 = vpop.f32.mrb[0].mxu0
        %2643 = vmatprep.mubr.f32.mxu0 0.0
        %2644 = vmatmul.mubr.f32.gmra.mrb[0].mxu0 %v2426
        %v2645 = vpop.f32.mrb[0].mxu0
        %v2646 = vadd.f32 0.0, %v2645
        %v2647 = vpop.f32.mrb[0].mxu0
        %2648 = vmatprep.mubr.f32.mxu0 0.0
        %2649 = vmatmul.mubr.f32.gmra.mrb[0].mxu0 %v2427
        %v2650 = vpop.f32.mrb[0].mxu0
        %v2651 = vadd.f32 0.0, %v2650
        %v2652 = vpop.f32.mrb[0].mxu0
        %2653 = vmatprep.mubr.f32.mxu0 0.0
        %2654 = vmatmul.mubr.f32.gmra.mrb[0].mxu0 %v2428
        %v2655 = vpop.f32.mrb[0].mxu0
        %v2656 = vadd.f32 0.0, %v2655
        %v2657 = vpop.f32.mrb[0].mxu0
        %2658 = vmatprep.mubr.f32.mxu0 0.0
        %2659 = vmatmul.mubr.f32.gmra.mrb[0].mxu0 %v2429
        %v2660 = vpop.f32.mrb[0].mxu0
        %v2661 = vadd.f32 0.0, %v2660
        %v2662 = vpop.f32.mrb[0].mxu0
        %2663 = vmatprep.mubr.f32.mxu0 0.0
        %2664 = vmatmul.mubr.f32.gmra.mrb[0].mxu0 %v2430
        %v2665 = vpop.f32.mrb[0].mxu0
        %v2666 = vadd.f32 0.0, %v2665
        %v2667 = vpop.f32.mrb[0].mxu0
        %2668 = vmatprep.mubr.f32.mxu0 0.0
        %2669 = vmatmul.mubr.f32.gmra.mrb[0].mxu0 %v2431
        %v2670 = vpop.f32.mrb[0].mxu0
        %v2671 = vadd.f32 0.0, %v2670
        %v2672 = vpop.f32.mrb[0].mxu0
        %2673 = vdwg.mxu0
        %v2674 = vadd.f32 %v2368, %v2516
        %v2675 = vadd.f32 %v2369, %v2521
        %v2676 = vadd.f32 %v2370, %v2526
        %v2677 = vadd.f32 %v2371, %v2531
        %v2678 = vadd.f32 %v2372, %v2536
        %v2679 = vadd.f32 %v2373, %v2541
        %v2680 = vadd.f32 %v2374, %v2546
        %v2681 = vadd.f32 %v2375, %v2551
        %v2682 = vadd.f32 %v2376, %v2556
        %v2683 = vadd.f32 %v2377, %v2561
        %v2684 = vadd.f32 %v2378, %v2566
        %v2685 = vadd.f32 %v2379, %v2571
        %v2686 = vadd.f32 %v2380, %v2576
        %v2687 = vadd.f32 %v2381, %v2581
        %v2688 = vadd.f32 %v2382, %v2586
        %v2689 = vadd.f32 %v2383, %v2591
        %v2690 = vadd.f32 %v2384, %v2596
        %v2691 = vadd.f32 %v2385, %v2601
        %v2692 = vadd.f32 %v2386, %v2606
        %v2693 = vadd.f32 %v2387, %v2611
        %v2694 = vadd.f32 %v2388, %v2616
        %v2695 = vadd.f32 %v2389, %v2621
        %v2696 = vadd.f32 %v2390, %v2626
        %v2697 = vadd.f32 %v2391, %v2631
        %v2698 = vadd.f32 %v2392, %v2636
        %v2699 = vadd.f32 %v2393, %v2641
        %v2700 = vadd.f32 %v2394, %v2646
        %v2701 = vadd.f32 %v2395, %v2651
        %v2702 = vadd.f32 %v2396, %v2656
        %v2703 = vadd.f32 %v2397, %v2661
        %v2704 = vadd.f32 %v2398, %v2666
        %v2705 = vadd.f32 %v2399, %v2671
        %s2706 = scalar_lea.vmem [#allocation2], 48
        %v2707 = vld [vmem:[%s2706] sm:$0xff]
        %v2708 = vld [vmem:[%s2706 + $0x8] sm:$0xff]
        %v2709 = vld [vmem:[%s2706 + $0x18] sm:$0xff]
        %v2710 = vld [vmem:[%s2706 + $0x20] sm:$0xff]
        %v2711 = vld [vmem:[%s2706 + $0x30] sm:$0xff]
        %v2712 = vld [vmem:[%s2706 + $0x38] sm:$0xff]
        %v2713 = vld [vmem:[%s2706 + $0x48] sm:$0xff]
        %v2714 = vld [vmem:[%s2706 + $0x50] sm:$0xff]
        %v2715 = vld [vmem:[%s2706 + $0x60] sm:$0xff]
        %v2716 = vld [vmem:[%s2706 + $0x68] sm:$0xff]
        %v2717 = vld [vmem:[%s2706 + $0x78] sm:$0xff]
        %v2718 = vld [vmem:[%s2706 + $0x80] sm:$0xff]
        %v2719 = vld [vmem:[%s2706 + $0x90] sm:$0xff]
        %v2720 = vld [vmem:[%s2706 + $0x98] sm:$0xff]
        %v2721 = vld [vmem:[%s2706 + $0xa8] sm:$0xff]
        %v2722 = vld [vmem:[%s2706 + $0xb0] sm:$0xff]
        %v2723 = vld [vmem:[%s2706 + $0xc0] sm:$0xff]
        %v2724 = vld [vmem:[%s2706 + $0xc8] sm:$0xff]
        %v2725 = vld [vmem:[%s2706 + $0xd8] sm:$0xff]
        %v2726 = vld [vmem:[%s2706 + $0xe0] sm:$0xff]
        %v2727 = vld [vmem:[%s2706 + $0xf0] sm:$0xff]
        %v2728 = vld [vmem:[%s2706 + $0xf8] sm:$0xff]
        %v2729 = vld [vmem:[%s2706 + $0x108] sm:$0xff]
        %v2730 = vld [vmem:[%s2706 + $0x110] sm:$0xff]
        %v2731 = vld [vmem:[%s2706 + $0x120] sm:$0xff]
        %v2732 = vld [vmem:[%s2706 + $0x128] sm:$0xff]
        %v2733 = vld [vmem:[%s2706 + $0x138] sm:$0xff]
        %v2734 = vld [vmem:[%s2706 + $0x140] sm:$0xff]
        %v2735 = vld [vmem:[%s2706 + $0x150] sm:$0xff]
        %v2736 = vld [vmem:[%s2706 + $0x158] sm:$0xff]
        %v2737 = vld [vmem:[%s2706 + $0x168] sm:$0xff]
        %v2738 = vld [vmem:[%s2706 + $0x170] sm:$0xff]
        %s2739 = scalar_lea.vmem [#allocation10], 768
        %v2740 = vld [vmem:[%s2739] sm:$0xff]
        %v2741 = vld [vmem:[%s2739 + $0x8] sm:$0xff]
        %v2742 = vld [vmem:[%s2739 + $0x10] sm:$0xff]
        %v2743 = vld [vmem:[%s2739 + $0x18] sm:$0xff]
        %v2744 = vld [vmem:[%s2739 + $0x20] sm:$0xff]
        %v2745 = vld [vmem:[%s2739 + $0x28] sm:$0xff]
        %v2746 = vld [vmem:[%s2739 + $0x30] sm:$0xff]
        %v2747 = vld [vmem:[%s2739 + $0x38] sm:$0xff]
        %v2748 = vld [vmem:[%s2739 + $0x40] sm:$0xff]
        %v2749 = vld [vmem:[%s2739 + $0x48] sm:$0xff]
        %v2750 = vld [vmem:[%s2739 + $0x50] sm:$0xff]
        %v2751 = vld [vmem:[%s2739 + $0x58] sm:$0xff]
        %v2752 = vld [vmem:[%s2739 + $0x60] sm:$0xff]
        %v2753 = vld [vmem:[%s2739 + $0x68] sm:$0xff]
        %v2754 = vld [vmem:[%s2739 + $0x70] sm:$0xff]
        %v2755 = vld [vmem:[%s2739 + $0x78] sm:$0xff]
        %2756 = vmatprep.subr.mxu0 0.0
        %2757 = vmatpush1.msra.mxu0 %v2740
        %2758 = vmatprep.subr.mxu0 0.0
        %2759 = vmatpush1.msra.mxu0 %v2741
        %2760 = vmatprep.subr.mxu0 0.0
        %2761 = vmatpush1.msra.mxu0 %v2742
        %2762 = vmatprep.subr.mxu0 0.0
        %2763 = vmatpush1.msra.mxu0 %v2743
        %2764 = vmatprep.subr.mxu0 0.0
        %2765 = vmatpush1.msra.mxu0 %v2744
        %2766 = vmatprep.subr.mxu0 0.0
        %2767 = vmatpush1.msra.mxu0 %v2745
        %2768 = vmatprep.subr.mxu0 0.0
        %2769 = vmatpush1.msra.mxu0 %v2746
        %2770 = vmatprep.subr.mxu0 0.0
        %2771 = vmatpush1.msra.mxu0 %v2747
        %2772 = vmatprep.subr.mxu0 0.0
        %2773 = vmatpush1.msra.mxu0 %v2748
        %2774 = vmatprep.subr.mxu0 0.0
        %2775 = vmatpush1.msra.mxu0 %v2749
        %2776 = vmatprep.subr.mxu0 0.0
        %2777 = vmatpush1.msra.mxu0 %v2750
        %2778 = vmatprep.subr.mxu0 0.0
        %2779 = vmatpush1.msra.mxu0 %v2751
        %2780 = vmatprep.subr.mxu0 0.0
        %2781 = vmatpush1.msra.mxu0 %v2752
        %2782 = vmatprep.subr.mxu0 0.0
        %2783 = vmatpush1.msra.mxu0 %v2753
        %2784 = vmatprep.subr.mxu0 0.0
        %2785 = vmatpush1.msra.mxu0 %v2754
        %2786 = vmatprep.subr.mxu0 0.0
        %2787 = vmatpush1.msra.mxu0 %v2755
        %2788 = vmatprep.subr.mxu0 0.0
        %2789 = vmatpush1.msra.mxu0 0.0
        %2790 = vmatprep.subr.mxu0 0.0
        %2791 = vmatpush1.msra.mxu0 0.0
        %2792 = vmatprep.subr.mxu0 0.0
        %2793 = vmatpush1.msra.mxu0 0.0
        %2794 = vmatprep.subr.mxu0 0.0
        %2795 = vmatpush1.msra.mxu0 0.0
        %2796 = vmatprep.subr.mxu0 0.0
        %2797 = vmatpush1.msra.mxu0 0.0
        %2798 = vmatprep.subr.mxu0 0.0
        %2799 = vmatpush1.msra.mxu0 0.0
        %2800 = vmatprep.subr.mxu0 0.0
        %2801 = vmatpush1.msra.mxu0 0.0
        %2802 = vmatprep.subr.mxu0 0.0
        %2803 = vmatpush1.msra.mxu0 0.0
        %2804 = vmatprep.subr.mxu0 0.0
        %2805 = vmatpush1.msra.mxu0 0.0
        %2806 = vmatprep.subr.mxu0 0.0
        %2807 = vmatpush1.msra.mxu0 0.0
        %2808 = vmatprep.subr.mxu0 0.0
        %2809 = vmatpush1.msra.mxu0 0.0
        %2810 = vmatprep.subr.mxu0 0.0
        %2811 = vmatpush1.msra.mxu0 0.0
        %2812 = vmatprep.subr.mxu0 0.0
        %2813 = vmatpush1.msra.mxu0 0.0
        %2814 = vmatprep.subr.mxu0 0.0
        %2815 = vmatpush1.msra.mxu0 0.0
        %2816 = vmatprep.subr.mxu0 0.0
        %2817 = vmatpush1.msra.mxu0 0.0
        %2818 = vmatprep.subr.mxu0 0.0
        %2819 = vmatpush1.msra.mxu0 0.0
        %2820 = vmatprep.mubr.f32.mxu0 0.0
        %2821 = vmatmul.mubr.f32.gmra.mrb[0].mxu0 %v2707
        %v2822 = vpop.f32.mrb[0].mxu0
        %v2823 = vadd.f32 0.0, %v2822
        %v2824 = vpop.f32.mrb[0].mxu0
        %2825 = vmatprep.mubr.f32.mxu0 0.0
        %2826 = vmatmul.mubr.f32.gmra.mrb[0].mxu0 %v2708
        %v2827 = vpop.f32.mrb[0].mxu0
        %v2828 = vadd.f32 0.0, %v2827
        %v2829 = vpop.f32.mrb[0].mxu0
        %2830 = vmatprep.mubr.f32.mxu0 0.0
        %2831 = vmatmul.mubr.f32.gmra.mrb[0].mxu0 %v2709
        %v2832 = vpop.f32.mrb[0].mxu0
        %v2833 = vadd.f32 0.0, %v2832
        %v2834 = vpop.f32.mrb[0].mxu0
        %2835 = vmatprep.mubr.f32.mxu0 0.0
        %2836 = vmatmul.mubr.f32.gmra.mrb[0].mxu0 %v2710
        %v2837 = vpop.f32.mrb[0].mxu0
        %v2838 = vadd.f32 0.0, %v2837
        %v2839 = vpop.f32.mrb[0].mxu0
        %2840 = vmatprep.mubr.f32.mxu0 0.0
        %2841 = vmatmul.mubr.f32.gmra.mrb[0].mxu0 %v2711
        %v2842 = vpop.f32.mrb[0].mxu0
        %v2843 = vadd.f32 0.0, %v2842
        %v2844 = vpop.f32.mrb[0].mxu0
        %2845 = vmatprep.mubr.f32.mxu0 0.0
        %2846 = vmatmul.mubr.f32.gmra.mrb[0].mxu0 %v2712
        %v2847 = vpop.f32.mrb[0].mxu0
        %v2848 = vadd.f32 0.0, %v2847
        %v2849 = vpop.f32.mrb[0].mxu0
        %2850 = vmatprep.mubr.f32.mxu0 0.0
        %2851 = vmatmul.mubr.f32.gmra.mrb[0].mxu0 %v2713
        %v2852 = vpop.f32.mrb[0].mxu0
        %v2853 = vadd.f32 0.0, %v2852
        %v2854 = vpop.f32.mrb[0].mxu0
        %2855 = vmatprep.mubr.f32.mxu0 0.0
        %2856 = vmatmul.mubr.f32.gmra.mrb[0].mxu0 %v2714
        %v2857 = vpop.f32.mrb[0].mxu0
        %v2858 = vadd.f32 0.0, %v2857
        %v2859 = vpop.f32.mrb[0].mxu0
        %2860 = vmatprep.mubr.f32.mxu0 0.0
        %2861 = vmatmul.mubr.f32.gmra.mrb[0].mxu0 %v2715
        %v2862 = vpop.f32.mrb[0].mxu0
        %v2863 = vadd.f32 0.0, %v2862
        %v2864 = vpop.f32.mrb[0].mxu0
        %2865 = vmatprep.mubr.f32.mxu0 0.0
        %2866 = vmatmul.mubr.f32.gmra.mrb[0].mxu0 %v2716
        %v2867 = vpop.f32.mrb[0].mxu0
        %v2868 = vadd.f32 0.0, %v2867
        %v2869 = vpop.f32.mrb[0].mxu0
        %2870 = vmatprep.mubr.f32.mxu0 0.0
        %2871 = vmatmul.mubr.f32.gmra.mrb[0].mxu0 %v2717
        %v2872 = vpop.f32.mrb[0].mxu0
        %v2873 = vadd.f32 0.0, %v2872
        %v2874 = vpop.f32.mrb[0].mxu0
        %2875 = vmatprep.mubr.f32.mxu0 0.0
        %2876 = vmatmul.mubr.f32.gmra.mrb[0].mxu0 %v2718
        %v2877 = vpop.f32.mrb[0].mxu0
        %v2878 = vadd.f32 0.0, %v2877
        %v2879 = vpop.f32.mrb[0].mxu0
        %2880 = vmatprep.mubr.f32.mxu0 0.0
        %2881 = vmatmul.mubr.f32.gmra.mrb[0].mxu0 %v2719
        %v2882 = vpop.f32.mrb[0].mxu0
        %v2883 = vadd.f32 0.0, %v2882
        %v2884 = vpop.f32.mrb[0].mxu0
        %2885 = vmatprep.mubr.f32.mxu0 0.0
        %2886 = vmatmul.mubr.f32.gmra.mrb[0].mxu0 %v2720
        %v2887 = vpop.f32.mrb[0].mxu0
        %v2888 = vadd.f32 0.0, %v2887
        %v2889 = vpop.f32.mrb[0].mxu0
        %2890 = vmatprep.mubr.f32.mxu0 0.0
        %2891 = vmatmul.mubr.f32.gmra.mrb[0].mxu0 %v2721
        %v2892 = vpop.f32.mrb[0].mxu0
        %v2893 = vadd.f32 0.0, %v2892
        %v2894 = vpop.f32.mrb[0].mxu0
        %2895 = vmatprep.mubr.f32.mxu0 0.0
        %2896 = vmatmul.mubr.f32.gmra.mrb[0].mxu0 %v2722
        %v2897 = vpop.f32.mrb[0].mxu0
        %v2898 = vadd.f32 0.0, %v2897
        %v2899 = vpop.f32.mrb[0].mxu0
        %2900 = vmatprep.mubr.f32.mxu0 0.0
        %2901 = vmatmul.mubr.f32.gmra.mrb[0].mxu0 %v2723
        %v2902 = vpop.f32.mrb[0].mxu0
        %v2903 = vadd.f32 0.0, %v2902
        %v2904 = vpop.f32.mrb[0].mxu0
        %2905 = vmatprep.mubr.f32.mxu0 0.0
        %2906 = vmatmul.mubr.f32.gmra.mrb[0].mxu0 %v2724
        %v2907 = vpop.f32.mrb[0].mxu0
        %v2908 = vadd.f32 0.0, %v2907
        %v2909 = vpop.f32.mrb[0].mxu0
        %2910 = vmatprep.mubr.f32.mxu0 0.0
        %2911 = vmatmul.mubr.f32.gmra.mrb[0].mxu0 %v2725
        %v2912 = vpop.f32.mrb[0].mxu0
        %v2913 = vadd.f32 0.0, %v2912
        %v2914 = vpop.f32.mrb[0].mxu0
        %2915 = vmatprep.mubr.f32.mxu0 0.0
        %2916 = vmatmul.mubr.f32.gmra.mrb[0].mxu0 %v2726
        %v2917 = vpop.f32.mrb[0].mxu0
        %v2918 = vadd.f32 0.0, %v2917
        %v2919 = vpop.f32.mrb[0].mxu0
        %2920 = vmatprep.mubr.f32.mxu0 0.0
        %2921 = vmatmul.mubr.f32.gmra.mrb[0].mxu0 %v2727
        %v2922 = vpop.f32.mrb[0].mxu0
        %v2923 = vadd.f32 0.0, %v2922
        %v2924 = vpop.f32.mrb[0].mxu0
        %2925 = vmatprep.mubr.f32.mxu0 0.0
        %2926 = vmatmul.mubr.f32.gmra.mrb[0].mxu0 %v2728
        %v2927 = vpop.f32.mrb[0].mxu0
        %v2928 = vadd.f32 0.0, %v2927
        %v2929 = vpop.f32.mrb[0].mxu0
        %2930 = vmatprep.mubr.f32.mxu0 0.0
        %2931 = vmatmul.mubr.f32.gmra.mrb[0].mxu0 %v2729
        %v2932 = vpop.f32.mrb[0].mxu0
        %v2933 = vadd.f32 0.0, %v2932
        %v2934 = vpop.f32.mrb[0].mxu0
        %2935 = vmatprep.mubr.f32.mxu0 0.0
        %2936 = vmatmul.mubr.f32.gmra.mrb[0].mxu0 %v2730
        %v2937 = vpop.f32.mrb[0].mxu0
        %v2938 = vadd.f32 0.0, %v2937
        %v2939 = vpop.f32.mrb[0].mxu0
        %2940 = vmatprep.mubr.f32.mxu0 0.0
        %2941 = vmatmul.mubr.f32.gmra.mrb[0].mxu0 %v2731
        %v2942 = vpop.f32.mrb[0].mxu0
        %v2943 = vadd.f32 0.0, %v2942
        %v2944 = vpop.f32.mrb[0].mxu0
        %2945 = vmatprep.mubr.f32.mxu0 0.0
        %2946 = vmatmul.mubr.f32.gmra.mrb[0].mxu0 %v2732
        %v2947 = vpop.f32.mrb[0].mxu0
        %v2948 = vadd.f32 0.0, %v2947
        %v2949 = vpop.f32.mrb[0].mxu0
        %2950 = vmatprep.mubr.f32.mxu0 0.0
        %2951 = vmatmul.mubr.f32.gmra.mrb[0].mxu0 %v2733
        %v2952 = vpop.f32.mrb[0].mxu0
        %v2953 = vadd.f32 0.0, %v2952
        %v2954 = vpop.f32.mrb[0].mxu0
        %2955 = vmatprep.mubr.f32.mxu0 0.0
        %2956 = vmatmul.mubr.f32.gmra.mrb[0].mxu0 %v2734
        %v2957 = vpop.f32.mrb[0].mxu0
        %v2958 = vadd.f32 0.0, %v2957
        %v2959 = vpop.f32.mrb[0].mxu0
        %2960 = vmatprep.mubr.f32.mxu0 0.0
        %2961 = vmatmul.mubr.f32.gmra.mrb[0].mxu0 %v2735
        %v2962 = vpop.f32.mrb[0].mxu0
        %v2963 = vadd.f32 0.0, %v2962
        %v2964 = vpop.f32.mrb[0].mxu0
        %2965 = vmatprep.mubr.f32.mxu0 0.0
        %2966 = vmatmul.mubr.f32.gmra.mrb[0].mxu0 %v2736
        %v2967 = vpop.f32.mrb[0].mxu0
        %v2968 = vadd.f32 0.0, %v2967
        %v2969 = vpop.f32.mrb[0].mxu0
        %2970 = vmatprep.mubr.f32.mxu0 0.0
        %2971 = vmatmul.mubr.f32.gmra.mrb[0].mxu0 %v2737
        %v2972 = vpop.f32.mrb[0].mxu0
        %v2973 = vadd.f32 0.0, %v2972
        %v2974 = vpop.f32.mrb[0].mxu0
        %2975 = vmatprep.mubr.f32.mxu0 0.0
        %2976 = vmatmul.mubr.f32.gmra.mrb[0].mxu0 %v2738
        %v2977 = vpop.f32.mrb[0].mxu0
        %v2978 = vadd.f32 0.0, %v2977
        %v2979 = vpop.f32.mrb[0].mxu0
        %2980 = vdwg.mxu0
        %v2981 = vadd.f32 %v2674, %v2823
        %v2982 = vadd.f32 %v2675, %v2828
        %v2983 = vadd.f32 %v2676, %v2833
        %v2984 = vadd.f32 %v2677, %v2838
        %v2985 = vadd.f32 %v2678, %v2843
        %v2986 = vadd.f32 %v2679, %v2848
        %v2987 = vadd.f32 %v2680, %v2853
        %v2988 = vadd.f32 %v2681, %v2858
        %v2989 = vadd.f32 %v2682, %v2863
        %v2990 = vadd.f32 %v2683, %v2868
        %v2991 = vadd.f32 %v2684, %v2873
        %v2992 = vadd.f32 %v2685, %v2878
        %v2993 = vadd.f32 %v2686, %v2883
        %v2994 = vadd.f32 %v2687, %v2888
        %v2995 = vadd.f32 %v2688, %v2893
        %v2996 = vadd.f32 %v2689, %v2898
        %v2997 = vadd.f32 %v2690, %v2903
        %v2998 = vadd.f32 %v2691, %v2908
        %v2999 = vadd.f32 %v2692, %v2913
        %v3000 = vadd.f32 %v2693, %v2918
        %v3001 = vadd.f32 %v2694, %v2923
        %v3002 = vadd.f32 %v2695, %v2928
        %v3003 = vadd.f32 %v2696, %v2933
        %v3004 = vadd.f32 %v2697, %v2938
        %v3005 = vadd.f32 %v2698, %v2943
        %v3006 = vadd.f32 %v2699, %v2948
        %v3007 = vadd.f32 %v2700, %v2953
        %v3008 = vadd.f32 %v2701, %v2958
        %v3009 = vadd.f32 %v2702, %v2963
        %v3010 = vadd.f32 %v2703, %v2968
        %v3011 = vadd.f32 %v2704, %v2973
        %v3012 = vadd.f32 %v2705, %v2978
        %v3013 = vld [vmem:[%s2706 + $0x1] sm:$0xff]
        %v3014 = vld [vmem:[%s2706 + $0x9] sm:$0xff]
        %v3015 = vld [vmem:[%s2706 + $0x19] sm:$0xff]
        %v3016 = vld [vmem:[%s2706 + $0x21] sm:$0xff]
        %v3017 = vld [vmem:[%s2706 + $0x31] sm:$0xff]
        %v3018 = vld [vmem:[%s2706 + $0x39] sm:$0xff]
        %v3019 = vld [vmem:[%s2706 + $0x49] sm:$0xff]
        %v3020 = vld [vmem:[%s2706 + $0x51] sm:$0xff]
        %v3021 = vld [vmem:[%s2706 + $0x61] sm:$0xff]
        %v3022 = vld [vmem:[%s2706 + $0x69] sm:$0xff]
        %v3023 = vld [vmem:[%s2706 + $0x79] sm:$0xff]
        %v3024 = vld [vmem:[%s2706 + $0x81] sm:$0xff]
        %v3025 = vld [vmem:[%s2706 + $0x91] sm:$0xff]
        %v3026 = vld [vmem:[%s2706 + $0x99] sm:$0xff]
        %v3027 = vld [vmem:[%s2706 + $0xa9] sm:$0xff]
        %v3028 = vld [vmem:[%s2706 + $0xb1] sm:$0xff]
        %v3029 = vld [vmem:[%s2706 + $0xc1] sm:$0xff]
        %v3030 = vld [vmem:[%s2706 + $0xc9] sm:$0xff]
        %v3031 = vld [vmem:[%s2706 + $0xd9] sm:$0xff]
        %v3032 = vld [vmem:[%s2706 + $0xe1] sm:$0xff]
        %v3033 = vld [vmem:[%s2706 + $0xf1] sm:$0xff]
        %v3034 = vld [vmem:[%s2706 + $0xf9] sm:$0xff]
        %v3035 = vld [vmem:[%s2706 + $0x109] sm:$0xff]
        %v3036 = vld [vmem:[%s2706 + $0x111] sm:$0xff]
        %v3037 = vld [vmem:[%s2706 + $0x121] sm:$0xff]
        %v3038 = vld [vmem:[%s2706 + $0x129] sm:$0xff]
        %v3039 = vld [vmem:[%s2706 + $0x139] sm:$0xff]
        %v3040 = vld [vmem:[%s2706 + $0x141] sm:$0xff]
        %v3041 = vld [vmem:[%s2706 + $0x151] sm:$0xff]
        %v3042 = vld [vmem:[%s2706 + $0x159] sm:$0xff]
        %v3043 = vld [vmem:[%s2706 + $0x169] sm:$0xff]
        %v3044 = vld [vmem:[%s2706 + $0x171] sm:$0xff]
        %s3045 = scalar_lea.vmem [#allocation10], 896
        %v3046 = vld [vmem:[%s3045] sm:$0xff]
        %v3047 = vld [vmem:[%s3045 + $0x8] sm:$0xff]
        %v3048 = vld [vmem:[%s3045 + $0x10] sm:$0xff]
        %v3049 = vld [vmem:[%s3045 + $0x18] sm:$0xff]
        %v3050 = vld [vmem:[%s3045 + $0x20] sm:$0xff]
        %v3051 = vld [vmem:[%s3045 + $0x28] sm:$0xff]
        %v3052 = vld [vmem:[%s3045 + $0x30] sm:$0xff]
        %v3053 = vld [vmem:[%s3045 + $0x38] sm:$0xff]
        %v3054 = vld [vmem:[%s3045 + $0x40] sm:$0xff]
        %v3055 = vld [vmem:[%s3045 + $0x48] sm:$0xff]
        %v3056 = vld [vmem:[%s3045 + $0x50] sm:$0xff]
        %v3057 = vld [vmem:[%s3045 + $0x58] sm:$0xff]
        %v3058 = vld [vmem:[%s3045 + $0x60] sm:$0xff]
        %v3059 = vld [vmem:[%s3045 + $0x68] sm:$0xff]
        %v3060 = vld [vmem:[%s3045 + $0x70] sm:$0xff]
        %v3061 = vld [vmem:[%s3045 + $0x78] sm:$0xff]
        %3062 = vmatprep.subr.mxu0 0.0
        %3063 = vmatpush1.msra.mxu0 %v3046
        %3064 = vmatprep.subr.mxu0 0.0
        %3065 = vmatpush1.msra.mxu0 %v3047
        %3066 = vmatprep.subr.mxu0 0.0
        %3067 = vmatpush1.msra.mxu0 %v3048
        %3068 = vmatprep.subr.mxu0 0.0
        %3069 = vmatpush1.msra.mxu0 %v3049
        %3070 = vmatprep.subr.mxu0 0.0
        %3071 = vmatpush1.msra.mxu0 %v3050
        %3072 = vmatprep.subr.mxu0 0.0
        %3073 = vmatpush1.msra.mxu0 %v3051
        %3074 = vmatprep.subr.mxu0 0.0
        %3075 = vmatpush1.msra.mxu0 %v3052
        %3076 = vmatprep.subr.mxu0 0.0
        %3077 = vmatpush1.msra.mxu0 %v3053
        %3078 = vmatprep.subr.mxu0 0.0
        %3079 = vmatpush1.msra.mxu0 %v3054
        %3080 = vmatprep.subr.mxu0 0.0
        %3081 = vmatpush1.msra.mxu0 %v3055
        %3082 = vmatprep.subr.mxu0 0.0
        %3083 = vmatpush1.msra.mxu0 %v3056
        %3084 = vmatprep.subr.mxu0 0.0
        %3085 = vmatpush1.msra.mxu0 %v3057
        %3086 = vmatprep.subr.mxu0 0.0
        %3087 = vmatpush1.msra.mxu0 %v3058
        %3088 = vmatprep.subr.mxu0 0.0
        %3089 = vmatpush1.msra.mxu0 %v3059
        %3090 = vmatprep.subr.mxu0 0.0
        %3091 = vmatpush1.msra.mxu0 %v3060
        %3092 = vmatprep.subr.mxu0 0.0
        %3093 = vmatpush1.msra.mxu0 %v3061
        %3094 = vmatprep.subr.mxu0 0.0
        %3095 = vmatpush1.msra.mxu0 0.0
        %3096 = vmatprep.subr.mxu0 0.0
        %3097 = vmatpush1.msra.mxu0 0.0
        %3098 = vmatprep.subr.mxu0 0.0
        %3099 = vmatpush1.msra.mxu0 0.0
        %3100 = vmatprep.subr.mxu0 0.0
        %3101 = vmatpush1.msra.mxu0 0.0
        %3102 = vmatprep.subr.mxu0 0.0
        %3103 = vmatpush1.msra.mxu0 0.0
        %3104 = vmatprep.subr.mxu0 0.0
        %3105 = vmatpush1.msra.mxu0 0.0
        %3106 = vmatprep.subr.mxu0 0.0
        %3107 = vmatpush1.msra.mxu0 0.0
        %3108 = vmatprep.subr.mxu0 0.0
        %3109 = vmatpush1.msra.mxu0 0.0
        %3110 = vmatprep.subr.mxu0 0.0
        %3111 = vmatpush1.msra.mxu0 0.0
        %3112 = vmatprep.subr.mxu0 0.0
        %3113 = vmatpush1.msra.mxu0 0.0
        %3114 = vmatprep.subr.mxu0 0.0
        %3115 = vmatpush1.msra.mxu0 0.0
        %3116 = vmatprep.subr.mxu0 0.0
        %3117 = vmatpush1.msra.mxu0 0.0
        %3118 = vmatprep.subr.mxu0 0.0
        %3119 = vmatpush1.msra.mxu0 0.0
        %3120 = vmatprep.subr.mxu0 0.0
        %3121 = vmatpush1.msra.mxu0 0.0
        %3122 = vmatprep.subr.mxu0 0.0
        %3123 = vmatpush1.msra.mxu0 0.0
        %3124 = vmatprep.subr.mxu0 0.0
        %3125 = vmatpush1.msra.mxu0 0.0
        %3126 = vmatprep.mubr.f32.mxu0 0.0
        %3127 = vmatmul.mubr.f32.gmra.mrb[0].mxu0 %v3013
        %v3128 = vpop.f32.mrb[0].mxu0
        %v3129 = vadd.f32 0.0, %v3128
        %v3130 = vpop.f32.mrb[0].mxu0
        %3131 = vmatprep.mubr.f32.mxu0 0.0
        %3132 = vmatmul.mubr.f32.gmra.mrb[0].mxu0 %v3014
        %v3133 = vpop.f32.mrb[0].mxu0
        %v3134 = vadd.f32 0.0, %v3133
        %v3135 = vpop.f32.mrb[0].mxu0
        %3136 = vmatprep.mubr.f32.mxu0 0.0
        %3137 = vmatmul.mubr.f32.gmra.mrb[0].mxu0 %v3015
        %v3138 = vpop.f32.mrb[0].mxu0
        %v3139 = vadd.f32 0.0, %v3138
        %v3140 = vpop.f32.mrb[0].mxu0
        %3141 = vmatprep.mubr.f32.mxu0 0.0
        %3142 = vmatmul.mubr.f32.gmra.mrb[0].mxu0 %v3016
        %v3143 = vpop.f32.mrb[0].mxu0
        %v3144 = vadd.f32 0.0, %v3143
        %v3145 = vpop.f32.mrb[0].mxu0
        %3146 = vmatprep.mubr.f32.mxu0 0.0
        %3147 = vmatmul.mubr.f32.gmra.mrb[0].mxu0 %v3017
        %v3148 = vpop.f32.mrb[0].mxu0
        %v3149 = vadd.f32 0.0, %v3148
        %v3150 = vpop.f32.mrb[0].mxu0
        %3151 = vmatprep.mubr.f32.mxu0 0.0
        %3152 = vmatmul.mubr.f32.gmra.mrb[0].mxu0 %v3018
        %v3153 = vpop.f32.mrb[0].mxu0
        %v3154 = vadd.f32 0.0, %v3153
        %v3155 = vpop.f32.mrb[0].mxu0
        %3156 = vmatprep.mubr.f32.mxu0 0.0
        %3157 = vmatmul.mubr.f32.gmra.mrb[0].mxu0 %v3019
        %v3158 = vpop.f32.mrb[0].mxu0
        %v3159 = vadd.f32 0.0, %v3158
        %v3160 = vpop.f32.mrb[0].mxu0
        %3161 = vmatprep.mubr.f32.mxu0 0.0
        %3162 = vmatmul.mubr.f32.gmra.mrb[0].mxu0 %v3020
        %v3163 = vpop.f32.mrb[0].mxu0
        %v3164 = vadd.f32 0.0, %v3163
        %v3165 = vpop.f32.mrb[0].mxu0
        %3166 = vmatprep.mubr.f32.mxu0 0.0
        %3167 = vmatmul.mubr.f32.gmra.mrb[0].mxu0 %v3021
        %v3168 = vpop.f32.mrb[0].mxu0
        %v3169 = vadd.f32 0.0, %v3168
        %v3170 = vpop.f32.mrb[0].mxu0
        %3171 = vmatprep.mubr.f32.mxu0 0.0
        %3172 = vmatmul.mubr.f32.gmra.mrb[0].mxu0 %v3022
        %v3173 = vpop.f32.mrb[0].mxu0
        %v3174 = vadd.f32 0.0, %v3173
        %v3175 = vpop.f32.mrb[0].mxu0
        %3176 = vmatprep.mubr.f32.mxu0 0.0
        %3177 = vmatmul.mubr.f32.gmra.mrb[0].mxu0 %v3023
        %v3178 = vpop.f32.mrb[0].mxu0
        %v3179 = vadd.f32 0.0, %v3178
        %v3180 = vpop.f32.mrb[0].mxu0
        %3181 = vmatprep.mubr.f32.mxu0 0.0
        %3182 = vmatmul.mubr.f32.gmra.mrb[0].mxu0 %v3024
        %v3183 = vpop.f32.mrb[0].mxu0
        %v3184 = vadd.f32 0.0, %v3183
        %v3185 = vpop.f32.mrb[0].mxu0
        %3186 = vmatprep.mubr.f32.mxu0 0.0
        %3187 = vmatmul.mubr.f32.gmra.mrb[0].mxu0 %v3025
        %v3188 = vpop.f32.mrb[0].mxu0
        %v3189 = vadd.f32 0.0, %v3188
        %v3190 = vpop.f32.mrb[0].mxu0
        %3191 = vmatprep.mubr.f32.mxu0 0.0
        %3192 = vmatmul.mubr.f32.gmra.mrb[0].mxu0 %v3026
        %v3193 = vpop.f32.mrb[0].mxu0
        %v3194 = vadd.f32 0.0, %v3193
        %v3195 = vpop.f32.mrb[0].mxu0
        %3196 = vmatprep.mubr.f32.mxu0 0.0
        %3197 = vmatmul.mubr.f32.gmra.mrb[0].mxu0 %v3027
        %v3198 = vpop.f32.mrb[0].mxu0
        %v3199 = vadd.f32 0.0, %v3198
        %v3200 = vpop.f32.mrb[0].mxu0
        %3201 = vmatprep.mubr.f32.mxu0 0.0
        %3202 = vmatmul.mubr.f32.gmra.mrb[0].mxu0 %v3028
        %v3203 = vpop.f32.mrb[0].mxu0
        %v3204 = vadd.f32 0.0, %v3203
        %v3205 = vpop.f32.mrb[0].mxu0
        %3206 = vmatprep.mubr.f32.mxu0 0.0
        %3207 = vmatmul.mubr.f32.gmra.mrb[0].mxu0 %v3029
        %v3208 = vpop.f32.mrb[0].mxu0
        %v3209 = vadd.f32 0.0, %v3208
        %v3210 = vpop.f32.mrb[0].mxu0
        %3211 = vmatprep.mubr.f32.mxu0 0.0
        %3212 = vmatmul.mubr.f32.gmra.mrb[0].mxu0 %v3030
        %v3213 = vpop.f32.mrb[0].mxu0
        %v3214 = vadd.f32 0.0, %v3213
        %v3215 = vpop.f32.mrb[0].mxu0
        %3216 = vmatprep.mubr.f32.mxu0 0.0
        %3217 = vmatmul.mubr.f32.gmra.mrb[0].mxu0 %v3031
        %v3218 = vpop.f32.mrb[0].mxu0
        %v3219 = vadd.f32 0.0, %v3218
        %v3220 = vpop.f32.mrb[0].mxu0
        %3221 = vmatprep.mubr.f32.mxu0 0.0
        %3222 = vmatmul.mubr.f32.gmra.mrb[0].mxu0 %v3032
        %v3223 = vpop.f32.mrb[0].mxu0
        %v3224 = vadd.f32 0.0, %v3223
        %v3225 = vpop.f32.mrb[0].mxu0
        %3226 = vmatprep.mubr.f32.mxu0 0.0
        %3227 = vmatmul.mubr.f32.gmra.mrb[0].mxu0 %v3033
        %v3228 = vpop.f32.mrb[0].mxu0
        %v3229 = vadd.f32 0.0, %v3228
        %v3230 = vpop.f32.mrb[0].mxu0
        %3231 = vmatprep.mubr.f32.mxu0 0.0
        %3232 = vmatmul.mubr.f32.gmra.mrb[0].mxu0 %v3034
        %v3233 = vpop.f32.mrb[0].mxu0
        %v3234 = vadd.f32 0.0, %v3233
        %v3235 = vpop.f32.mrb[0].mxu0
        %3236 = vmatprep.mubr.f32.mxu0 0.0
        %3237 = vmatmul.mubr.f32.gmra.mrb[0].mxu0 %v3035
        %v3238 = vpop.f32.mrb[0].mxu0
        %v3239 = vadd.f32 0.0, %v3238
        %v3240 = vpop.f32.mrb[0].mxu0
        %3241 = vmatprep.mubr.f32.mxu0 0.0
        %3242 = vmatmul.mubr.f32.gmra.mrb[0].mxu0 %v3036
        %v3243 = vpop.f32.mrb[0].mxu0
        %v3244 = vadd.f32 0.0, %v3243
        %v3245 = vpop.f32.mrb[0].mxu0
        %3246 = vmatprep.mubr.f32.mxu0 0.0
        %3247 = vmatmul.mubr.f32.gmra.mrb[0].mxu0 %v3037
        %v3248 = vpop.f32.mrb[0].mxu0
        %v3249 = vadd.f32 0.0, %v3248
        %v3250 = vpop.f32.mrb[0].mxu0
        %3251 = vmatprep.mubr.f32.mxu0 0.0
        %3252 = vmatmul.mubr.f32.gmra.mrb[0].mxu0 %v3038
        %v3253 = vpop.f32.mrb[0].mxu0
        %v3254 = vadd.f32 0.0, %v3253
        %v3255 = vpop.f32.mrb[0].mxu0
        %3256 = vmatprep.mubr.f32.mxu0 0.0
        %3257 = vmatmul.mubr.f32.gmra.mrb[0].mxu0 %v3039
        %v3258 = vpop.f32.mrb[0].mxu0
        %v3259 = vadd.f32 0.0, %v3258
        %v3260 = vpop.f32.mrb[0].mxu0
        %3261 = vmatprep.mubr.f32.mxu0 0.0
        %3262 = vmatmul.mubr.f32.gmra.mrb[0].mxu0 %v3040
        %v3263 = vpop.f32.mrb[0].mxu0
        %v3264 = vadd.f32 0.0, %v3263
        %v3265 = vpop.f32.mrb[0].mxu0
        %3266 = vmatprep.mubr.f32.mxu0 0.0
        %3267 = vmatmul.mubr.f32.gmra.mrb[0].mxu0 %v3041
        %v3268 = vpop.f32.mrb[0].mxu0
        %v3269 = vadd.f32 0.0, %v3268
        %v3270 = vpop.f32.mrb[0].mxu0
        %3271 = vmatprep.mubr.f32.mxu0 0.0
        %3272 = vmatmul.mubr.f32.gmra.mrb[0].mxu0 %v3042
        %v3273 = vpop.f32.mrb[0].mxu0
        %v3274 = vadd.f32 0.0, %v3273
        %v3275 = vpop.f32.mrb[0].mxu0
        %3276 = vmatprep.mubr.f32.mxu0 0.0
        %3277 = vmatmul.mubr.f32.gmra.mrb[0].mxu0 %v3043
        %v3278 = vpop.f32.mrb[0].mxu0
        %v3279 = vadd.f32 0.0, %v3278
        %v3280 = vpop.f32.mrb[0].mxu0
        %3281 = vmatprep.mubr.f32.mxu0 0.0
        %3282 = vmatmul.mubr.f32.gmra.mrb[0].mxu0 %v3044
        %v3283 = vpop.f32.mrb[0].mxu0
        %v3284 = vadd.f32 0.0, %v3283
        %v3285 = vpop.f32.mrb[0].mxu0
        %3286 = vdwg.mxu0
        %v3287 = vadd.f32 %v2981, %v3129
        %v3288 = vadd.f32 %v2982, %v3134
        %v3289 = vadd.f32 %v2983, %v3139
        %v3290 = vadd.f32 %v2984, %v3144
        %v3291 = vadd.f32 %v2985, %v3149
        %v3292 = vadd.f32 %v2986, %v3154
        %v3293 = vadd.f32 %v2987, %v3159
        %v3294 = vadd.f32 %v2988, %v3164
        %v3295 = vadd.f32 %v2989, %v3169
        %v3296 = vadd.f32 %v2990, %v3174
        %v3297 = vadd.f32 %v2991, %v3179
        %v3298 = vadd.f32 %v2992, %v3184
        %v3299 = vadd.f32 %v2993, %v3189
        %v3300 = vadd.f32 %v2994, %v3194
        %v3301 = vadd.f32 %v2995, %v3199
        %v3302 = vadd.f32 %v2996, %v3204
        %v3303 = vadd.f32 %v2997, %v3209
        %v3304 = vadd.f32 %v2998, %v3214
        %v3305 = vadd.f32 %v2999, %v3219
        %v3306 = vadd.f32 %v3000, %v3224
        %v3307 = vadd.f32 %v3001, %v3229
        %v3308 = vadd.f32 %v3002, %v3234
        %v3309 = vadd.f32 %v3003, %v3239
        %v3310 = vadd.f32 %v3004, %v3244
        %v3311 = vadd.f32 %v3005, %v3249
        %v3312 = vadd.f32 %v3006, %v3254
        %v3313 = vadd.f32 %v3007, %v3259
        %v3314 = vadd.f32 %v3008, %v3264
        %v3315 = vadd.f32 %v3009, %v3269
        %v3316 = vadd.f32 %v3010, %v3274
        %v3317 = vadd.f32 %v3011, %v3279
        %v3318 = vadd.f32 %v3012, %v3284
        %v3319 = vld [vmem:[%s2706 + $0x2] sm:$0xff]
        %v3320 = vld [vmem:[%s2706 + $0xa] sm:$0xff]
        %v3321 = vld [vmem:[%s2706 + $0x1a] sm:$0xff]
        %v3322 = vld [vmem:[%s2706 + $0x22] sm:$0xff]
        %v3323 = vld [vmem:[%s2706 + $0x32] sm:$0xff]
        %v3324 = vld [vmem:[%s2706 + $0x3a] sm:$0xff]
        %v3325 = vld [vmem:[%s2706 + $0x4a] sm:$0xff]
        %v3326 = vld [vmem:[%s2706 + $0x52] sm:$0xff]
        %v3327 = vld [vmem:[%s2706 + $0x62] sm:$0xff]
        %v3328 = vld [vmem:[%s2706 + $0x6a] sm:$0xff]
        %v3329 = vld [vmem:[%s2706 + $0x7a] sm:$0xff]
        %v3330 = vld [vmem:[%s2706 + $0x82] sm:$0xff]
        %v3331 = vld [vmem:[%s2706 + $0x92] sm:$0xff]
        %v3332 = vld [vmem:[%s2706 + $0x9a] sm:$0xff]
        %v3333 = vld [vmem:[%s2706 + $0xaa] sm:$0xff]
        %v3334 = vld [vmem:[%s2706 + $0xb2] sm:$0xff]
        %v3335 = vld [vmem:[%s2706 + $0xc2] sm:$0xff]
        %v3336 = vld [vmem:[%s2706 + $0xca] sm:$0xff]
        %v3337 = vld [vmem:[%s2706 + $0xda] sm:$0xff]
        %v3338 = vld [vmem:[%s2706 + $0xe2] sm:$0xff]
        %v3339 = vld [vmem:[%s2706 + $0xf2] sm:$0xff]
        %v3340 = vld [vmem:[%s2706 + $0xfa] sm:$0xff]
        %v3341 = vld [vmem:[%s2706 + $0x10a] sm:$0xff]
        %v3342 = vld [vmem:[%s2706 + $0x112] sm:$0xff]
        %v3343 = vld [vmem:[%s2706 + $0x122] sm:$0xff]
        %v3344 = vld [vmem:[%s2706 + $0x12a] sm:$0xff]
        %v3345 = vld [vmem:[%s2706 + $0x13a] sm:$0xff]
        %v3346 = vld [vmem:[%s2706 + $0x142] sm:$0xff]
        %v3347 = vld [vmem:[%s2706 + $0x152] sm:$0xff]
        %v3348 = vld [vmem:[%s2706 + $0x15a] sm:$0xff]
        %v3349 = vld [vmem:[%s2706 + $0x16a] sm:$0xff]
        %v3350 = vld [vmem:[%s2706 + $0x172] sm:$0xff]
        %s3351 = scalar_lea.vmem [#allocation10], 1024
        %v3352 = vld [vmem:[%s3351] sm:$0xff]
        %v3353 = vld [vmem:[%s3351 + $0x8] sm:$0xff]
        %v3354 = vld [vmem:[%s3351 + $0x10] sm:$0xff]
        %v3355 = vld [vmem:[%s3351 + $0x18] sm:$0xff]
        %v3356 = vld [vmem:[%s3351 + $0x20] sm:$0xff]
        %v3357 = vld [vmem:[%s3351 + $0x28] sm:$0xff]
        %v3358 = vld [vmem:[%s3351 + $0x30] sm:$0xff]
        %v3359 = vld [vmem:[%s3351 + $0x38] sm:$0xff]
        %v3360 = vld [vmem:[%s3351 + $0x40] sm:$0xff]
        %v3361 = vld [vmem:[%s3351 + $0x48] sm:$0xff]
        %v3362 = vld [vmem:[%s3351 + $0x50] sm:$0xff]
        %v3363 = vld [vmem:[%s3351 + $0x58] sm:$0xff]
        %v3364 = vld [vmem:[%s3351 + $0x60] sm:$0xff]
        %v3365 = vld [vmem:[%s3351 + $0x68] sm:$0xff]
        %v3366 = vld [vmem:[%s3351 + $0x70] sm:$0xff]
        %v3367 = vld [vmem:[%s3351 + $0x78] sm:$0xff]
        %3368 = vmatprep.subr.mxu0 0.0
        %3369 = vmatpush1.msra.mxu0 %v3352
        %3370 = vmatprep.subr.mxu0 0.0
        %3371 = vmatpush1.msra.mxu0 %v3353
        %3372 = vmatprep.subr.mxu0 0.0
        %3373 = vmatpush1.msra.mxu0 %v3354
        %3374 = vmatprep.subr.mxu0 0.0
        %3375 = vmatpush1.msra.mxu0 %v3355
        %3376 = vmatprep.subr.mxu0 0.0
        %3377 = vmatpush1.msra.mxu0 %v3356
        %3378 = vmatprep.subr.mxu0 0.0
        %3379 = vmatpush1.msra.mxu0 %v3357
        %3380 = vmatprep.subr.mxu0 0.0
        %3381 = vmatpush1.msra.mxu0 %v3358
        %3382 = vmatprep.subr.mxu0 0.0
        %3383 = vmatpush1.msra.mxu0 %v3359
        %3384 = vmatprep.subr.mxu0 0.0
        %3385 = vmatpush1.msra.mxu0 %v3360
        %3386 = vmatprep.subr.mxu0 0.0
        %3387 = vmatpush1.msra.mxu0 %v3361
        %3388 = vmatprep.subr.mxu0 0.0
        %3389 = vmatpush1.msra.mxu0 %v3362
        %3390 = vmatprep.subr.mxu0 0.0
        %3391 = vmatpush1.msra.mxu0 %v3363
        %3392 = vmatprep.subr.mxu0 0.0
        %3393 = vmatpush1.msra.mxu0 %v3364
        %3394 = vmatprep.subr.mxu0 0.0
        %3395 = vmatpush1.msra.mxu0 %v3365
        %3396 = vmatprep.subr.mxu0 0.0
        %3397 = vmatpush1.msra.mxu0 %v3366
        %3398 = vmatprep.subr.mxu0 0.0
        %3399 = vmatpush1.msra.mxu0 %v3367
        %3400 = vmatprep.subr.mxu0 0.0
        %3401 = vmatpush1.msra.mxu0 0.0
        %3402 = vmatprep.subr.mxu0 0.0
        %3403 = vmatpush1.msra.mxu0 0.0
        %3404 = vmatprep.subr.mxu0 0.0
        %3405 = vmatpush1.msra.mxu0 0.0
        %3406 = vmatprep.subr.mxu0 0.0
        %3407 = vmatpush1.msra.mxu0 0.0
        %3408 = vmatprep.subr.mxu0 0.0
        %3409 = vmatpush1.msra.mxu0 0.0
        %3410 = vmatprep.subr.mxu0 0.0
        %3411 = vmatpush1.msra.mxu0 0.0
        %3412 = vmatprep.subr.mxu0 0.0
        %3413 = vmatpush1.msra.mxu0 0.0
        %3414 = vmatprep.subr.mxu0 0.0
        %3415 = vmatpush1.msra.mxu0 0.0
        %3416 = vmatprep.subr.mxu0 0.0
        %3417 = vmatpush1.msra.mxu0 0.0
        %3418 = vmatprep.subr.mxu0 0.0
        %3419 = vmatpush1.msra.mxu0 0.0
        %3420 = vmatprep.subr.mxu0 0.0
        %3421 = vmatpush1.msra.mxu0 0.0
        %3422 = vmatprep.subr.mxu0 0.0
        %3423 = vmatpush1.msra.mxu0 0.0
        %3424 = vmatprep.subr.mxu0 0.0
        %3425 = vmatpush1.msra.mxu0 0.0
        %3426 = vmatprep.subr.mxu0 0.0
        %3427 = vmatpush1.msra.mxu0 0.0
        %3428 = vmatprep.subr.mxu0 0.0
        %3429 = vmatpush1.msra.mxu0 0.0
        %3430 = vmatprep.subr.mxu0 0.0
        %3431 = vmatpush1.msra.mxu0 0.0
        %3432 = vmatprep.mubr.f32.mxu0 0.0
        %3433 = vmatmul.mubr.f32.gmra.mrb[0].mxu0 %v3319
        %v3434 = vpop.f32.mrb[0].mxu0
        %v3435 = vadd.f32 0.0, %v3434
        %v3436 = vpop.f32.mrb[0].mxu0
        %3437 = vmatprep.mubr.f32.mxu0 0.0
        %3438 = vmatmul.mubr.f32.gmra.mrb[0].mxu0 %v3320
        %v3439 = vpop.f32.mrb[0].mxu0
        %v3440 = vadd.f32 0.0, %v3439
        %v3441 = vpop.f32.mrb[0].mxu0
        %3442 = vmatprep.mubr.f32.mxu0 0.0
        %3443 = vmatmul.mubr.f32.gmra.mrb[0].mxu0 %v3321
        %v3444 = vpop.f32.mrb[0].mxu0
        %v3445 = vadd.f32 0.0, %v3444
        %v3446 = vpop.f32.mrb[0].mxu0
        %3447 = vmatprep.mubr.f32.mxu0 0.0
        %3448 = vmatmul.mubr.f32.gmra.mrb[0].mxu0 %v3322
        %v3449 = vpop.f32.mrb[0].mxu0
        %v3450 = vadd.f32 0.0, %v3449
        %v3451 = vpop.f32.mrb[0].mxu0
        %3452 = vmatprep.mubr.f32.mxu0 0.0
        %3453 = vmatmul.mubr.f32.gmra.mrb[0].mxu0 %v3323
        %v3454 = vpop.f32.mrb[0].mxu0
        %v3455 = vadd.f32 0.0, %v3454
        %v3456 = vpop.f32.mrb[0].mxu0
        %3457 = vmatprep.mubr.f32.mxu0 0.0
        %3458 = vmatmul.mubr.f32.gmra.mrb[0].mxu0 %v3324
        %v3459 = vpop.f32.mrb[0].mxu0
        %v3460 = vadd.f32 0.0, %v3459
        %v3461 = vpop.f32.mrb[0].mxu0
        %3462 = vmatprep.mubr.f32.mxu0 0.0
        %3463 = vmatmul.mubr.f32.gmra.mrb[0].mxu0 %v3325
        %v3464 = vpop.f32.mrb[0].mxu0
        %v3465 = vadd.f32 0.0, %v3464
        %v3466 = vpop.f32.mrb[0].mxu0
        %3467 = vmatprep.mubr.f32.mxu0 0.0
        %3468 = vmatmul.mubr.f32.gmra.mrb[0].mxu0 %v3326
        %v3469 = vpop.f32.mrb[0].mxu0
        %v3470 = vadd.f32 0.0, %v3469
        %v3471 = vpop.f32.mrb[0].mxu0
        %3472 = vmatprep.mubr.f32.mxu0 0.0
        %3473 = vmatmul.mubr.f32.gmra.mrb[0].mxu0 %v3327
        %v3474 = vpop.f32.mrb[0].mxu0
        %v3475 = vadd.f32 0.0, %v3474
        %v3476 = vpop.f32.mrb[0].mxu0
        %3477 = vmatprep.mubr.f32.mxu0 0.0
        %3478 = vmatmul.mubr.f32.gmra.mrb[0].mxu0 %v3328
        %v3479 = vpop.f32.mrb[0].mxu0
        %v3480 = vadd.f32 0.0, %v3479
        %v3481 = vpop.f32.mrb[0].mxu0
        %3482 = vmatprep.mubr.f32.mxu0 0.0
        %3483 = vmatmul.mubr.f32.gmra.mrb[0].mxu0 %v3329
        %v3484 = vpop.f32.mrb[0].mxu0
        %v3485 = vadd.f32 0.0, %v3484
        %v3486 = vpop.f32.mrb[0].mxu0
        %3487 = vmatprep.mubr.f32.mxu0 0.0
        %3488 = vmatmul.mubr.f32.gmra.mrb[0].mxu0 %v3330
        %v3489 = vpop.f32.mrb[0].mxu0
        %v3490 = vadd.f32 0.0, %v3489
        %v3491 = vpop.f32.mrb[0].mxu0
        %3492 = vmatprep.mubr.f32.mxu0 0.0
        %3493 = vmatmul.mubr.f32.gmra.mrb[0].mxu0 %v3331
        %v3494 = vpop.f32.mrb[0].mxu0
        %v3495 = vadd.f32 0.0, %v3494
        %v3496 = vpop.f32.mrb[0].mxu0
        %3497 = vmatprep.mubr.f32.mxu0 0.0
        %3498 = vmatmul.mubr.f32.gmra.mrb[0].mxu0 %v3332
        %v3499 = vpop.f32.mrb[0].mxu0
        %v3500 = vadd.f32 0.0, %v3499
        %v3501 = vpop.f32.mrb[0].mxu0
        %3502 = vmatprep.mubr.f32.mxu0 0.0
        %3503 = vmatmul.mubr.f32.gmra.mrb[0].mxu0 %v3333
        %v3504 = vpop.f32.mrb[0].mxu0
        %v3505 = vadd.f32 0.0, %v3504
        %v3506 = vpop.f32.mrb[0].mxu0
        %3507 = vmatprep.mubr.f32.mxu0 0.0
        %3508 = vmatmul.mubr.f32.gmra.mrb[0].mxu0 %v3334
        %v3509 = vpop.f32.mrb[0].mxu0
        %v3510 = vadd.f32 0.0, %v3509
        %v3511 = vpop.f32.mrb[0].mxu0
        %3512 = vmatprep.mubr.f32.mxu0 0.0
        %3513 = vmatmul.mubr.f32.gmra.mrb[0].mxu0 %v3335
        %v3514 = vpop.f32.mrb[0].mxu0
        %v3515 = vadd.f32 0.0, %v3514
        %v3516 = vpop.f32.mrb[0].mxu0
        %3517 = vmatprep.mubr.f32.mxu0 0.0
        %3518 = vmatmul.mubr.f32.gmra.mrb[0].mxu0 %v3336
        %v3519 = vpop.f32.mrb[0].mxu0
        %v3520 = vadd.f32 0.0, %v3519
        %v3521 = vpop.f32.mrb[0].mxu0
        %3522 = vmatprep.mubr.f32.mxu0 0.0
        %3523 = vmatmul.mubr.f32.gmra.mrb[0].mxu0 %v3337
        %v3524 = vpop.f32.mrb[0].mxu0
        %v3525 = vadd.f32 0.0, %v3524
        %v3526 = vpop.f32.mrb[0].mxu0
        %3527 = vmatprep.mubr.f32.mxu0 0.0
        %3528 = vmatmul.mubr.f32.gmra.mrb[0].mxu0 %v3338
        %v3529 = vpop.f32.mrb[0].mxu0
        %v3530 = vadd.f32 0.0, %v3529
        %v3531 = vpop.f32.mrb[0].mxu0
        %3532 = vmatprep.mubr.f32.mxu0 0.0
        %3533 = vmatmul.mubr.f32.gmra.mrb[0].mxu0 %v3339
        %v3534 = vpop.f32.mrb[0].mxu0
        %v3535 = vadd.f32 0.0, %v3534
        %v3536 = vpop.f32.mrb[0].mxu0
        %3537 = vmatprep.mubr.f32.mxu0 0.0
        %3538 = vmatmul.mubr.f32.gmra.mrb[0].mxu0 %v3340
        %v3539 = vpop.f32.mrb[0].mxu0
        %v3540 = vadd.f32 0.0, %v3539
        %v3541 = vpop.f32.mrb[0].mxu0
        %3542 = vmatprep.mubr.f32.mxu0 0.0
        %3543 = vmatmul.mubr.f32.gmra.mrb[0].mxu0 %v3341
        %v3544 = vpop.f32.mrb[0].mxu0
        %v3545 = vadd.f32 0.0, %v3544
        %v3546 = vpop.f32.mrb[0].mxu0
        %3547 = vmatprep.mubr.f32.mxu0 0.0
        %3548 = vmatmul.mubr.f32.gmra.mrb[0].mxu0 %v3342
        %v3549 = vpop.f32.mrb[0].mxu0
        %v3550 = vadd.f32 0.0, %v3549
        %v3551 = vpop.f32.mrb[0].mxu0
        %3552 = vmatprep.mubr.f32.mxu0 0.0
        %3553 = vmatmul.mubr.f32.gmra.mrb[0].mxu0 %v3343
        %v3554 = vpop.f32.mrb[0].mxu0
        %v3555 = vadd.f32 0.0, %v3554
        %v3556 = vpop.f32.mrb[0].mxu0
        %3557 = vmatprep.mubr.f32.mxu0 0.0
        %3558 = vmatmul.mubr.f32.gmra.mrb[0].mxu0 %v3344
        %v3559 = vpop.f32.mrb[0].mxu0
        %v3560 = vadd.f32 0.0, %v3559
        %v3561 = vpop.f32.mrb[0].mxu0
        %3562 = vmatprep.mubr.f32.mxu0 0.0
        %3563 = vmatmul.mubr.f32.gmra.mrb[0].mxu0 %v3345
        %v3564 = vpop.f32.mrb[0].mxu0
        %v3565 = vadd.f32 0.0, %v3564
        %v3566 = vpop.f32.mrb[0].mxu0
        %3567 = vmatprep.mubr.f32.mxu0 0.0
        %3568 = vmatmul.mubr.f32.gmra.mrb[0].mxu0 %v3346
        %v3569 = vpop.f32.mrb[0].mxu0
        %v3570 = vadd.f32 0.0, %v3569
        %v3571 = vpop.f32.mrb[0].mxu0
        %3572 = vmatprep.mubr.f32.mxu0 0.0
        %3573 = vmatmul.mubr.f32.gmra.mrb[0].mxu0 %v3347
        %v3574 = vpop.f32.mrb[0].mxu0
        %v3575 = vadd.f32 0.0, %v3574
        %v3576 = vpop.f32.mrb[0].mxu0
        %3577 = vmatprep.mubr.f32.mxu0 0.0
        %3578 = vmatmul.mubr.f32.gmra.mrb[0].mxu0 %v3348
        %v3579 = vpop.f32.mrb[0].mxu0
        %v3580 = vadd.f32 0.0, %v3579
        %v3581 = vpop.f32.mrb[0].mxu0
        %3582 = vmatprep.mubr.f32.mxu0 0.0
        %3583 = vmatmul.mubr.f32.gmra.mrb[0].mxu0 %v3349
        %v3584 = vpop.f32.mrb[0].mxu0
        %v3585 = vadd.f32 0.0, %v3584
        %v3586 = vpop.f32.mrb[0].mxu0
        %3587 = vmatprep.mubr.f32.mxu0 0.0
        %3588 = vmatmul.mubr.f32.gmra.mrb[0].mxu0 %v3350
        %v3589 = vpop.f32.mrb[0].mxu0
        %v3590 = vadd.f32 0.0, %v3589
        %v3591 = vpop.f32.mrb[0].mxu0
        %3592 = vdwg.mxu0
        %v3593 = vadd.f32 %v3287, %v3435
        %v3594 = vadd.f32 %v3288, %v3440
        %v3595 = vadd.f32 %v3289, %v3445
        %v3596 = vadd.f32 %v3290, %v3450
        %v3597 = vadd.f32 %v3291, %v3455
        %v3598 = vadd.f32 %v3292, %v3460
        %v3599 = vadd.f32 %v3293, %v3465
        %v3600 = vadd.f32 %v3294, %v3470
        %v3601 = vadd.f32 %v3295, %v3475
        %v3602 = vadd.f32 %v3296, %v3480
        %v3603 = vadd.f32 %v3297, %v3485
        %v3604 = vadd.f32 %v3298, %v3490
        %v3605 = vadd.f32 %v3299, %v3495
        %v3606 = vadd.f32 %v3300, %v3500
        %v3607 = vadd.f32 %v3301, %v3505
        %v3608 = vadd.f32 %v3302, %v3510
        %v3609 = vadd.f32 %v3303, %v3515
        %v3610 = vadd.f32 %v3304, %v3520
        %v3611 = vadd.f32 %v3305, %v3525
        %v3612 = vadd.f32 %v3306, %v3530
        %v3613 = vadd.f32 %v3307, %v3535
        %v3614 = vadd.f32 %v3308, %v3540
        %v3615 = vadd.f32 %v3309, %v3545
        %v3616 = vadd.f32 %v3310, %v3550
        %v3617 = vadd.f32 %v3311, %v3555
        %v3618 = vadd.f32 %v3312, %v3560
        %v3619 = vadd.f32 %v3313, %v3565
        %v3620 = vadd.f32 %v3314, %v3570
        %v3621 = vadd.f32 %v3315, %v3575
        %v3622 = vadd.f32 %v3316, %v3580
        %v3623 = vadd.f32 %v3317, %v3585
        %v3624 = vadd.f32 %v3318, %v3590
        %v3625 = vld [vmem:[%s5] sm:$0x1]
        %v3627 = vlaneseq
        %v3628 = vshrl.u32 %v3627, 7
        %v3629 = vsub.s32 0, %v3628
        %v3630 = vrot.slane %v3625, %v3629
        %v3632 = vadd.f32 %v3593, %v3630
        %v3633 = vadd.f32 %v3594, %v3630
        %v3634 = vadd.f32 %v3595, %v3630
        %v3635 = vadd.f32 %v3596, %v3630
        %v3636 = vadd.f32 %v3597, %v3630
        %v3637 = vadd.f32 %v3598, %v3630
        %v3638 = vadd.f32 %v3599, %v3630
        %v3639 = vadd.f32 %v3600, %v3630
        %v3640 = vadd.f32 %v3601, %v3630
        %v3641 = vadd.f32 %v3602, %v3630
        %v3642 = vadd.f32 %v3603, %v3630
        %v3643 = vadd.f32 %v3604, %v3630
        %v3644 = vadd.f32 %v3605, %v3630
        %v3645 = vadd.f32 %v3606, %v3630
        %v3646 = vadd.f32 %v3607, %v3630
        %v3647 = vadd.f32 %v3608, %v3630
        %v3648 = vadd.f32 %v3609, %v3630
        %v3649 = vadd.f32 %v3610, %v3630
        %v3650 = vadd.f32 %v3611, %v3630
        %v3651 = vadd.f32 %v3612, %v3630
        %v3652 = vadd.f32 %v3613, %v3630
        %v3653 = vadd.f32 %v3614, %v3630
        %v3654 = vadd.f32 %v3615, %v3630
        %v3655 = vadd.f32 %v3616, %v3630
        %v3656 = vadd.f32 %v3617, %v3630
        %v3657 = vadd.f32 %v3618, %v3630
        %v3658 = vadd.f32 %v3619, %v3630
        %v3659 = vadd.f32 %v3620, %v3630
        %v3660 = vadd.f32 %v3621, %v3630
        %v3661 = vadd.f32 %v3622, %v3630
        %v3662 = vadd.f32 %v3623, %v3630
        %v3663 = vadd.f32 %v3624, %v3630
        %v3664 = vmax.f32 %v3632, 0.0
        %v3665 = vmax.f32 %v3633, 0.0
        %v3666 = vmax.f32 %v3634, 0.0
        %v3667 = vmax.f32 %v3635, 0.0
        %v3668 = vmax.f32 %v3636, 0.0
        %v3669 = vmax.f32 %v3637, 0.0
        %v3670 = vmax.f32 %v3638, 0.0
        %v3671 = vmax.f32 %v3639, 0.0
        %v3672 = vmax.f32 %v3640, 0.0
        %v3673 = vmax.f32 %v3641, 0.0
        %v3674 = vmax.f32 %v3642, 0.0
        %v3675 = vmax.f32 %v3643, 0.0
        %v3676 = vmax.f32 %v3644, 0.0
        %v3677 = vmax.f32 %v3645, 0.0
        %v3678 = vmax.f32 %v3646, 0.0
        %v3679 = vmax.f32 %v3647, 0.0
        %v3680 = vmax.f32 %v3648, 0.0
        %v3681 = vmax.f32 %v3649, 0.0
        %v3682 = vmax.f32 %v3650, 0.0
        %v3683 = vmax.f32 %v3651, 0.0
        %v3684 = vmax.f32 %v3652, 0.0
        %v3685 = vmax.f32 %v3653, 0.0
        %v3686 = vmax.f32 %v3654, 0.0
        %v3687 = vmax.f32 %v3655, 0.0
        %v3688 = vmax.f32 %v3656, 0.0
        %v3689 = vmax.f32 %v3657, 0.0
        %v3690 = vmax.f32 %v3658, 0.0
        %v3691 = vmax.f32 %v3659, 0.0
        %v3692 = vmax.f32 %v3660, 0.0
        %v3693 = vmax.f32 %v3661, 0.0
        %v3694 = vmax.f32 %v3662, 0.0
        %v3695 = vmax.f32 %v3663, 0.0
        %v3696 = vld [vmem:[#allocation11] sm:$0xff]
        %v3697 = vld [vmem:[#allocation11 + $0x8] sm:$0xff]
        %v3698 = vld [vmem:[#allocation11 + $0x10] sm:$0xff]
        %v3699 = vld [vmem:[#allocation11 + $0x18] sm:$0xff]
        %v3700 = vld [vmem:[#allocation11 + $0x20] sm:$0xff]
        %v3701 = vld [vmem:[#allocation11 + $0x28] sm:$0xff]
        %v3702 = vld [vmem:[#allocation11 + $0x30] sm:$0xff]
        %v3703 = vld [vmem:[#allocation11 + $0x38] sm:$0xff]
        %v3704 = vld [vmem:[#allocation11 + $0x40] sm:$0xff]
        %v3705 = vld [vmem:[#allocation11 + $0x48] sm:$0xff]
        %v3706 = vld [vmem:[#allocation11 + $0x50] sm:$0xff]
        %v3707 = vld [vmem:[#allocation11 + $0x58] sm:$0xff]
        %v3708 = vld [vmem:[#allocation11 + $0x60] sm:$0xff]
        %v3709 = vld [vmem:[#allocation11 + $0x68] sm:$0xff]
        %v3710 = vld [vmem:[#allocation11 + $0x70] sm:$0xff]
        %v3711 = vld [vmem:[#allocation11 + $0x78] sm:$0xff]
        %v3712 = vld [vmem:[%s7] sm:$0x1]
        %v3714 = vlaneseq
        %v3715 = vshrl.u32 %v3714, 7
        %v3716 = vsub.s32 0, %v3715
        %v3717 = vrot.slane %v3712, %v3716
        %3719 = vmatprep.subr.mxu0 0.0
        %3720 = vmatpush1.msra.mxu0 %v3696
        %3721 = vmatprep.subr.mxu0 0.0
        %3722 = vmatpush1.msra.mxu0 %v3697
        %3723 = vmatprep.subr.mxu0 0.0
        %3724 = vmatpush1.msra.mxu0 %v3698
        %3725 = vmatprep.subr.mxu0 0.0
        %3726 = vmatpush1.msra.mxu0 %v3699
        %3727 = vmatprep.subr.mxu0 0.0
        %3728 = vmatpush1.msra.mxu0 %v3700
        %3729 = vmatprep.subr.mxu0 0.0
        %3730 = vmatpush1.msra.mxu0 %v3701
        %3731 = vmatprep.subr.mxu0 0.0
        %3732 = vmatpush1.msra.mxu0 %v3702
        %3733 = vmatprep.subr.mxu0 0.0
        %3734 = vmatpush1.msra.mxu0 %v3703
        %3735 = vmatprep.subr.mxu0 0.0
        %3736 = vmatpush1.msra.mxu0 %v3704
        %3737 = vmatprep.subr.mxu0 0.0
        %3738 = vmatpush1.msra.mxu0 %v3705
        %3739 = vmatprep.subr.mxu0 0.0
        %3740 = vmatpush1.msra.mxu0 %v3706
        %3741 = vmatprep.subr.mxu0 0.0
        %3742 = vmatpush1.msra.mxu0 %v3707
        %3743 = vmatprep.subr.mxu0 0.0
        %3744 = vmatpush1.msra.mxu0 %v3708
        %3745 = vmatprep.subr.mxu0 0.0
        %3746 = vmatpush1.msra.mxu0 %v3709
        %3747 = vmatprep.subr.mxu0 0.0
        %3748 = vmatpush1.msra.mxu0 %v3710
        %3749 = vmatprep.subr.mxu0 0.0
        %3750 = vmatpush1.msra.mxu0 %v3711
        %3751 = vmatprep.subr.mxu0 0.0
        %3752 = vmatpush1.msra.mxu0 0.0
        %3753 = vmatprep.subr.mxu0 0.0
        %3754 = vmatpush1.msra.mxu0 0.0
        %3755 = vmatprep.subr.mxu0 0.0
        %3756 = vmatpush1.msra.mxu0 0.0
        %3757 = vmatprep.subr.mxu0 0.0
        %3758 = vmatpush1.msra.mxu0 0.0
        %3759 = vmatprep.subr.mxu0 0.0
        %3760 = vmatpush1.msra.mxu0 0.0
        %3761 = vmatprep.subr.mxu0 0.0
        %3762 = vmatpush1.msra.mxu0 0.0
        %3763 = vmatprep.subr.mxu0 0.0
        %3764 = vmatpush1.msra.mxu0 0.0
        %3765 = vmatprep.subr.mxu0 0.0
        %3766 = vmatpush1.msra.mxu0 0.0
        %3767 = vmatprep.subr.mxu0 0.0
        %3768 = vmatpush1.msra.mxu0 0.0
        %3769 = vmatprep.subr.mxu0 0.0
        %3770 = vmatpush1.msra.mxu0 0.0
        %3771 = vmatprep.subr.mxu0 0.0
        %3772 = vmatpush1.msra.mxu0 0.0
        %3773 = vmatprep.subr.mxu0 0.0
        %3774 = vmatpush1.msra.mxu0 0.0
        %3775 = vmatprep.subr.mxu0 0.0
        %3776 = vmatpush1.msra.mxu0 0.0
        %3777 = vmatprep.subr.mxu0 0.0
        %3778 = vmatpush1.msra.mxu0 0.0
        %3779 = vmatprep.subr.mxu0 0.0
        %3780 = vmatpush1.msra.mxu0 0.0
        %3781 = vmatprep.subr.mxu0 0.0
        %3782 = vmatpush1.msra.mxu0 0.0
        %3783 = vmatprep.mubr.f32.mxu0 0.0
        %3784 = vmatmul.mubr.f32.gmra.mrb[0].mxu0 %v3664
        %v3785 = vpop.f32.mrb[0].mxu0
        %v3786 = vadd.f32 %v3717, %v3785
        %v3787 = vpop.f32.mrb[0].mxu0
        %3788 = vmatprep.mubr.f32.mxu0 0.0
        %3789 = vmatmul.mubr.f32.gmra.mrb[0].mxu0 %v3665
        %v3790 = vpop.f32.mrb[0].mxu0
        %v3791 = vadd.f32 %v3717, %v3790
        %v3792 = vpop.f32.mrb[0].mxu0
        %3793 = vmatprep.mubr.f32.mxu0 0.0
        %3794 = vmatmul.mubr.f32.gmra.mrb[0].mxu0 %v3666
        %v3795 = vpop.f32.mrb[0].mxu0
        %v3796 = vadd.f32 %v3717, %v3795
        %v3797 = vpop.f32.mrb[0].mxu0
        %3798 = vmatprep.mubr.f32.mxu0 0.0
        %3799 = vmatmul.mubr.f32.gmra.mrb[0].mxu0 %v3667
        %v3800 = vpop.f32.mrb[0].mxu0
        %v3801 = vadd.f32 %v3717, %v3800
        %v3802 = vpop.f32.mrb[0].mxu0
        %3803 = vmatprep.mubr.f32.mxu0 0.0
        %3804 = vmatmul.mubr.f32.gmra.mrb[0].mxu0 %v3668
        %v3805 = vpop.f32.mrb[0].mxu0
        %v3806 = vadd.f32 %v3717, %v3805
        %v3807 = vpop.f32.mrb[0].mxu0
        %3808 = vmatprep.mubr.f32.mxu0 0.0
        %3809 = vmatmul.mubr.f32.gmra.mrb[0].mxu0 %v3669
        %v3810 = vpop.f32.mrb[0].mxu0
        %v3811 = vadd.f32 %v3717, %v3810
        %v3812 = vpop.f32.mrb[0].mxu0
        %3813 = vmatprep.mubr.f32.mxu0 0.0
        %3814 = vmatmul.mubr.f32.gmra.mrb[0].mxu0 %v3670
        %v3815 = vpop.f32.mrb[0].mxu0
        %v3816 = vadd.f32 %v3717, %v3815
        %v3817 = vpop.f32.mrb[0].mxu0
        %3818 = vmatprep.mubr.f32.mxu0 0.0
        %3819 = vmatmul.mubr.f32.gmra.mrb[0].mxu0 %v3671
        %v3820 = vpop.f32.mrb[0].mxu0
        %v3821 = vadd.f32 %v3717, %v3820
        %v3822 = vpop.f32.mrb[0].mxu0
        %3823 = vmatprep.mubr.f32.mxu0 0.0
        %3824 = vmatmul.mubr.f32.gmra.mrb[0].mxu0 %v3672
        %v3825 = vpop.f32.mrb[0].mxu0
        %v3826 = vadd.f32 %v3717, %v3825
        %v3827 = vpop.f32.mrb[0].mxu0
        %3828 = vmatprep.mubr.f32.mxu0 0.0
        %3829 = vmatmul.mubr.f32.gmra.mrb[0].mxu0 %v3673
        %v3830 = vpop.f32.mrb[0].mxu0
        %v3831 = vadd.f32 %v3717, %v3830
        %v3832 = vpop.f32.mrb[0].mxu0
        %3833 = vmatprep.mubr.f32.mxu0 0.0
        %3834 = vmatmul.mubr.f32.gmra.mrb[0].mxu0 %v3674
        %v3835 = vpop.f32.mrb[0].mxu0
        %v3836 = vadd.f32 %v3717, %v3835
        %v3837 = vpop.f32.mrb[0].mxu0
        %3838 = vmatprep.mubr.f32.mxu0 0.0
        %3839 = vmatmul.mubr.f32.gmra.mrb[0].mxu0 %v3675
        %v3840 = vpop.f32.mrb[0].mxu0
        %v3841 = vadd.f32 %v3717, %v3840
        %v3842 = vpop.f32.mrb[0].mxu0
        %3843 = vmatprep.mubr.f32.mxu0 0.0
        %3844 = vmatmul.mubr.f32.gmra.mrb[0].mxu0 %v3676
        %v3845 = vpop.f32.mrb[0].mxu0
        %v3846 = vadd.f32 %v3717, %v3845
        %v3847 = vpop.f32.mrb[0].mxu0
        %3848 = vmatprep.mubr.f32.mxu0 0.0
        %3849 = vmatmul.mubr.f32.gmra.mrb[0].mxu0 %v3677
        %v3850 = vpop.f32.mrb[0].mxu0
        %v3851 = vadd.f32 %v3717, %v3850
        %v3852 = vpop.f32.mrb[0].mxu0
        %3853 = vmatprep.mubr.f32.mxu0 0.0
        %3854 = vmatmul.mubr.f32.gmra.mrb[0].mxu0 %v3678
        %v3855 = vpop.f32.mrb[0].mxu0
        %v3856 = vadd.f32 %v3717, %v3855
        %v3857 = vpop.f32.mrb[0].mxu0
        %3858 = vmatprep.mubr.f32.mxu0 0.0
        %3859 = vmatmul.mubr.f32.gmra.mrb[0].mxu0 %v3679
        %v3860 = vpop.f32.mrb[0].mxu0
        %v3861 = vadd.f32 %v3717, %v3860
        %v3862 = vpop.f32.mrb[0].mxu0
        %3863 = vmatprep.mubr.f32.mxu0 0.0
        %3864 = vmatmul.mubr.f32.gmra.mrb[0].mxu0 %v3680
        %v3865 = vpop.f32.mrb[0].mxu0
        %v3866 = vadd.f32 %v3717, %v3865
        %v3867 = vpop.f32.mrb[0].mxu0
        %3868 = vmatprep.mubr.f32.mxu0 0.0
        %3869 = vmatmul.mubr.f32.gmra.mrb[0].mxu0 %v3681
        %v3870 = vpop.f32.mrb[0].mxu0
        %v3871 = vadd.f32 %v3717, %v3870
        %v3872 = vpop.f32.mrb[0].mxu0
        %3873 = vmatprep.mubr.f32.mxu0 0.0
        %3874 = vmatmul.mubr.f32.gmra.mrb[0].mxu0 %v3682
        %v3875 = vpop.f32.mrb[0].mxu0
        %v3876 = vadd.f32 %v3717, %v3875
        %v3877 = vpop.f32.mrb[0].mxu0
        %3878 = vmatprep.mubr.f32.mxu0 0.0
        %3879 = vmatmul.mubr.f32.gmra.mrb[0].mxu0 %v3683
        %v3880 = vpop.f32.mrb[0].mxu0
        %v3881 = vadd.f32 %v3717, %v3880
        %v3882 = vpop.f32.mrb[0].mxu0
        %3883 = vmatprep.mubr.f32.mxu0 0.0
        %3884 = vmatmul.mubr.f32.gmra.mrb[0].mxu0 %v3684
        %v3885 = vpop.f32.mrb[0].mxu0
        %v3886 = vadd.f32 %v3717, %v3885
        %v3887 = vpop.f32.mrb[0].mxu0
        %3888 = vmatprep.mubr.f32.mxu0 0.0
        %3889 = vmatmul.mubr.f32.gmra.mrb[0].mxu0 %v3685
        %v3890 = vpop.f32.mrb[0].mxu0
        %v3891 = vadd.f32 %v3717, %v3890
        %v3892 = vpop.f32.mrb[0].mxu0
        %3893 = vmatprep.mubr.f32.mxu0 0.0
        %3894 = vmatmul.mubr.f32.gmra.mrb[0].mxu0 %v3686
        %v3895 = vpop.f32.mrb[0].mxu0
        %v3896 = vadd.f32 %v3717, %v3895
        %v3897 = vpop.f32.mrb[0].mxu0
        %3898 = vmatprep.mubr.f32.mxu0 0.0
        %3899 = vmatmul.mubr.f32.gmra.mrb[0].mxu0 %v3687
        %v3900 = vpop.f32.mrb[0].mxu0
        %v3901 = vadd.f32 %v3717, %v3900
        %v3902 = vpop.f32.mrb[0].mxu0
        %3903 = vmatprep.mubr.f32.mxu0 0.0
        %3904 = vmatmul.mubr.f32.gmra.mrb[0].mxu0 %v3688
        %v3905 = vpop.f32.mrb[0].mxu0
        %v3906 = vadd.f32 %v3717, %v3905
        %v3907 = vpop.f32.mrb[0].mxu0
        %3908 = vmatprep.mubr.f32.mxu0 0.0
        %3909 = vmatmul.mubr.f32.gmra.mrb[0].mxu0 %v3689
        %v3910 = vpop.f32.mrb[0].mxu0
        %v3911 = vadd.f32 %v3717, %v3910
        %v3912 = vpop.f32.mrb[0].mxu0
        %3913 = vmatprep.mubr.f32.mxu0 0.0
        %3914 = vmatmul.mubr.f32.gmra.mrb[0].mxu0 %v3690
        %v3915 = vpop.f32.mrb[0].mxu0
        %v3916 = vadd.f32 %v3717, %v3915
        %v3917 = vpop.f32.mrb[0].mxu0
        %3918 = vmatprep.mubr.f32.mxu0 0.0
        %3919 = vmatmul.mubr.f32.gmra.mrb[0].mxu0 %v3691
        %v3920 = vpop.f32.mrb[0].mxu0
        %v3921 = vadd.f32 %v3717, %v3920
        %v3922 = vpop.f32.mrb[0].mxu0
        %3923 = vmatprep.mubr.f32.mxu0 0.0
        %3924 = vmatmul.mubr.f32.gmra.mrb[0].mxu0 %v3692
        %v3925 = vpop.f32.mrb[0].mxu0
        %v3926 = vadd.f32 %v3717, %v3925
        %v3927 = vpop.f32.mrb[0].mxu0
        %3928 = vmatprep.mubr.f32.mxu0 0.0
        %3929 = vmatmul.mubr.f32.gmra.mrb[0].mxu0 %v3693
        %v3930 = vpop.f32.mrb[0].mxu0
        %v3931 = vadd.f32 %v3717, %v3930
        %v3932 = vpop.f32.mrb[0].mxu0
        %3933 = vmatprep.mubr.f32.mxu0 0.0
        %3934 = vmatmul.mubr.f32.gmra.mrb[0].mxu0 %v3694
        %v3935 = vpop.f32.mrb[0].mxu0
        %v3936 = vadd.f32 %v3717, %v3935
        %v3937 = vpop.f32.mrb[0].mxu0
        %3938 = vmatprep.mubr.f32.mxu0 0.0
        %3939 = vmatmul.mubr.f32.gmra.mrb[0].mxu0 %v3695
        %v3940 = vpop.f32.mrb[0].mxu0
        %v3941 = vadd.f32 %v3717, %v3940
        %v3942 = vpop.f32.mrb[0].mxu0
        %3943 = vdwg.mxu0
        %v3944 = vld [vmem:[%s318] sm:$0xff]
        %v3945 = vld [vmem:[%s318 + $0x8] sm:$0xff]
        %v3946 = vld [vmem:[%s318 + $0x10] sm:$0xff]
        %v3947 = vld [vmem:[%s318 + $0x18] sm:$0xff]
        %v3948 = vld [vmem:[%s318 + $0x20] sm:$0xff]
        %v3949 = vld [vmem:[%s318 + $0x28] sm:$0xff]
        %v3950 = vld [vmem:[%s318 + $0x30] sm:$0xff]
        %v3951 = vld [vmem:[%s318 + $0x38] sm:$0xff]
        %v3952 = vld [vmem:[%s318 + $0x40] sm:$0xff]
        %v3953 = vld [vmem:[%s318 + $0x48] sm:$0xff]
        %v3954 = vld [vmem:[%s318 + $0x50] sm:$0xff]
        %v3955 = vld [vmem:[%s318 + $0x58] sm:$0xff]
        %v3956 = vld [vmem:[%s318 + $0x60] sm:$0xff]
        %v3957 = vld [vmem:[%s318 + $0x68] sm:$0xff]
        %v3958 = vld [vmem:[%s318 + $0x70] sm:$0xff]
        %v3959 = vld [vmem:[%s318 + $0x78] sm:$0xff]
        %v3960 = vld [vmem:[%s318 + $0x80] sm:$0xff]
        %v3961 = vld [vmem:[%s318 + $0x88] sm:$0xff]
        %v3962 = vld [vmem:[%s318 + $0x90] sm:$0xff]
        %v3963 = vld [vmem:[%s318 + $0x98] sm:$0xff]
        %v3964 = vld [vmem:[%s318 + $0xa0] sm:$0xff]
        %v3965 = vld [vmem:[%s318 + $0xa8] sm:$0xff]
        %v3966 = vld [vmem:[%s318 + $0xb0] sm:$0xff]
        %v3967 = vld [vmem:[%s318 + $0xb8] sm:$0xff]
        %v3968 = vld [vmem:[%s318 + $0xc0] sm:$0xff]
        %v3969 = vld [vmem:[%s318 + $0xc8] sm:$0xff]
        %v3970 = vld [vmem:[%s318 + $0xd0] sm:$0xff]
        %v3971 = vld [vmem:[%s318 + $0xd8] sm:$0xff]
        %v3972 = vld [vmem:[%s318 + $0xe0] sm:$0xff]
        %v3973 = vld [vmem:[%s318 + $0xe8] sm:$0xff]
        %v3974 = vld [vmem:[%s318 + $0xf0] sm:$0xff]
        %v3975 = vld [vmem:[%s318 + $0xf8] sm:$0xff]
        %v3976 = vadd.f32 %v3786, %v3944
        %v3977 = vadd.f32 %v3791, %v3945
        %v3978 = vadd.f32 %v3796, %v3946
        %v3979 = vadd.f32 %v3801, %v3947
        %v3980 = vadd.f32 %v3806, %v3948
        %v3981 = vadd.f32 %v3811, %v3949
        %v3982 = vadd.f32 %v3816, %v3950
        %v3983 = vadd.f32 %v3821, %v3951
        %v3984 = vadd.f32 %v3826, %v3952
        %v3985 = vadd.f32 %v3831, %v3953
        %v3986 = vadd.f32 %v3836, %v3954
        %v3987 = vadd.f32 %v3841, %v3955
        %v3988 = vadd.f32 %v3846, %v3956
        %v3989 = vadd.f32 %v3851, %v3957
        %v3990 = vadd.f32 %v3856, %v3958
        %v3991 = vadd.f32 %v3861, %v3959
        %v3992 = vadd.f32 %v3866, %v3960
        %v3993 = vadd.f32 %v3871, %v3961
        %v3994 = vadd.f32 %v3876, %v3962
        %v3995 = vadd.f32 %v3881, %v3963
        %v3996 = vadd.f32 %v3886, %v3964
        %v3997 = vadd.f32 %v3891, %v3965
        %v3998 = vadd.f32 %v3896, %v3966
        %v3999 = vadd.f32 %v3901, %v3967
        %v4000 = vadd.f32 %v3906, %v3968
        %v4001 = vadd.f32 %v3911, %v3969
        %v4002 = vadd.f32 %v3916, %v3970
        %v4003 = vadd.f32 %v3921, %v3971
        %v4004 = vadd.f32 %v3926, %v3972
        %v4005 = vadd.f32 %v3931, %v3973
        %v4006 = vadd.f32 %v3936, %v3974
        %v4007 = vadd.f32 %v3941, %v3975
        %v4008 = vmax.f32 %v3976, 0.0
        %v4009 = vmax.f32 %v3977, 0.0
        %v4010 = vmax.f32 %v3978, 0.0
        %v4011 = vmax.f32 %v3979, 0.0
        %v4012 = vmax.f32 %v3980, 0.0
        %v4013 = vmax.f32 %v3981, 0.0
        %v4014 = vmax.f32 %v3982, 0.0
        %v4015 = vmax.f32 %v3983, 0.0
        %v4016 = vmax.f32 %v3984, 0.0
        %v4017 = vmax.f32 %v3985, 0.0
        %v4018 = vmax.f32 %v3986, 0.0
        %v4019 = vmax.f32 %v3987, 0.0
        %v4020 = vmax.f32 %v3988, 0.0
        %v4021 = vmax.f32 %v3989, 0.0
        %v4022 = vmax.f32 %v3990, 0.0
        %v4023 = vmax.f32 %v3991, 0.0
        %v4024 = vmax.f32 %v3992, 0.0
        %v4025 = vmax.f32 %v3993, 0.0
        %v4026 = vmax.f32 %v3994, 0.0
        %v4027 = vmax.f32 %v3995, 0.0
        %v4028 = vmax.f32 %v3996, 0.0
        %v4029 = vmax.f32 %v3997, 0.0
        %v4030 = vmax.f32 %v3998, 0.0
        %v4031 = vmax.f32 %v3999, 0.0
        %v4032 = vmax.f32 %v4000, 0.0
        %v4033 = vmax.f32 %v4001, 0.0
        %v4034 = vmax.f32 %v4002, 0.0
        %v4035 = vmax.f32 %v4003, 0.0
        %v4036 = vmax.f32 %v4004, 0.0
        %v4037 = vmax.f32 %v4005, 0.0
        %v4038 = vmax.f32 %v4006, 0.0
        %v4039 = vmax.f32 %v4007, 0.0
        %4040 = vst [vmem:[%s360] sm:$0xff] %v4008
        %4041 = vst [vmem:[%s360 + $0x8] sm:$0xff] %v4009
        %4042 = vst [vmem:[%s360 + $0x10] sm:$0xff] %v4010
        %4043 = vst [vmem:[%s360 + $0x18] sm:$0xff] %v4011
        %4044 = vst [vmem:[%s360 + $0x20] sm:$0xff] %v4012
        %4045 = vst [vmem:[%s360 + $0x28] sm:$0xff] %v4013
        %4046 = vst [vmem:[%s360 + $0x30] sm:$0xff] %v4014
        %4047 = vst [vmem:[%s360 + $0x38] sm:$0xff] %v4015
        %4048 = vst [vmem:[%s360 + $0x40] sm:$0xff] %v4016
        %4049 = vst [vmem:[%s360 + $0x48] sm:$0xff] %v4017
        %4050 = vst [vmem:[%s360 + $0x50] sm:$0xff] %v4018
        %4051 = vst [vmem:[%s360 + $0x58] sm:$0xff] %v4019
        %4052 = vst [vmem:[%s360 + $0x60] sm:$0xff] %v4020
        %4053 = vst [vmem:[%s360 + $0x68] sm:$0xff] %v4021
        %4054 = vst [vmem:[%s360 + $0x70] sm:$0xff] %v4022
        %4055 = vst [vmem:[%s360 + $0x78] sm:$0xff] %v4023
        %4056 = vst [vmem:[%s360 + $0x80] sm:$0xff] %v4024
        %4057 = vst [vmem:[%s360 + $0x88] sm:$0xff] %v4025
        %4058 = vst [vmem:[%s360 + $0x90] sm:$0xff] %v4026
        %4059 = vst [vmem:[%s360 + $0x98] sm:$0xff] %v4027
        %4060 = vst [vmem:[%s360 + $0xa0] sm:$0xff] %v4028
        %4061 = vst [vmem:[%s360 + $0xa8] sm:$0xff] %v4029
        %4062 = vst [vmem:[%s360 + $0xb0] sm:$0xff] %v4030
        %4063 = vst [vmem:[%s360 + $0xb8] sm:$0xff] %v4031
        %4064 = vst [vmem:[%s360 + $0xc0] sm:$0xff] %v4032
        %4065 = vst [vmem:[%s360 + $0xc8] sm:$0xff] %v4033
        %4066 = vst [vmem:[%s360 + $0xd0] sm:$0xff] %v4034
        %4067 = vst [vmem:[%s360 + $0xd8] sm:$0xff] %v4035
        %4068 = vst [vmem:[%s360 + $0xe0] sm:$0xff] %v4036
        %4069 = vst [vmem:[%s360 + $0xe8] sm:$0xff] %v4037
        %4070 = vst [vmem:[%s360 + $0xf0] sm:$0xff] %v4038
        %4071 = vst [vmem:[%s360 + $0xf8] sm:$0xff] %v4039
        %s4072 = sand.u32 %s203, 1
        %s4073 = scalar_lea.sflag [#allocation7], %s4072
        %s4074 = sand.u32 %s203, 1
        %s4075 = smul.addr %s4074, 256
        %s4076 = scalar_lea.vmem [#allocation13], %s4075
        // Predicated region
        $region93: #{tpu_custom_call.1} parent=47 // pred_check
          %p4077 = pneg %p213
        $region94: #{tpu_custom_call.1} parent=47 // pred_check_branch
          %4079 = sbr.rel (%p4077) target = $region96
        $region95: #{tpu_custom_call.1} parent=47 // pred_region
          %s4080 = smul.u32 16, %s32
          %s4082 = ssub.s32 4096, 4096
          %4083 = vsyncadd %s4073, %s4082
          %s4084 = smul.addr %s4080, 2
          %s4085 = smul.addr %s31, 32
          %s4086 = sadd.s32 %s4084, %s4085
          %s4087 = smul.addr %s4086, 128
          %s4088 = scalar_lea.hbm %s8, %s4087
          %s4089 = sshll.u32 %s4076, 4
          %s4090 = int_to_ptr.vmem [resolvable:$true] %s4089
          %4095 = dma.vmem_to_hbm [thread:$0]  %s4090, 4096, %s4088, %s4073, 128, 128, 8
        $region96: #{tpu_custom_call.1} parent=47 // pred_fallthru
          _
      $region48: #{tpu_custom_call.1} parent=5 // pred_fallthru
        _
      %p4096 = scmp.le.s32.totalorder 2, %s22
      // Predicated region
      $region97: #{tpu_custom_call.1} parent=5 // pred_check
        %p4097 = pneg %p4096
      $region98: #{tpu_custom_call.1} parent=5 // pred_check_branch
        %4099 = sbr.rel (%p4097) target = $region100
      $region99: #{tpu_custom_call.1} parent=5 // pred_region
        %s4100 = ssub.s32 %s22, 2
        // Predicated region
        $region101: #{tpu_custom_call.1} parent=99 // pred_check
          %p4101 = pneg %p219
        $region102: #{tpu_custom_call.1} parent=99 // pred_check_branch
          %4103 = sbr.rel (%p4101) target = $region104
        $region103: #{tpu_custom_call.1} parent=99 // pred_region
          %s4104 = sand.u32 %s204, 1
          %s4105 = scalar_lea.sflag [#allocation7], %s4104
          %s4106 = sand.u32 %s204, 1
          %s4107 = smul.addr %s4106, 256
          %s4108 = scalar_lea.vmem [#allocation13], %s4107
          %4109 = dma.done %s4105, 4096
        $region104: #{tpu_custom_call.1} parent=99 // pred_fallthru
          _
      $region100: #{tpu_custom_call.1} parent=5 // pred_fallthru
        _
    $region6: #{tpu_custom_call.1} parent=1 // loop_footer
      %s26 = sadd.s32 1, %s22
    $region7: #{tpu_custom_call.1} parent=1 // loop_footer_branch
      %21 = sbr.rel target = $region3
    $region8: #{tpu_custom_call.1} parent=1 // loop_exit
      _
    %4110 = vsyncpa [#allocation6], 1
    %s4111 = scalar_lea.sflag [#allocation6], 1
    %4112 = vsyncpa %s4111, 1
    %4113 = vsyncpa [#allocation9], 1
    %4114 = vsyncpa [#allocation12], 1
    %4115 = vsyncpa [#allocation7], 1
    %s4116 = scalar_lea.sflag [#allocation7], 1
    %4117 = vsyncpa %s4116, 1
  %4118 = vsyncmov [#allocation4]
  %s4119 = vpop.sfrf %4118
  %p4120 = scmp.eq.s32.totalorder %s4119, 0
  %p4121 = pneg %p4120
  %4123 = shalt.err (%p4121)
  %s4124 = scalar_lea.sflag [#allocation4], 1
  %4125 = vsyncmov %s4124
  %s4126 = vpop.sfrf %4125
  %p4127 = scmp.eq.s32.totalorder %s4126, 0
  %p4128 = pneg %p4127
  %4130 = shalt.err (%p4128)

</llo_original>
